<compile_context>
chip_gen: v7x
topology: tpu7x:2x2x1
jax: 0.10.0
libtpu: 0.0.40
codegen_flags: <defaults>
</compile_context>

<pallas_src>
import jax
import jax.numpy as jnp
from jax.experimental import pallas as pl
from jax.experimental.pallas import tpu as pltpu


def basic_block_forward(x_nchw, w1, g1, be1, m1, v1, w2, g2, be2, m2, v2,
                        eps=1e-5):
    """BasicBlock forward (stride=1, dilation=1, downsample=None)."""
    B, C, H, W = x_nchw.shape
    Cout = w1.shape[0]
    assert C == Cout, "identity path requires inplanes == planes"

    LANE = 128
    Cp = ((max(C, Cout) + LANE - 1) // LANE) * LANE   # lane-dense channels
    Wpa = ((W + 1 + 15) // 16) * 16                   # >= W+1, multiple of 16
    Hp = H + 2
    N = H * Wpa

    # ------------------------------------------------------------------ kernel
    def kernel(xp_ref, w1_ref, s1_ref, b1_ref, w2_ref, s2_ref, b2_ref,
               o_ref, cat_ref, mid_ref):
        # xp_ref : (1, Hp, Wpa, Cp) bf16  zero-halo input (rows +-1, cols >= W,
        #                                  channels >= Cin all zero)
        # w*_ref : (3, 3*Cp, Cp)    bf16  weights, kw-major; kh stacked on Cin
        # s*/b*  : (1, Cp)          f32   folded BatchNorm scale / bias
        # o_ref  : (1, H, Wpa, Cp)  bf16  padded, lane-dense output block
        # cat_ref: (N, 3*Cp)        bf16  K-fused LHS scratch (reused per conv)
        # mid_ref: (Hp, Wpa, Cp)    bf16  zero-halo intermediate scratch
        def conv3x3(src_rows, w_ref):
            # out[h, w] = sum_{kh, kw} src[h + kh, w + kw - 1] @ W[kh, kw]
            # kh is folded into the contraction axis (K = 3*Cp); the kw shift
            # is one circular roll of each kw-group's partial sum along the
            # merged (H*Wpa) axis.  The wrap-around only ever reads the zero
            # halo columns, because Wpa >= W + 1.
            for kh in range(3):
                cat_ref[:, kh * Cp:(kh + 1) * Cp] = src_rows(kh)
            lhs = cat_ref[...]                                     # (N, 3Cp)
            parts = [jnp.dot(lhs, w_ref[kw],
                             preferred_element_type=jnp.float32)   # (N, Cp)
                     for kw in range(3)]
            return (pltpu.roll(parts[0], shift=1, axis=0)
                    + parts[1]
                    + pltpu.roll(parts[2], shift=N - 1, axis=0))

        # ---- conv1 (3x3, stride 1, pad 1) + BN1 + ReLU ----
        acc1 = conv3x3(lambda kh: xp_ref[0, kh:kh + H, :, :].reshape(N, Cp),
                       w1_ref)
        y = jnp.maximum(acc1 * s1_ref[...] + b1_ref[...], 0.0)

        # zero-halo intermediate: halo rows, aligned interior store, then a
        # narrow store that zeroes only the right column halo.
        zero_row = jnp.zeros((1, Wpa, Cp), mid_ref.dtype)
        mid_ref[0:1, :, :] = zero_row
        mid_ref[Hp - 1:Hp, :, :] = zero_row
        mid_ref[1:1 + H, :, :] = y.reshape(H, Wpa, Cp).astype(mid_ref.dtype)
        mid_ref[1:1 + H, W:Wpa, :] = jnp.zeros((H, Wpa - W, Cp), mid_ref.dtype)

        # ---- conv2 (3x3, stride 1, pad 1) + BN2 + residual + ReLU ----
        acc2 = conv3x3(lambda kh: mid_ref[kh:kh + H, :, :].reshape(N, Cp),
                       w2_ref)
        z = acc2 * s2_ref[...] + b2_ref[...]
        identity = xp_ref[0, 1:1 + H, :, :].reshape(N, Cp).astype(jnp.float32)
        out = jnp.maximum(z + identity, 0.0)
        o_ref[...] = out.reshape(1, H, Wpa, Cp).astype(o_ref.dtype)

    # --------------------------------------------------------------- operands
    # NCHW -> NHWC (channels on lanes), bf16 activations, zero halo:
    # 1 row top/bottom, (Wpa - W) columns on the right, channel padding.
    x_nhwc = jnp.transpose(x_nchw, (0, 2, 3, 1)).astype(jnp.bfloat16)
    xp = jnp.pad(x_nhwc, ((0, 0), (1, 1), (0, Wpa - W), (0, Cp - C)))

    # fold BatchNorm (running stats) into per-channel scale/bias, pad channels
    def fold_bn(g, b, m, v):
        s = g / jnp.sqrt(v + eps)
        return s, b - m * s

    def padc(a):
        return jnp.pad(a.astype(jnp.float32), (0, Cp - Cout)).reshape(1, Cp)

    s1, b1 = fold_bn(g1, be1, m1, v1)
    s2, b2 = fold_bn(g2, be2, m2, v2)
    s1p, b1p, s2p, b2p = padc(s1), padc(b1), padc(s2), padc(b2)

    # PyTorch conv weight (Cout, Cin, 3, 3) -> (3 kw, 3*Cp [kh-stacked Cin], Cp)
    def prep_w(w, cin):
        wt = jnp.transpose(w, (3, 2, 1, 0))                # (kw, kh, Cin, Cout)
        wt = jnp.pad(wt, ((0, 0), (0, 0), (0, Cp - cin), (0, Cp - Cout)))
        return wt.reshape(3, 3 * Cp, Cp).astype(jnp.bfloat16)

    w1r = prep_w(w1, C)
    w2r = prep_w(w2, Cout)

    # explicit VMEM budget (double-buffered in/out, scratches, f32 temp slack)
    vmem_est = (2 * Hp * Wpa * Cp * 2          # input block x2 buffers (bf16)
                + 2 * H * Wpa * Cp * 2         # output block x2 buffers (bf16)
                + 2 * 2 * 3 * 3 * Cp * Cp * 2  # two weight tensors x2 buffers
                + N * 3 * Cp * 2               # cat scratch (bf16)
                + Hp * Wpa * Cp * 2            # mid scratch (bf16)
                + 8 * N * Cp * 4)              # f32 temporaries headroom
    vmem_limit = int(min(max(int(vmem_est * 1.25), 32 << 20), 112 << 20))

    out_nhwc = pl.pallas_call(
        kernel,
        out_shape=jax.ShapeDtypeStruct((B, H, Wpa, Cp), jnp.bfloat16),
        grid_spec=pltpu.PrefetchScalarGridSpec(
            num_scalar_prefetch=0,
            grid=(B,),
            in_specs=[
                pl.BlockSpec((1, Hp, Wpa, Cp), lambda b: (b, 0, 0, 0)),
                pl.BlockSpec((3, 3 * Cp, Cp), lambda b: (0, 0, 0)),
                pl.BlockSpec((1, Cp), lambda b: (0, 0)),
                pl.BlockSpec((1, Cp), lambda b: (0, 0)),
                pl.BlockSpec((3, 3 * Cp, Cp), lambda b: (0, 0, 0)),
                pl.BlockSpec((1, Cp), lambda b: (0, 0)),
                pl.BlockSpec((1, Cp), lambda b: (0, 0)),
            ],
            out_specs=pl.BlockSpec((1, H, Wpa, Cp), lambda b: (b, 0, 0, 0)),
            scratch_shapes=[
                pltpu.VMEM((N, 3 * Cp), jnp.bfloat16),     # K-fused LHS
                pltpu.VMEM((Hp, Wpa, Cp), jnp.bfloat16),   # zero-halo mid
            ],
        ),
        compiler_params=pltpu.CompilerParams(
            dimension_semantics=("parallel",),
            vmem_limit_bytes=vmem_limit),
    )(xp, w1r, s1p, b1p, w2r, s2p, b2p)

    # crop padded width / channels, NHWC -> NCHW, f32 (module-facing layout)
    return jnp.transpose(out_nhwc[:, :, :W, :Cout],
                         (0, 3, 1, 2)).astype(jnp.float32)


def _reference_forward(x, w1, s1, b1, w2, s2, b2):
    """Pure-JAX NCHW reference (mirrors the kernel's bf16 intermediate)."""
    dn = ('NCHW', 'OIHW', 'NCHW')
    hi = jax.lax.Precision.HIGHEST
    y = jax.lax.conv_general_dilated(x, w1, (1, 1), 'SAME',
                                     dimension_numbers=dn, precision=hi)
    y = y * s1[None, :, None, None] + b1[None, :, None, None]
    y = jnp.maximum(y, 0.0)
    y = y.astype(jnp.bfloat16).astype(jnp.float32)
    z = jax.lax.conv_general_dilated(y, w2, (1, 1), 'SAME',
                                     dimension_numbers=dn, precision=hi)
    z = z * s2[None, :, None, None] + b2[None, :, None, None]
    return jnp.maximum(z + x, 0.0)


if __name__ == "__main__":
    key = jax.random.PRNGKey(0)
    ks = jax.random.split(key, 12)

    B, C, H, W = 2, 4, 16, 16      # inplanes = planes = 4, stride = 1
    Cout = C

    x = jax.random.normal(ks[0], (B, C, H, W), jnp.float32)

    # conv weights (PyTorch layout Cout, Cin, kh, kw), deterministic init
    w1 = jax.random.normal(ks[1], (Cout, C, 3, 3), jnp.float32) * 0.2
    w2 = jax.random.normal(ks[2], (Cout, Cout, 3, 3), jnp.float32) * 0.2

    # BatchNorm parameters / running stats
    g1 = 1.0 + 0.1 * jax.random.normal(ks[3], (Cout,), jnp.float32)
    be1 = 0.1 * jax.random.normal(ks[4], (Cout,), jnp.float32)
    m1 = 0.1 * jax.random.normal(ks[5], (Cout,), jnp.float32)
    v1 = jnp.abs(jax.random.normal(ks[6], (Cout,), jnp.float32)) + 0.5
    g2 = 1.0 + 0.1 * jax.random.normal(ks[7], (Cout,), jnp.float32)
    be2 = 0.1 * jax.random.normal(ks[8], (Cout,), jnp.float32)
    m2 = 0.1 * jax.random.normal(ks[9], (Cout,), jnp.float32)
    v2 = jnp.abs(jax.random.normal(ks[10], (Cout,), jnp.float32)) + 0.5

    out = basic_block_forward(x, w1, g1, be1, m1, v1, w2, g2, be2, m2, v2)
    out = jax.block_until_ready(out)

    # correctness check vs pure-JAX reference (same bf16 rounding of inputs)
    eps = 1e-5
    s1 = g1 / jnp.sqrt(v1 + eps)
    b1 = be1 - m1 * s1
    s2 = g2 / jnp.sqrt(v2 + eps)
    b2 = be2 - m2 * s2
    bf = lambda a: a.astype(jnp.bfloat16).astype(jnp.float32)
    ref = _reference_forward(bf(x), bf(w1), s1, b1, bf(w2), s2, b2)

    assert out.shape == (B, C, H, W)
    err = float(jnp.max(jnp.abs(out - ref)))
    assert jnp.allclose(out, ref, atol=1e-2, rtol=1e-2), err

    print("KERNEL_OK")
</pallas_src>

<mosaic_0001>
module attributes {stable_mosaic.version = 11 : i64} {
  func.func @kernel(%arg0: i32, %arg1: memref<1x18x32x128xbf16, #tpu.memory_space<vmem>>, %arg2: memref<3x384x128xbf16, #tpu.memory_space<vmem>>, %arg3: memref<1x128xf32, #tpu.memory_space<vmem>>, %arg4: memref<1x128xf32, #tpu.memory_space<vmem>>, %arg5: memref<3x384x128xbf16, #tpu.memory_space<vmem>>, %arg6: memref<1x128xf32, #tpu.memory_space<vmem>>, %arg7: memref<1x128xf32, #tpu.memory_space<vmem>>, %arg8: memref<1x16x32x128xbf16, #tpu.memory_space<vmem>>, %arg9: memref<512x384xbf16, #tpu.memory_space<vmem>>, %arg10: memref<18x32x128xbf16, #tpu.memory_space<vmem>>) attributes {dimension_semantics = [#tpu.dimension_semantics<parallel>], iteration_bounds = array<i64: 2>, scalar_prefetch = 0 : i64, scratch_operands = 2 : i64, tpu.core_type = #tpu.core_type<tc>, window_params = [{transform_indices = @transform_0, window_bounds = array<i64: 1, 18, 32, 128>}, {pipeline_mode = #tpu.pipeline_mode<synchronous>, transform_indices = @transform_1, window_bounds = array<i64: 3, 384, 128>}, {pipeline_mode = #tpu.pipeline_mode<synchronous>, transform_indices = @transform_2, window_bounds = array<i64: 1, 128>}, {pipeline_mode = #tpu.pipeline_mode<synchronous>, transform_indices = @transform_3, window_bounds = array<i64: 1, 128>}, {pipeline_mode = #tpu.pipeline_mode<synchronous>, transform_indices = @transform_4, window_bounds = array<i64: 3, 384, 128>}, {pipeline_mode = #tpu.pipeline_mode<synchronous>, transform_indices = @transform_5, window_bounds = array<i64: 1, 128>}, {pipeline_mode = #tpu.pipeline_mode<synchronous>, transform_indices = @transform_6, window_bounds = array<i64: 1, 128>}, {transform_indices = @transform_7, window_bounds = array<i64: 1, 16, 32, 128>}]} {
    %c0 = arith.constant 0 : index
    %c0_0 = arith.constant 0 : index
    %c0_1 = arith.constant 0 : index
    %c0_2 = arith.constant 0 : index
    %0 = vector.load %arg1[%c0, %c0_0, %c0_1, %c0_2] : memref<1x18x32x128xbf16, #tpu.memory_space<vmem>>, vector<1x16x32x128xbf16>
    %1 = vector.shape_cast %0 : vector<1x16x32x128xbf16> to vector<16x32x128xbf16>
    %2 = vector.shape_cast %1 : vector<16x32x128xbf16> to vector<512x128xbf16>
    %c0_3 = arith.constant 0 : index
    %c0_4 = arith.constant 0 : index
    %3 = vector.load %arg9[%c0_3, %c0_4] : memref<512x384xbf16, #tpu.memory_space<vmem>>, vector<512x128xbf16>
    tpu.vector_store %arg9[%c0_3, %c0_4], %2 {strides = array<i32>} : memref<512x384xbf16, #tpu.memory_space<vmem>>, vector<512x128xbf16>,
    %c0_5 = arith.constant 0 : index
    %c1 = arith.constant 1 : index
    %c0_6 = arith.constant 0 : index
    %c0_7 = arith.constant 0 : index
    %4 = vector.load %arg1[%c0_5, %c1, %c0_6, %c0_7] : memref<1x18x32x128xbf16, #tpu.memory_space<vmem>>, vector<1x16x32x128xbf16>
    %5 = vector.shape_cast %4 : vector<1x16x32x128xbf16> to vector<16x32x128xbf16>
    %6 = vector.shape_cast %5 : vector<16x32x128xbf16> to vector<512x128xbf16>
    %c0_8 = arith.constant 0 : index
    %c128 = arith.constant 128 : index
    %7 = vector.load %arg9[%c0_8, %c128] : memref<512x384xbf16, #tpu.memory_space<vmem>>, vector<512x128xbf16>
    tpu.vector_store %arg9[%c0_8, %c128], %6 {strides = array<i32>} : memref<512x384xbf16, #tpu.memory_space<vmem>>, vector<512x128xbf16>,
    %c0_9 = arith.constant 0 : index
    %c2 = arith.constant 2 : index
    %c0_10 = arith.constant 0 : index
    %c0_11 = arith.constant 0 : index
    %8 = vector.load %arg1[%c0_9, %c2, %c0_10, %c0_11] : memref<1x18x32x128xbf16, #tpu.memory_space<vmem>>, vector<1x16x32x128xbf16>
    %9 = vector.shape_cast %8 : vector<1x16x32x128xbf16> to vector<16x32x128xbf16>
    %10 = vector.shape_cast %9 : vector<16x32x128xbf16> to vector<512x128xbf16>
    %c0_12 = arith.constant 0 : index
    %c256 = arith.constant 256 : index
    %11 = vector.load %arg9[%c0_12, %c256] : memref<512x384xbf16, #tpu.memory_space<vmem>>, vector<512x128xbf16>
    tpu.vector_store %arg9[%c0_12, %c256], %10 {strides = array<i32>} : memref<512x384xbf16, #tpu.memory_space<vmem>>, vector<512x128xbf16>,
    %c0_13 = arith.constant 0 : index
    %c0_14 = arith.constant 0 : index
    %12 = vector.load %arg9[%c0_13, %c0_14] : memref<512x384xbf16, #tpu.memory_space<vmem>>, vector<512x384xbf16>
    %c0_15 = arith.constant 0 : index
    %c0_16 = arith.constant 0 : index
    %c0_17 = arith.constant 0 : index
    %13 = vector.load %arg2[%c0_15, %c0_16, %c0_17] : memref<3x384x128xbf16, #tpu.memory_space<vmem>>, vector<1x384x128xbf16>
    %14 = vector.shape_cast %13 : vector<1x384x128xbf16> to vector<384x128xbf16>
    %cst = arith.constant dense<0.000000e+00> : vector<512x128xf32>
    %15 = tpu.matmul %12, %14, %cst {dimension_numbers = #tpu.dot_dimension_numbers<[1], [0], [0], [1], [0, 0, 1, 1], [], []>} : vector<512x384xbf16>, vector<384x128xbf16>, vector<512x128xf32> -> vector<512x128xf32>
    %c1_18 = arith.constant 1 : index
    %c0_19 = arith.constant 0 : index
    %c0_20 = arith.constant 0 : index
    %16 = vector.load %arg2[%c1_18, %c0_19, %c0_20] : memref<3x384x128xbf16, #tpu.memory_space<vmem>>, vector<1x384x128xbf16>
    %17 = vector.shape_cast %16 : vector<1x384x128xbf16> to vector<384x128xbf16>
    %cst_21 = arith.constant dense<0.000000e+00> : vector<512x128xf32>
    %18 = tpu.matmul %12, %17, %cst_21 {dimension_numbers = #tpu.dot_dimension_numbers<[1], [0], [0], [1], [0, 0, 1, 1], [], []>} : vector<512x384xbf16>, vector<384x128xbf16>, vector<512x128xf32> -> vector<512x128xf32>
    %c2_22 = arith.constant 2 : index
    %c0_23 = arith.constant 0 : index
    %c0_24 = arith.constant 0 : index
    %19 = vector.load %arg2[%c2_22, %c0_23, %c0_24] : memref<3x384x128xbf16, #tpu.memory_space<vmem>>, vector<1x384x128xbf16>
    %20 = vector.shape_cast %19 : vector<1x384x128xbf16> to vector<384x128xbf16>
    %cst_25 = arith.constant dense<0.000000e+00> : vector<512x128xf32>
    %21 = tpu.matmul %12, %20, %cst_25 {dimension_numbers = #tpu.dot_dimension_numbers<[1], [0], [0], [1], [0, 0, 1, 1], [], []>} : vector<512x384xbf16>, vector<384x128xbf16>, vector<512x128xf32> -> vector<512x128xf32>
    %c1_i32 = arith.constant 1 : i32
    %22 = tpu.dynamic_rotate %15 by %c1_i32 dim 0 : vector<512x128xf32>, i32 -> vector<512x128xf32>
    %23 = arith.addf %22, %18 : vector<512x128xf32>
    %c511_i32 = arith.constant 511 : i32
    %24 = tpu.dynamic_rotate %21 by %c511_i32 dim 0 : vector<512x128xf32>, i32 -> vector<512x128xf32>
    %25 = arith.addf %23, %24 : vector<512x128xf32>
    %c0_26 = arith.constant 0 : index
    %c0_27 = arith.constant 0 : index
    %26 = vector.load %arg3[%c0_26, %c0_27] : memref<1x128xf32, #tpu.memory_space<vmem>>, vector<1x128xf32>
    %27 = vector.broadcast %26 : vector<1x128xf32> to vector<512x128xf32>
    %28 = arith.mulf %25, %27 : vector<512x128xf32>
    %c0_28 = arith.constant 0 : index
    %c0_29 = arith.constant 0 : index
    %29 = vector.load %arg4[%c0_28, %c0_29] : memref<1x128xf32, #tpu.memory_space<vmem>>, vector<1x128xf32>
    %30 = vector.broadcast %29 : vector<1x128xf32> to vector<512x128xf32>
    %31 = arith.addf %28, %30 : vector<512x128xf32>
    %cst_30 = arith.constant 0.000000e+00 : f32
    %32 = vector.broadcast %cst_30 : f32 to vector<512x128xf32>
    %33 = arith.maximumf %31, %32 : vector<512x128xf32>
    %cst_31 = arith.constant 0.000000e+00 : bf16
    %34 = vector.broadcast %cst_31 : bf16 to vector<1x32x128xbf16>
    %c0_32 = arith.constant 0 : index
    %c0_33 = arith.constant 0 : index
    %c0_34 = arith.constant 0 : index
    %35 = vector.load %arg10[%c0_32, %c0_33, %c0_34] : memref<18x32x128xbf16, #tpu.memory_space<vmem>>, vector<1x32x128xbf16>
    tpu.vector_store %arg10[%c0_32, %c0_33, %c0_34], %34 {strides = array<i32>} : memref<18x32x128xbf16, #tpu.memory_space<vmem>>, vector<1x32x128xbf16>,
    %c17 = arith.constant 17 : index
    %c0_35 = arith.constant 0 : index
    %c0_36 = arith.constant 0 : index
    %36 = vector.load %arg10[%c17, %c0_35, %c0_36] : memref<18x32x128xbf16, #tpu.memory_space<vmem>>, vector<1x32x128xbf16>
    tpu.vector_store %arg10[%c17, %c0_35, %c0_36], %34 {strides = array<i32>} : memref<18x32x128xbf16, #tpu.memory_space<vmem>>, vector<1x32x128xbf16>,
    %37 = vector.shape_cast %33 : vector<512x128xf32> to vector<16x32x128xf32>
    %38 = arith.truncf %37 : vector<16x32x128xf32> to vector<16x32x128xbf16>
    %c1_37 = arith.constant 1 : index
    %c0_38 = arith.constant 0 : index
    %c0_39 = arith.constant 0 : index
    %39 = vector.load %arg10[%c1_37, %c0_38, %c0_39] : memref<18x32x128xbf16, #tpu.memory_space<vmem>>, vector<16x32x128xbf16>
    tpu.vector_store %arg10[%c1_37, %c0_38, %c0_39], %38 {strides = array<i32>} : memref<18x32x128xbf16, #tpu.memory_space<vmem>>, vector<16x32x128xbf16>,
    %cst_40 = arith.constant 0.000000e+00 : bf16
    %40 = vector.broadcast %cst_40 : bf16 to vector<16x16x128xbf16>
    %c1_41 = arith.constant 1 : index
    %c16 = arith.constant 16 : index
    %c0_42 = arith.constant 0 : index
    %41 = vector.load %arg10[%c1_41, %c16, %c0_42] : memref<18x32x128xbf16, #tpu.memory_space<vmem>>, vector<16x16x128xbf16>
    tpu.vector_store %arg10[%c1_41, %c16, %c0_42], %40 {strides = array<i32>} : memref<18x32x128xbf16, #tpu.memory_space<vmem>>, vector<16x16x128xbf16>,
    %c0_43 = arith.constant 0 : index
    %c0_44 = arith.constant 0 : index
    %c0_45 = arith.constant 0 : index
    %42 = vector.load %arg10[%c0_43, %c0_44, %c0_45] : memref<18x32x128xbf16, #tpu.memory_space<vmem>>, vector<16x32x128xbf16>
    %43 = vector.shape_cast %42 : vector<16x32x128xbf16> to vector<512x128xbf16>
    %c0_46 = arith.constant 0 : index
    %c0_47 = arith.constant 0 : index
    %44 = vector.load %arg9[%c0_46, %c0_47] : memref<512x384xbf16, #tpu.memory_space<vmem>>, vector<512x128xbf16>
    tpu.vector_store %arg9[%c0_46, %c0_47], %43 {strides = array<i32>} : memref<512x384xbf16, #tpu.memory_space<vmem>>, vector<512x128xbf16>,
    %c1_48 = arith.constant 1 : index
    %c0_49 = arith.constant 0 : index
    %c0_50 = arith.constant 0 : index
    %45 = vector.load %arg10[%c1_48, %c0_49, %c0_50] : memref<18x32x128xbf16, #tpu.memory_space<vmem>>, vector<16x32x128xbf16>
    %46 = vector.shape_cast %45 : vector<16x32x128xbf16> to vector<512x128xbf16>
    %c0_51 = arith.constant 0 : index
    %c128_52 = arith.constant 128 : index
    %47 = vector.load %arg9[%c0_51, %c128_52] : memref<512x384xbf16, #tpu.memory_space<vmem>>, vector<512x128xbf16>
    tpu.vector_store %arg9[%c0_51, %c128_52], %46 {strides = array<i32>} : memref<512x384xbf16, #tpu.memory_space<vmem>>, vector<512x128xbf16>,
    %c2_53 = arith.constant 2 : index
    %c0_54 = arith.constant 0 : index
    %c0_55 = arith.constant 0 : index
    %48 = vector.load %arg10[%c2_53, %c0_54, %c0_55] : memref<18x32x128xbf16, #tpu.memory_space<vmem>>, vector<16x32x128xbf16>
    %49 = vector.shape_cast %48 : vector<16x32x128xbf16> to vector<512x128xbf16>
    %c0_56 = arith.constant 0 : index
    %c256_57 = arith.constant 256 : index
    %50 = vector.load %arg9[%c0_56, %c256_57] : memref<512x384xbf16, #tpu.memory_space<vmem>>, vector<512x128xbf16>
    tpu.vector_store %arg9[%c0_56, %c256_57], %49 {strides = array<i32>} : memref<512x384xbf16, #tpu.memory_space<vmem>>, vector<512x128xbf16>,
    %c0_58 = arith.constant 0 : index
    %c0_59 = arith.constant 0 : index
    %51 = vector.load %arg9[%c0_58, %c0_59] : memref<512x384xbf16, #tpu.memory_space<vmem>>, vector<512x384xbf16>
    %c0_60 = arith.constant 0 : index
    %c0_61 = arith.constant 0 : index
    %c0_62 = arith.constant 0 : index
    %52 = vector.load %arg5[%c0_60, %c0_61, %c0_62] : memref<3x384x128xbf16, #tpu.memory_space<vmem>>, vector<1x384x128xbf16>
    %53 = vector.shape_cast %52 : vector<1x384x128xbf16> to vector<384x128xbf16>
    %cst_63 = arith.constant dense<0.000000e+00> : vector<512x128xf32>
    %54 = tpu.matmul %51, %53, %cst_63 {dimension_numbers = #tpu.dot_dimension_numbers<[1], [0], [0], [1], [0, 0, 1, 1], [], []>} : vector<512x384xbf16>, vector<384x128xbf16>, vector<512x128xf32> -> vector<512x128xf32>
    %c1_64 = arith.constant 1 : index
    %c0_65 = arith.constant 0 : index
    %c0_66 = arith.constant 0 : index
    %55 = vector.load %arg5[%c1_64, %c0_65, %c0_66] : memref<3x384x128xbf16, #tpu.memory_space<vmem>>, vector<1x384x128xbf16>
    %56 = vector.shape_cast %55 : vector<1x384x128xbf16> to vector<384x128xbf16>
    %cst_67 = arith.constant dense<0.000000e+00> : vector<512x128xf32>
    %57 = tpu.matmul %51, %56, %cst_67 {dimension_numbers = #tpu.dot_dimension_numbers<[1], [0], [0], [1], [0, 0, 1, 1], [], []>} : vector<512x384xbf16>, vector<384x128xbf16>, vector<512x128xf32> -> vector<512x128xf32>
    %c2_68 = arith.constant 2 : index
    %c0_69 = arith.constant 0 : index
    %c0_70 = arith.constant 0 : index
    %58 = vector.load %arg5[%c2_68, %c0_69, %c0_70] : memref<3x384x128xbf16, #tpu.memory_space<vmem>>, vector<1x384x128xbf16>
    %59 = vector.shape_cast %58 : vector<1x384x128xbf16> to vector<384x128xbf16>
    %cst_71 = arith.constant dense<0.000000e+00> : vector<512x128xf32>
    %60 = tpu.matmul %51, %59, %cst_71 {dimension_numbers = #tpu.dot_dimension_numbers<[1], [0], [0], [1], [0, 0, 1, 1], [], []>} : vector<512x384xbf16>, vector<384x128xbf16>, vector<512x128xf32> -> vector<512x128xf32>
    %c1_i32_72 = arith.constant 1 : i32
    %61 = tpu.dynamic_rotate %54 by %c1_i32_72 dim 0 : vector<512x128xf32>, i32 -> vector<512x128xf32>
    %62 = arith.addf %61, %57 : vector<512x128xf32>
    %c511_i32_73 = arith.constant 511 : i32
    %63 = tpu.dynamic_rotate %60 by %c511_i32_73 dim 0 : vector<512x128xf32>, i32 -> vector<512x128xf32>
    %64 = arith.addf %62, %63 : vector<512x128xf32>
    %c0_74 = arith.constant 0 : index
    %c0_75 = arith.constant 0 : index
    %65 = vector.load %arg6[%c0_74, %c0_75] : memref<1x128xf32, #tpu.memory_space<vmem>>, vector<1x128xf32>
    %66 = vector.broadcast %65 : vector<1x128xf32> to vector<512x128xf32>
    %67 = arith.mulf %64, %66 : vector<512x128xf32>
    %c0_76 = arith.constant 0 : index
    %c0_77 = arith.constant 0 : index
    %68 = vector.load %arg7[%c0_76, %c0_77] : memref<1x128xf32, #tpu.memory_space<vmem>>, vector<1x128xf32>
    %69 = vector.broadcast %68 : vector<1x128xf32> to vector<512x128xf32>
    %70 = arith.addf %67, %69 : vector<512x128xf32>
    %c0_78 = arith.constant 0 : index
    %c1_79 = arith.constant 1 : index
    %c0_80 = arith.constant 0 : index
    %c0_81 = arith.constant 0 : index
    %71 = vector.load %arg1[%c0_78, %c1_79, %c0_80, %c0_81] : memref<1x18x32x128xbf16, #tpu.memory_space<vmem>>, vector<1x16x32x128xbf16>
    %72 = vector.shape_cast %71 : vector<1x16x32x128xbf16> to vector<16x32x128xbf16>
    %73 = vector.shape_cast %72 : vector<16x32x128xbf16> to vector<512x128xbf16>
    %74 = arith.extf %73 : vector<512x128xbf16> to vector<512x128xf32>
    %75 = arith.addf %70, %74 : vector<512x128xf32>
    %cst_82 = arith.constant 0.000000e+00 : f32
    %76 = vector.broadcast %cst_82 : f32 to vector<512x128xf32>
    %77 = arith.maximumf %75, %76 : vector<512x128xf32>
    %78 = vector.shape_cast %77 : vector<512x128xf32> to vector<1x16x32x128xf32>
    %79 = arith.truncf %78 : vector<1x16x32x128xf32> to vector<1x16x32x128xbf16>
    %c0_83 = arith.constant 0 : index
    %c0_84 = arith.constant 0 : index
    %c0_85 = arith.constant 0 : index
    %c0_86 = arith.constant 0 : index
    %80 = vector.load %arg8[%c0_83, %c0_84, %c0_85, %c0_86] : memref<1x16x32x128xbf16, #tpu.memory_space<vmem>>, vector<1x16x32x128xbf16>
    tpu.vector_store %arg8[%c0_83, %c0_84, %c0_85, %c0_86], %79 {strides = array<i32>} : memref<1x16x32x128xbf16, #tpu.memory_space<vmem>>, vector<1x16x32x128xbf16>,
    return
  }
  func.func @transform_0(%arg0: i32) -> (i32, i32, i32, i32) {
    %c0_i32 = arith.constant 0 : i32
    %c0_i32_0 = arith.constant 0 : i32
    %c0_i32_1 = arith.constant 0 : i32
    %c0_i32_2 = arith.constant 0 : i32
    return %arg0, %c0_i32, %c0_i32_0, %c0_i32_1 : i32, i32, i32, i32
  }
  func.func @transform_1(%arg0: i32) -> (i32, i32, i32) {
    %c0_i32 = arith.constant 0 : i32
    %c0_i32_0 = arith.constant 0 : i32
    %c0_i32_1 = arith.constant 0 : i32
    %c0_i32_2 = arith.constant 0 : i32
    return %c0_i32, %c0_i32_0, %c0_i32_1 : i32, i32, i32
  }
  func.func @transform_2(%arg0: i32) -> (i32, i32) {
    %c0_i32 = arith.constant 0 : i32
    %c0_i32_0 = arith.constant 0 : i32
    %c0_i32_1 = arith.constant 0 : i32
    return %c0_i32, %c0_i32_0 : i32, i32
  }
  func.func @transform_3(%arg0: i32) -> (i32, i32) {
    %c0_i32 = arith.constant 0 : i32
    %c0_i32_0 = arith.constant 0 : i32
    %c0_i32_1 = arith.constant 0 : i32
    return %c0_i32, %c0_i32_0 : i32, i32
  }
  func.func @transform_4(%arg0: i32) -> (i32, i32, i32) {
    %c0_i32 = arith.constant 0 : i32
    %c0_i32_0 = arith.constant 0 : i32
    %c0_i32_1 = arith.constant 0 : i32
    %c0_i32_2 = arith.constant 0 : i32
    return %c0_i32, %c0_i32_0, %c0_i32_1 : i32, i32, i32
  }
  func.func @transform_5(%arg0: i32) -> (i32, i32) {
    %c0_i32 = arith.constant 0 : i32
    %c0_i32_0 = arith.constant 0 : i32
    %c0_i32_1 = arith.constant 0 : i32
    return %c0_i32, %c0_i32_0 : i32, i32
  }
  func.func @transform_6(%arg0: i32) -> (i32, i32) {
    %c0_i32 = arith.constant 0 : i32
    %c0_i32_0 = arith.constant 0 : i32
    %c0_i32_1 = arith.constant 0 : i32
    return %c0_i32, %c0_i32_0 : i32, i32
  }
  func.func @transform_7(%arg0: i32) -> (i32, i32, i32, i32) {
    %c0_i32 = arith.constant 0 : i32
    %c0_i32_0 = arith.constant 0 : i32
    %c0_i32_1 = arith.constant 0 : i32
    %c0_i32_2 = arith.constant 0 : i32
    return %arg0, %c0_i32, %c0_i32_0, %c0_i32_1 : i32, i32, i32, i32
  }
}

</mosaic_0001>

<llo_original>
// kernel: tpu_custom_call.1
$region0: #{tpu_custom_call.1}
  #allocation0 [shape = 'u32[]', space=smem, size = 0x4, offset = 0x4, fixed_abs, tag = 'smem constant byte address 0x4 - core index']
  #allocation1 [shape = 'u32[144,128]{1,0:T(1,128)}', space=vmem, size = 0x12000, scoped, tag = 'internal scratch']
  #allocation2 [shape = 'bf16[512,384]{1,0:T(16,128)(2,1)}', space=vmem, size = 0x60000, scoped, tag = 'scratch operand']
  #allocation3 [shape = 'bf16[18,32,128]{2,1,0:T(16,128)(2,1)}', space=vmem, size = 0x24000, scoped, tag = 'scratch operand']
  %s0 = inlined_call_operand.hbm [shape: bf16[2,18,32,128], index: 0, kind: input, shape index: {}]
  %s1 = inlined_call_operand.hbm [shape: bf16[3,384,128], index: 1, kind: input, shape index: {}]
  %s2 = inlined_call_operand.vmem [shape: f32[1,128], index: 2, kind: input, shape index: {}]
  %s3 = inlined_call_operand.vmem [shape: f32[1,128], index: 3, kind: input, shape index: {}]
  %s4 = inlined_call_operand.hbm [shape: bf16[3,384,128], index: 4, kind: input, shape index: {}]
  %s5 = inlined_call_operand.vmem [shape: f32[1,128], index: 5, kind: input, shape index: {}]
  %s6 = inlined_call_operand.vmem [shape: f32[1,128], index: 6, kind: input, shape index: {}]
  %s7 = inlined_call_operand.hbm [shape: bf16[2,16,32,128], index: 7, kind: output, shape index: {}]
  %s8 = sld [smem:[#allocation0]]
  $region73: #{tpu_custom_call.1} parent=0
    _
  %s10 = ssub.s32 1, %s8
  %s11 = scalar_select 0, %s10, %s8
  $region1: #{tpu_custom_call.1} parent=0
    #allocation4 [shape = 'u8[294912]{0}', space=vmem, size = 0x48000, scoped, tag = 'input window, operand 0']
    #allocation5 [shape = 's32[2]{0}', space=sflag, size = 0x8, scoped, tag = 'scoped memory for tpu_custom_call.1']
    #allocation6 [shape = 's32[2]{0}', space=sflag, size = 0x8, scoped, tag = 'scoped memory for tpu_custom_call.1']
    #allocation7 [shape = 'u8[294912]{0}', space=vmem, size = 0x48000, scoped, tag = 'input window, operand 1, single buffered']
    #allocation8 [shape = 's32[1]{0}', space=sflag, size = 0x4, scoped, tag = 'scoped memory for tpu_custom_call.1']
    #allocation9 [shape = 'u8[294912]{0}', space=vmem, size = 0x48000, scoped, tag = 'input window, operand 4, single buffered']
    #allocation10 [shape = 'u8[262144]{0}', space=vmem, size = 0x40000, scoped, tag = 'output window, operand 0']
    %12 = vsyncpa [#allocation5], 0
    %s13 = scalar_lea.sflag [#allocation5], 1
    %14 = vsyncpa %s13, 0
    %15 = vsyncpa [#allocation8], 0
    %16 = vsyncpa [#allocation6], 0
    %s17 = scalar_lea.sflag [#allocation6], 1
    %18 = vsyncpa %s17, 0
    loop: start=0, step=1, limit=4
    $region2: #{tpu_custom_call.1} parent=1 // loop_pre_header
      _
    $region3: #{tpu_custom_call.1} parent=1 // loop_header
      %s20 = sphi 0, %s24
      %p21 = scmp.ge.s32.totalorder %s20, 4
      %s30 = sphi 0, %s32
      %s33 = sphi 0, %s30
      %s34 = sphi 0, %s33
      %s50 = sphi 0, %s34
      %s54 = sphi 0, %s54
      %s56 = sphi 0, %s54
      %s57 = sphi 0, %s56
      %s71 = sphi 0, %s57
      %s75 = sphi 0, %s75
      %s77 = sphi 0, %s75
      %s78 = sphi 0, %s77
      %s92 = sphi 0, %s78
      %s96 = sphi 0, %s96
      %s98 = sphi 0, %s96
      %s99 = sphi 0, %s98
      %s113 = sphi 0, %s99
      %s117 = sphi 0, %s117
      %s119 = sphi 0, %s117
      %s120 = sphi 0, %s119
      %s134 = sphi 0, %s120
      %s138 = sphi 0, %s138
      %s140 = sphi 0, %s138
      %s141 = sphi 0, %s140
      %s155 = sphi 0, %s141
      %s159 = sphi 0, %s159
      %s161 = sphi 0, %s159
      %s162 = sphi 0, %s161
      %s176 = sphi 0, %s162
      %s182 = sphi 0, %s184
      %s185 = sphi 0, %s182
      %s186 = sphi 0, %s185
      %s202 = sphi 0, %s186
    $region4: #{tpu_custom_call.1} parent=1 // loop_header_branch
      %23 = sbr.rel (%p21) target = $region8
    $region5: #{tpu_custom_call.1} parent=1 // loop_body
      %s25 = ssub.s32 %s20, 1
      %s26 = ssub.s32 %s20, 2
      %s27 = sadd.s32 %s20, 1
      %s28 = ssub.s32 %s20, %s27
      %p29 = scmp.eq.s32.totalorder %s28, 0
      %s31 = sadd.s32 %s30, 1
      %s32 = scalar_select %p29, %s30, %s31
      %p35 = pneg %p29
      %p36 = scmp.eq.s32.totalorder %s20, 1
      %p37 = por %p35, %p36
      %p38 = scmp.ne.s32.totalorder %s30, %s33
      %p39 = scmp.eq.s32.totalorder %s20, 0
      %p40 = por %p38, %p39
      %p41 = scmp.ne.s32.totalorder %s30, %s33
      %p42 = scmp.eq.s32.totalorder %s25, 1
      %p43 = por %p41, %p42
      %p44 = scmp.ne.s32.totalorder %s33, %s34
      %p45 = scmp.eq.s32.totalorder %s25, 0
      %p46 = por %p44, %p45
      %p47 = scmp.ne.s32.totalorder %s33, %s34
      %p48 = scmp.eq.s32.totalorder %s26, 1
      %p49 = por %p47, %p48
      %p51 = scmp.ne.s32.totalorder %s34, %s50
      %p52 = scmp.eq.s32.totalorder %s26, 0
      %p53 = por %p51, %p52
      %s55 = sadd.s32 %s54, 1
      %p58 = scmp.eq.s32.totalorder %s20, 1
      %p59 = scmp.ne.s32.totalorder %s54, %s56
      %p60 = scmp.eq.s32.totalorder %s20, 0
      %p61 = por %p59, %p60
      %p62 = scmp.ne.s32.totalorder %s54, %s56
      %p63 = scmp.eq.s32.totalorder %s25, 1
      %p64 = por %p62, %p63
      %p65 = scmp.ne.s32.totalorder %s56, %s57
      %p66 = scmp.eq.s32.totalorder %s25, 0
      %p67 = por %p65, %p66
      %p68 = scmp.ne.s32.totalorder %s56, %s57
      %p69 = scmp.eq.s32.totalorder %s26, 1
      %p70 = por %p68, %p69
      %p72 = scmp.ne.s32.totalorder %s57, %s71
      %p73 = scmp.eq.s32.totalorder %s26, 0
      %p74 = por %p72, %p73
      %s76 = sadd.s32 %s75, 1
      %p79 = scmp.eq.s32.totalorder %s20, 1
      %p80 = scmp.ne.s32.totalorder %s75, %s77
      %p81 = scmp.eq.s32.totalorder %s20, 0
      %p82 = por %p80, %p81
      %p83 = scmp.ne.s32.totalorder %s75, %s77
      %p84 = scmp.eq.s32.totalorder %s25, 1
      %p85 = por %p83, %p84
      %p86 = scmp.ne.s32.totalorder %s77, %s78
      %p87 = scmp.eq.s32.totalorder %s25, 0
      %p88 = por %p86, %p87
      %p89 = scmp.ne.s32.totalorder %s77, %s78
      %p90 = scmp.eq.s32.totalorder %s26, 1
      %p91 = por %p89, %p90
      %p93 = scmp.ne.s32.totalorder %s78, %s92
      %p94 = scmp.eq.s32.totalorder %s26, 0
      %p95 = por %p93, %p94
      %s97 = sadd.s32 %s96, 1
      %p100 = scmp.eq.s32.totalorder %s20, 1
      %p101 = scmp.ne.s32.totalorder %s96, %s98
      %p102 = scmp.eq.s32.totalorder %s20, 0
      %p103 = por %p101, %p102
      %p104 = scmp.ne.s32.totalorder %s96, %s98
      %p105 = scmp.eq.s32.totalorder %s25, 1
      %p106 = por %p104, %p105
      %p107 = scmp.ne.s32.totalorder %s98, %s99
      %p108 = scmp.eq.s32.totalorder %s25, 0
      %p109 = por %p107, %p108
      %p110 = scmp.ne.s32.totalorder %s98, %s99
      %p111 = scmp.eq.s32.totalorder %s26, 1
      %p112 = por %p110, %p111
      %p114 = scmp.ne.s32.totalorder %s99, %s113
      %p115 = scmp.eq.s32.totalorder %s26, 0
      %p116 = por %p114, %p115
      %s118 = sadd.s32 %s117, 1
      %p121 = scmp.eq.s32.totalorder %s20, 1
      %p122 = scmp.ne.s32.totalorder %s117, %s119
      %p123 = scmp.eq.s32.totalorder %s20, 0
      %p124 = por %p122, %p123
      %p125 = scmp.ne.s32.totalorder %s117, %s119
      %p126 = scmp.eq.s32.totalorder %s25, 1
      %p127 = por %p125, %p126
      %p128 = scmp.ne.s32.totalorder %s119, %s120
      %p129 = scmp.eq.s32.totalorder %s25, 0
      %p130 = por %p128, %p129
      %p131 = scmp.ne.s32.totalorder %s119, %s120
      %p132 = scmp.eq.s32.totalorder %s26, 1
      %p133 = por %p131, %p132
      %p135 = scmp.ne.s32.totalorder %s120, %s134
      %p136 = scmp.eq.s32.totalorder %s26, 0
      %p137 = por %p135, %p136
      %s139 = sadd.s32 %s138, 1
      %p142 = scmp.eq.s32.totalorder %s20, 1
      %p143 = scmp.ne.s32.totalorder %s138, %s140
      %p144 = scmp.eq.s32.totalorder %s20, 0
      %p145 = por %p143, %p144
      %p146 = scmp.ne.s32.totalorder %s138, %s140
      %p147 = scmp.eq.s32.totalorder %s25, 1
      %p148 = por %p146, %p147
      %p149 = scmp.ne.s32.totalorder %s140, %s141
      %p150 = scmp.eq.s32.totalorder %s25, 0
      %p151 = por %p149, %p150
      %p152 = scmp.ne.s32.totalorder %s140, %s141
      %p153 = scmp.eq.s32.totalorder %s26, 1
      %p154 = por %p152, %p153
      %p156 = scmp.ne.s32.totalorder %s141, %s155
      %p157 = scmp.eq.s32.totalorder %s26, 0
      %p158 = por %p156, %p157
      %s160 = sadd.s32 %s159, 1
      %p163 = scmp.eq.s32.totalorder %s20, 1
      %p164 = scmp.ne.s32.totalorder %s159, %s161
      %p165 = scmp.eq.s32.totalorder %s20, 0
      %p166 = por %p164, %p165
      %p167 = scmp.ne.s32.totalorder %s159, %s161
      %p168 = scmp.eq.s32.totalorder %s25, 1
      %p169 = por %p167, %p168
      %p170 = scmp.ne.s32.totalorder %s161, %s162
      %p171 = scmp.eq.s32.totalorder %s25, 0
      %p172 = por %p170, %p171
      %p173 = scmp.ne.s32.totalorder %s161, %s162
      %p174 = scmp.eq.s32.totalorder %s26, 1
      %p175 = por %p173, %p174
      %p177 = scmp.ne.s32.totalorder %s162, %s176
      %p178 = scmp.eq.s32.totalorder %s26, 0
      %p179 = por %p177, %p178
      %s180 = ssub.s32 %s20, %s27
      %p181 = scmp.eq.s32.totalorder %s180, 0
      %s183 = sadd.s32 %s182, 1
      %s184 = scalar_select %p181, %s182, %s183
      %p187 = pneg %p181
      %p188 = scmp.eq.s32.totalorder %s20, 1
      %p189 = por %p187, %p188
      %p190 = scmp.ne.s32.totalorder %s182, %s185
      %p191 = scmp.eq.s32.totalorder %s20, 0
      %p192 = por %p190, %p191
      %p193 = scmp.ne.s32.totalorder %s182, %s185
      %p194 = scmp.eq.s32.totalorder %s25, 1
      %p195 = por %p193, %p194
      %p196 = scmp.ne.s32.totalorder %s185, %s186
      %p197 = scmp.eq.s32.totalorder %s25, 0
      %p198 = por %p196, %p197
      %p199 = scmp.ne.s32.totalorder %s185, %s186
      %p200 = scmp.eq.s32.totalorder %s26, 1
      %p201 = por %p199, %p200
      %p203 = scmp.ne.s32.totalorder %s186, %s202
      %p204 = scmp.eq.s32.totalorder %s26, 0
      %p205 = por %p203, %p204
      %p206 = scmp.le.s32.totalorder 1, %s20
      %p207 = scmp.lt.s32.totalorder %s20, 3
      %p208 = pnand %p206, %p207
      %p209 = pneg %p208
      // Predicated region
      $region9: #{tpu_custom_call.1} parent=5 // pred_check
        _
      $region10: #{tpu_custom_call.1} parent=5 // pred_check_branch
        %211 = sbr.rel (%p208) target = $region12
      $region11: #{tpu_custom_call.1} parent=5 // pred_region
        %s212 = ssub.s32 %s20, 1
        // Predicated region
        $region13: #{tpu_custom_call.1} parent=11 // pred_check
          %p213 = pneg %p67
        $region14: #{tpu_custom_call.1} parent=11 // pred_check_branch
          %215 = sbr.rel (%p213) target = $region16
        $region15: #{tpu_custom_call.1} parent=11 // pred_region
          %s217 = ssub.s32 9216, 9216
          %218 = vsyncadd [#allocation8], %s217
          %s219 = sshll.u32 [#allocation7], 4
          %s220 = int_to_ptr.vmem [resolvable:$true] %s219
          %225 = dma.hbm_to_vmem [thread:$0]  %s1, 9216, %s220, [#allocation8], 64, 64, 4
        $region16: #{tpu_custom_call.1} parent=11 // pred_fallthru
          _
        // Predicated region
        $region17: #{tpu_custom_call.1} parent=11 // pred_check
          %p226 = pneg %p88
        $region18: #{tpu_custom_call.1} parent=11 // pred_check_branch
          %228 = sbr.rel (%p226) target = $region20
        $region19: #{tpu_custom_call.1} parent=11 // pred_region
          _
        $region20: #{tpu_custom_call.1} parent=11 // pred_fallthru
          _
        // Predicated region
        $region21: #{tpu_custom_call.1} parent=11 // pred_check
          %p229 = pneg %p109
        $region22: #{tpu_custom_call.1} parent=11 // pred_check_branch
          %231 = sbr.rel (%p229) target = $region24
        $region23: #{tpu_custom_call.1} parent=11 // pred_region
          _
        $region24: #{tpu_custom_call.1} parent=11 // pred_fallthru
          _
        // Predicated region
        $region25: #{tpu_custom_call.1} parent=11 // pred_check
          %p232 = pneg %p130
        $region26: #{tpu_custom_call.1} parent=11 // pred_check_branch
          %234 = sbr.rel (%p232) target = $region28
        $region27: #{tpu_custom_call.1} parent=11 // pred_region
          %s236 = ssub.s32 9216, 9216
          %237 = vsyncadd [#allocation8], %s236
          %s238 = sshll.u32 [#allocation9], 4
          %s239 = int_to_ptr.vmem [resolvable:$true] %s238
          %244 = dma.hbm_to_vmem [thread:$0]  %s4, 9216, %s239, [#allocation8], 64, 64, 4
        $region28: #{tpu_custom_call.1} parent=11 // pred_fallthru
          _
        // Predicated region
        $region29: #{tpu_custom_call.1} parent=11 // pred_check
          %p245 = pneg %p151
        $region30: #{tpu_custom_call.1} parent=11 // pred_check_branch
          %247 = sbr.rel (%p245) target = $region32
        $region31: #{tpu_custom_call.1} parent=11 // pred_region
          _
        $region32: #{tpu_custom_call.1} parent=11 // pred_fallthru
          _
        // Predicated region
        $region33: #{tpu_custom_call.1} parent=11 // pred_check
          %p248 = pneg %p172
        $region34: #{tpu_custom_call.1} parent=11 // pred_check_branch
          %250 = sbr.rel (%p248) target = $region36
        $region35: #{tpu_custom_call.1} parent=11 // pred_region
          _
        $region36: #{tpu_custom_call.1} parent=11 // pred_fallthru
          _
      $region12: #{tpu_custom_call.1} parent=5 // pred_fallthru
        _
      %p251 = scmp.lt.s32.totalorder %s20, 2
      // Predicated region
      $region37: #{tpu_custom_call.1} parent=5 // pred_check
        %p252 = pneg %p251
      $region38: #{tpu_custom_call.1} parent=5 // pred_check_branch
        %254 = sbr.rel (%p252) target = $region40
      $region39: #{tpu_custom_call.1} parent=5 // pred_region
        // Predicated region
        $region41: #{tpu_custom_call.1} parent=39 // pred_check
          %p255 = pneg %p40
        $region42: #{tpu_custom_call.1} parent=39 // pred_check_branch
          %257 = sbr.rel (%p255) target = $region44
        $region43: #{tpu_custom_call.1} parent=39 // pred_region
          %s258 = sand.u32 %s30, 1
          %s259 = scalar_lea.sflag [#allocation5], %s258
          %s260 = sand.u32 %s30, 1
          %s261 = smul.addr %s260, 288
          %s262 = scalar_lea.vmem [#allocation4], %s261
          %s264 = ssub.s32 4608, 4608
          %265 = vsyncadd %s259, %s264
          %s266 = smul.addr %s20, 72
          %s267 = smul.addr %s266, 64
          %s268 = scalar_lea.hbm %s0, %s267
          %s269 = sshll.u32 %s262, 4
          %s270 = int_to_ptr.vmem [resolvable:$true] %s269
          %275 = dma.hbm_to_vmem [thread:$0]  %s268, 4608, %s270, %s259, 64, 64, 4
        $region44: #{tpu_custom_call.1} parent=39 // pred_fallthru
          _
      $region40: #{tpu_custom_call.1} parent=5 // pred_fallthru
        _
      %p276 = scmp.le.s32.totalorder 1, %s20
      %p277 = scmp.lt.s32.totalorder %s20, 3
      %p278 = pnand %p276, %p277
      %p279 = pneg %p278
      // Predicated region
      $region45: #{tpu_custom_call.1} parent=5 // pred_check
        _
      $region46: #{tpu_custom_call.1} parent=5 // pred_check_branch
        %281 = sbr.rel (%p278) target = $region48
      $region47: #{tpu_custom_call.1} parent=5 // pred_region
        %s282 = ssub.s32 %s20, 1
        %s283 = sand.u32 %s33, 1
        %s284 = scalar_lea.sflag [#allocation5], %s283
        %s285 = sand.u32 %s33, 1
        %s286 = smul.addr %s285, 288
        %s287 = scalar_lea.vmem [#allocation4], %s286
        // Predicated region
        $region49: #{tpu_custom_call.1} parent=47 // pred_check
          %p288 = pneg %p46
        $region50: #{tpu_custom_call.1} parent=47 // pred_check_branch
          %290 = sbr.rel (%p288) target = $region52
        $region51: #{tpu_custom_call.1} parent=47 // pred_region
          %291 = dma.done %s284, 4608
        $region52: #{tpu_custom_call.1} parent=47 // pred_fallthru
          _
        // Predicated region
        $region53: #{tpu_custom_call.1} parent=47 // pred_check
          %p292 = pneg %p67
        $region54: #{tpu_custom_call.1} parent=47 // pred_check_branch
          %294 = sbr.rel (%p292) target = $region56
        $region55: #{tpu_custom_call.1} parent=47 // pred_region
          %295 = dma.done [#allocation8], 9216
        $region56: #{tpu_custom_call.1} parent=47 // pred_fallthru
          _
        // Predicated region
        $region57: #{tpu_custom_call.1} parent=47 // pred_check
          %p296 = pneg %p130
        $region58: #{tpu_custom_call.1} parent=47 // pred_check_branch
          %298 = sbr.rel (%p296) target = $region60
        $region59: #{tpu_custom_call.1} parent=47 // pred_region
          %299 = dma.done [#allocation8], 9216
        $region60: #{tpu_custom_call.1} parent=47 // pred_fallthru
          _
        %s300 = sand.u32 %s33, 1
        %s301 = scalar_lea.sflag [#allocation5], %s300
        %s302 = sand.u32 %s33, 1
        %s303 = smul.addr %s302, 288
        %s304 = scalar_lea.vmem [#allocation4], %s303
        %p305 = pneg %p46
        %p306 = pneg %p43
        %p307 = pneg %p67
        %p308 = pneg %p64
        %p309 = pneg %p88
        %p310 = pneg %p85
        %p311 = pneg %p109
        %p312 = pneg %p106
        %p313 = pneg %p130
        %p314 = pneg %p127
        %p315 = pneg %p151
        %p316 = pneg %p148
        %p317 = pneg %p172
        %p318 = pneg %p169
        %p319 = pneg %p198
        %p320 = pneg %p195
        %s321 = sand.u32 %s185, 1
        %s322 = scalar_lea.sflag [#allocation6], %s321
        %s323 = sand.u32 %s185, 1
        %s324 = smul.addr %s323, 256
        %s325 = scalar_lea.vmem [#allocation10], %s324
        %v327 = vld [vmem:[%s287] sm:$0xf]
        %v328 = vld [vmem:[%s287 + $0x4] sm:$0xf]
        %v329 = vld [vmem:[%s287 + $0x8] sm:$0xf]
        %v330 = vld [vmem:[%s287 + $0xc] sm:$0xf]
        %v331 = vld [vmem:[%s287 + $0x10] sm:$0xf]
        %v332 = vld [vmem:[%s287 + $0x14] sm:$0xf]
        %v333 = vld [vmem:[%s287 + $0x18] sm:$0xf]
        %v334 = vld [vmem:[%s287 + $0x1c] sm:$0xf]
        %v335 = vld [vmem:[%s287 + $0x20] sm:$0xf]
        %v336 = vld [vmem:[%s287 + $0x24] sm:$0xf]
        %v337 = vld [vmem:[%s287 + $0x28] sm:$0xf]
        %v338 = vld [vmem:[%s287 + $0x2c] sm:$0xf]
        %v339 = vld [vmem:[%s287 + $0x30] sm:$0xf]
        %v340 = vld [vmem:[%s287 + $0x34] sm:$0xf]
        %v341 = vld [vmem:[%s287 + $0x38] sm:$0xf]
        %v342 = vld [vmem:[%s287 + $0x3c] sm:$0xf]
        %v343 = vld [vmem:[%s287 + $0x40] sm:$0xf]
        %v344 = vld [vmem:[%s287 + $0x44] sm:$0xf]
        %v345 = vld [vmem:[%s287 + $0x48] sm:$0xf]
        %v346 = vld [vmem:[%s287 + $0x4c] sm:$0xf]
        %v347 = vld [vmem:[%s287 + $0x50] sm:$0xf]
        %v348 = vld [vmem:[%s287 + $0x54] sm:$0xf]
        %v349 = vld [vmem:[%s287 + $0x58] sm:$0xf]
        %v350 = vld [vmem:[%s287 + $0x5c] sm:$0xf]
        %v351 = vld [vmem:[%s287 + $0x60] sm:$0xf]
        %v352 = vld [vmem:[%s287 + $0x64] sm:$0xf]
        %v353 = vld [vmem:[%s287 + $0x68] sm:$0xf]
        %v354 = vld [vmem:[%s287 + $0x6c] sm:$0xf]
        %v355 = vld [vmem:[%s287 + $0x70] sm:$0xf]
        %v356 = vld [vmem:[%s287 + $0x74] sm:$0xf]
        %v357 = vld [vmem:[%s287 + $0x78] sm:$0xf]
        %v358 = vld [vmem:[%s287 + $0x7c] sm:$0xf]
        %v359 = vld [vmem:[%s287 + $0x80] sm:$0xf]
        %v360 = vld [vmem:[%s287 + $0x84] sm:$0xf]
        %v361 = vld [vmem:[%s287 + $0x88] sm:$0xf]
        %v362 = vld [vmem:[%s287 + $0x8c] sm:$0xf]
        %v363 = vld [vmem:[%s287 + $0x90] sm:$0xf]
        %v364 = vld [vmem:[%s287 + $0x94] sm:$0xf]
        %v365 = vld [vmem:[%s287 + $0x98] sm:$0xf]
        %v366 = vld [vmem:[%s287 + $0x9c] sm:$0xf]
        %v367 = vld [vmem:[%s287 + $0xa0] sm:$0xf]
        %v368 = vld [vmem:[%s287 + $0xa4] sm:$0xf]
        %v369 = vld [vmem:[%s287 + $0xa8] sm:$0xf]
        %v370 = vld [vmem:[%s287 + $0xac] sm:$0xf]
        %v371 = vld [vmem:[%s287 + $0xb0] sm:$0xf]
        %v372 = vld [vmem:[%s287 + $0xb4] sm:$0xf]
        %v373 = vld [vmem:[%s287 + $0xb8] sm:$0xf]
        %v374 = vld [vmem:[%s287 + $0xbc] sm:$0xf]
        %v375 = vld [vmem:[%s287 + $0xc0] sm:$0xf]
        %v376 = vld [vmem:[%s287 + $0xc4] sm:$0xf]
        %v377 = vld [vmem:[%s287 + $0xc8] sm:$0xf]
        %v378 = vld [vmem:[%s287 + $0xcc] sm:$0xf]
        %v379 = vld [vmem:[%s287 + $0xd0] sm:$0xf]
        %v380 = vld [vmem:[%s287 + $0xd4] sm:$0xf]
        %v381 = vld [vmem:[%s287 + $0xd8] sm:$0xf]
        %v382 = vld [vmem:[%s287 + $0xdc] sm:$0xf]
        %v383 = vld [vmem:[%s287 + $0xe0] sm:$0xf]
        %v384 = vld [vmem:[%s287 + $0xe4] sm:$0xf]
        %v385 = vld [vmem:[%s287 + $0xe8] sm:$0xf]
        %v386 = vld [vmem:[%s287 + $0xec] sm:$0xf]
        %v387 = vld [vmem:[%s287 + $0xf0] sm:$0xf]
        %v388 = vld [vmem:[%s287 + $0xf4] sm:$0xf]
        %v389 = vld [vmem:[%s287 + $0xf8] sm:$0xf]
        %v390 = vld [vmem:[%s287 + $0xfc] sm:$0xf]
        %v455 = vunpack.c.l.b16 %v327
        %v456 = vunpack.c.l.b16 %v328
        %v457 = vunpack.c.l.b16 %v329
        %v458 = vunpack.c.l.b16 %v330
        %v459 = vunpack.c.l.b16 %v331
        %v460 = vunpack.c.l.b16 %v332
        %v461 = vunpack.c.l.b16 %v333
        %v462 = vunpack.c.l.b16 %v334
        %v463 = vunpack.c.l.b16 %v335
        %v464 = vunpack.c.l.b16 %v336
        %v465 = vunpack.c.l.b16 %v337
        %v466 = vunpack.c.l.b16 %v338
        %v467 = vunpack.c.l.b16 %v339
        %v468 = vunpack.c.l.b16 %v340
        %v469 = vunpack.c.l.b16 %v341
        %v470 = vunpack.c.l.b16 %v342
        %v471 = vunpack.c.l.b16 %v343
        %v472 = vunpack.c.l.b16 %v344
        %v473 = vunpack.c.l.b16 %v345
        %v474 = vunpack.c.l.b16 %v346
        %v475 = vunpack.c.l.b16 %v347
        %v476 = vunpack.c.l.b16 %v348
        %v477 = vunpack.c.l.b16 %v349
        %v478 = vunpack.c.l.b16 %v350
        %v479 = vunpack.c.l.b16 %v351
        %v480 = vunpack.c.l.b16 %v352
        %v481 = vunpack.c.l.b16 %v353
        %v482 = vunpack.c.l.b16 %v354
        %v483 = vunpack.c.l.b16 %v355
        %v484 = vunpack.c.l.b16 %v356
        %v485 = vunpack.c.l.b16 %v357
        %v486 = vunpack.c.l.b16 %v358
        %v487 = vunpack.c.l.b16 %v359
        %v488 = vunpack.c.l.b16 %v360
        %v489 = vunpack.c.l.b16 %v361
        %v490 = vunpack.c.l.b16 %v362
        %v491 = vunpack.c.l.b16 %v363
        %v492 = vunpack.c.l.b16 %v364
        %v493 = vunpack.c.l.b16 %v365
        %v494 = vunpack.c.l.b16 %v366
        %v495 = vunpack.c.l.b16 %v367
        %v496 = vunpack.c.l.b16 %v368
        %v497 = vunpack.c.l.b16 %v369
        %v498 = vunpack.c.l.b16 %v370
        %v499 = vunpack.c.l.b16 %v371
        %v500 = vunpack.c.l.b16 %v372
        %v501 = vunpack.c.l.b16 %v373
        %v502 = vunpack.c.l.b16 %v374
        %v503 = vunpack.c.l.b16 %v375
        %v504 = vunpack.c.l.b16 %v376
        %v505 = vunpack.c.l.b16 %v377
        %v506 = vunpack.c.l.b16 %v378
        %v507 = vunpack.c.l.b16 %v379
        %v508 = vunpack.c.l.b16 %v380
        %v509 = vunpack.c.l.b16 %v381
        %v510 = vunpack.c.l.b16 %v382
        %v511 = vunpack.c.l.b16 %v383
        %v512 = vunpack.c.l.b16 %v384
        %v513 = vunpack.c.l.b16 %v385
        %v514 = vunpack.c.l.b16 %v386
        %v515 = vunpack.c.l.b16 %v387
        %v516 = vunpack.c.l.b16 %v388
        %v517 = vunpack.c.l.b16 %v389
        %v518 = vunpack.c.l.b16 %v390
        %v519 = vpack.c.b16 %v456, %v455
        %v520 = vpack.c.b16 %v458, %v457
        %v521 = vpack.c.b16 %v460, %v459
        %v522 = vpack.c.b16 %v462, %v461
        %v523 = vpack.c.b16 %v464, %v463
        %v524 = vpack.c.b16 %v466, %v465
        %v525 = vpack.c.b16 %v468, %v467
        %v526 = vpack.c.b16 %v470, %v469
        %v527 = vpack.c.b16 %v472, %v471
        %v528 = vpack.c.b16 %v474, %v473
        %v529 = vpack.c.b16 %v476, %v475
        %v530 = vpack.c.b16 %v478, %v477
        %v531 = vpack.c.b16 %v480, %v479
        %v532 = vpack.c.b16 %v482, %v481
        %v533 = vpack.c.b16 %v484, %v483
        %v534 = vpack.c.b16 %v486, %v485
        %v535 = vpack.c.b16 %v488, %v487
        %v536 = vpack.c.b16 %v490, %v489
        %v537 = vpack.c.b16 %v492, %v491
        %v538 = vpack.c.b16 %v494, %v493
        %v539 = vpack.c.b16 %v496, %v495
        %v540 = vpack.c.b16 %v498, %v497
        %v541 = vpack.c.b16 %v500, %v499
        %v542 = vpack.c.b16 %v502, %v501
        %v543 = vpack.c.b16 %v504, %v503
        %v544 = vpack.c.b16 %v506, %v505
        %v545 = vpack.c.b16 %v508, %v507
        %v546 = vpack.c.b16 %v510, %v509
        %v547 = vpack.c.b16 %v512, %v511
        %v548 = vpack.c.b16 %v514, %v513
        %v549 = vpack.c.b16 %v516, %v515
        %v550 = vpack.c.b16 %v518, %v517
        %583 = vst [vmem:[#allocation2] sm:$0xff] %v519
        %584 = vst [vmem:[#allocation2 + $0x18] sm:$0xff] %v520
        %585 = vst [vmem:[#allocation2 + $0x30] sm:$0xff] %v521
        %586 = vst [vmem:[#allocation2 + $0x48] sm:$0xff] %v522
        %587 = vst [vmem:[#allocation2 + $0x60] sm:$0xff] %v523
        %588 = vst [vmem:[#allocation2 + $0x78] sm:$0xff] %v524
        %589 = vst [vmem:[#allocation2 + $0x90] sm:$0xff] %v525
        %590 = vst [vmem:[#allocation2 + $0xa8] sm:$0xff] %v526
        %591 = vst [vmem:[#allocation2 + $0xc0] sm:$0xff] %v527
        %592 = vst [vmem:[#allocation2 + $0xd8] sm:$0xff] %v528
        %593 = vst [vmem:[#allocation2 + $0xf0] sm:$0xff] %v529
        %594 = vst [vmem:[#allocation2 + $0x108] sm:$0xff] %v530
        %595 = vst [vmem:[#allocation2 + $0x120] sm:$0xff] %v531
        %596 = vst [vmem:[#allocation2 + $0x138] sm:$0xff] %v532
        %597 = vst [vmem:[#allocation2 + $0x150] sm:$0xff] %v533
        %598 = vst [vmem:[#allocation2 + $0x168] sm:$0xff] %v534
        %599 = vst [vmem:[#allocation2 + $0x180] sm:$0xff] %v535
        %600 = vst [vmem:[#allocation2 + $0x198] sm:$0xff] %v536
        %601 = vst [vmem:[#allocation2 + $0x1b0] sm:$0xff] %v537
        %602 = vst [vmem:[#allocation2 + $0x1c8] sm:$0xff] %v538
        %603 = vst [vmem:[#allocation2 + $0x1e0] sm:$0xff] %v539
        %604 = vst [vmem:[#allocation2 + $0x1f8] sm:$0xff] %v540
        %605 = vst [vmem:[#allocation2 + $0x210] sm:$0xff] %v541
        %606 = vst [vmem:[#allocation2 + $0x228] sm:$0xff] %v542
        %607 = vst [vmem:[#allocation2 + $0x240] sm:$0xff] %v543
        %608 = vst [vmem:[#allocation2 + $0x258] sm:$0xff] %v544
        %609 = vst [vmem:[#allocation2 + $0x270] sm:$0xff] %v545
        %610 = vst [vmem:[#allocation2 + $0x288] sm:$0xff] %v546
        %611 = vst [vmem:[#allocation2 + $0x2a0] sm:$0xff] %v547
        %612 = vst [vmem:[#allocation2 + $0x2b8] sm:$0xff] %v548
        %613 = vst [vmem:[#allocation2 + $0x2d0] sm:$0xff] %v549
        %614 = vst [vmem:[#allocation2 + $0x2e8] sm:$0xff] %v550
        %s615 = scalar_lea.vmem %s287, 16 [#allocation4]
        %v616 = vld [vmem:[%s615] sm:$0xf]
        %v617 = vld [vmem:[%s615 + $0x4] sm:$0xf]
        %v618 = vld [vmem:[%s615 + $0x8] sm:$0xf]
        %v619 = vld [vmem:[%s615 + $0xc] sm:$0xf]
        %v620 = vld [vmem:[%s615 + $0x10] sm:$0xf]
        %v621 = vld [vmem:[%s615 + $0x14] sm:$0xf]
        %v622 = vld [vmem:[%s615 + $0x18] sm:$0xf]
        %v623 = vld [vmem:[%s615 + $0x1c] sm:$0xf]
        %v624 = vld [vmem:[%s615 + $0x20] sm:$0xf]
        %v625 = vld [vmem:[%s615 + $0x24] sm:$0xf]
        %v626 = vld [vmem:[%s615 + $0x28] sm:$0xf]
        %v627 = vld [vmem:[%s615 + $0x2c] sm:$0xf]
        %v628 = vld [vmem:[%s615 + $0x30] sm:$0xf]
        %v629 = vld [vmem:[%s615 + $0x34] sm:$0xf]
        %v630 = vld [vmem:[%s615 + $0x38] sm:$0xf]
        %v631 = vld [vmem:[%s615 + $0x3c] sm:$0xf]
        %v632 = vld [vmem:[%s615 + $0x40] sm:$0xf]
        %v633 = vld [vmem:[%s615 + $0x44] sm:$0xf]
        %v634 = vld [vmem:[%s615 + $0x48] sm:$0xf]
        %v635 = vld [vmem:[%s615 + $0x4c] sm:$0xf]
        %v636 = vld [vmem:[%s615 + $0x50] sm:$0xf]
        %v637 = vld [vmem:[%s615 + $0x54] sm:$0xf]
        %v638 = vld [vmem:[%s615 + $0x58] sm:$0xf]
        %v639 = vld [vmem:[%s615 + $0x5c] sm:$0xf]
        %v640 = vld [vmem:[%s615 + $0x60] sm:$0xf]
        %v641 = vld [vmem:[%s615 + $0x64] sm:$0xf]
        %v642 = vld [vmem:[%s615 + $0x68] sm:$0xf]
        %v643 = vld [vmem:[%s615 + $0x6c] sm:$0xf]
        %v644 = vld [vmem:[%s615 + $0x70] sm:$0xf]
        %v645 = vld [vmem:[%s615 + $0x74] sm:$0xf]
        %v646 = vld [vmem:[%s615 + $0x78] sm:$0xf]
        %v647 = vld [vmem:[%s615 + $0x7c] sm:$0xf]
        %v648 = vld [vmem:[%s615 + $0x80] sm:$0xf]
        %v649 = vld [vmem:[%s615 + $0x84] sm:$0xf]
        %v650 = vld [vmem:[%s615 + $0x88] sm:$0xf]
        %v651 = vld [vmem:[%s615 + $0x8c] sm:$0xf]
        %v652 = vld [vmem:[%s615 + $0x90] sm:$0xf]
        %v653 = vld [vmem:[%s615 + $0x94] sm:$0xf]
        %v654 = vld [vmem:[%s615 + $0x98] sm:$0xf]
        %v655 = vld [vmem:[%s615 + $0x9c] sm:$0xf]
        %v656 = vld [vmem:[%s615 + $0xa0] sm:$0xf]
        %v657 = vld [vmem:[%s615 + $0xa4] sm:$0xf]
        %v658 = vld [vmem:[%s615 + $0xa8] sm:$0xf]
        %v659 = vld [vmem:[%s615 + $0xac] sm:$0xf]
        %v660 = vld [vmem:[%s615 + $0xb0] sm:$0xf]
        %v661 = vld [vmem:[%s615 + $0xb4] sm:$0xf]
        %v662 = vld [vmem:[%s615 + $0xb8] sm:$0xf]
        %v663 = vld [vmem:[%s615 + $0xbc] sm:$0xf]
        %v664 = vld [vmem:[%s615 + $0xc0] sm:$0xf]
        %v665 = vld [vmem:[%s615 + $0xc4] sm:$0xf]
        %v666 = vld [vmem:[%s615 + $0xc8] sm:$0xf]
        %v667 = vld [vmem:[%s615 + $0xcc] sm:$0xf]
        %v668 = vld [vmem:[%s615 + $0xd0] sm:$0xf]
        %v669 = vld [vmem:[%s615 + $0xd4] sm:$0xf]
        %v670 = vld [vmem:[%s615 + $0xd8] sm:$0xf]
        %v671 = vld [vmem:[%s615 + $0xdc] sm:$0xf]
        %v672 = vld [vmem:[%s615 + $0xe0] sm:$0xf]
        %v673 = vld [vmem:[%s615 + $0xe4] sm:$0xf]
        %v674 = vld [vmem:[%s615 + $0xe8] sm:$0xf]
        %v675 = vld [vmem:[%s615 + $0xec] sm:$0xf]
        %v676 = vld [vmem:[%s615 + $0xf0] sm:$0xf]
        %v677 = vld [vmem:[%s615 + $0xf4] sm:$0xf]
        %v678 = vld [vmem:[%s615 + $0xf8] sm:$0xf]
        %v679 = vld [vmem:[%s615 + $0xfc] sm:$0xf]
        %v744 = vunpack.c.l.b16 %v616
        %v745 = vunpack.c.l.b16 %v617
        %v746 = vunpack.c.l.b16 %v618
        %v747 = vunpack.c.l.b16 %v619
        %v748 = vunpack.c.l.b16 %v620
        %v749 = vunpack.c.l.b16 %v621
        %v750 = vunpack.c.l.b16 %v622
        %v751 = vunpack.c.l.b16 %v623
        %v752 = vunpack.c.l.b16 %v624
        %v753 = vunpack.c.l.b16 %v625
        %v754 = vunpack.c.l.b16 %v626
        %v755 = vunpack.c.l.b16 %v627
        %v756 = vunpack.c.l.b16 %v628
        %v757 = vunpack.c.l.b16 %v629
        %v758 = vunpack.c.l.b16 %v630
        %v759 = vunpack.c.l.b16 %v631
        %v760 = vunpack.c.l.b16 %v632
        %v761 = vunpack.c.l.b16 %v633
        %v762 = vunpack.c.l.b16 %v634
        %v763 = vunpack.c.l.b16 %v635
        %v764 = vunpack.c.l.b16 %v636
        %v765 = vunpack.c.l.b16 %v637
        %v766 = vunpack.c.l.b16 %v638
        %v767 = vunpack.c.l.b16 %v639
        %v768 = vunpack.c.l.b16 %v640
        %v769 = vunpack.c.l.b16 %v641
        %v770 = vunpack.c.l.b16 %v642
        %v771 = vunpack.c.l.b16 %v643
        %v772 = vunpack.c.l.b16 %v644
        %v773 = vunpack.c.l.b16 %v645
        %v774 = vunpack.c.l.b16 %v646
        %v775 = vunpack.c.l.b16 %v647
        %v776 = vunpack.c.l.b16 %v648
        %v777 = vunpack.c.l.b16 %v649
        %v778 = vunpack.c.l.b16 %v650
        %v779 = vunpack.c.l.b16 %v651
        %v780 = vunpack.c.l.b16 %v652
        %v781 = vunpack.c.l.b16 %v653
        %v782 = vunpack.c.l.b16 %v654
        %v783 = vunpack.c.l.b16 %v655
        %v784 = vunpack.c.l.b16 %v656
        %v785 = vunpack.c.l.b16 %v657
        %v786 = vunpack.c.l.b16 %v658
        %v787 = vunpack.c.l.b16 %v659
        %v788 = vunpack.c.l.b16 %v660
        %v789 = vunpack.c.l.b16 %v661
        %v790 = vunpack.c.l.b16 %v662
        %v791 = vunpack.c.l.b16 %v663
        %v792 = vunpack.c.l.b16 %v664
        %v793 = vunpack.c.l.b16 %v665
        %v794 = vunpack.c.l.b16 %v666
        %v795 = vunpack.c.l.b16 %v667
        %v796 = vunpack.c.l.b16 %v668
        %v797 = vunpack.c.l.b16 %v669
        %v798 = vunpack.c.l.b16 %v670
        %v799 = vunpack.c.l.b16 %v671
        %v800 = vunpack.c.l.b16 %v672
        %v801 = vunpack.c.l.b16 %v673
        %v802 = vunpack.c.l.b16 %v674
        %v803 = vunpack.c.l.b16 %v675
        %v804 = vunpack.c.l.b16 %v676
        %v805 = vunpack.c.l.b16 %v677
        %v806 = vunpack.c.l.b16 %v678
        %v807 = vunpack.c.l.b16 %v679
        %v808 = vpack.c.b16 %v745, %v744
        %v809 = vpack.c.b16 %v747, %v746
        %v810 = vpack.c.b16 %v749, %v748
        %v811 = vpack.c.b16 %v751, %v750
        %v812 = vpack.c.b16 %v753, %v752
        %v813 = vpack.c.b16 %v755, %v754
        %v814 = vpack.c.b16 %v757, %v756
        %v815 = vpack.c.b16 %v759, %v758
        %v816 = vpack.c.b16 %v761, %v760
        %v817 = vpack.c.b16 %v763, %v762
        %v818 = vpack.c.b16 %v765, %v764
        %v819 = vpack.c.b16 %v767, %v766
        %v820 = vpack.c.b16 %v769, %v768
        %v821 = vpack.c.b16 %v771, %v770
        %v822 = vpack.c.b16 %v773, %v772
        %v823 = vpack.c.b16 %v775, %v774
        %v824 = vpack.c.b16 %v777, %v776
        %v825 = vpack.c.b16 %v779, %v778
        %v826 = vpack.c.b16 %v781, %v780
        %v827 = vpack.c.b16 %v783, %v782
        %v828 = vpack.c.b16 %v785, %v784
        %v829 = vpack.c.b16 %v787, %v786
        %v830 = vpack.c.b16 %v789, %v788
        %v831 = vpack.c.b16 %v791, %v790
        %v832 = vpack.c.b16 %v793, %v792
        %v833 = vpack.c.b16 %v795, %v794
        %v834 = vpack.c.b16 %v797, %v796
        %v835 = vpack.c.b16 %v799, %v798
        %v836 = vpack.c.b16 %v801, %v800
        %v837 = vpack.c.b16 %v803, %v802
        %v838 = vpack.c.b16 %v805, %v804
        %v839 = vpack.c.b16 %v807, %v806
        %872 = vst [vmem:[#allocation2 + $0x8] sm:$0xff] %v808
        %873 = vst [vmem:[#allocation2 + $0x20] sm:$0xff] %v809
        %874 = vst [vmem:[#allocation2 + $0x38] sm:$0xff] %v810
        %875 = vst [vmem:[#allocation2 + $0x50] sm:$0xff] %v811
        %876 = vst [vmem:[#allocation2 + $0x68] sm:$0xff] %v812
        %877 = vst [vmem:[#allocation2 + $0x80] sm:$0xff] %v813
        %878 = vst [vmem:[#allocation2 + $0x98] sm:$0xff] %v814
        %879 = vst [vmem:[#allocation2 + $0xb0] sm:$0xff] %v815
        %880 = vst [vmem:[#allocation2 + $0xc8] sm:$0xff] %v816
        %881 = vst [vmem:[#allocation2 + $0xe0] sm:$0xff] %v817
        %882 = vst [vmem:[#allocation2 + $0xf8] sm:$0xff] %v818
        %883 = vst [vmem:[#allocation2 + $0x110] sm:$0xff] %v819
        %884 = vst [vmem:[#allocation2 + $0x128] sm:$0xff] %v820
        %885 = vst [vmem:[#allocation2 + $0x140] sm:$0xff] %v821
        %886 = vst [vmem:[#allocation2 + $0x158] sm:$0xff] %v822
        %887 = vst [vmem:[#allocation2 + $0x170] sm:$0xff] %v823
        %888 = vst [vmem:[#allocation2 + $0x188] sm:$0xff] %v824
        %889 = vst [vmem:[#allocation2 + $0x1a0] sm:$0xff] %v825
        %890 = vst [vmem:[#allocation2 + $0x1b8] sm:$0xff] %v826
        %891 = vst [vmem:[#allocation2 + $0x1d0] sm:$0xff] %v827
        %892 = vst [vmem:[#allocation2 + $0x1e8] sm:$0xff] %v828
        %893 = vst [vmem:[#allocation2 + $0x200] sm:$0xff] %v829
        %894 = vst [vmem:[#allocation2 + $0x218] sm:$0xff] %v830
        %895 = vst [vmem:[#allocation2 + $0x230] sm:$0xff] %v831
        %896 = vst [vmem:[#allocation2 + $0x248] sm:$0xff] %v832
        %897 = vst [vmem:[#allocation2 + $0x260] sm:$0xff] %v833
        %898 = vst [vmem:[#allocation2 + $0x278] sm:$0xff] %v834
        %899 = vst [vmem:[#allocation2 + $0x290] sm:$0xff] %v835
        %900 = vst [vmem:[#allocation2 + $0x2a8] sm:$0xff] %v836
        %901 = vst [vmem:[#allocation2 + $0x2c0] sm:$0xff] %v837
        %902 = vst [vmem:[#allocation2 + $0x2d8] sm:$0xff] %v838
        %903 = vst [vmem:[#allocation2 + $0x2f0] sm:$0xff] %v839
        %s904 = scalar_lea.vmem %s287, 32 [#allocation4]
        %v905 = vld [vmem:[%s904] sm:$0xf]
        %v906 = vld [vmem:[%s904 + $0x4] sm:$0xf]
        %v907 = vld [vmem:[%s904 + $0x8] sm:$0xf]
        %v908 = vld [vmem:[%s904 + $0xc] sm:$0xf]
        %v909 = vld [vmem:[%s904 + $0x10] sm:$0xf]
        %v910 = vld [vmem:[%s904 + $0x14] sm:$0xf]
        %v911 = vld [vmem:[%s904 + $0x18] sm:$0xf]
        %v912 = vld [vmem:[%s904 + $0x1c] sm:$0xf]
        %v913 = vld [vmem:[%s904 + $0x20] sm:$0xf]
        %v914 = vld [vmem:[%s904 + $0x24] sm:$0xf]
        %v915 = vld [vmem:[%s904 + $0x28] sm:$0xf]
        %v916 = vld [vmem:[%s904 + $0x2c] sm:$0xf]
        %v917 = vld [vmem:[%s904 + $0x30] sm:$0xf]
        %v918 = vld [vmem:[%s904 + $0x34] sm:$0xf]
        %v919 = vld [vmem:[%s904 + $0x38] sm:$0xf]
        %v920 = vld [vmem:[%s904 + $0x3c] sm:$0xf]
        %v921 = vld [vmem:[%s904 + $0x40] sm:$0xf]
        %v922 = vld [vmem:[%s904 + $0x44] sm:$0xf]
        %v923 = vld [vmem:[%s904 + $0x48] sm:$0xf]
        %v924 = vld [vmem:[%s904 + $0x4c] sm:$0xf]
        %v925 = vld [vmem:[%s904 + $0x50] sm:$0xf]
        %v926 = vld [vmem:[%s904 + $0x54] sm:$0xf]
        %v927 = vld [vmem:[%s904 + $0x58] sm:$0xf]
        %v928 = vld [vmem:[%s904 + $0x5c] sm:$0xf]
        %v929 = vld [vmem:[%s904 + $0x60] sm:$0xf]
        %v930 = vld [vmem:[%s904 + $0x64] sm:$0xf]
        %v931 = vld [vmem:[%s904 + $0x68] sm:$0xf]
        %v932 = vld [vmem:[%s904 + $0x6c] sm:$0xf]
        %v933 = vld [vmem:[%s904 + $0x70] sm:$0xf]
        %v934 = vld [vmem:[%s904 + $0x74] sm:$0xf]
        %v935 = vld [vmem:[%s904 + $0x78] sm:$0xf]
        %v936 = vld [vmem:[%s904 + $0x7c] sm:$0xf]
        %v937 = vld [vmem:[%s904 + $0x80] sm:$0xf]
        %v938 = vld [vmem:[%s904 + $0x84] sm:$0xf]
        %v939 = vld [vmem:[%s904 + $0x88] sm:$0xf]
        %v940 = vld [vmem:[%s904 + $0x8c] sm:$0xf]
        %v941 = vld [vmem:[%s904 + $0x90] sm:$0xf]
        %v942 = vld [vmem:[%s904 + $0x94] sm:$0xf]
        %v943 = vld [vmem:[%s904 + $0x98] sm:$0xf]
        %v944 = vld [vmem:[%s904 + $0x9c] sm:$0xf]
        %v945 = vld [vmem:[%s904 + $0xa0] sm:$0xf]
        %v946 = vld [vmem:[%s904 + $0xa4] sm:$0xf]
        %v947 = vld [vmem:[%s904 + $0xa8] sm:$0xf]
        %v948 = vld [vmem:[%s904 + $0xac] sm:$0xf]
        %v949 = vld [vmem:[%s904 + $0xb0] sm:$0xf]
        %v950 = vld [vmem:[%s904 + $0xb4] sm:$0xf]
        %v951 = vld [vmem:[%s904 + $0xb8] sm:$0xf]
        %v952 = vld [vmem:[%s904 + $0xbc] sm:$0xf]
        %v953 = vld [vmem:[%s904 + $0xc0] sm:$0xf]
        %v954 = vld [vmem:[%s904 + $0xc4] sm:$0xf]
        %v955 = vld [vmem:[%s904 + $0xc8] sm:$0xf]
        %v956 = vld [vmem:[%s904 + $0xcc] sm:$0xf]
        %v957 = vld [vmem:[%s904 + $0xd0] sm:$0xf]
        %v958 = vld [vmem:[%s904 + $0xd4] sm:$0xf]
        %v959 = vld [vmem:[%s904 + $0xd8] sm:$0xf]
        %v960 = vld [vmem:[%s904 + $0xdc] sm:$0xf]
        %v961 = vld [vmem:[%s904 + $0xe0] sm:$0xf]
        %v962 = vld [vmem:[%s904 + $0xe4] sm:$0xf]
        %v963 = vld [vmem:[%s904 + $0xe8] sm:$0xf]
        %v964 = vld [vmem:[%s904 + $0xec] sm:$0xf]
        %v965 = vld [vmem:[%s904 + $0xf0] sm:$0xf]
        %v966 = vld [vmem:[%s904 + $0xf4] sm:$0xf]
        %v967 = vld [vmem:[%s904 + $0xf8] sm:$0xf]
        %v968 = vld [vmem:[%s904 + $0xfc] sm:$0xf]
        %v1033 = vunpack.c.l.b16 %v905
        %v1034 = vunpack.c.l.b16 %v906
        %v1035 = vunpack.c.l.b16 %v907
        %v1036 = vunpack.c.l.b16 %v908
        %v1037 = vunpack.c.l.b16 %v909
        %v1038 = vunpack.c.l.b16 %v910
        %v1039 = vunpack.c.l.b16 %v911
        %v1040 = vunpack.c.l.b16 %v912
        %v1041 = vunpack.c.l.b16 %v913
        %v1042 = vunpack.c.l.b16 %v914
        %v1043 = vunpack.c.l.b16 %v915
        %v1044 = vunpack.c.l.b16 %v916
        %v1045 = vunpack.c.l.b16 %v917
        %v1046 = vunpack.c.l.b16 %v918
        %v1047 = vunpack.c.l.b16 %v919
        %v1048 = vunpack.c.l.b16 %v920
        %v1049 = vunpack.c.l.b16 %v921
        %v1050 = vunpack.c.l.b16 %v922
        %v1051 = vunpack.c.l.b16 %v923
        %v1052 = vunpack.c.l.b16 %v924
        %v1053 = vunpack.c.l.b16 %v925
        %v1054 = vunpack.c.l.b16 %v926
        %v1055 = vunpack.c.l.b16 %v927
        %v1056 = vunpack.c.l.b16 %v928
        %v1057 = vunpack.c.l.b16 %v929
        %v1058 = vunpack.c.l.b16 %v930
        %v1059 = vunpack.c.l.b16 %v931
        %v1060 = vunpack.c.l.b16 %v932
        %v1061 = vunpack.c.l.b16 %v933
        %v1062 = vunpack.c.l.b16 %v934
        %v1063 = vunpack.c.l.b16 %v935
        %v1064 = vunpack.c.l.b16 %v936
        %v1065 = vunpack.c.l.b16 %v937
        %v1066 = vunpack.c.l.b16 %v938
        %v1067 = vunpack.c.l.b16 %v939
        %v1068 = vunpack.c.l.b16 %v940
        %v1069 = vunpack.c.l.b16 %v941
        %v1070 = vunpack.c.l.b16 %v942
        %v1071 = vunpack.c.l.b16 %v943
        %v1072 = vunpack.c.l.b16 %v944
        %v1073 = vunpack.c.l.b16 %v945
        %v1074 = vunpack.c.l.b16 %v946
        %v1075 = vunpack.c.l.b16 %v947
        %v1076 = vunpack.c.l.b16 %v948
        %v1077 = vunpack.c.l.b16 %v949
        %v1078 = vunpack.c.l.b16 %v950
        %v1079 = vunpack.c.l.b16 %v951
        %v1080 = vunpack.c.l.b16 %v952
        %v1081 = vunpack.c.l.b16 %v953
        %v1082 = vunpack.c.l.b16 %v954
        %v1083 = vunpack.c.l.b16 %v955
        %v1084 = vunpack.c.l.b16 %v956
        %v1085 = vunpack.c.l.b16 %v957
        %v1086 = vunpack.c.l.b16 %v958
        %v1087 = vunpack.c.l.b16 %v959
        %v1088 = vunpack.c.l.b16 %v960
        %v1089 = vunpack.c.l.b16 %v961
        %v1090 = vunpack.c.l.b16 %v962
        %v1091 = vunpack.c.l.b16 %v963
        %v1092 = vunpack.c.l.b16 %v964
        %v1093 = vunpack.c.l.b16 %v965
        %v1094 = vunpack.c.l.b16 %v966
        %v1095 = vunpack.c.l.b16 %v967
        %v1096 = vunpack.c.l.b16 %v968
        %v1097 = vpack.c.b16 %v1034, %v1033
        %v1098 = vpack.c.b16 %v1036, %v1035
        %v1099 = vpack.c.b16 %v1038, %v1037
        %v1100 = vpack.c.b16 %v1040, %v1039
        %v1101 = vpack.c.b16 %v1042, %v1041
        %v1102 = vpack.c.b16 %v1044, %v1043
        %v1103 = vpack.c.b16 %v1046, %v1045
        %v1104 = vpack.c.b16 %v1048, %v1047
        %v1105 = vpack.c.b16 %v1050, %v1049
        %v1106 = vpack.c.b16 %v1052, %v1051
        %v1107 = vpack.c.b16 %v1054, %v1053
        %v1108 = vpack.c.b16 %v1056, %v1055
        %v1109 = vpack.c.b16 %v1058, %v1057
        %v1110 = vpack.c.b16 %v1060, %v1059
        %v1111 = vpack.c.b16 %v1062, %v1061
        %v1112 = vpack.c.b16 %v1064, %v1063
        %v1113 = vpack.c.b16 %v1066, %v1065
        %v1114 = vpack.c.b16 %v1068, %v1067
        %v1115 = vpack.c.b16 %v1070, %v1069
        %v1116 = vpack.c.b16 %v1072, %v1071
        %v1117 = vpack.c.b16 %v1074, %v1073
        %v1118 = vpack.c.b16 %v1076, %v1075
        %v1119 = vpack.c.b16 %v1078, %v1077
        %v1120 = vpack.c.b16 %v1080, %v1079
        %v1121 = vpack.c.b16 %v1082, %v1081
        %v1122 = vpack.c.b16 %v1084, %v1083
        %v1123 = vpack.c.b16 %v1086, %v1085
        %v1124 = vpack.c.b16 %v1088, %v1087
        %v1125 = vpack.c.b16 %v1090, %v1089
        %v1126 = vpack.c.b16 %v1092, %v1091
        %v1127 = vpack.c.b16 %v1094, %v1093
        %v1128 = vpack.c.b16 %v1096, %v1095
        %1161 = vst [vmem:[#allocation2 + $0x10] sm:$0xff] %v1097
        %1162 = vst [vmem:[#allocation2 + $0x28] sm:$0xff] %v1098
        %1163 = vst [vmem:[#allocation2 + $0x40] sm:$0xff] %v1099
        %1164 = vst [vmem:[#allocation2 + $0x58] sm:$0xff] %v1100
        %1165 = vst [vmem:[#allocation2 + $0x70] sm:$0xff] %v1101
        %1166 = vst [vmem:[#allocation2 + $0x88] sm:$0xff] %v1102
        %1167 = vst [vmem:[#allocation2 + $0xa0] sm:$0xff] %v1103
        %1168 = vst [vmem:[#allocation2 + $0xb8] sm:$0xff] %v1104
        %1169 = vst [vmem:[#allocation2 + $0xd0] sm:$0xff] %v1105
        %1170 = vst [vmem:[#allocation2 + $0xe8] sm:$0xff] %v1106
        %1171 = vst [vmem:[#allocation2 + $0x100] sm:$0xff] %v1107
        %1172 = vst [vmem:[#allocation2 + $0x118] sm:$0xff] %v1108
        %1173 = vst [vmem:[#allocation2 + $0x130] sm:$0xff] %v1109
        %1174 = vst [vmem:[#allocation2 + $0x148] sm:$0xff] %v1110
        %1175 = vst [vmem:[#allocation2 + $0x160] sm:$0xff] %v1111
        %1176 = vst [vmem:[#allocation2 + $0x178] sm:$0xff] %v1112
        %1177 = vst [vmem:[#allocation2 + $0x190] sm:$0xff] %v1113
        %1178 = vst [vmem:[#allocation2 + $0x1a8] sm:$0xff] %v1114
        %1179 = vst [vmem:[#allocation2 + $0x1c0] sm:$0xff] %v1115
        %1180 = vst [vmem:[#allocation2 + $0x1d8] sm:$0xff] %v1116
        %1181 = vst [vmem:[#allocation2 + $0x1f0] sm:$0xff] %v1117
        %1182 = vst [vmem:[#allocation2 + $0x208] sm:$0xff] %v1118
        %1183 = vst [vmem:[#allocation2 + $0x220] sm:$0xff] %v1119
        %1184 = vst [vmem:[#allocation2 + $0x238] sm:$0xff] %v1120
        %1185 = vst [vmem:[#allocation2 + $0x250] sm:$0xff] %v1121
        %1186 = vst [vmem:[#allocation2 + $0x268] sm:$0xff] %v1122
        %1187 = vst [vmem:[#allocation2 + $0x280] sm:$0xff] %v1123
        %1188 = vst [vmem:[#allocation2 + $0x298] sm:$0xff] %v1124
        %1189 = vst [vmem:[#allocation2 + $0x2b0] sm:$0xff] %v1125
        %1190 = vst [vmem:[#allocation2 + $0x2c8] sm:$0xff] %v1126
        %1191 = vst [vmem:[#allocation2 + $0x2e0] sm:$0xff] %v1127
        %1192 = vst [vmem:[#allocation2 + $0x2f8] sm:$0xff] %v1128
        %v1193 = vld [vmem:[#allocation2] sm:$0xff]
        %v1194 = vld [vmem:[#allocation2 + $0x8] sm:$0xff]
        %v1195 = vld [vmem:[#allocation2 + $0x10] sm:$0xff]
        %v1196 = vld [vmem:[#allocation2 + $0x18] sm:$0xff]
        %v1197 = vld [vmem:[#allocation2 + $0x20] sm:$0xff]
        %v1198 = vld [vmem:[#allocation2 + $0x28] sm:$0xff]
        %v1199 = vld [vmem:[#allocation2 + $0x30] sm:$0xff]
        %v1200 = vld [vmem:[#allocation2 + $0x38] sm:$0xff]
        %v1201 = vld [vmem:[#allocation2 + $0x40] sm:$0xff]
        %v1202 = vld [vmem:[#allocation2 + $0x48] sm:$0xff]
        %v1203 = vld [vmem:[#allocation2 + $0x50] sm:$0xff]
        %v1204 = vld [vmem:[#allocation2 + $0x58] sm:$0xff]
        %v1205 = vld [vmem:[#allocation2 + $0x60] sm:$0xff]
        %v1206 = vld [vmem:[#allocation2 + $0x68] sm:$0xff]
        %v1207 = vld [vmem:[#allocation2 + $0x70] sm:$0xff]
        %v1208 = vld [vmem:[#allocation2 + $0x78] sm:$0xff]
        %v1209 = vld [vmem:[#allocation2 + $0x80] sm:$0xff]
        %v1210 = vld [vmem:[#allocation2 + $0x88] sm:$0xff]
        %v1211 = vld [vmem:[#allocation2 + $0x90] sm:$0xff]
        %v1212 = vld [vmem:[#allocation2 + $0x98] sm:$0xff]
        %v1213 = vld [vmem:[#allocation2 + $0xa0] sm:$0xff]
        %v1214 = vld [vmem:[#allocation2 + $0xa8] sm:$0xff]
        %v1215 = vld [vmem:[#allocation2 + $0xb0] sm:$0xff]
        %v1216 = vld [vmem:[#allocation2 + $0xb8] sm:$0xff]
        %v1217 = vld [vmem:[#allocation2 + $0xc0] sm:$0xff]
        %v1218 = vld [vmem:[#allocation2 + $0xc8] sm:$0xff]
        %v1219 = vld [vmem:[#allocation2 + $0xd0] sm:$0xff]
        %v1220 = vld [vmem:[#allocation2 + $0xd8] sm:$0xff]
        %v1221 = vld [vmem:[#allocation2 + $0xe0] sm:$0xff]
        %v1222 = vld [vmem:[#allocation2 + $0xe8] sm:$0xff]
        %v1223 = vld [vmem:[#allocation2 + $0xf0] sm:$0xff]
        %v1224 = vld [vmem:[#allocation2 + $0xf8] sm:$0xff]
        %v1225 = vld [vmem:[#allocation2 + $0x100] sm:$0xff]
        %v1226 = vld [vmem:[#allocation2 + $0x108] sm:$0xff]
        %v1227 = vld [vmem:[#allocation2 + $0x110] sm:$0xff]
        %v1228 = vld [vmem:[#allocation2 + $0x118] sm:$0xff]
        %v1229 = vld [vmem:[#allocation2 + $0x120] sm:$0xff]
        %v1230 = vld [vmem:[#allocation2 + $0x128] sm:$0xff]
        %v1231 = vld [vmem:[#allocation2 + $0x130] sm:$0xff]
        %v1232 = vld [vmem:[#allocation2 + $0x138] sm:$0xff]
        %v1233 = vld [vmem:[#allocation2 + $0x140] sm:$0xff]
        %v1234 = vld [vmem:[#allocation2 + $0x148] sm:$0xff]
        %v1235 = vld [vmem:[#allocation2 + $0x150] sm:$0xff]
        %v1236 = vld [vmem:[#allocation2 + $0x158] sm:$0xff]
        %v1237 = vld [vmem:[#allocation2 + $0x160] sm:$0xff]
        %v1238 = vld [vmem:[#allocation2 + $0x168] sm:$0xff]
        %v1239 = vld [vmem:[#allocation2 + $0x170] sm:$0xff]
        %v1240 = vld [vmem:[#allocation2 + $0x178] sm:$0xff]
        %v1241 = vld [vmem:[#allocation2 + $0x180] sm:$0xff]
        %v1242 = vld [vmem:[#allocation2 + $0x188] sm:$0xff]
        %v1243 = vld [vmem:[#allocation2 + $0x190] sm:$0xff]
        %v1244 = vld [vmem:[#allocation2 + $0x198] sm:$0xff]
        %v1245 = vld [vmem:[#allocation2 + $0x1a0] sm:$0xff]
        %v1246 = vld [vmem:[#allocation2 + $0x1a8] sm:$0xff]
        %v1247 = vld [vmem:[#allocation2 + $0x1b0] sm:$0xff]
        %v1248 = vld [vmem:[#allocation2 + $0x1b8] sm:$0xff]
        %v1249 = vld [vmem:[#allocation2 + $0x1c0] sm:$0xff]
        %v1250 = vld [vmem:[#allocation2 + $0x1c8] sm:$0xff]
        %v1251 = vld [vmem:[#allocation2 + $0x1d0] sm:$0xff]
        %v1252 = vld [vmem:[#allocation2 + $0x1d8] sm:$0xff]
        %v1253 = vld [vmem:[#allocation2 + $0x1e0] sm:$0xff]
        %v1254 = vld [vmem:[#allocation2 + $0x1e8] sm:$0xff]
        %v1255 = vld [vmem:[#allocation2 + $0x1f0] sm:$0xff]
        %v1256 = vld [vmem:[#allocation2 + $0x1f8] sm:$0xff]
        %v1257 = vld [vmem:[#allocation2 + $0x200] sm:$0xff]
        %v1258 = vld [vmem:[#allocation2 + $0x208] sm:$0xff]
        %v1259 = vld [vmem:[#allocation2 + $0x210] sm:$0xff]
        %v1260 = vld [vmem:[#allocation2 + $0x218] sm:$0xff]
        %v1261 = vld [vmem:[#allocation2 + $0x220] sm:$0xff]
        %v1262 = vld [vmem:[#allocation2 + $0x228] sm:$0xff]
        %v1263 = vld [vmem:[#allocation2 + $0x230] sm:$0xff]
        %v1264 = vld [vmem:[#allocation2 + $0x238] sm:$0xff]
        %v1265 = vld [vmem:[#allocation2 + $0x240] sm:$0xff]
        %v1266 = vld [vmem:[#allocation2 + $0x248] sm:$0xff]
        %v1267 = vld [vmem:[#allocation2 + $0x250] sm:$0xff]
        %v1268 = vld [vmem:[#allocation2 + $0x258] sm:$0xff]
        %v1269 = vld [vmem:[#allocation2 + $0x260] sm:$0xff]
        %v1270 = vld [vmem:[#allocation2 + $0x268] sm:$0xff]
        %v1271 = vld [vmem:[#allocation2 + $0x270] sm:$0xff]
        %v1272 = vld [vmem:[#allocation2 + $0x278] sm:$0xff]
        %v1273 = vld [vmem:[#allocation2 + $0x280] sm:$0xff]
        %v1274 = vld [vmem:[#allocation2 + $0x288] sm:$0xff]
        %v1275 = vld [vmem:[#allocation2 + $0x290] sm:$0xff]
        %v1276 = vld [vmem:[#allocation2 + $0x298] sm:$0xff]
        %v1277 = vld [vmem:[#allocation2 + $0x2a0] sm:$0xff]
        %v1278 = vld [vmem:[#allocation2 + $0x2a8] sm:$0xff]
        %v1279 = vld [vmem:[#allocation2 + $0x2b0] sm:$0xff]
        %v1280 = vld [vmem:[#allocation2 + $0x2b8] sm:$0xff]
        %v1281 = vld [vmem:[#allocation2 + $0x2c0] sm:$0xff]
        %v1282 = vld [vmem:[#allocation2 + $0x2c8] sm:$0xff]
        %v1283 = vld [vmem:[#allocation2 + $0x2d0] sm:$0xff]
        %v1284 = vld [vmem:[#allocation2 + $0x2d8] sm:$0xff]
        %v1285 = vld [vmem:[#allocation2 + $0x2e0] sm:$0xff]
        %v1286 = vld [vmem:[#allocation2 + $0x2e8] sm:$0xff]
        %v1287 = vld [vmem:[#allocation2 + $0x2f0] sm:$0xff]
        %v1288 = vld [vmem:[#allocation2 + $0x2f8] sm:$0xff]
        %v1289 = vld [vmem:[#allocation7] sm:$0xf]
        %v1290 = vld [vmem:[#allocation7 + $0x4] sm:$0xf]
        %v1291 = vld [vmem:[#allocation7 + $0x8] sm:$0xf]
        %v1292 = vld [vmem:[#allocation7 + $0xc] sm:$0xf]
        %v1293 = vld [vmem:[#allocation7 + $0x10] sm:$0xf]
        %v1294 = vld [vmem:[#allocation7 + $0x14] sm:$0xf]
        %v1295 = vld [vmem:[#allocation7 + $0x18] sm:$0xf]
        %v1296 = vld [vmem:[#allocation7 + $0x1c] sm:$0xf]
        %v1297 = vld [vmem:[#allocation7 + $0x20] sm:$0xf]
        %v1298 = vld [vmem:[#allocation7 + $0x24] sm:$0xf]
        %v1299 = vld [vmem:[#allocation7 + $0x28] sm:$0xf]
        %v1300 = vld [vmem:[#allocation7 + $0x2c] sm:$0xf]
        %v1301 = vld [vmem:[#allocation7 + $0x30] sm:$0xf]
        %v1302 = vld [vmem:[#allocation7 + $0x34] sm:$0xf]
        %v1303 = vld [vmem:[#allocation7 + $0x38] sm:$0xf]
        %v1304 = vld [vmem:[#allocation7 + $0x3c] sm:$0xf]
        %v1305 = vld [vmem:[#allocation7 + $0x40] sm:$0xf]
        %v1306 = vld [vmem:[#allocation7 + $0x44] sm:$0xf]
        %v1307 = vld [vmem:[#allocation7 + $0x48] sm:$0xf]
        %v1308 = vld [vmem:[#allocation7 + $0x4c] sm:$0xf]
        %v1309 = vld [vmem:[#allocation7 + $0x50] sm:$0xf]
        %v1310 = vld [vmem:[#allocation7 + $0x54] sm:$0xf]
        %v1311 = vld [vmem:[#allocation7 + $0x58] sm:$0xf]
        %v1312 = vld [vmem:[#allocation7 + $0x5c] sm:$0xf]
        %v1313 = vld [vmem:[#allocation7 + $0x60] sm:$0xf]
        %v1314 = vld [vmem:[#allocation7 + $0x64] sm:$0xf]
        %v1315 = vld [vmem:[#allocation7 + $0x68] sm:$0xf]
        %v1316 = vld [vmem:[#allocation7 + $0x6c] sm:$0xf]
        %v1317 = vld [vmem:[#allocation7 + $0x70] sm:$0xf]
        %v1318 = vld [vmem:[#allocation7 + $0x74] sm:$0xf]
        %v1319 = vld [vmem:[#allocation7 + $0x78] sm:$0xf]
        %v1320 = vld [vmem:[#allocation7 + $0x7c] sm:$0xf]
        %v1321 = vld [vmem:[#allocation7 + $0x80] sm:$0xf]
        %v1322 = vld [vmem:[#allocation7 + $0x84] sm:$0xf]
        %v1323 = vld [vmem:[#allocation7 + $0x88] sm:$0xf]
        %v1324 = vld [vmem:[#allocation7 + $0x8c] sm:$0xf]
        %v1325 = vld [vmem:[#allocation7 + $0x90] sm:$0xf]
        %v1326 = vld [vmem:[#allocation7 + $0x94] sm:$0xf]
        %v1327 = vld [vmem:[#allocation7 + $0x98] sm:$0xf]
        %v1328 = vld [vmem:[#allocation7 + $0x9c] sm:$0xf]
        %v1329 = vld [vmem:[#allocation7 + $0xa0] sm:$0xf]
        %v1330 = vld [vmem:[#allocation7 + $0xa4] sm:$0xf]
        %v1331 = vld [vmem:[#allocation7 + $0xa8] sm:$0xf]
        %v1332 = vld [vmem:[#allocation7 + $0xac] sm:$0xf]
        %v1333 = vld [vmem:[#allocation7 + $0xb0] sm:$0xf]
        %v1334 = vld [vmem:[#allocation7 + $0xb4] sm:$0xf]
        %v1335 = vld [vmem:[#allocation7 + $0xb8] sm:$0xf]
        %v1336 = vld [vmem:[#allocation7 + $0xbc] sm:$0xf]
        %v1385 = vunpack.c.l.b16 %v1289
        %v1386 = vunpack.c.l.b16 %v1290
        %v1387 = vunpack.c.l.b16 %v1291
        %v1388 = vunpack.c.l.b16 %v1292
        %v1389 = vunpack.c.l.b16 %v1293
        %v1390 = vunpack.c.l.b16 %v1294
        %v1391 = vunpack.c.l.b16 %v1295
        %v1392 = vunpack.c.l.b16 %v1296
        %v1393 = vunpack.c.l.b16 %v1297
        %v1394 = vunpack.c.l.b16 %v1298
        %v1395 = vunpack.c.l.b16 %v1299
        %v1396 = vunpack.c.l.b16 %v1300
        %v1397 = vunpack.c.l.b16 %v1301
        %v1398 = vunpack.c.l.b16 %v1302
        %v1399 = vunpack.c.l.b16 %v1303
        %v1400 = vunpack.c.l.b16 %v1304
        %v1401 = vunpack.c.l.b16 %v1305
        %v1402 = vunpack.c.l.b16 %v1306
        %v1403 = vunpack.c.l.b16 %v1307
        %v1404 = vunpack.c.l.b16 %v1308
        %v1405 = vunpack.c.l.b16 %v1309
        %v1406 = vunpack.c.l.b16 %v1310
        %v1407 = vunpack.c.l.b16 %v1311
        %v1408 = vunpack.c.l.b16 %v1312
        %v1409 = vunpack.c.l.b16 %v1313
        %v1410 = vunpack.c.l.b16 %v1314
        %v1411 = vunpack.c.l.b16 %v1315
        %v1412 = vunpack.c.l.b16 %v1316
        %v1413 = vunpack.c.l.b16 %v1317
        %v1414 = vunpack.c.l.b16 %v1318
        %v1415 = vunpack.c.l.b16 %v1319
        %v1416 = vunpack.c.l.b16 %v1320
        %v1417 = vunpack.c.l.b16 %v1321
        %v1418 = vunpack.c.l.b16 %v1322
        %v1419 = vunpack.c.l.b16 %v1323
        %v1420 = vunpack.c.l.b16 %v1324
        %v1421 = vunpack.c.l.b16 %v1325
        %v1422 = vunpack.c.l.b16 %v1326
        %v1423 = vunpack.c.l.b16 %v1327
        %v1424 = vunpack.c.l.b16 %v1328
        %v1425 = vunpack.c.l.b16 %v1329
        %v1426 = vunpack.c.l.b16 %v1330
        %v1427 = vunpack.c.l.b16 %v1331
        %v1428 = vunpack.c.l.b16 %v1332
        %v1429 = vunpack.c.l.b16 %v1333
        %v1430 = vunpack.c.l.b16 %v1334
        %v1431 = vunpack.c.l.b16 %v1335
        %v1432 = vunpack.c.l.b16 %v1336
        %v1433 = vpack.c.b16 %v1386, %v1385
        %v1434 = vpack.c.b16 %v1388, %v1387
        %v1435 = vpack.c.b16 %v1390, %v1389
        %v1436 = vpack.c.b16 %v1392, %v1391
        %v1437 = vpack.c.b16 %v1394, %v1393
        %v1438 = vpack.c.b16 %v1396, %v1395
        %v1439 = vpack.c.b16 %v1398, %v1397
        %v1440 = vpack.c.b16 %v1400, %v1399
        %v1441 = vpack.c.b16 %v1402, %v1401
        %v1442 = vpack.c.b16 %v1404, %v1403
        %v1443 = vpack.c.b16 %v1406, %v1405
        %v1444 = vpack.c.b16 %v1408, %v1407
        %v1445 = vpack.c.b16 %v1410, %v1409
        %v1446 = vpack.c.b16 %v1412, %v1411
        %v1447 = vpack.c.b16 %v1414, %v1413
        %v1448 = vpack.c.b16 %v1416, %v1415
        %v1449 = vpack.c.b16 %v1418, %v1417
        %v1450 = vpack.c.b16 %v1420, %v1419
        %v1451 = vpack.c.b16 %v1422, %v1421
        %v1452 = vpack.c.b16 %v1424, %v1423
        %v1453 = vpack.c.b16 %v1426, %v1425
        %v1454 = vpack.c.b16 %v1428, %v1427
        %v1455 = vpack.c.b16 %v1430, %v1429
        %v1456 = vpack.c.b16 %v1432, %v1431
        %1481 = vmatprep.subr.bf16.mxu0 0
        %1482 = vmatpush1.bf16.msra.mxu0 %v1433
        %1483 = vmatprep.subr.bf16.mxu0 0
        %1484 = vmatpush1.bf16.msra.mxu0 %v1434
        %1485 = vmatprep.subr.bf16.mxu0 0
        %1486 = vmatpush1.bf16.msra.mxu0 %v1435
        %1487 = vmatprep.subr.bf16.mxu0 0
        %1488 = vmatpush1.bf16.msra.mxu0 %v1436
        %1489 = vmatprep.subr.bf16.mxu0 0
        %1490 = vmatpush1.bf16.msra.mxu0 %v1437
        %1491 = vmatprep.subr.bf16.mxu0 0
        %1492 = vmatpush1.bf16.msra.mxu0 %v1438
        %1493 = vmatprep.subr.bf16.mxu0 0
        %1494 = vmatpush1.bf16.msra.mxu0 %v1439
        %1495 = vmatprep.subr.bf16.mxu0 0
        %1496 = vmatpush1.bf16.msra.mxu0 %v1440
        %1497 = vmatprep.subr.bf16.mxu0 0
        %1498 = vmatpush1.bf16.msra.mxu0 %v1441
        %1499 = vmatprep.subr.bf16.mxu0 0
        %1500 = vmatpush1.bf16.msra.mxu0 %v1442
        %1501 = vmatprep.subr.bf16.mxu0 0
        %1502 = vmatpush1.bf16.msra.mxu0 %v1443
        %1503 = vmatprep.subr.bf16.mxu0 0
        %1504 = vmatpush1.bf16.msra.mxu0 %v1444
        %1505 = vmatprep.subr.bf16.mxu0 0
        %1506 = vmatpush1.bf16.msra.mxu0 %v1445
        %1507 = vmatprep.subr.bf16.mxu0 0
        %1508 = vmatpush1.bf16.msra.mxu0 %v1446
        %1509 = vmatprep.subr.bf16.mxu0 0
        %1510 = vmatpush1.bf16.msra.mxu0 %v1447
        %1511 = vmatprep.subr.bf16.mxu0 0
        %1512 = vmatpush1.bf16.msra.mxu0 %v1448
        %1513 = vmatprep.mubr.bf16.mxu0 %v1194
        %1514 = vmatmul.mubr.bf16.gmra.mrb[0].mxu0 %v1193
        %v1515 = vpop.f32.mrb[0].mxu0
        %v1516 = vadd.f32 0.0, %v1515
        %v1517 = vpop.f32.mrb[0].mxu0
        %v1518 = vpop.f32.mrb[0].mxu0
        %v1519 = vadd.f32 0.0, %v1518
        %v1520 = vpop.f32.mrb[0].mxu0
        %1521 = vmatprep.mubr.bf16.mxu0 %v1197
        %1522 = vmatmul.mubr.bf16.gmra.mrb[0].mxu0 %v1196
        %v1523 = vpop.f32.mrb[0].mxu0
        %v1524 = vadd.f32 0.0, %v1523
        %v1525 = vpop.f32.mrb[0].mxu0
        %v1526 = vpop.f32.mrb[0].mxu0
        %v1527 = vadd.f32 0.0, %v1526
        %v1528 = vpop.f32.mrb[0].mxu0
        %1529 = vmatprep.mubr.bf16.mxu0 %v1200
        %1530 = vmatmul.mubr.bf16.gmra.mrb[0].mxu0 %v1199
        %v1531 = vpop.f32.mrb[0].mxu0
        %v1532 = vadd.f32 0.0, %v1531
        %v1533 = vpop.f32.mrb[0].mxu0
        %v1534 = vpop.f32.mrb[0].mxu0
        %v1535 = vadd.f32 0.0, %v1534
        %v1536 = vpop.f32.mrb[0].mxu0
        %1537 = vmatprep.mubr.bf16.mxu0 %v1203
        %1538 = vmatmul.mubr.bf16.gmra.mrb[0].mxu0 %v1202
        %v1539 = vpop.f32.mrb[0].mxu0
        %v1540 = vadd.f32 0.0, %v1539
        %v1541 = vpop.f32.mrb[0].mxu0
        %v1542 = vpop.f32.mrb[0].mxu0
        %v1543 = vadd.f32 0.0, %v1542
        %v1544 = vpop.f32.mrb[0].mxu0
        %1545 = vmatprep.mubr.bf16.mxu0 %v1206
        %1546 = vmatmul.mubr.bf16.gmra.mrb[0].mxu0 %v1205
        %v1547 = vpop.f32.mrb[0].mxu0
        %v1548 = vadd.f32 0.0, %v1547
        %v1549 = vpop.f32.mrb[0].mxu0
        %v1550 = vpop.f32.mrb[0].mxu0
        %v1551 = vadd.f32 0.0, %v1550
        %v1552 = vpop.f32.mrb[0].mxu0
        %1553 = vmatprep.mubr.bf16.mxu0 %v1209
        %1554 = vmatmul.mubr.bf16.gmra.mrb[0].mxu0 %v1208
        %v1555 = vpop.f32.mrb[0].mxu0
        %v1556 = vadd.f32 0.0, %v1555
        %v1557 = vpop.f32.mrb[0].mxu0
        %v1558 = vpop.f32.mrb[0].mxu0
        %v1559 = vadd.f32 0.0, %v1558
        %v1560 = vpop.f32.mrb[0].mxu0
        %1561 = vmatprep.mubr.bf16.mxu0 %v1212
        %1562 = vmatmul.mubr.bf16.gmra.mrb[0].mxu0 %v1211
        %v1563 = vpop.f32.mrb[0].mxu0
        %v1564 = vadd.f32 0.0, %v1563
        %v1565 = vpop.f32.mrb[0].mxu0
        %v1566 = vpop.f32.mrb[0].mxu0
        %v1567 = vadd.f32 0.0, %v1566
        %v1568 = vpop.f32.mrb[0].mxu0
        %1569 = vmatprep.mubr.bf16.mxu0 %v1215
        %1570 = vmatmul.mubr.bf16.gmra.mrb[0].mxu0 %v1214
        %v1571 = vpop.f32.mrb[0].mxu0
        %v1572 = vadd.f32 0.0, %v1571
        %v1573 = vpop.f32.mrb[0].mxu0
        %v1574 = vpop.f32.mrb[0].mxu0
        %v1575 = vadd.f32 0.0, %v1574
        %v1576 = vpop.f32.mrb[0].mxu0
        %1577 = vmatprep.mubr.bf16.mxu0 %v1218
        %1578 = vmatmul.mubr.bf16.gmra.mrb[0].mxu0 %v1217
        %v1579 = vpop.f32.mrb[0].mxu0
        %v1580 = vadd.f32 0.0, %v1579
        %v1581 = vpop.f32.mrb[0].mxu0
        %v1582 = vpop.f32.mrb[0].mxu0
        %v1583 = vadd.f32 0.0, %v1582
        %v1584 = vpop.f32.mrb[0].mxu0
        %1585 = vmatprep.mubr.bf16.mxu0 %v1221
        %1586 = vmatmul.mubr.bf16.gmra.mrb[0].mxu0 %v1220
        %v1587 = vpop.f32.mrb[0].mxu0
        %v1588 = vadd.f32 0.0, %v1587
        %v1589 = vpop.f32.mrb[0].mxu0
        %v1590 = vpop.f32.mrb[0].mxu0
        %v1591 = vadd.f32 0.0, %v1590
        %v1592 = vpop.f32.mrb[0].mxu0
        %1593 = vmatprep.mubr.bf16.mxu0 %v1224
        %1594 = vmatmul.mubr.bf16.gmra.mrb[0].mxu0 %v1223
        %v1595 = vpop.f32.mrb[0].mxu0
        %v1596 = vadd.f32 0.0, %v1595
        %v1597 = vpop.f32.mrb[0].mxu0
        %v1598 = vpop.f32.mrb[0].mxu0
        %v1599 = vadd.f32 0.0, %v1598
        %v1600 = vpop.f32.mrb[0].mxu0
        %1601 = vmatprep.mubr.bf16.mxu0 %v1227
        %1602 = vmatmul.mubr.bf16.gmra.mrb[0].mxu0 %v1226
        %v1603 = vpop.f32.mrb[0].mxu0
        %v1604 = vadd.f32 0.0, %v1603
        %v1605 = vpop.f32.mrb[0].mxu0
        %v1606 = vpop.f32.mrb[0].mxu0
        %v1607 = vadd.f32 0.0, %v1606
        %v1608 = vpop.f32.mrb[0].mxu0
        %1609 = vmatprep.mubr.bf16.mxu0 %v1230
        %1610 = vmatmul.mubr.bf16.gmra.mrb[0].mxu0 %v1229
        %v1611 = vpop.f32.mrb[0].mxu0
        %v1612 = vadd.f32 0.0, %v1611
        %v1613 = vpop.f32.mrb[0].mxu0
        %v1614 = vpop.f32.mrb[0].mxu0
        %v1615 = vadd.f32 0.0, %v1614
        %v1616 = vpop.f32.mrb[0].mxu0
        %1617 = vmatprep.mubr.bf16.mxu0 %v1233
        %1618 = vmatmul.mubr.bf16.gmra.mrb[0].mxu0 %v1232
        %v1619 = vpop.f32.mrb[0].mxu0
        %v1620 = vadd.f32 0.0, %v1619
        %v1621 = vpop.f32.mrb[0].mxu0
        %v1622 = vpop.f32.mrb[0].mxu0
        %v1623 = vadd.f32 0.0, %v1622
        %v1624 = vpop.f32.mrb[0].mxu0
        %1625 = vmatprep.mubr.bf16.mxu0 %v1236
        %1626 = vmatmul.mubr.bf16.gmra.mrb[0].mxu0 %v1235
        %v1627 = vpop.f32.mrb[0].mxu0
        %v1628 = vadd.f32 0.0, %v1627
        %v1629 = vpop.f32.mrb[0].mxu0
        %v1630 = vpop.f32.mrb[0].mxu0
        %v1631 = vadd.f32 0.0, %v1630
        %v1632 = vpop.f32.mrb[0].mxu0
        %1633 = vmatprep.mubr.bf16.mxu0 %v1239
        %1634 = vmatmul.mubr.bf16.gmra.mrb[0].mxu0 %v1238
        %v1635 = vpop.f32.mrb[0].mxu0
        %v1636 = vadd.f32 0.0, %v1635
        %v1637 = vpop.f32.mrb[0].mxu0
        %v1638 = vpop.f32.mrb[0].mxu0
        %v1639 = vadd.f32 0.0, %v1638
        %v1640 = vpop.f32.mrb[0].mxu0
        %1641 = vmatprep.mubr.bf16.mxu0 %v1242
        %1642 = vmatmul.mubr.bf16.gmra.mrb[0].mxu0 %v1241
        %v1643 = vpop.f32.mrb[0].mxu0
        %v1644 = vadd.f32 0.0, %v1643
        %v1645 = vpop.f32.mrb[0].mxu0
        %v1646 = vpop.f32.mrb[0].mxu0
        %v1647 = vadd.f32 0.0, %v1646
        %v1648 = vpop.f32.mrb[0].mxu0
        %1649 = vmatprep.mubr.bf16.mxu0 %v1245
        %1650 = vmatmul.mubr.bf16.gmra.mrb[0].mxu0 %v1244
        %v1651 = vpop.f32.mrb[0].mxu0
        %v1652 = vadd.f32 0.0, %v1651
        %v1653 = vpop.f32.mrb[0].mxu0
        %v1654 = vpop.f32.mrb[0].mxu0
        %v1655 = vadd.f32 0.0, %v1654
        %v1656 = vpop.f32.mrb[0].mxu0
        %1657 = vmatprep.mubr.bf16.mxu0 %v1248
        %1658 = vmatmul.mubr.bf16.gmra.mrb[0].mxu0 %v1247
        %v1659 = vpop.f32.mrb[0].mxu0
        %v1660 = vadd.f32 0.0, %v1659
        %v1661 = vpop.f32.mrb[0].mxu0
        %v1662 = vpop.f32.mrb[0].mxu0
        %v1663 = vadd.f32 0.0, %v1662
        %v1664 = vpop.f32.mrb[0].mxu0
        %1665 = vmatprep.mubr.bf16.mxu0 %v1251
        %1666 = vmatmul.mubr.bf16.gmra.mrb[0].mxu0 %v1250
        %v1667 = vpop.f32.mrb[0].mxu0
        %v1668 = vadd.f32 0.0, %v1667
        %v1669 = vpop.f32.mrb[0].mxu0
        %v1670 = vpop.f32.mrb[0].mxu0
        %v1671 = vadd.f32 0.0, %v1670
        %v1672 = vpop.f32.mrb[0].mxu0
        %1673 = vmatprep.mubr.bf16.mxu0 %v1254
        %1674 = vmatmul.mubr.bf16.gmra.mrb[0].mxu0 %v1253
        %v1675 = vpop.f32.mrb[0].mxu0
        %v1676 = vadd.f32 0.0, %v1675
        %v1677 = vpop.f32.mrb[0].mxu0
        %v1678 = vpop.f32.mrb[0].mxu0
        %v1679 = vadd.f32 0.0, %v1678
        %v1680 = vpop.f32.mrb[0].mxu0
        %1681 = vmatprep.mubr.bf16.mxu0 %v1257
        %1682 = vmatmul.mubr.bf16.gmra.mrb[0].mxu0 %v1256
        %v1683 = vpop.f32.mrb[0].mxu0
        %v1684 = vadd.f32 0.0, %v1683
        %v1685 = vpop.f32.mrb[0].mxu0
        %v1686 = vpop.f32.mrb[0].mxu0
        %v1687 = vadd.f32 0.0, %v1686
        %v1688 = vpop.f32.mrb[0].mxu0
        %1689 = vmatprep.mubr.bf16.mxu0 %v1260
        %1690 = vmatmul.mubr.bf16.gmra.mrb[0].mxu0 %v1259
        %v1691 = vpop.f32.mrb[0].mxu0
        %v1692 = vadd.f32 0.0, %v1691
        %v1693 = vpop.f32.mrb[0].mxu0
        %v1694 = vpop.f32.mrb[0].mxu0
        %v1695 = vadd.f32 0.0, %v1694
        %v1696 = vpop.f32.mrb[0].mxu0
        %1697 = vmatprep.mubr.bf16.mxu0 %v1263
        %1698 = vmatmul.mubr.bf16.gmra.mrb[0].mxu0 %v1262
        %v1699 = vpop.f32.mrb[0].mxu0
        %v1700 = vadd.f32 0.0, %v1699
        %v1701 = vpop.f32.mrb[0].mxu0
        %v1702 = vpop.f32.mrb[0].mxu0
        %v1703 = vadd.f32 0.0, %v1702
        %v1704 = vpop.f32.mrb[0].mxu0
        %1705 = vmatprep.mubr.bf16.mxu0 %v1266
        %1706 = vmatmul.mubr.bf16.gmra.mrb[0].mxu0 %v1265
        %v1707 = vpop.f32.mrb[0].mxu0
        %v1708 = vadd.f32 0.0, %v1707
        %v1709 = vpop.f32.mrb[0].mxu0
        %v1710 = vpop.f32.mrb[0].mxu0
        %v1711 = vadd.f32 0.0, %v1710
        %v1712 = vpop.f32.mrb[0].mxu0
        %1713 = vmatprep.mubr.bf16.mxu0 %v1269
        %1714 = vmatmul.mubr.bf16.gmra.mrb[0].mxu0 %v1268
        %v1715 = vpop.f32.mrb[0].mxu0
        %v1716 = vadd.f32 0.0, %v1715
        %v1717 = vpop.f32.mrb[0].mxu0
        %v1718 = vpop.f32.mrb[0].mxu0
        %v1719 = vadd.f32 0.0, %v1718
        %v1720 = vpop.f32.mrb[0].mxu0
        %1721 = vmatprep.mubr.bf16.mxu0 %v1272
        %1722 = vmatmul.mubr.bf16.gmra.mrb[0].mxu0 %v1271
        %v1723 = vpop.f32.mrb[0].mxu0
        %v1724 = vadd.f32 0.0, %v1723
        %v1725 = vpop.f32.mrb[0].mxu0
        %v1726 = vpop.f32.mrb[0].mxu0
        %v1727 = vadd.f32 0.0, %v1726
        %v1728 = vpop.f32.mrb[0].mxu0
        %1729 = vmatprep.mubr.bf16.mxu0 %v1275
        %1730 = vmatmul.mubr.bf16.gmra.mrb[0].mxu0 %v1274
        %v1731 = vpop.f32.mrb[0].mxu0
        %v1732 = vadd.f32 0.0, %v1731
        %v1733 = vpop.f32.mrb[0].mxu0
        %v1734 = vpop.f32.mrb[0].mxu0
        %v1735 = vadd.f32 0.0, %v1734
        %v1736 = vpop.f32.mrb[0].mxu0
        %1737 = vmatprep.mubr.bf16.mxu0 %v1278
        %1738 = vmatmul.mubr.bf16.gmra.mrb[0].mxu0 %v1277
        %v1739 = vpop.f32.mrb[0].mxu0
        %v1740 = vadd.f32 0.0, %v1739
        %v1741 = vpop.f32.mrb[0].mxu0
        %v1742 = vpop.f32.mrb[0].mxu0
        %v1743 = vadd.f32 0.0, %v1742
        %v1744 = vpop.f32.mrb[0].mxu0
        %1745 = vmatprep.mubr.bf16.mxu0 %v1281
        %1746 = vmatmul.mubr.bf16.gmra.mrb[0].mxu0 %v1280
        %v1747 = vpop.f32.mrb[0].mxu0
        %v1748 = vadd.f32 0.0, %v1747
        %v1749 = vpop.f32.mrb[0].mxu0
        %v1750 = vpop.f32.mrb[0].mxu0
        %v1751 = vadd.f32 0.0, %v1750
        %v1752 = vpop.f32.mrb[0].mxu0
        %1753 = vmatprep.mubr.bf16.mxu0 %v1284
        %1754 = vmatmul.mubr.bf16.gmra.mrb[0].mxu0 %v1283
        %v1755 = vpop.f32.mrb[0].mxu0
        %v1756 = vadd.f32 0.0, %v1755
        %v1757 = vpop.f32.mrb[0].mxu0
        %v1758 = vpop.f32.mrb[0].mxu0
        %v1759 = vadd.f32 0.0, %v1758
        %v1760 = vpop.f32.mrb[0].mxu0
        %1761 = vmatprep.mubr.bf16.mxu0 %v1287
        %1762 = vmatmul.mubr.bf16.gmra.mrb[0].mxu0 %v1286
        %v1763 = vpop.f32.mrb[0].mxu0
        %v1764 = vadd.f32 0.0, %v1763
        %v1765 = vpop.f32.mrb[0].mxu0
        %v1766 = vpop.f32.mrb[0].mxu0
        %v1767 = vadd.f32 0.0, %v1766
        %v1768 = vpop.f32.mrb[0].mxu0
        %1769 = vdwg.mxu0
        %1770 = vmatprep.subr.bf16.mxu0 0
        %1771 = vmatpush1.bf16.msra.mxu0 %v1449
        %1772 = vmatprep.subr.bf16.mxu0 0
        %1773 = vmatpush1.bf16.msra.mxu0 %v1450
        %1774 = vmatprep.subr.bf16.mxu0 0
        %1775 = vmatpush1.bf16.msra.mxu0 %v1451
        %1776 = vmatprep.subr.bf16.mxu0 0
        %1777 = vmatpush1.bf16.msra.mxu0 %v1452
        %1778 = vmatprep.subr.bf16.mxu0 0
        %1779 = vmatpush1.bf16.msra.mxu0 %v1453
        %1780 = vmatprep.subr.bf16.mxu0 0
        %1781 = vmatpush1.bf16.msra.mxu0 %v1454
        %1782 = vmatprep.subr.bf16.mxu0 0
        %1783 = vmatpush1.bf16.msra.mxu0 %v1455
        %1784 = vmatprep.subr.bf16.mxu0 0
        %1785 = vmatpush1.bf16.msra.mxu0 %v1456
        %1786 = vmatprep.subr.bf16.mxu0 0
        %1787 = vmatpush1.bf16.msra.mxu0 0
        %1788 = vmatprep.subr.bf16.mxu0 0
        %1789 = vmatpush1.bf16.msra.mxu0 0
        %1790 = vmatprep.subr.bf16.mxu0 0
        %1791 = vmatpush1.bf16.msra.mxu0 0
        %1792 = vmatprep.subr.bf16.mxu0 0
        %1793 = vmatpush1.bf16.msra.mxu0 0
        %1794 = vmatprep.subr.bf16.mxu0 0
        %1795 = vmatpush1.bf16.msra.mxu0 0
        %1796 = vmatprep.subr.bf16.mxu0 0
        %1797 = vmatpush1.bf16.msra.mxu0 0
        %1798 = vmatprep.subr.bf16.mxu0 0
        %1799 = vmatpush1.bf16.msra.mxu0 0
        %1800 = vmatprep.subr.bf16.mxu0 0
        %1801 = vmatpush1.bf16.msra.mxu0 0
        %1802 = vmatprep.mubr.bf16.mxu0 0
        %1803 = vmatmul.mubr.bf16.gmra.mrb[0].mxu0 %v1195
        %v1804 = vpop.f32.mrb[0].mxu0
        %v1805 = vadd.f32 %v1516, %v1804
        %v1806 = vpop.f32.mrb[0].mxu0
        %v1807 = vpop.f32.mrb[0].mxu0
        %v1808 = vadd.f32 %v1519, %v1807
        %v1809 = vpop.f32.mrb[0].mxu0
        %1810 = vmatprep.mubr.bf16.mxu0 0
        %1811 = vmatmul.mubr.bf16.gmra.mrb[0].mxu0 %v1198
        %v1812 = vpop.f32.mrb[0].mxu0
        %v1813 = vadd.f32 %v1524, %v1812
        %v1814 = vpop.f32.mrb[0].mxu0
        %v1815 = vpop.f32.mrb[0].mxu0
        %v1816 = vadd.f32 %v1527, %v1815
        %v1817 = vpop.f32.mrb[0].mxu0
        %1818 = vmatprep.mubr.bf16.mxu0 0
        %1819 = vmatmul.mubr.bf16.gmra.mrb[0].mxu0 %v1201
        %v1820 = vpop.f32.mrb[0].mxu0
        %v1821 = vadd.f32 %v1532, %v1820
        %v1822 = vpop.f32.mrb[0].mxu0
        %v1823 = vpop.f32.mrb[0].mxu0
        %v1824 = vadd.f32 %v1535, %v1823
        %v1825 = vpop.f32.mrb[0].mxu0
        %1826 = vmatprep.mubr.bf16.mxu0 0
        %1827 = vmatmul.mubr.bf16.gmra.mrb[0].mxu0 %v1204
        %v1828 = vpop.f32.mrb[0].mxu0
        %v1829 = vadd.f32 %v1540, %v1828
        %v1830 = vpop.f32.mrb[0].mxu0
        %v1831 = vpop.f32.mrb[0].mxu0
        %v1832 = vadd.f32 %v1543, %v1831
        %v1833 = vpop.f32.mrb[0].mxu0
        %1834 = vmatprep.mubr.bf16.mxu0 0
        %1835 = vmatmul.mubr.bf16.gmra.mrb[0].mxu0 %v1207
        %v1836 = vpop.f32.mrb[0].mxu0
        %v1837 = vadd.f32 %v1548, %v1836
        %v1838 = vpop.f32.mrb[0].mxu0
        %v1839 = vpop.f32.mrb[0].mxu0
        %v1840 = vadd.f32 %v1551, %v1839
        %v1841 = vpop.f32.mrb[0].mxu0
        %1842 = vmatprep.mubr.bf16.mxu0 0
        %1843 = vmatmul.mubr.bf16.gmra.mrb[0].mxu0 %v1210
        %v1844 = vpop.f32.mrb[0].mxu0
        %v1845 = vadd.f32 %v1556, %v1844
        %v1846 = vpop.f32.mrb[0].mxu0
        %v1847 = vpop.f32.mrb[0].mxu0
        %v1848 = vadd.f32 %v1559, %v1847
        %v1849 = vpop.f32.mrb[0].mxu0
        %1850 = vmatprep.mubr.bf16.mxu0 0
        %1851 = vmatmul.mubr.bf16.gmra.mrb[0].mxu0 %v1213
        %v1852 = vpop.f32.mrb[0].mxu0
        %v1853 = vadd.f32 %v1564, %v1852
        %v1854 = vpop.f32.mrb[0].mxu0
        %v1855 = vpop.f32.mrb[0].mxu0
        %v1856 = vadd.f32 %v1567, %v1855
        %v1857 = vpop.f32.mrb[0].mxu0
        %1858 = vmatprep.mubr.bf16.mxu0 0
        %1859 = vmatmul.mubr.bf16.gmra.mrb[0].mxu0 %v1216
        %v1860 = vpop.f32.mrb[0].mxu0
        %v1861 = vadd.f32 %v1572, %v1860
        %v1862 = vpop.f32.mrb[0].mxu0
        %v1863 = vpop.f32.mrb[0].mxu0
        %v1864 = vadd.f32 %v1575, %v1863
        %v1865 = vpop.f32.mrb[0].mxu0
        %1866 = vmatprep.mubr.bf16.mxu0 0
        %1867 = vmatmul.mubr.bf16.gmra.mrb[0].mxu0 %v1219
        %v1868 = vpop.f32.mrb[0].mxu0
        %v1869 = vadd.f32 %v1580, %v1868
        %v1870 = vpop.f32.mrb[0].mxu0
        %v1871 = vpop.f32.mrb[0].mxu0
        %v1872 = vadd.f32 %v1583, %v1871
        %v1873 = vpop.f32.mrb[0].mxu0
        %1874 = vmatprep.mubr.bf16.mxu0 0
        %1875 = vmatmul.mubr.bf16.gmra.mrb[0].mxu0 %v1222
        %v1876 = vpop.f32.mrb[0].mxu0
        %v1877 = vadd.f32 %v1588, %v1876
        %v1878 = vpop.f32.mrb[0].mxu0
        %v1879 = vpop.f32.mrb[0].mxu0
        %v1880 = vadd.f32 %v1591, %v1879
        %v1881 = vpop.f32.mrb[0].mxu0
        %1882 = vmatprep.mubr.bf16.mxu0 0
        %1883 = vmatmul.mubr.bf16.gmra.mrb[0].mxu0 %v1225
        %v1884 = vpop.f32.mrb[0].mxu0
        %v1885 = vadd.f32 %v1596, %v1884
        %v1886 = vpop.f32.mrb[0].mxu0
        %v1887 = vpop.f32.mrb[0].mxu0
        %v1888 = vadd.f32 %v1599, %v1887
        %v1889 = vpop.f32.mrb[0].mxu0
        %1890 = vmatprep.mubr.bf16.mxu0 0
        %1891 = vmatmul.mubr.bf16.gmra.mrb[0].mxu0 %v1228
        %v1892 = vpop.f32.mrb[0].mxu0
        %v1893 = vadd.f32 %v1604, %v1892
        %v1894 = vpop.f32.mrb[0].mxu0
        %v1895 = vpop.f32.mrb[0].mxu0
        %v1896 = vadd.f32 %v1607, %v1895
        %v1897 = vpop.f32.mrb[0].mxu0
        %1898 = vmatprep.mubr.bf16.mxu0 0
        %1899 = vmatmul.mubr.bf16.gmra.mrb[0].mxu0 %v1231
        %v1900 = vpop.f32.mrb[0].mxu0
        %v1901 = vadd.f32 %v1612, %v1900
        %v1902 = vpop.f32.mrb[0].mxu0
        %v1903 = vpop.f32.mrb[0].mxu0
        %v1904 = vadd.f32 %v1615, %v1903
        %v1905 = vpop.f32.mrb[0].mxu0
        %1906 = vmatprep.mubr.bf16.mxu0 0
        %1907 = vmatmul.mubr.bf16.gmra.mrb[0].mxu0 %v1234
        %v1908 = vpop.f32.mrb[0].mxu0
        %v1909 = vadd.f32 %v1620, %v1908
        %v1910 = vpop.f32.mrb[0].mxu0
        %v1911 = vpop.f32.mrb[0].mxu0
        %v1912 = vadd.f32 %v1623, %v1911
        %v1913 = vpop.f32.mrb[0].mxu0
        %1914 = vmatprep.mubr.bf16.mxu0 0
        %1915 = vmatmul.mubr.bf16.gmra.mrb[0].mxu0 %v1237
        %v1916 = vpop.f32.mrb[0].mxu0
        %v1917 = vadd.f32 %v1628, %v1916
        %v1918 = vpop.f32.mrb[0].mxu0
        %v1919 = vpop.f32.mrb[0].mxu0
        %v1920 = vadd.f32 %v1631, %v1919
        %v1921 = vpop.f32.mrb[0].mxu0
        %1922 = vmatprep.mubr.bf16.mxu0 0
        %1923 = vmatmul.mubr.bf16.gmra.mrb[0].mxu0 %v1240
        %v1924 = vpop.f32.mrb[0].mxu0
        %v1925 = vadd.f32 %v1636, %v1924
        %v1926 = vpop.f32.mrb[0].mxu0
        %v1927 = vpop.f32.mrb[0].mxu0
        %v1928 = vadd.f32 %v1639, %v1927
        %v1929 = vpop.f32.mrb[0].mxu0
        %1930 = vmatprep.mubr.bf16.mxu0 0
        %1931 = vmatmul.mubr.bf16.gmra.mrb[0].mxu0 %v1243
        %v1932 = vpop.f32.mrb[0].mxu0
        %v1933 = vadd.f32 %v1644, %v1932
        %v1934 = vpop.f32.mrb[0].mxu0
        %v1935 = vpop.f32.mrb[0].mxu0
        %v1936 = vadd.f32 %v1647, %v1935
        %v1937 = vpop.f32.mrb[0].mxu0
        %1938 = vmatprep.mubr.bf16.mxu0 0
        %1939 = vmatmul.mubr.bf16.gmra.mrb[0].mxu0 %v1246
        %v1940 = vpop.f32.mrb[0].mxu0
        %v1941 = vadd.f32 %v1652, %v1940
        %v1942 = vpop.f32.mrb[0].mxu0
        %v1943 = vpop.f32.mrb[0].mxu0
        %v1944 = vadd.f32 %v1655, %v1943
        %v1945 = vpop.f32.mrb[0].mxu0
        %1946 = vmatprep.mubr.bf16.mxu0 0
        %1947 = vmatmul.mubr.bf16.gmra.mrb[0].mxu0 %v1249
        %v1948 = vpop.f32.mrb[0].mxu0
        %v1949 = vadd.f32 %v1660, %v1948
        %v1950 = vpop.f32.mrb[0].mxu0
        %v1951 = vpop.f32.mrb[0].mxu0
        %v1952 = vadd.f32 %v1663, %v1951
        %v1953 = vpop.f32.mrb[0].mxu0
        %1954 = vmatprep.mubr.bf16.mxu0 0
        %1955 = vmatmul.mubr.bf16.gmra.mrb[0].mxu0 %v1252
        %v1956 = vpop.f32.mrb[0].mxu0
        %v1957 = vadd.f32 %v1668, %v1956
        %v1958 = vpop.f32.mrb[0].mxu0
        %v1959 = vpop.f32.mrb[0].mxu0
        %v1960 = vadd.f32 %v1671, %v1959
        %v1961 = vpop.f32.mrb[0].mxu0
        %1962 = vmatprep.mubr.bf16.mxu0 0
        %1963 = vmatmul.mubr.bf16.gmra.mrb[0].mxu0 %v1255
        %v1964 = vpop.f32.mrb[0].mxu0
        %v1965 = vadd.f32 %v1676, %v1964
        %v1966 = vpop.f32.mrb[0].mxu0
        %v1967 = vpop.f32.mrb[0].mxu0
        %v1968 = vadd.f32 %v1679, %v1967
        %v1969 = vpop.f32.mrb[0].mxu0
        %1970 = vmatprep.mubr.bf16.mxu0 0
        %1971 = vmatmul.mubr.bf16.gmra.mrb[0].mxu0 %v1258
        %v1972 = vpop.f32.mrb[0].mxu0
        %v1973 = vadd.f32 %v1684, %v1972
        %v1974 = vpop.f32.mrb[0].mxu0
        %v1975 = vpop.f32.mrb[0].mxu0
        %v1976 = vadd.f32 %v1687, %v1975
        %v1977 = vpop.f32.mrb[0].mxu0
        %1978 = vmatprep.mubr.bf16.mxu0 0
        %1979 = vmatmul.mubr.bf16.gmra.mrb[0].mxu0 %v1261
        %v1980 = vpop.f32.mrb[0].mxu0
        %v1981 = vadd.f32 %v1692, %v1980
        %v1982 = vpop.f32.mrb[0].mxu0
        %v1983 = vpop.f32.mrb[0].mxu0
        %v1984 = vadd.f32 %v1695, %v1983
        %v1985 = vpop.f32.mrb[0].mxu0
        %1986 = vmatprep.mubr.bf16.mxu0 0
        %1987 = vmatmul.mubr.bf16.gmra.mrb[0].mxu0 %v1264
        %v1988 = vpop.f32.mrb[0].mxu0
        %v1989 = vadd.f32 %v1700, %v1988
        %v1990 = vpop.f32.mrb[0].mxu0
        %v1991 = vpop.f32.mrb[0].mxu0
        %v1992 = vadd.f32 %v1703, %v1991
        %v1993 = vpop.f32.mrb[0].mxu0
        %1994 = vmatprep.mubr.bf16.mxu0 0
        %1995 = vmatmul.mubr.bf16.gmra.mrb[0].mxu0 %v1267
        %v1996 = vpop.f32.mrb[0].mxu0
        %v1997 = vadd.f32 %v1708, %v1996
        %v1998 = vpop.f32.mrb[0].mxu0
        %v1999 = vpop.f32.mrb[0].mxu0
        %v2000 = vadd.f32 %v1711, %v1999
        %v2001 = vpop.f32.mrb[0].mxu0
        %2002 = vmatprep.mubr.bf16.mxu0 0
        %2003 = vmatmul.mubr.bf16.gmra.mrb[0].mxu0 %v1270
        %v2004 = vpop.f32.mrb[0].mxu0
        %v2005 = vadd.f32 %v1716, %v2004
        %v2006 = vpop.f32.mrb[0].mxu0
        %v2007 = vpop.f32.mrb[0].mxu0
        %v2008 = vadd.f32 %v1719, %v2007
        %v2009 = vpop.f32.mrb[0].mxu0
        %2010 = vmatprep.mubr.bf16.mxu0 0
        %2011 = vmatmul.mubr.bf16.gmra.mrb[0].mxu0 %v1273
        %v2012 = vpop.f32.mrb[0].mxu0
        %v2013 = vadd.f32 %v1724, %v2012
        %v2014 = vpop.f32.mrb[0].mxu0
        %v2015 = vpop.f32.mrb[0].mxu0
        %v2016 = vadd.f32 %v1727, %v2015
        %v2017 = vpop.f32.mrb[0].mxu0
        %2018 = vmatprep.mubr.bf16.mxu0 0
        %2019 = vmatmul.mubr.bf16.gmra.mrb[0].mxu0 %v1276
        %v2020 = vpop.f32.mrb[0].mxu0
        %v2021 = vadd.f32 %v1732, %v2020
        %v2022 = vpop.f32.mrb[0].mxu0
        %v2023 = vpop.f32.mrb[0].mxu0
        %v2024 = vadd.f32 %v1735, %v2023
        %v2025 = vpop.f32.mrb[0].mxu0
        %2026 = vmatprep.mubr.bf16.mxu0 0
        %2027 = vmatmul.mubr.bf16.gmra.mrb[0].mxu0 %v1279
        %v2028 = vpop.f32.mrb[0].mxu0
        %v2029 = vadd.f32 %v1740, %v2028
        %v2030 = vpop.f32.mrb[0].mxu0
        %v2031 = vpop.f32.mrb[0].mxu0
        %v2032 = vadd.f32 %v1743, %v2031
        %v2033 = vpop.f32.mrb[0].mxu0
        %2034 = vmatprep.mubr.bf16.mxu0 0
        %2035 = vmatmul.mubr.bf16.gmra.mrb[0].mxu0 %v1282
        %v2036 = vpop.f32.mrb[0].mxu0
        %v2037 = vadd.f32 %v1748, %v2036
        %v2038 = vpop.f32.mrb[0].mxu0
        %v2039 = vpop.f32.mrb[0].mxu0
        %v2040 = vadd.f32 %v1751, %v2039
        %v2041 = vpop.f32.mrb[0].mxu0
        %2042 = vmatprep.mubr.bf16.mxu0 0
        %2043 = vmatmul.mubr.bf16.gmra.mrb[0].mxu0 %v1285
        %v2044 = vpop.f32.mrb[0].mxu0
        %v2045 = vadd.f32 %v1756, %v2044
        %v2046 = vpop.f32.mrb[0].mxu0
        %v2047 = vpop.f32.mrb[0].mxu0
        %v2048 = vadd.f32 %v1759, %v2047
        %v2049 = vpop.f32.mrb[0].mxu0
        %2050 = vmatprep.mubr.bf16.mxu0 0
        %2051 = vmatmul.mubr.bf16.gmra.mrb[0].mxu0 %v1288
        %v2052 = vpop.f32.mrb[0].mxu0
        %v2053 = vadd.f32 %v1764, %v2052
        %v2054 = vpop.f32.mrb[0].mxu0
        %v2055 = vpop.f32.mrb[0].mxu0
        %v2056 = vadd.f32 %v1767, %v2055
        %v2057 = vpop.f32.mrb[0].mxu0
        %2058 = vdwg.mxu0
        %s2059 = scalar_lea.vmem [#allocation7], 192
        %v2060 = vld [vmem:[%s2059] sm:$0xf]
        %v2061 = vld [vmem:[%s2059 + $0x4] sm:$0xf]
        %v2062 = vld [vmem:[%s2059 + $0x8] sm:$0xf]
        %v2063 = vld [vmem:[%s2059 + $0xc] sm:$0xf]
        %v2064 = vld [vmem:[%s2059 + $0x10] sm:$0xf]
        %v2065 = vld [vmem:[%s2059 + $0x14] sm:$0xf]
        %v2066 = vld [vmem:[%s2059 + $0x18] sm:$0xf]
        %v2067 = vld [vmem:[%s2059 + $0x1c] sm:$0xf]
        %v2068 = vld [vmem:[%s2059 + $0x20] sm:$0xf]
        %v2069 = vld [vmem:[%s2059 + $0x24] sm:$0xf]
        %v2070 = vld [vmem:[%s2059 + $0x28] sm:$0xf]
        %v2071 = vld [vmem:[%s2059 + $0x2c] sm:$0xf]
        %v2072 = vld [vmem:[%s2059 + $0x30] sm:$0xf]
        %v2073 = vld [vmem:[%s2059 + $0x34] sm:$0xf]
        %v2074 = vld [vmem:[%s2059 + $0x38] sm:$0xf]
        %v2075 = vld [vmem:[%s2059 + $0x3c] sm:$0xf]
        %v2076 = vld [vmem:[%s2059 + $0x40] sm:$0xf]
        %v2077 = vld [vmem:[%s2059 + $0x44] sm:$0xf]
        %v2078 = vld [vmem:[%s2059 + $0x48] sm:$0xf]
        %v2079 = vld [vmem:[%s2059 + $0x4c] sm:$0xf]
        %v2080 = vld [vmem:[%s2059 + $0x50] sm:$0xf]
        %v2081 = vld [vmem:[%s2059 + $0x54] sm:$0xf]
        %v2082 = vld [vmem:[%s2059 + $0x58] sm:$0xf]
        %v2083 = vld [vmem:[%s2059 + $0x5c] sm:$0xf]
        %v2084 = vld [vmem:[%s2059 + $0x60] sm:$0xf]
        %v2085 = vld [vmem:[%s2059 + $0x64] sm:$0xf]
        %v2086 = vld [vmem:[%s2059 + $0x68] sm:$0xf]
        %v2087 = vld [vmem:[%s2059 + $0x6c] sm:$0xf]
        %v2088 = vld [vmem:[%s2059 + $0x70] sm:$0xf]
        %v2089 = vld [vmem:[%s2059 + $0x74] sm:$0xf]
        %v2090 = vld [vmem:[%s2059 + $0x78] sm:$0xf]
        %v2091 = vld [vmem:[%s2059 + $0x7c] sm:$0xf]
        %v2092 = vld [vmem:[%s2059 + $0x80] sm:$0xf]
        %v2093 = vld [vmem:[%s2059 + $0x84] sm:$0xf]
        %v2094 = vld [vmem:[%s2059 + $0x88] sm:$0xf]
        %v2095 = vld [vmem:[%s2059 + $0x8c] sm:$0xf]
        %v2096 = vld [vmem:[%s2059 + $0x90] sm:$0xf]
        %v2097 = vld [vmem:[%s2059 + $0x94] sm:$0xf]
        %v2098 = vld [vmem:[%s2059 + $0x98] sm:$0xf]
        %v2099 = vld [vmem:[%s2059 + $0x9c] sm:$0xf]
        %v2100 = vld [vmem:[%s2059 + $0xa0] sm:$0xf]
        %v2101 = vld [vmem:[%s2059 + $0xa4] sm:$0xf]
        %v2102 = vld [vmem:[%s2059 + $0xa8] sm:$0xf]
        %v2103 = vld [vmem:[%s2059 + $0xac] sm:$0xf]
        %v2104 = vld [vmem:[%s2059 + $0xb0] sm:$0xf]
        %v2105 = vld [vmem:[%s2059 + $0xb4] sm:$0xf]
        %v2106 = vld [vmem:[%s2059 + $0xb8] sm:$0xf]
        %v2107 = vld [vmem:[%s2059 + $0xbc] sm:$0xf]
        %v2156 = vunpack.c.l.b16 %v2060
        %v2157 = vunpack.c.l.b16 %v2061
        %v2158 = vunpack.c.l.b16 %v2062
        %v2159 = vunpack.c.l.b16 %v2063
        %v2160 = vunpack.c.l.b16 %v2064
        %v2161 = vunpack.c.l.b16 %v2065
        %v2162 = vunpack.c.l.b16 %v2066
        %v2163 = vunpack.c.l.b16 %v2067
        %v2164 = vunpack.c.l.b16 %v2068
        %v2165 = vunpack.c.l.b16 %v2069
        %v2166 = vunpack.c.l.b16 %v2070
        %v2167 = vunpack.c.l.b16 %v2071
        %v2168 = vunpack.c.l.b16 %v2072
        %v2169 = vunpack.c.l.b16 %v2073
        %v2170 = vunpack.c.l.b16 %v2074
        %v2171 = vunpack.c.l.b16 %v2075
        %v2172 = vunpack.c.l.b16 %v2076
        %v2173 = vunpack.c.l.b16 %v2077
        %v2174 = vunpack.c.l.b16 %v2078
        %v2175 = vunpack.c.l.b16 %v2079
        %v2176 = vunpack.c.l.b16 %v2080
        %v2177 = vunpack.c.l.b16 %v2081
        %v2178 = vunpack.c.l.b16 %v2082
        %v2179 = vunpack.c.l.b16 %v2083
        %v2180 = vunpack.c.l.b16 %v2084
        %v2181 = vunpack.c.l.b16 %v2085
        %v2182 = vunpack.c.l.b16 %v2086
        %v2183 = vunpack.c.l.b16 %v2087
        %v2184 = vunpack.c.l.b16 %v2088
        %v2185 = vunpack.c.l.b16 %v2089
        %v2186 = vunpack.c.l.b16 %v2090
        %v2187 = vunpack.c.l.b16 %v2091
        %v2188 = vunpack.c.l.b16 %v2092
        %v2189 = vunpack.c.l.b16 %v2093
        %v2190 = vunpack.c.l.b16 %v2094
        %v2191 = vunpack.c.l.b16 %v2095
        %v2192 = vunpack.c.l.b16 %v2096
        %v2193 = vunpack.c.l.b16 %v2097
        %v2194 = vunpack.c.l.b16 %v2098
        %v2195 = vunpack.c.l.b16 %v2099
        %v2196 = vunpack.c.l.b16 %v2100
        %v2197 = vunpack.c.l.b16 %v2101
        %v2198 = vunpack.c.l.b16 %v2102
        %v2199 = vunpack.c.l.b16 %v2103
        %v2200 = vunpack.c.l.b16 %v2104
        %v2201 = vunpack.c.l.b16 %v2105
        %v2202 = vunpack.c.l.b16 %v2106
        %v2203 = vunpack.c.l.b16 %v2107
        %v2204 = vpack.c.b16 %v2157, %v2156
        %v2205 = vpack.c.b16 %v2159, %v2158
        %v2206 = vpack.c.b16 %v2161, %v2160
        %v2207 = vpack.c.b16 %v2163, %v2162
        %v2208 = vpack.c.b16 %v2165, %v2164
        %v2209 = vpack.c.b16 %v2167, %v2166
        %v2210 = vpack.c.b16 %v2169, %v2168
        %v2211 = vpack.c.b16 %v2171, %v2170
        %v2212 = vpack.c.b16 %v2173, %v2172
        %v2213 = vpack.c.b16 %v2175, %v2174
        %v2214 = vpack.c.b16 %v2177, %v2176
        %v2215 = vpack.c.b16 %v2179, %v2178
        %v2216 = vpack.c.b16 %v2181, %v2180
        %v2217 = vpack.c.b16 %v2183, %v2182
        %v2218 = vpack.c.b16 %v2185, %v2184
        %v2219 = vpack.c.b16 %v2187, %v2186
        %v2220 = vpack.c.b16 %v2189, %v2188
        %v2221 = vpack.c.b16 %v2191, %v2190
        %v2222 = vpack.c.b16 %v2193, %v2192
        %v2223 = vpack.c.b16 %v2195, %v2194
        %v2224 = vpack.c.b16 %v2197, %v2196
        %v2225 = vpack.c.b16 %v2199, %v2198
        %v2226 = vpack.c.b16 %v2201, %v2200
        %v2227 = vpack.c.b16 %v2203, %v2202
        %2252 = vmatprep.subr.bf16.mxu0 0
        %2253 = vmatpush1.bf16.msra.mxu0 %v2204
        %2254 = vmatprep.subr.bf16.mxu0 0
        %2255 = vmatpush1.bf16.msra.mxu0 %v2205
        %2256 = vmatprep.subr.bf16.mxu0 0
        %2257 = vmatpush1.bf16.msra.mxu0 %v2206
        %2258 = vmatprep.subr.bf16.mxu0 0
        %2259 = vmatpush1.bf16.msra.mxu0 %v2207
        %2260 = vmatprep.subr.bf16.mxu0 0
        %2261 = vmatpush1.bf16.msra.mxu0 %v2208
        %2262 = vmatprep.subr.bf16.mxu0 0
        %2263 = vmatpush1.bf16.msra.mxu0 %v2209
        %2264 = vmatprep.subr.bf16.mxu0 0
        %2265 = vmatpush1.bf16.msra.mxu0 %v2210
        %2266 = vmatprep.subr.bf16.mxu0 0
        %2267 = vmatpush1.bf16.msra.mxu0 %v2211
        %2268 = vmatprep.subr.bf16.mxu0 0
        %2269 = vmatpush1.bf16.msra.mxu0 %v2212
        %2270 = vmatprep.subr.bf16.mxu0 0
        %2271 = vmatpush1.bf16.msra.mxu0 %v2213
        %2272 = vmatprep.subr.bf16.mxu0 0
        %2273 = vmatpush1.bf16.msra.mxu0 %v2214
        %2274 = vmatprep.subr.bf16.mxu0 0
        %2275 = vmatpush1.bf16.msra.mxu0 %v2215
        %2276 = vmatprep.subr.bf16.mxu0 0
        %2277 = vmatpush1.bf16.msra.mxu0 %v2216
        %2278 = vmatprep.subr.bf16.mxu0 0
        %2279 = vmatpush1.bf16.msra.mxu0 %v2217
        %2280 = vmatprep.subr.bf16.mxu0 0
        %2281 = vmatpush1.bf16.msra.mxu0 %v2218
        %2282 = vmatprep.subr.bf16.mxu0 0
        %2283 = vmatpush1.bf16.msra.mxu0 %v2219
        %2284 = vmatprep.mubr.bf16.mxu0 %v1194
        %2285 = vmatmul.mubr.bf16.gmra.mrb[0].mxu0 %v1193
        %v2286 = vpop.f32.mrb[0].mxu0
        %v2287 = vadd.f32 0.0, %v2286
        %v2288 = vpop.f32.mrb[0].mxu0
        %v2289 = vpop.f32.mrb[0].mxu0
        %v2290 = vadd.f32 0.0, %v2289
        %v2291 = vpop.f32.mrb[0].mxu0
        %2292 = vmatprep.mubr.bf16.mxu0 %v1197
        %2293 = vmatmul.mubr.bf16.gmra.mrb[0].mxu0 %v1196
        %v2294 = vpop.f32.mrb[0].mxu0
        %v2295 = vadd.f32 0.0, %v2294
        %v2296 = vpop.f32.mrb[0].mxu0
        %v2297 = vpop.f32.mrb[0].mxu0
        %v2298 = vadd.f32 0.0, %v2297
        %v2299 = vpop.f32.mrb[0].mxu0
        %2300 = vmatprep.mubr.bf16.mxu0 %v1200
        %2301 = vmatmul.mubr.bf16.gmra.mrb[0].mxu0 %v1199
        %v2302 = vpop.f32.mrb[0].mxu0
        %v2303 = vadd.f32 0.0, %v2302
        %v2304 = vpop.f32.mrb[0].mxu0
        %v2305 = vpop.f32.mrb[0].mxu0
        %v2306 = vadd.f32 0.0, %v2305
        %v2307 = vpop.f32.mrb[0].mxu0
        %2308 = vmatprep.mubr.bf16.mxu0 %v1203
        %2309 = vmatmul.mubr.bf16.gmra.mrb[0].mxu0 %v1202
        %v2310 = vpop.f32.mrb[0].mxu0
        %v2311 = vadd.f32 0.0, %v2310
        %v2312 = vpop.f32.mrb[0].mxu0
        %v2313 = vpop.f32.mrb[0].mxu0
        %v2314 = vadd.f32 0.0, %v2313
        %v2315 = vpop.f32.mrb[0].mxu0
        %2316 = vmatprep.mubr.bf16.mxu0 %v1206
        %2317 = vmatmul.mubr.bf16.gmra.mrb[0].mxu0 %v1205
        %v2318 = vpop.f32.mrb[0].mxu0
        %v2319 = vadd.f32 0.0, %v2318
        %v2320 = vpop.f32.mrb[0].mxu0
        %v2321 = vpop.f32.mrb[0].mxu0
        %v2322 = vadd.f32 0.0, %v2321
        %v2323 = vpop.f32.mrb[0].mxu0
        %2324 = vmatprep.mubr.bf16.mxu0 %v1209
        %2325 = vmatmul.mubr.bf16.gmra.mrb[0].mxu0 %v1208
        %v2326 = vpop.f32.mrb[0].mxu0
        %v2327 = vadd.f32 0.0, %v2326
        %v2328 = vpop.f32.mrb[0].mxu0
        %v2329 = vpop.f32.mrb[0].mxu0
        %v2330 = vadd.f32 0.0, %v2329
        %v2331 = vpop.f32.mrb[0].mxu0
        %2332 = vmatprep.mubr.bf16.mxu0 %v1212
        %2333 = vmatmul.mubr.bf16.gmra.mrb[0].mxu0 %v1211
        %v2334 = vpop.f32.mrb[0].mxu0
        %v2335 = vadd.f32 0.0, %v2334
        %v2336 = vpop.f32.mrb[0].mxu0
        %v2337 = vpop.f32.mrb[0].mxu0
        %v2338 = vadd.f32 0.0, %v2337
        %v2339 = vpop.f32.mrb[0].mxu0
        %2340 = vmatprep.mubr.bf16.mxu0 %v1215
        %2341 = vmatmul.mubr.bf16.gmra.mrb[0].mxu0 %v1214
        %v2342 = vpop.f32.mrb[0].mxu0
        %v2343 = vadd.f32 0.0, %v2342
        %v2344 = vpop.f32.mrb[0].mxu0
        %v2345 = vpop.f32.mrb[0].mxu0
        %v2346 = vadd.f32 0.0, %v2345
        %v2347 = vpop.f32.mrb[0].mxu0
        %2348 = vmatprep.mubr.bf16.mxu0 %v1218
        %2349 = vmatmul.mubr.bf16.gmra.mrb[0].mxu0 %v1217
        %v2350 = vpop.f32.mrb[0].mxu0
        %v2351 = vadd.f32 0.0, %v2350
        %v2352 = vpop.f32.mrb[0].mxu0
        %v2353 = vpop.f32.mrb[0].mxu0
        %v2354 = vadd.f32 0.0, %v2353
        %v2355 = vpop.f32.mrb[0].mxu0
        %2356 = vmatprep.mubr.bf16.mxu0 %v1221
        %2357 = vmatmul.mubr.bf16.gmra.mrb[0].mxu0 %v1220
        %v2358 = vpop.f32.mrb[0].mxu0
        %v2359 = vadd.f32 0.0, %v2358
        %v2360 = vpop.f32.mrb[0].mxu0
        %v2361 = vpop.f32.mrb[0].mxu0
        %v2362 = vadd.f32 0.0, %v2361
        %v2363 = vpop.f32.mrb[0].mxu0
        %2364 = vmatprep.mubr.bf16.mxu0 %v1224
        %2365 = vmatmul.mubr.bf16.gmra.mrb[0].mxu0 %v1223
        %v2366 = vpop.f32.mrb[0].mxu0
        %v2367 = vadd.f32 0.0, %v2366
        %v2368 = vpop.f32.mrb[0].mxu0
        %v2369 = vpop.f32.mrb[0].mxu0
        %v2370 = vadd.f32 0.0, %v2369
        %v2371 = vpop.f32.mrb[0].mxu0
        %2372 = vmatprep.mubr.bf16.mxu0 %v1227
        %2373 = vmatmul.mubr.bf16.gmra.mrb[0].mxu0 %v1226
        %v2374 = vpop.f32.mrb[0].mxu0
        %v2375 = vadd.f32 0.0, %v2374
        %v2376 = vpop.f32.mrb[0].mxu0
        %v2377 = vpop.f32.mrb[0].mxu0
        %v2378 = vadd.f32 0.0, %v2377
        %v2379 = vpop.f32.mrb[0].mxu0
        %2380 = vmatprep.mubr.bf16.mxu0 %v1230
        %2381 = vmatmul.mubr.bf16.gmra.mrb[0].mxu0 %v1229
        %v2382 = vpop.f32.mrb[0].mxu0
        %v2383 = vadd.f32 0.0, %v2382
        %v2384 = vpop.f32.mrb[0].mxu0
        %v2385 = vpop.f32.mrb[0].mxu0
        %v2386 = vadd.f32 0.0, %v2385
        %v2387 = vpop.f32.mrb[0].mxu0
        %2388 = vmatprep.mubr.bf16.mxu0 %v1233
        %2389 = vmatmul.mubr.bf16.gmra.mrb[0].mxu0 %v1232
        %v2390 = vpop.f32.mrb[0].mxu0
        %v2391 = vadd.f32 0.0, %v2390
        %v2392 = vpop.f32.mrb[0].mxu0
        %v2393 = vpop.f32.mrb[0].mxu0
        %v2394 = vadd.f32 0.0, %v2393
        %v2395 = vpop.f32.mrb[0].mxu0
        %2396 = vmatprep.mubr.bf16.mxu0 %v1236
        %2397 = vmatmul.mubr.bf16.gmra.mrb[0].mxu0 %v1235
        %v2398 = vpop.f32.mrb[0].mxu0
        %v2399 = vadd.f32 0.0, %v2398
        %v2400 = vpop.f32.mrb[0].mxu0
        %v2401 = vpop.f32.mrb[0].mxu0
        %v2402 = vadd.f32 0.0, %v2401
        %v2403 = vpop.f32.mrb[0].mxu0
        %2404 = vmatprep.mubr.bf16.mxu0 %v1239
        %2405 = vmatmul.mubr.bf16.gmra.mrb[0].mxu0 %v1238
        %v2406 = vpop.f32.mrb[0].mxu0
        %v2407 = vadd.f32 0.0, %v2406
        %v2408 = vpop.f32.mrb[0].mxu0
        %v2409 = vpop.f32.mrb[0].mxu0
        %v2410 = vadd.f32 0.0, %v2409
        %v2411 = vpop.f32.mrb[0].mxu0
        %2412 = vmatprep.mubr.bf16.mxu0 %v1242
        %2413 = vmatmul.mubr.bf16.gmra.mrb[0].mxu0 %v1241
        %v2414 = vpop.f32.mrb[0].mxu0
        %v2415 = vadd.f32 0.0, %v2414
        %v2416 = vpop.f32.mrb[0].mxu0
        %v2417 = vpop.f32.mrb[0].mxu0
        %v2418 = vadd.f32 0.0, %v2417
        %v2419 = vpop.f32.mrb[0].mxu0
        %2420 = vmatprep.mubr.bf16.mxu0 %v1245
        %2421 = vmatmul.mubr.bf16.gmra.mrb[0].mxu0 %v1244
        %v2422 = vpop.f32.mrb[0].mxu0
        %v2423 = vadd.f32 0.0, %v2422
        %v2424 = vpop.f32.mrb[0].mxu0
        %v2425 = vpop.f32.mrb[0].mxu0
        %v2426 = vadd.f32 0.0, %v2425
        %v2427 = vpop.f32.mrb[0].mxu0
        %2428 = vmatprep.mubr.bf16.mxu0 %v1248
        %2429 = vmatmul.mubr.bf16.gmra.mrb[0].mxu0 %v1247
        %v2430 = vpop.f32.mrb[0].mxu0
        %v2431 = vadd.f32 0.0, %v2430
        %v2432 = vpop.f32.mrb[0].mxu0
        %v2433 = vpop.f32.mrb[0].mxu0
        %v2434 = vadd.f32 0.0, %v2433
        %v2435 = vpop.f32.mrb[0].mxu0
        %2436 = vmatprep.mubr.bf16.mxu0 %v1251
        %2437 = vmatmul.mubr.bf16.gmra.mrb[0].mxu0 %v1250
        %v2438 = vpop.f32.mrb[0].mxu0
        %v2439 = vadd.f32 0.0, %v2438
        %v2440 = vpop.f32.mrb[0].mxu0
        %v2441 = vpop.f32.mrb[0].mxu0
        %v2442 = vadd.f32 0.0, %v2441
        %v2443 = vpop.f32.mrb[0].mxu0
        %2444 = vmatprep.mubr.bf16.mxu0 %v1254
        %2445 = vmatmul.mubr.bf16.gmra.mrb[0].mxu0 %v1253
        %v2446 = vpop.f32.mrb[0].mxu0
        %v2447 = vadd.f32 0.0, %v2446
        %v2448 = vpop.f32.mrb[0].mxu0
        %v2449 = vpop.f32.mrb[0].mxu0
        %v2450 = vadd.f32 0.0, %v2449
        %v2451 = vpop.f32.mrb[0].mxu0
        %2452 = vmatprep.mubr.bf16.mxu0 %v1257
        %2453 = vmatmul.mubr.bf16.gmra.mrb[0].mxu0 %v1256
        %v2454 = vpop.f32.mrb[0].mxu0
        %v2455 = vadd.f32 0.0, %v2454
        %v2456 = vpop.f32.mrb[0].mxu0
        %v2457 = vpop.f32.mrb[0].mxu0
        %v2458 = vadd.f32 0.0, %v2457
        %v2459 = vpop.f32.mrb[0].mxu0
        %2460 = vmatprep.mubr.bf16.mxu0 %v1260
        %2461 = vmatmul.mubr.bf16.gmra.mrb[0].mxu0 %v1259
        %v2462 = vpop.f32.mrb[0].mxu0
        %v2463 = vadd.f32 0.0, %v2462
        %v2464 = vpop.f32.mrb[0].mxu0
        %v2465 = vpop.f32.mrb[0].mxu0
        %v2466 = vadd.f32 0.0, %v2465
        %v2467 = vpop.f32.mrb[0].mxu0
        %2468 = vmatprep.mubr.bf16.mxu0 %v1263
        %2469 = vmatmul.mubr.bf16.gmra.mrb[0].mxu0 %v1262
        %v2470 = vpop.f32.mrb[0].mxu0
        %v2471 = vadd.f32 0.0, %v2470
        %v2472 = vpop.f32.mrb[0].mxu0
        %v2473 = vpop.f32.mrb[0].mxu0
        %v2474 = vadd.f32 0.0, %v2473
        %v2475 = vpop.f32.mrb[0].mxu0
        %2476 = vmatprep.mubr.bf16.mxu0 %v1266
        %2477 = vmatmul.mubr.bf16.gmra.mrb[0].mxu0 %v1265
        %v2478 = vpop.f32.mrb[0].mxu0
        %v2479 = vadd.f32 0.0, %v2478
        %v2480 = vpop.f32.mrb[0].mxu0
        %v2481 = vpop.f32.mrb[0].mxu0
        %v2482 = vadd.f32 0.0, %v2481
        %v2483 = vpop.f32.mrb[0].mxu0
        %2484 = vmatprep.mubr.bf16.mxu0 %v1269
        %2485 = vmatmul.mubr.bf16.gmra.mrb[0].mxu0 %v1268
        %v2486 = vpop.f32.mrb[0].mxu0
        %v2487 = vadd.f32 0.0, %v2486
        %v2488 = vpop.f32.mrb[0].mxu0
        %v2489 = vpop.f32.mrb[0].mxu0
        %v2490 = vadd.f32 0.0, %v2489
        %v2491 = vpop.f32.mrb[0].mxu0
        %2492 = vmatprep.mubr.bf16.mxu0 %v1272
        %2493 = vmatmul.mubr.bf16.gmra.mrb[0].mxu0 %v1271
        %v2494 = vpop.f32.mrb[0].mxu0
        %v2495 = vadd.f32 0.0, %v2494
        %v2496 = vpop.f32.mrb[0].mxu0
        %v2497 = vpop.f32.mrb[0].mxu0
        %v2498 = vadd.f32 0.0, %v2497
        %v2499 = vpop.f32.mrb[0].mxu0
        %2500 = vmatprep.mubr.bf16.mxu0 %v1275
        %2501 = vmatmul.mubr.bf16.gmra.mrb[0].mxu0 %v1274
        %v2502 = vpop.f32.mrb[0].mxu0
        %v2503 = vadd.f32 0.0, %v2502
        %v2504 = vpop.f32.mrb[0].mxu0
        %v2505 = vpop.f32.mrb[0].mxu0
        %v2506 = vadd.f32 0.0, %v2505
        %v2507 = vpop.f32.mrb[0].mxu0
        %2508 = vmatprep.mubr.bf16.mxu0 %v1278
        %2509 = vmatmul.mubr.bf16.gmra.mrb[0].mxu0 %v1277
        %v2510 = vpop.f32.mrb[0].mxu0
        %v2511 = vadd.f32 0.0, %v2510
        %v2512 = vpop.f32.mrb[0].mxu0
        %v2513 = vpop.f32.mrb[0].mxu0
        %v2514 = vadd.f32 0.0, %v2513
        %v2515 = vpop.f32.mrb[0].mxu0
        %2516 = vmatprep.mubr.bf16.mxu0 %v1281
        %2517 = vmatmul.mubr.bf16.gmra.mrb[0].mxu0 %v1280
        %v2518 = vpop.f32.mrb[0].mxu0
        %v2519 = vadd.f32 0.0, %v2518
        %v2520 = vpop.f32.mrb[0].mxu0
        %v2521 = vpop.f32.mrb[0].mxu0
        %v2522 = vadd.f32 0.0, %v2521
        %v2523 = vpop.f32.mrb[0].mxu0
        %2524 = vmatprep.mubr.bf16.mxu0 %v1284
        %2525 = vmatmul.mubr.bf16.gmra.mrb[0].mxu0 %v1283
        %v2526 = vpop.f32.mrb[0].mxu0
        %v2527 = vadd.f32 0.0, %v2526
        %v2528 = vpop.f32.mrb[0].mxu0
        %v2529 = vpop.f32.mrb[0].mxu0
        %v2530 = vadd.f32 0.0, %v2529
        %v2531 = vpop.f32.mrb[0].mxu0
        %2532 = vmatprep.mubr.bf16.mxu0 %v1287
        %2533 = vmatmul.mubr.bf16.gmra.mrb[0].mxu0 %v1286
        %v2534 = vpop.f32.mrb[0].mxu0
        %v2535 = vadd.f32 0.0, %v2534
        %v2536 = vpop.f32.mrb[0].mxu0
        %v2537 = vpop.f32.mrb[0].mxu0
        %v2538 = vadd.f32 0.0, %v2537
        %v2539 = vpop.f32.mrb[0].mxu0
        %2540 = vdwg.mxu0
        %2541 = vmatprep.subr.bf16.mxu0 0
        %2542 = vmatpush1.bf16.msra.mxu0 %v2220
        %2543 = vmatprep.subr.bf16.mxu0 0
        %2544 = vmatpush1.bf16.msra.mxu0 %v2221
        %2545 = vmatprep.subr.bf16.mxu0 0
        %2546 = vmatpush1.bf16.msra.mxu0 %v2222
        %2547 = vmatprep.subr.bf16.mxu0 0
        %2548 = vmatpush1.bf16.msra.mxu0 %v2223
        %2549 = vmatprep.subr.bf16.mxu0 0
        %2550 = vmatpush1.bf16.msra.mxu0 %v2224
        %2551 = vmatprep.subr.bf16.mxu0 0
        %2552 = vmatpush1.bf16.msra.mxu0 %v2225
        %2553 = vmatprep.subr.bf16.mxu0 0
        %2554 = vmatpush1.bf16.msra.mxu0 %v2226
        %2555 = vmatprep.subr.bf16.mxu0 0
        %2556 = vmatpush1.bf16.msra.mxu0 %v2227
        %2557 = vmatprep.subr.bf16.mxu0 0
        %2558 = vmatpush1.bf16.msra.mxu0 0
        %2559 = vmatprep.subr.bf16.mxu0 0
        %2560 = vmatpush1.bf16.msra.mxu0 0
        %2561 = vmatprep.subr.bf16.mxu0 0
        %2562 = vmatpush1.bf16.msra.mxu0 0
        %2563 = vmatprep.subr.bf16.mxu0 0
        %2564 = vmatpush1.bf16.msra.mxu0 0
        %2565 = vmatprep.subr.bf16.mxu0 0
        %2566 = vmatpush1.bf16.msra.mxu0 0
        %2567 = vmatprep.subr.bf16.mxu0 0
        %2568 = vmatpush1.bf16.msra.mxu0 0
        %2569 = vmatprep.subr.bf16.mxu0 0
        %2570 = vmatpush1.bf16.msra.mxu0 0
        %2571 = vmatprep.subr.bf16.mxu0 0
        %2572 = vmatpush1.bf16.msra.mxu0 0
        %2573 = vmatprep.mubr.bf16.mxu0 0
        %2574 = vmatmul.mubr.bf16.gmra.mrb[0].mxu0 %v1195
        %v2575 = vpop.f32.mrb[0].mxu0
        %v2576 = vadd.f32 %v2287, %v2575
        %v2577 = vpop.f32.mrb[0].mxu0
        %v2578 = vpop.f32.mrb[0].mxu0
        %v2579 = vadd.f32 %v2290, %v2578
        %v2580 = vpop.f32.mrb[0].mxu0
        %2581 = vmatprep.mubr.bf16.mxu0 0
        %2582 = vmatmul.mubr.bf16.gmra.mrb[0].mxu0 %v1198
        %v2583 = vpop.f32.mrb[0].mxu0
        %v2584 = vadd.f32 %v2295, %v2583
        %v2585 = vpop.f32.mrb[0].mxu0
        %v2586 = vpop.f32.mrb[0].mxu0
        %v2587 = vadd.f32 %v2298, %v2586
        %v2588 = vpop.f32.mrb[0].mxu0
        %2589 = vmatprep.mubr.bf16.mxu0 0
        %2590 = vmatmul.mubr.bf16.gmra.mrb[0].mxu0 %v1201
        %v2591 = vpop.f32.mrb[0].mxu0
        %v2592 = vadd.f32 %v2303, %v2591
        %v2593 = vpop.f32.mrb[0].mxu0
        %v2594 = vpop.f32.mrb[0].mxu0
        %v2595 = vadd.f32 %v2306, %v2594
        %v2596 = vpop.f32.mrb[0].mxu0
        %2597 = vmatprep.mubr.bf16.mxu0 0
        %2598 = vmatmul.mubr.bf16.gmra.mrb[0].mxu0 %v1204
        %v2599 = vpop.f32.mrb[0].mxu0
        %v2600 = vadd.f32 %v2311, %v2599
        %v2601 = vpop.f32.mrb[0].mxu0
        %v2602 = vpop.f32.mrb[0].mxu0
        %v2603 = vadd.f32 %v2314, %v2602
        %v2604 = vpop.f32.mrb[0].mxu0
        %2605 = vmatprep.mubr.bf16.mxu0 0
        %2606 = vmatmul.mubr.bf16.gmra.mrb[0].mxu0 %v1207
        %v2607 = vpop.f32.mrb[0].mxu0
        %v2608 = vadd.f32 %v2319, %v2607
        %v2609 = vpop.f32.mrb[0].mxu0
        %v2610 = vpop.f32.mrb[0].mxu0
        %v2611 = vadd.f32 %v2322, %v2610
        %v2612 = vpop.f32.mrb[0].mxu0
        %2613 = vmatprep.mubr.bf16.mxu0 0
        %2614 = vmatmul.mubr.bf16.gmra.mrb[0].mxu0 %v1210
        %v2615 = vpop.f32.mrb[0].mxu0
        %v2616 = vadd.f32 %v2327, %v2615
        %v2617 = vpop.f32.mrb[0].mxu0
        %v2618 = vpop.f32.mrb[0].mxu0
        %v2619 = vadd.f32 %v2330, %v2618
        %v2620 = vpop.f32.mrb[0].mxu0
        %2621 = vmatprep.mubr.bf16.mxu0 0
        %2622 = vmatmul.mubr.bf16.gmra.mrb[0].mxu0 %v1213
        %v2623 = vpop.f32.mrb[0].mxu0
        %v2624 = vadd.f32 %v2335, %v2623
        %v2625 = vpop.f32.mrb[0].mxu0
        %v2626 = vpop.f32.mrb[0].mxu0
        %v2627 = vadd.f32 %v2338, %v2626
        %v2628 = vpop.f32.mrb[0].mxu0
        %2629 = vmatprep.mubr.bf16.mxu0 0
        %2630 = vmatmul.mubr.bf16.gmra.mrb[0].mxu0 %v1216
        %v2631 = vpop.f32.mrb[0].mxu0
        %v2632 = vadd.f32 %v2343, %v2631
        %v2633 = vpop.f32.mrb[0].mxu0
        %v2634 = vpop.f32.mrb[0].mxu0
        %v2635 = vadd.f32 %v2346, %v2634
        %v2636 = vpop.f32.mrb[0].mxu0
        %2637 = vmatprep.mubr.bf16.mxu0 0
        %2638 = vmatmul.mubr.bf16.gmra.mrb[0].mxu0 %v1219
        %v2639 = vpop.f32.mrb[0].mxu0
        %v2640 = vadd.f32 %v2351, %v2639
        %v2641 = vpop.f32.mrb[0].mxu0
        %v2642 = vpop.f32.mrb[0].mxu0
        %v2643 = vadd.f32 %v2354, %v2642
        %v2644 = vpop.f32.mrb[0].mxu0
        %2645 = vmatprep.mubr.bf16.mxu0 0
        %2646 = vmatmul.mubr.bf16.gmra.mrb[0].mxu0 %v1222
        %v2647 = vpop.f32.mrb[0].mxu0
        %v2648 = vadd.f32 %v2359, %v2647
        %v2649 = vpop.f32.mrb[0].mxu0
        %v2650 = vpop.f32.mrb[0].mxu0
        %v2651 = vadd.f32 %v2362, %v2650
        %v2652 = vpop.f32.mrb[0].mxu0
        %2653 = vmatprep.mubr.bf16.mxu0 0
        %2654 = vmatmul.mubr.bf16.gmra.mrb[0].mxu0 %v1225
        %v2655 = vpop.f32.mrb[0].mxu0
        %v2656 = vadd.f32 %v2367, %v2655
        %v2657 = vpop.f32.mrb[0].mxu0
        %v2658 = vpop.f32.mrb[0].mxu0
        %v2659 = vadd.f32 %v2370, %v2658
        %v2660 = vpop.f32.mrb[0].mxu0
        %2661 = vmatprep.mubr.bf16.mxu0 0
        %2662 = vmatmul.mubr.bf16.gmra.mrb[0].mxu0 %v1228
        %v2663 = vpop.f32.mrb[0].mxu0
        %v2664 = vadd.f32 %v2375, %v2663
        %v2665 = vpop.f32.mrb[0].mxu0
        %v2666 = vpop.f32.mrb[0].mxu0
        %v2667 = vadd.f32 %v2378, %v2666
        %v2668 = vpop.f32.mrb[0].mxu0
        %2669 = vmatprep.mubr.bf16.mxu0 0
        %2670 = vmatmul.mubr.bf16.gmra.mrb[0].mxu0 %v1231
        %v2671 = vpop.f32.mrb[0].mxu0
        %v2672 = vadd.f32 %v2383, %v2671
        %v2673 = vpop.f32.mrb[0].mxu0
        %v2674 = vpop.f32.mrb[0].mxu0
        %v2675 = vadd.f32 %v2386, %v2674
        %v2676 = vpop.f32.mrb[0].mxu0
        %2677 = vmatprep.mubr.bf16.mxu0 0
        %2678 = vmatmul.mubr.bf16.gmra.mrb[0].mxu0 %v1234
        %v2679 = vpop.f32.mrb[0].mxu0
        %v2680 = vadd.f32 %v2391, %v2679
        %v2681 = vpop.f32.mrb[0].mxu0
        %v2682 = vpop.f32.mrb[0].mxu0
        %v2683 = vadd.f32 %v2394, %v2682
        %v2684 = vpop.f32.mrb[0].mxu0
        %2685 = vmatprep.mubr.bf16.mxu0 0
        %2686 = vmatmul.mubr.bf16.gmra.mrb[0].mxu0 %v1237
        %v2687 = vpop.f32.mrb[0].mxu0
        %v2688 = vadd.f32 %v2399, %v2687
        %v2689 = vpop.f32.mrb[0].mxu0
        %v2690 = vpop.f32.mrb[0].mxu0
        %v2691 = vadd.f32 %v2402, %v2690
        %v2692 = vpop.f32.mrb[0].mxu0
        %2693 = vmatprep.mubr.bf16.mxu0 0
        %2694 = vmatmul.mubr.bf16.gmra.mrb[0].mxu0 %v1240
        %v2695 = vpop.f32.mrb[0].mxu0
        %v2696 = vadd.f32 %v2407, %v2695
        %v2697 = vpop.f32.mrb[0].mxu0
        %v2698 = vpop.f32.mrb[0].mxu0
        %v2699 = vadd.f32 %v2410, %v2698
        %v2700 = vpop.f32.mrb[0].mxu0
        %2701 = vmatprep.mubr.bf16.mxu0 0
        %2702 = vmatmul.mubr.bf16.gmra.mrb[0].mxu0 %v1243
        %v2703 = vpop.f32.mrb[0].mxu0
        %v2704 = vadd.f32 %v2415, %v2703
        %v2705 = vpop.f32.mrb[0].mxu0
        %v2706 = vpop.f32.mrb[0].mxu0
        %v2707 = vadd.f32 %v2418, %v2706
        %v2708 = vpop.f32.mrb[0].mxu0
        %2709 = vmatprep.mubr.bf16.mxu0 0
        %2710 = vmatmul.mubr.bf16.gmra.mrb[0].mxu0 %v1246
        %v2711 = vpop.f32.mrb[0].mxu0
        %v2712 = vadd.f32 %v2423, %v2711
        %v2713 = vpop.f32.mrb[0].mxu0
        %v2714 = vpop.f32.mrb[0].mxu0
        %v2715 = vadd.f32 %v2426, %v2714
        %v2716 = vpop.f32.mrb[0].mxu0
        %2717 = vmatprep.mubr.bf16.mxu0 0
        %2718 = vmatmul.mubr.bf16.gmra.mrb[0].mxu0 %v1249
        %v2719 = vpop.f32.mrb[0].mxu0
        %v2720 = vadd.f32 %v2431, %v2719
        %v2721 = vpop.f32.mrb[0].mxu0
        %v2722 = vpop.f32.mrb[0].mxu0
        %v2723 = vadd.f32 %v2434, %v2722
        %v2724 = vpop.f32.mrb[0].mxu0
        %2725 = vmatprep.mubr.bf16.mxu0 0
        %2726 = vmatmul.mubr.bf16.gmra.mrb[0].mxu0 %v1252
        %v2727 = vpop.f32.mrb[0].mxu0
        %v2728 = vadd.f32 %v2439, %v2727
        %v2729 = vpop.f32.mrb[0].mxu0
        %v2730 = vpop.f32.mrb[0].mxu0
        %v2731 = vadd.f32 %v2442, %v2730
        %v2732 = vpop.f32.mrb[0].mxu0
        %2733 = vmatprep.mubr.bf16.mxu0 0
        %2734 = vmatmul.mubr.bf16.gmra.mrb[0].mxu0 %v1255
        %v2735 = vpop.f32.mrb[0].mxu0
        %v2736 = vadd.f32 %v2447, %v2735
        %v2737 = vpop.f32.mrb[0].mxu0
        %v2738 = vpop.f32.mrb[0].mxu0
        %v2739 = vadd.f32 %v2450, %v2738
        %v2740 = vpop.f32.mrb[0].mxu0
        %2741 = vmatprep.mubr.bf16.mxu0 0
        %2742 = vmatmul.mubr.bf16.gmra.mrb[0].mxu0 %v1258
        %v2743 = vpop.f32.mrb[0].mxu0
        %v2744 = vadd.f32 %v2455, %v2743
        %v2745 = vpop.f32.mrb[0].mxu0
        %v2746 = vpop.f32.mrb[0].mxu0
        %v2747 = vadd.f32 %v2458, %v2746
        %v2748 = vpop.f32.mrb[0].mxu0
        %2749 = vmatprep.mubr.bf16.mxu0 0
        %2750 = vmatmul.mubr.bf16.gmra.mrb[0].mxu0 %v1261
        %v2751 = vpop.f32.mrb[0].mxu0
        %v2752 = vadd.f32 %v2463, %v2751
        %v2753 = vpop.f32.mrb[0].mxu0
        %v2754 = vpop.f32.mrb[0].mxu0
        %v2755 = vadd.f32 %v2466, %v2754
        %v2756 = vpop.f32.mrb[0].mxu0
        %2757 = vmatprep.mubr.bf16.mxu0 0
        %2758 = vmatmul.mubr.bf16.gmra.mrb[0].mxu0 %v1264
        %v2759 = vpop.f32.mrb[0].mxu0
        %v2760 = vadd.f32 %v2471, %v2759
        %v2761 = vpop.f32.mrb[0].mxu0
        %v2762 = vpop.f32.mrb[0].mxu0
        %v2763 = vadd.f32 %v2474, %v2762
        %v2764 = vpop.f32.mrb[0].mxu0
        %2765 = vmatprep.mubr.bf16.mxu0 0
        %2766 = vmatmul.mubr.bf16.gmra.mrb[0].mxu0 %v1267
        %v2767 = vpop.f32.mrb[0].mxu0
        %v2768 = vadd.f32 %v2479, %v2767
        %v2769 = vpop.f32.mrb[0].mxu0
        %v2770 = vpop.f32.mrb[0].mxu0
        %v2771 = vadd.f32 %v2482, %v2770
        %v2772 = vpop.f32.mrb[0].mxu0
        %2773 = vmatprep.mubr.bf16.mxu0 0
        %2774 = vmatmul.mubr.bf16.gmra.mrb[0].mxu0 %v1270
        %v2775 = vpop.f32.mrb[0].mxu0
        %v2776 = vadd.f32 %v2487, %v2775
        %v2777 = vpop.f32.mrb[0].mxu0
        %v2778 = vpop.f32.mrb[0].mxu0
        %v2779 = vadd.f32 %v2490, %v2778
        %v2780 = vpop.f32.mrb[0].mxu0
        %2781 = vmatprep.mubr.bf16.mxu0 0
        %2782 = vmatmul.mubr.bf16.gmra.mrb[0].mxu0 %v1273
        %v2783 = vpop.f32.mrb[0].mxu0
        %v2784 = vadd.f32 %v2495, %v2783
        %v2785 = vpop.f32.mrb[0].mxu0
        %v2786 = vpop.f32.mrb[0].mxu0
        %v2787 = vadd.f32 %v2498, %v2786
        %v2788 = vpop.f32.mrb[0].mxu0
        %2789 = vmatprep.mubr.bf16.mxu0 0
        %2790 = vmatmul.mubr.bf16.gmra.mrb[0].mxu0 %v1276
        %v2791 = vpop.f32.mrb[0].mxu0
        %v2792 = vadd.f32 %v2503, %v2791
        %v2793 = vpop.f32.mrb[0].mxu0
        %v2794 = vpop.f32.mrb[0].mxu0
        %v2795 = vadd.f32 %v2506, %v2794
        %v2796 = vpop.f32.mrb[0].mxu0
        %2797 = vmatprep.mubr.bf16.mxu0 0
        %2798 = vmatmul.mubr.bf16.gmra.mrb[0].mxu0 %v1279
        %v2799 = vpop.f32.mrb[0].mxu0
        %v2800 = vadd.f32 %v2511, %v2799
        %v2801 = vpop.f32.mrb[0].mxu0
        %v2802 = vpop.f32.mrb[0].mxu0
        %v2803 = vadd.f32 %v2514, %v2802
        %v2804 = vpop.f32.mrb[0].mxu0
        %2805 = vmatprep.mubr.bf16.mxu0 0
        %2806 = vmatmul.mubr.bf16.gmra.mrb[0].mxu0 %v1282
        %v2807 = vpop.f32.mrb[0].mxu0
        %v2808 = vadd.f32 %v2519, %v2807
        %v2809 = vpop.f32.mrb[0].mxu0
        %v2810 = vpop.f32.mrb[0].mxu0
        %v2811 = vadd.f32 %v2522, %v2810
        %v2812 = vpop.f32.mrb[0].mxu0
        %2813 = vmatprep.mubr.bf16.mxu0 0
        %2814 = vmatmul.mubr.bf16.gmra.mrb[0].mxu0 %v1285
        %v2815 = vpop.f32.mrb[0].mxu0
        %v2816 = vadd.f32 %v2527, %v2815
        %v2817 = vpop.f32.mrb[0].mxu0
        %v2818 = vpop.f32.mrb[0].mxu0
        %v2819 = vadd.f32 %v2530, %v2818
        %v2820 = vpop.f32.mrb[0].mxu0
        %2821 = vmatprep.mubr.bf16.mxu0 0
        %2822 = vmatmul.mubr.bf16.gmra.mrb[0].mxu0 %v1288
        %v2823 = vpop.f32.mrb[0].mxu0
        %v2824 = vadd.f32 %v2535, %v2823
        %v2825 = vpop.f32.mrb[0].mxu0
        %v2826 = vpop.f32.mrb[0].mxu0
        %v2827 = vadd.f32 %v2538, %v2826
        %v2828 = vpop.f32.mrb[0].mxu0
        %2829 = vdwg.mxu0
        %s2830 = scalar_lea.vmem [#allocation7], 384
        %v2831 = vld [vmem:[%s2830] sm:$0xf]
        %v2832 = vld [vmem:[%s2830 + $0x4] sm:$0xf]
        %v2833 = vld [vmem:[%s2830 + $0x8] sm:$0xf]
        %v2834 = vld [vmem:[%s2830 + $0xc] sm:$0xf]
        %v2835 = vld [vmem:[%s2830 + $0x10] sm:$0xf]
        %v2836 = vld [vmem:[%s2830 + $0x14] sm:$0xf]
        %v2837 = vld [vmem:[%s2830 + $0x18] sm:$0xf]
        %v2838 = vld [vmem:[%s2830 + $0x1c] sm:$0xf]
        %v2839 = vld [vmem:[%s2830 + $0x20] sm:$0xf]
        %v2840 = vld [vmem:[%s2830 + $0x24] sm:$0xf]
        %v2841 = vld [vmem:[%s2830 + $0x28] sm:$0xf]
        %v2842 = vld [vmem:[%s2830 + $0x2c] sm:$0xf]
        %v2843 = vld [vmem:[%s2830 + $0x30] sm:$0xf]
        %v2844 = vld [vmem:[%s2830 + $0x34] sm:$0xf]
        %v2845 = vld [vmem:[%s2830 + $0x38] sm:$0xf]
        %v2846 = vld [vmem:[%s2830 + $0x3c] sm:$0xf]
        %v2847 = vld [vmem:[%s2830 + $0x40] sm:$0xf]
        %v2848 = vld [vmem:[%s2830 + $0x44] sm:$0xf]
        %v2849 = vld [vmem:[%s2830 + $0x48] sm:$0xf]
        %v2850 = vld [vmem:[%s2830 + $0x4c] sm:$0xf]
        %v2851 = vld [vmem:[%s2830 + $0x50] sm:$0xf]
        %v2852 = vld [vmem:[%s2830 + $0x54] sm:$0xf]
        %v2853 = vld [vmem:[%s2830 + $0x58] sm:$0xf]
        %v2854 = vld [vmem:[%s2830 + $0x5c] sm:$0xf]
        %v2855 = vld [vmem:[%s2830 + $0x60] sm:$0xf]
        %v2856 = vld [vmem:[%s2830 + $0x64] sm:$0xf]
        %v2857 = vld [vmem:[%s2830 + $0x68] sm:$0xf]
        %v2858 = vld [vmem:[%s2830 + $0x6c] sm:$0xf]
        %v2859 = vld [vmem:[%s2830 + $0x70] sm:$0xf]
        %v2860 = vld [vmem:[%s2830 + $0x74] sm:$0xf]
        %v2861 = vld [vmem:[%s2830 + $0x78] sm:$0xf]
        %v2862 = vld [vmem:[%s2830 + $0x7c] sm:$0xf]
        %v2863 = vld [vmem:[%s2830 + $0x80] sm:$0xf]
        %v2864 = vld [vmem:[%s2830 + $0x84] sm:$0xf]
        %v2865 = vld [vmem:[%s2830 + $0x88] sm:$0xf]
        %v2866 = vld [vmem:[%s2830 + $0x8c] sm:$0xf]
        %v2867 = vld [vmem:[%s2830 + $0x90] sm:$0xf]
        %v2868 = vld [vmem:[%s2830 + $0x94] sm:$0xf]
        %v2869 = vld [vmem:[%s2830 + $0x98] sm:$0xf]
        %v2870 = vld [vmem:[%s2830 + $0x9c] sm:$0xf]
        %v2871 = vld [vmem:[%s2830 + $0xa0] sm:$0xf]
        %v2872 = vld [vmem:[%s2830 + $0xa4] sm:$0xf]
        %v2873 = vld [vmem:[%s2830 + $0xa8] sm:$0xf]
        %v2874 = vld [vmem:[%s2830 + $0xac] sm:$0xf]
        %v2875 = vld [vmem:[%s2830 + $0xb0] sm:$0xf]
        %v2876 = vld [vmem:[%s2830 + $0xb4] sm:$0xf]
        %v2877 = vld [vmem:[%s2830 + $0xb8] sm:$0xf]
        %v2878 = vld [vmem:[%s2830 + $0xbc] sm:$0xf]
        %v2927 = vunpack.c.l.b16 %v2831
        %v2928 = vunpack.c.l.b16 %v2832
        %v2929 = vunpack.c.l.b16 %v2833
        %v2930 = vunpack.c.l.b16 %v2834
        %v2931 = vunpack.c.l.b16 %v2835
        %v2932 = vunpack.c.l.b16 %v2836
        %v2933 = vunpack.c.l.b16 %v2837
        %v2934 = vunpack.c.l.b16 %v2838
        %v2935 = vunpack.c.l.b16 %v2839
        %v2936 = vunpack.c.l.b16 %v2840
        %v2937 = vunpack.c.l.b16 %v2841
        %v2938 = vunpack.c.l.b16 %v2842
        %v2939 = vunpack.c.l.b16 %v2843
        %v2940 = vunpack.c.l.b16 %v2844
        %v2941 = vunpack.c.l.b16 %v2845
        %v2942 = vunpack.c.l.b16 %v2846
        %v2943 = vunpack.c.l.b16 %v2847
        %v2944 = vunpack.c.l.b16 %v2848
        %v2945 = vunpack.c.l.b16 %v2849
        %v2946 = vunpack.c.l.b16 %v2850
        %v2947 = vunpack.c.l.b16 %v2851
        %v2948 = vunpack.c.l.b16 %v2852
        %v2949 = vunpack.c.l.b16 %v2853
        %v2950 = vunpack.c.l.b16 %v2854
        %v2951 = vunpack.c.l.b16 %v2855
        %v2952 = vunpack.c.l.b16 %v2856
        %v2953 = vunpack.c.l.b16 %v2857
        %v2954 = vunpack.c.l.b16 %v2858
        %v2955 = vunpack.c.l.b16 %v2859
        %v2956 = vunpack.c.l.b16 %v2860
        %v2957 = vunpack.c.l.b16 %v2861
        %v2958 = vunpack.c.l.b16 %v2862
        %v2959 = vunpack.c.l.b16 %v2863
        %v2960 = vunpack.c.l.b16 %v2864
        %v2961 = vunpack.c.l.b16 %v2865
        %v2962 = vunpack.c.l.b16 %v2866
        %v2963 = vunpack.c.l.b16 %v2867
        %v2964 = vunpack.c.l.b16 %v2868
        %v2965 = vunpack.c.l.b16 %v2869
        %v2966 = vunpack.c.l.b16 %v2870
        %v2967 = vunpack.c.l.b16 %v2871
        %v2968 = vunpack.c.l.b16 %v2872
        %v2969 = vunpack.c.l.b16 %v2873
        %v2970 = vunpack.c.l.b16 %v2874
        %v2971 = vunpack.c.l.b16 %v2875
        %v2972 = vunpack.c.l.b16 %v2876
        %v2973 = vunpack.c.l.b16 %v2877
        %v2974 = vunpack.c.l.b16 %v2878
        %v2975 = vpack.c.b16 %v2928, %v2927
        %v2976 = vpack.c.b16 %v2930, %v2929
        %v2977 = vpack.c.b16 %v2932, %v2931
        %v2978 = vpack.c.b16 %v2934, %v2933
        %v2979 = vpack.c.b16 %v2936, %v2935
        %v2980 = vpack.c.b16 %v2938, %v2937
        %v2981 = vpack.c.b16 %v2940, %v2939
        %v2982 = vpack.c.b16 %v2942, %v2941
        %v2983 = vpack.c.b16 %v2944, %v2943
        %v2984 = vpack.c.b16 %v2946, %v2945
        %v2985 = vpack.c.b16 %v2948, %v2947
        %v2986 = vpack.c.b16 %v2950, %v2949
        %v2987 = vpack.c.b16 %v2952, %v2951
        %v2988 = vpack.c.b16 %v2954, %v2953
        %v2989 = vpack.c.b16 %v2956, %v2955
        %v2990 = vpack.c.b16 %v2958, %v2957
        %v2991 = vpack.c.b16 %v2960, %v2959
        %v2992 = vpack.c.b16 %v2962, %v2961
        %v2993 = vpack.c.b16 %v2964, %v2963
        %v2994 = vpack.c.b16 %v2966, %v2965
        %v2995 = vpack.c.b16 %v2968, %v2967
        %v2996 = vpack.c.b16 %v2970, %v2969
        %v2997 = vpack.c.b16 %v2972, %v2971
        %v2998 = vpack.c.b16 %v2974, %v2973
        %3023 = vmatprep.subr.bf16.mxu0 0
        %3024 = vmatpush1.bf16.msra.mxu0 %v2975
        %3025 = vmatprep.subr.bf16.mxu0 0
        %3026 = vmatpush1.bf16.msra.mxu0 %v2976
        %3027 = vmatprep.subr.bf16.mxu0 0
        %3028 = vmatpush1.bf16.msra.mxu0 %v2977
        %3029 = vmatprep.subr.bf16.mxu0 0
        %3030 = vmatpush1.bf16.msra.mxu0 %v2978
        %3031 = vmatprep.subr.bf16.mxu0 0
        %3032 = vmatpush1.bf16.msra.mxu0 %v2979
        %3033 = vmatprep.subr.bf16.mxu0 0
        %3034 = vmatpush1.bf16.msra.mxu0 %v2980
        %3035 = vmatprep.subr.bf16.mxu0 0
        %3036 = vmatpush1.bf16.msra.mxu0 %v2981
        %3037 = vmatprep.subr.bf16.mxu0 0
        %3038 = vmatpush1.bf16.msra.mxu0 %v2982
        %3039 = vmatprep.subr.bf16.mxu0 0
        %3040 = vmatpush1.bf16.msra.mxu0 %v2983
        %3041 = vmatprep.subr.bf16.mxu0 0
        %3042 = vmatpush1.bf16.msra.mxu0 %v2984
        %3043 = vmatprep.subr.bf16.mxu0 0
        %3044 = vmatpush1.bf16.msra.mxu0 %v2985
        %3045 = vmatprep.subr.bf16.mxu0 0
        %3046 = vmatpush1.bf16.msra.mxu0 %v2986
        %3047 = vmatprep.subr.bf16.mxu0 0
        %3048 = vmatpush1.bf16.msra.mxu0 %v2987
        %3049 = vmatprep.subr.bf16.mxu0 0
        %3050 = vmatpush1.bf16.msra.mxu0 %v2988
        %3051 = vmatprep.subr.bf16.mxu0 0
        %3052 = vmatpush1.bf16.msra.mxu0 %v2989
        %3053 = vmatprep.subr.bf16.mxu0 0
        %3054 = vmatpush1.bf16.msra.mxu0 %v2990
        %3055 = vmatprep.mubr.bf16.mxu0 %v1194
        %3056 = vmatmul.mubr.bf16.gmra.mrb[0].mxu0 %v1193
        %v3057 = vpop.f32.mrb[0].mxu0
        %v3058 = vadd.f32 0.0, %v3057
        %v3059 = vpop.f32.mrb[0].mxu0
        %v3060 = vpop.f32.mrb[0].mxu0
        %v3061 = vadd.f32 0.0, %v3060
        %v3062 = vpop.f32.mrb[0].mxu0
        %3063 = vmatprep.mubr.bf16.mxu0 %v1197
        %3064 = vmatmul.mubr.bf16.gmra.mrb[0].mxu0 %v1196
        %v3065 = vpop.f32.mrb[0].mxu0
        %v3066 = vadd.f32 0.0, %v3065
        %v3067 = vpop.f32.mrb[0].mxu0
        %v3068 = vpop.f32.mrb[0].mxu0
        %v3069 = vadd.f32 0.0, %v3068
        %v3070 = vpop.f32.mrb[0].mxu0
        %3071 = vmatprep.mubr.bf16.mxu0 %v1200
        %3072 = vmatmul.mubr.bf16.gmra.mrb[0].mxu0 %v1199
        %v3073 = vpop.f32.mrb[0].mxu0
        %v3074 = vadd.f32 0.0, %v3073
        %v3075 = vpop.f32.mrb[0].mxu0
        %v3076 = vpop.f32.mrb[0].mxu0
        %v3077 = vadd.f32 0.0, %v3076
        %v3078 = vpop.f32.mrb[0].mxu0
        %3079 = vmatprep.mubr.bf16.mxu0 %v1203
        %3080 = vmatmul.mubr.bf16.gmra.mrb[0].mxu0 %v1202
        %v3081 = vpop.f32.mrb[0].mxu0
        %v3082 = vadd.f32 0.0, %v3081
        %v3083 = vpop.f32.mrb[0].mxu0
        %v3084 = vpop.f32.mrb[0].mxu0
        %v3085 = vadd.f32 0.0, %v3084
        %v3086 = vpop.f32.mrb[0].mxu0
        %3087 = vmatprep.mubr.bf16.mxu0 %v1206
        %3088 = vmatmul.mubr.bf16.gmra.mrb[0].mxu0 %v1205
        %v3089 = vpop.f32.mrb[0].mxu0
        %v3090 = vadd.f32 0.0, %v3089
        %v3091 = vpop.f32.mrb[0].mxu0
        %v3092 = vpop.f32.mrb[0].mxu0
        %v3093 = vadd.f32 0.0, %v3092
        %v3094 = vpop.f32.mrb[0].mxu0
        %3095 = vmatprep.mubr.bf16.mxu0 %v1209
        %3096 = vmatmul.mubr.bf16.gmra.mrb[0].mxu0 %v1208
        %v3097 = vpop.f32.mrb[0].mxu0
        %v3098 = vadd.f32 0.0, %v3097
        %v3099 = vpop.f32.mrb[0].mxu0
        %v3100 = vpop.f32.mrb[0].mxu0
        %v3101 = vadd.f32 0.0, %v3100
        %v3102 = vpop.f32.mrb[0].mxu0
        %3103 = vmatprep.mubr.bf16.mxu0 %v1212
        %3104 = vmatmul.mubr.bf16.gmra.mrb[0].mxu0 %v1211
        %v3105 = vpop.f32.mrb[0].mxu0
        %v3106 = vadd.f32 0.0, %v3105
        %v3107 = vpop.f32.mrb[0].mxu0
        %v3108 = vpop.f32.mrb[0].mxu0
        %v3109 = vadd.f32 0.0, %v3108
        %v3110 = vpop.f32.mrb[0].mxu0
        %3111 = vmatprep.mubr.bf16.mxu0 %v1215
        %3112 = vmatmul.mubr.bf16.gmra.mrb[0].mxu0 %v1214
        %v3113 = vpop.f32.mrb[0].mxu0
        %v3114 = vadd.f32 0.0, %v3113
        %v3115 = vpop.f32.mrb[0].mxu0
        %v3116 = vpop.f32.mrb[0].mxu0
        %v3117 = vadd.f32 0.0, %v3116
        %v3118 = vpop.f32.mrb[0].mxu0
        %3119 = vmatprep.mubr.bf16.mxu0 %v1218
        %3120 = vmatmul.mubr.bf16.gmra.mrb[0].mxu0 %v1217
        %v3121 = vpop.f32.mrb[0].mxu0
        %v3122 = vadd.f32 0.0, %v3121
        %v3123 = vpop.f32.mrb[0].mxu0
        %v3124 = vpop.f32.mrb[0].mxu0
        %v3125 = vadd.f32 0.0, %v3124
        %v3126 = vpop.f32.mrb[0].mxu0
        %3127 = vmatprep.mubr.bf16.mxu0 %v1221
        %3128 = vmatmul.mubr.bf16.gmra.mrb[0].mxu0 %v1220
        %v3129 = vpop.f32.mrb[0].mxu0
        %v3130 = vadd.f32 0.0, %v3129
        %v3131 = vpop.f32.mrb[0].mxu0
        %v3132 = vpop.f32.mrb[0].mxu0
        %v3133 = vadd.f32 0.0, %v3132
        %v3134 = vpop.f32.mrb[0].mxu0
        %3135 = vmatprep.mubr.bf16.mxu0 %v1224
        %3136 = vmatmul.mubr.bf16.gmra.mrb[0].mxu0 %v1223
        %v3137 = vpop.f32.mrb[0].mxu0
        %v3138 = vadd.f32 0.0, %v3137
        %v3139 = vpop.f32.mrb[0].mxu0
        %v3140 = vpop.f32.mrb[0].mxu0
        %v3141 = vadd.f32 0.0, %v3140
        %v3142 = vpop.f32.mrb[0].mxu0
        %3143 = vmatprep.mubr.bf16.mxu0 %v1227
        %3144 = vmatmul.mubr.bf16.gmra.mrb[0].mxu0 %v1226
        %v3145 = vpop.f32.mrb[0].mxu0
        %v3146 = vadd.f32 0.0, %v3145
        %v3147 = vpop.f32.mrb[0].mxu0
        %v3148 = vpop.f32.mrb[0].mxu0
        %v3149 = vadd.f32 0.0, %v3148
        %v3150 = vpop.f32.mrb[0].mxu0
        %3151 = vmatprep.mubr.bf16.mxu0 %v1230
        %3152 = vmatmul.mubr.bf16.gmra.mrb[0].mxu0 %v1229
        %v3153 = vpop.f32.mrb[0].mxu0
        %v3154 = vadd.f32 0.0, %v3153
        %v3155 = vpop.f32.mrb[0].mxu0
        %v3156 = vpop.f32.mrb[0].mxu0
        %v3157 = vadd.f32 0.0, %v3156
        %v3158 = vpop.f32.mrb[0].mxu0
        %3159 = vmatprep.mubr.bf16.mxu0 %v1233
        %3160 = vmatmul.mubr.bf16.gmra.mrb[0].mxu0 %v1232
        %v3161 = vpop.f32.mrb[0].mxu0
        %v3162 = vadd.f32 0.0, %v3161
        %v3163 = vpop.f32.mrb[0].mxu0
        %v3164 = vpop.f32.mrb[0].mxu0
        %v3165 = vadd.f32 0.0, %v3164
        %v3166 = vpop.f32.mrb[0].mxu0
        %3167 = vmatprep.mubr.bf16.mxu0 %v1236
        %3168 = vmatmul.mubr.bf16.gmra.mrb[0].mxu0 %v1235
        %v3169 = vpop.f32.mrb[0].mxu0
        %v3170 = vadd.f32 0.0, %v3169
        %v3171 = vpop.f32.mrb[0].mxu0
        %v3172 = vpop.f32.mrb[0].mxu0
        %v3173 = vadd.f32 0.0, %v3172
        %v3174 = vpop.f32.mrb[0].mxu0
        %3175 = vmatprep.mubr.bf16.mxu0 %v1239
        %3176 = vmatmul.mubr.bf16.gmra.mrb[0].mxu0 %v1238
        %v3177 = vpop.f32.mrb[0].mxu0
        %v3178 = vadd.f32 0.0, %v3177
        %v3179 = vpop.f32.mrb[0].mxu0
        %v3180 = vpop.f32.mrb[0].mxu0
        %v3181 = vadd.f32 0.0, %v3180
        %v3182 = vpop.f32.mrb[0].mxu0
        %3183 = vmatprep.mubr.bf16.mxu0 %v1242
        %3184 = vmatmul.mubr.bf16.gmra.mrb[0].mxu0 %v1241
        %v3185 = vpop.f32.mrb[0].mxu0
        %v3186 = vadd.f32 0.0, %v3185
        %v3187 = vpop.f32.mrb[0].mxu0
        %v3188 = vpop.f32.mrb[0].mxu0
        %v3189 = vadd.f32 0.0, %v3188
        %v3190 = vpop.f32.mrb[0].mxu0
        %3191 = vmatprep.mubr.bf16.mxu0 %v1245
        %3192 = vmatmul.mubr.bf16.gmra.mrb[0].mxu0 %v1244
        %v3193 = vpop.f32.mrb[0].mxu0
        %v3194 = vadd.f32 0.0, %v3193
        %v3195 = vpop.f32.mrb[0].mxu0
        %v3196 = vpop.f32.mrb[0].mxu0
        %v3197 = vadd.f32 0.0, %v3196
        %v3198 = vpop.f32.mrb[0].mxu0
        %3199 = vmatprep.mubr.bf16.mxu0 %v1248
        %3200 = vmatmul.mubr.bf16.gmra.mrb[0].mxu0 %v1247
        %v3201 = vpop.f32.mrb[0].mxu0
        %v3202 = vadd.f32 0.0, %v3201
        %v3203 = vpop.f32.mrb[0].mxu0
        %v3204 = vpop.f32.mrb[0].mxu0
        %v3205 = vadd.f32 0.0, %v3204
        %v3206 = vpop.f32.mrb[0].mxu0
        %3207 = vmatprep.mubr.bf16.mxu0 %v1251
        %3208 = vmatmul.mubr.bf16.gmra.mrb[0].mxu0 %v1250
        %v3209 = vpop.f32.mrb[0].mxu0
        %v3210 = vadd.f32 0.0, %v3209
        %v3211 = vpop.f32.mrb[0].mxu0
        %v3212 = vpop.f32.mrb[0].mxu0
        %v3213 = vadd.f32 0.0, %v3212
        %v3214 = vpop.f32.mrb[0].mxu0
        %3215 = vmatprep.mubr.bf16.mxu0 %v1254
        %3216 = vmatmul.mubr.bf16.gmra.mrb[0].mxu0 %v1253
        %v3217 = vpop.f32.mrb[0].mxu0
        %v3218 = vadd.f32 0.0, %v3217
        %v3219 = vpop.f32.mrb[0].mxu0
        %v3220 = vpop.f32.mrb[0].mxu0
        %v3221 = vadd.f32 0.0, %v3220
        %v3222 = vpop.f32.mrb[0].mxu0
        %3223 = vmatprep.mubr.bf16.mxu0 %v1257
        %3224 = vmatmul.mubr.bf16.gmra.mrb[0].mxu0 %v1256
        %v3225 = vpop.f32.mrb[0].mxu0
        %v3226 = vadd.f32 0.0, %v3225
        %v3227 = vpop.f32.mrb[0].mxu0
        %v3228 = vpop.f32.mrb[0].mxu0
        %v3229 = vadd.f32 0.0, %v3228
        %v3230 = vpop.f32.mrb[0].mxu0
        %3231 = vmatprep.mubr.bf16.mxu0 %v1260
        %3232 = vmatmul.mubr.bf16.gmra.mrb[0].mxu0 %v1259
        %v3233 = vpop.f32.mrb[0].mxu0
        %v3234 = vadd.f32 0.0, %v3233
        %v3235 = vpop.f32.mrb[0].mxu0
        %v3236 = vpop.f32.mrb[0].mxu0
        %v3237 = vadd.f32 0.0, %v3236
        %v3238 = vpop.f32.mrb[0].mxu0
        %3239 = vmatprep.mubr.bf16.mxu0 %v1263
        %3240 = vmatmul.mubr.bf16.gmra.mrb[0].mxu0 %v1262
        %v3241 = vpop.f32.mrb[0].mxu0
        %v3242 = vadd.f32 0.0, %v3241
        %v3243 = vpop.f32.mrb[0].mxu0
        %v3244 = vpop.f32.mrb[0].mxu0
        %v3245 = vadd.f32 0.0, %v3244
        %v3246 = vpop.f32.mrb[0].mxu0
        %3247 = vmatprep.mubr.bf16.mxu0 %v1266
        %3248 = vmatmul.mubr.bf16.gmra.mrb[0].mxu0 %v1265
        %v3249 = vpop.f32.mrb[0].mxu0
        %v3250 = vadd.f32 0.0, %v3249
        %v3251 = vpop.f32.mrb[0].mxu0
        %v3252 = vpop.f32.mrb[0].mxu0
        %v3253 = vadd.f32 0.0, %v3252
        %v3254 = vpop.f32.mrb[0].mxu0
        %3255 = vmatprep.mubr.bf16.mxu0 %v1269
        %3256 = vmatmul.mubr.bf16.gmra.mrb[0].mxu0 %v1268
        %v3257 = vpop.f32.mrb[0].mxu0
        %v3258 = vadd.f32 0.0, %v3257
        %v3259 = vpop.f32.mrb[0].mxu0
        %v3260 = vpop.f32.mrb[0].mxu0
        %v3261 = vadd.f32 0.0, %v3260
        %v3262 = vpop.f32.mrb[0].mxu0
        %3263 = vmatprep.mubr.bf16.mxu0 %v1272
        %3264 = vmatmul.mubr.bf16.gmra.mrb[0].mxu0 %v1271
        %v3265 = vpop.f32.mrb[0].mxu0
        %v3266 = vadd.f32 0.0, %v3265
        %v3267 = vpop.f32.mrb[0].mxu0
        %v3268 = vpop.f32.mrb[0].mxu0
        %v3269 = vadd.f32 0.0, %v3268
        %v3270 = vpop.f32.mrb[0].mxu0
        %3271 = vmatprep.mubr.bf16.mxu0 %v1275
        %3272 = vmatmul.mubr.bf16.gmra.mrb[0].mxu0 %v1274
        %v3273 = vpop.f32.mrb[0].mxu0
        %v3274 = vadd.f32 0.0, %v3273
        %v3275 = vpop.f32.mrb[0].mxu0
        %v3276 = vpop.f32.mrb[0].mxu0
        %v3277 = vadd.f32 0.0, %v3276
        %v3278 = vpop.f32.mrb[0].mxu0
        %3279 = vmatprep.mubr.bf16.mxu0 %v1278
        %3280 = vmatmul.mubr.bf16.gmra.mrb[0].mxu0 %v1277
        %v3281 = vpop.f32.mrb[0].mxu0
        %v3282 = vadd.f32 0.0, %v3281
        %v3283 = vpop.f32.mrb[0].mxu0
        %v3284 = vpop.f32.mrb[0].mxu0
        %v3285 = vadd.f32 0.0, %v3284
        %v3286 = vpop.f32.mrb[0].mxu0
        %3287 = vmatprep.mubr.bf16.mxu0 %v1281
        %3288 = vmatmul.mubr.bf16.gmra.mrb[0].mxu0 %v1280
        %v3289 = vpop.f32.mrb[0].mxu0
        %v3290 = vadd.f32 0.0, %v3289
        %v3291 = vpop.f32.mrb[0].mxu0
        %v3292 = vpop.f32.mrb[0].mxu0
        %v3293 = vadd.f32 0.0, %v3292
        %v3294 = vpop.f32.mrb[0].mxu0
        %3295 = vmatprep.mubr.bf16.mxu0 %v1284
        %3296 = vmatmul.mubr.bf16.gmra.mrb[0].mxu0 %v1283
        %v3297 = vpop.f32.mrb[0].mxu0
        %v3298 = vadd.f32 0.0, %v3297
        %v3299 = vpop.f32.mrb[0].mxu0
        %v3300 = vpop.f32.mrb[0].mxu0
        %v3301 = vadd.f32 0.0, %v3300
        %v3302 = vpop.f32.mrb[0].mxu0
        %3303 = vmatprep.mubr.bf16.mxu0 %v1287
        %3304 = vmatmul.mubr.bf16.gmra.mrb[0].mxu0 %v1286
        %v3305 = vpop.f32.mrb[0].mxu0
        %v3306 = vadd.f32 0.0, %v3305
        %v3307 = vpop.f32.mrb[0].mxu0
        %v3308 = vpop.f32.mrb[0].mxu0
        %v3309 = vadd.f32 0.0, %v3308
        %v3310 = vpop.f32.mrb[0].mxu0
        %3311 = vdwg.mxu0
        %3312 = vmatprep.subr.bf16.mxu0 0
        %3313 = vmatpush1.bf16.msra.mxu0 %v2991
        %3314 = vmatprep.subr.bf16.mxu0 0
        %3315 = vmatpush1.bf16.msra.mxu0 %v2992
        %3316 = vmatprep.subr.bf16.mxu0 0
        %3317 = vmatpush1.bf16.msra.mxu0 %v2993
        %3318 = vmatprep.subr.bf16.mxu0 0
        %3319 = vmatpush1.bf16.msra.mxu0 %v2994
        %3320 = vmatprep.subr.bf16.mxu0 0
        %3321 = vmatpush1.bf16.msra.mxu0 %v2995
        %3322 = vmatprep.subr.bf16.mxu0 0
        %3323 = vmatpush1.bf16.msra.mxu0 %v2996
        %3324 = vmatprep.subr.bf16.mxu0 0
        %3325 = vmatpush1.bf16.msra.mxu0 %v2997
        %3326 = vmatprep.subr.bf16.mxu0 0
        %3327 = vmatpush1.bf16.msra.mxu0 %v2998
        %3328 = vmatprep.subr.bf16.mxu0 0
        %3329 = vmatpush1.bf16.msra.mxu0 0
        %3330 = vmatprep.subr.bf16.mxu0 0
        %3331 = vmatpush1.bf16.msra.mxu0 0
        %3332 = vmatprep.subr.bf16.mxu0 0
        %3333 = vmatpush1.bf16.msra.mxu0 0
        %3334 = vmatprep.subr.bf16.mxu0 0
        %3335 = vmatpush1.bf16.msra.mxu0 0
        %3336 = vmatprep.subr.bf16.mxu0 0
        %3337 = vmatpush1.bf16.msra.mxu0 0
        %3338 = vmatprep.subr.bf16.mxu0 0
        %3339 = vmatpush1.bf16.msra.mxu0 0
        %3340 = vmatprep.subr.bf16.mxu0 0
        %3341 = vmatpush1.bf16.msra.mxu0 0
        %3342 = vmatprep.subr.bf16.mxu0 0
        %3343 = vmatpush1.bf16.msra.mxu0 0
        %3344 = vmatprep.mubr.bf16.mxu0 0
        %3345 = vmatmul.mubr.bf16.gmra.mrb[0].mxu0 %v1195
        %v3346 = vpop.f32.mrb[0].mxu0
        %v3347 = vadd.f32 %v3058, %v3346
        %v3348 = vpop.f32.mrb[0].mxu0
        %v3349 = vpop.f32.mrb[0].mxu0
        %v3350 = vadd.f32 %v3061, %v3349
        %v3351 = vpop.f32.mrb[0].mxu0
        %3352 = vmatprep.mubr.bf16.mxu0 0
        %3353 = vmatmul.mubr.bf16.gmra.mrb[0].mxu0 %v1198
        %v3354 = vpop.f32.mrb[0].mxu0
        %v3355 = vadd.f32 %v3066, %v3354
        %v3356 = vpop.f32.mrb[0].mxu0
        %v3357 = vpop.f32.mrb[0].mxu0
        %v3358 = vadd.f32 %v3069, %v3357
        %v3359 = vpop.f32.mrb[0].mxu0
        %3360 = vmatprep.mubr.bf16.mxu0 0
        %3361 = vmatmul.mubr.bf16.gmra.mrb[0].mxu0 %v1201
        %v3362 = vpop.f32.mrb[0].mxu0
        %v3363 = vadd.f32 %v3074, %v3362
        %v3364 = vpop.f32.mrb[0].mxu0
        %v3365 = vpop.f32.mrb[0].mxu0
        %v3366 = vadd.f32 %v3077, %v3365
        %v3367 = vpop.f32.mrb[0].mxu0
        %3368 = vmatprep.mubr.bf16.mxu0 0
        %3369 = vmatmul.mubr.bf16.gmra.mrb[0].mxu0 %v1204
        %v3370 = vpop.f32.mrb[0].mxu0
        %v3371 = vadd.f32 %v3082, %v3370
        %v3372 = vpop.f32.mrb[0].mxu0
        %v3373 = vpop.f32.mrb[0].mxu0
        %v3374 = vadd.f32 %v3085, %v3373
        %v3375 = vpop.f32.mrb[0].mxu0
        %3376 = vmatprep.mubr.bf16.mxu0 0
        %3377 = vmatmul.mubr.bf16.gmra.mrb[0].mxu0 %v1207
        %v3378 = vpop.f32.mrb[0].mxu0
        %v3379 = vadd.f32 %v3090, %v3378
        %v3380 = vpop.f32.mrb[0].mxu0
        %v3381 = vpop.f32.mrb[0].mxu0
        %v3382 = vadd.f32 %v3093, %v3381
        %v3383 = vpop.f32.mrb[0].mxu0
        %3384 = vmatprep.mubr.bf16.mxu0 0
        %3385 = vmatmul.mubr.bf16.gmra.mrb[0].mxu0 %v1210
        %v3386 = vpop.f32.mrb[0].mxu0
        %v3387 = vadd.f32 %v3098, %v3386
        %v3388 = vpop.f32.mrb[0].mxu0
        %v3389 = vpop.f32.mrb[0].mxu0
        %v3390 = vadd.f32 %v3101, %v3389
        %v3391 = vpop.f32.mrb[0].mxu0
        %3392 = vmatprep.mubr.bf16.mxu0 0
        %3393 = vmatmul.mubr.bf16.gmra.mrb[0].mxu0 %v1213
        %v3394 = vpop.f32.mrb[0].mxu0
        %v3395 = vadd.f32 %v3106, %v3394
        %v3396 = vpop.f32.mrb[0].mxu0
        %v3397 = vpop.f32.mrb[0].mxu0
        %v3398 = vadd.f32 %v3109, %v3397
        %v3399 = vpop.f32.mrb[0].mxu0
        %3400 = vmatprep.mubr.bf16.mxu0 0
        %3401 = vmatmul.mubr.bf16.gmra.mrb[0].mxu0 %v1216
        %v3402 = vpop.f32.mrb[0].mxu0
        %v3403 = vadd.f32 %v3114, %v3402
        %v3404 = vpop.f32.mrb[0].mxu0
        %v3405 = vpop.f32.mrb[0].mxu0
        %v3406 = vadd.f32 %v3117, %v3405
        %v3407 = vpop.f32.mrb[0].mxu0
        %3408 = vmatprep.mubr.bf16.mxu0 0
        %3409 = vmatmul.mubr.bf16.gmra.mrb[0].mxu0 %v1219
        %v3410 = vpop.f32.mrb[0].mxu0
        %v3411 = vadd.f32 %v3122, %v3410
        %v3412 = vpop.f32.mrb[0].mxu0
        %v3413 = vpop.f32.mrb[0].mxu0
        %v3414 = vadd.f32 %v3125, %v3413
        %v3415 = vpop.f32.mrb[0].mxu0
        %3416 = vmatprep.mubr.bf16.mxu0 0
        %3417 = vmatmul.mubr.bf16.gmra.mrb[0].mxu0 %v1222
        %v3418 = vpop.f32.mrb[0].mxu0
        %v3419 = vadd.f32 %v3130, %v3418
        %v3420 = vpop.f32.mrb[0].mxu0
        %v3421 = vpop.f32.mrb[0].mxu0
        %v3422 = vadd.f32 %v3133, %v3421
        %v3423 = vpop.f32.mrb[0].mxu0
        %3424 = vmatprep.mubr.bf16.mxu0 0
        %3425 = vmatmul.mubr.bf16.gmra.mrb[0].mxu0 %v1225
        %v3426 = vpop.f32.mrb[0].mxu0
        %v3427 = vadd.f32 %v3138, %v3426
        %v3428 = vpop.f32.mrb[0].mxu0
        %v3429 = vpop.f32.mrb[0].mxu0
        %v3430 = vadd.f32 %v3141, %v3429
        %v3431 = vpop.f32.mrb[0].mxu0
        %3432 = vmatprep.mubr.bf16.mxu0 0
        %3433 = vmatmul.mubr.bf16.gmra.mrb[0].mxu0 %v1228
        %v3434 = vpop.f32.mrb[0].mxu0
        %v3435 = vadd.f32 %v3146, %v3434
        %v3436 = vpop.f32.mrb[0].mxu0
        %v3437 = vpop.f32.mrb[0].mxu0
        %v3438 = vadd.f32 %v3149, %v3437
        %v3439 = vpop.f32.mrb[0].mxu0
        %3440 = vmatprep.mubr.bf16.mxu0 0
        %3441 = vmatmul.mubr.bf16.gmra.mrb[0].mxu0 %v1231
        %v3442 = vpop.f32.mrb[0].mxu0
        %v3443 = vadd.f32 %v3154, %v3442
        %v3444 = vpop.f32.mrb[0].mxu0
        %v3445 = vpop.f32.mrb[0].mxu0
        %v3446 = vadd.f32 %v3157, %v3445
        %v3447 = vpop.f32.mrb[0].mxu0
        %3448 = vmatprep.mubr.bf16.mxu0 0
        %3449 = vmatmul.mubr.bf16.gmra.mrb[0].mxu0 %v1234
        %v3450 = vpop.f32.mrb[0].mxu0
        %v3451 = vadd.f32 %v3162, %v3450
        %v3452 = vpop.f32.mrb[0].mxu0
        %v3453 = vpop.f32.mrb[0].mxu0
        %v3454 = vadd.f32 %v3165, %v3453
        %v3455 = vpop.f32.mrb[0].mxu0
        %3456 = vmatprep.mubr.bf16.mxu0 0
        %3457 = vmatmul.mubr.bf16.gmra.mrb[0].mxu0 %v1237
        %v3458 = vpop.f32.mrb[0].mxu0
        %v3459 = vadd.f32 %v3170, %v3458
        %v3460 = vpop.f32.mrb[0].mxu0
        %v3461 = vpop.f32.mrb[0].mxu0
        %v3462 = vadd.f32 %v3173, %v3461
        %v3463 = vpop.f32.mrb[0].mxu0
        %3464 = vmatprep.mubr.bf16.mxu0 0
        %3465 = vmatmul.mubr.bf16.gmra.mrb[0].mxu0 %v1240
        %v3466 = vpop.f32.mrb[0].mxu0
        %v3467 = vadd.f32 %v3178, %v3466
        %v3468 = vpop.f32.mrb[0].mxu0
        %v3469 = vpop.f32.mrb[0].mxu0
        %v3470 = vadd.f32 %v3181, %v3469
        %v3471 = vpop.f32.mrb[0].mxu0
        %3472 = vmatprep.mubr.bf16.mxu0 0
        %3473 = vmatmul.mubr.bf16.gmra.mrb[0].mxu0 %v1243
        %v3474 = vpop.f32.mrb[0].mxu0
        %v3475 = vadd.f32 %v3186, %v3474
        %v3476 = vpop.f32.mrb[0].mxu0
        %v3477 = vpop.f32.mrb[0].mxu0
        %v3478 = vadd.f32 %v3189, %v3477
        %v3479 = vpop.f32.mrb[0].mxu0
        %3480 = vmatprep.mubr.bf16.mxu0 0
        %3481 = vmatmul.mubr.bf16.gmra.mrb[0].mxu0 %v1246
        %v3482 = vpop.f32.mrb[0].mxu0
        %v3483 = vadd.f32 %v3194, %v3482
        %v3484 = vpop.f32.mrb[0].mxu0
        %v3485 = vpop.f32.mrb[0].mxu0
        %v3486 = vadd.f32 %v3197, %v3485
        %v3487 = vpop.f32.mrb[0].mxu0
        %3488 = vmatprep.mubr.bf16.mxu0 0
        %3489 = vmatmul.mubr.bf16.gmra.mrb[0].mxu0 %v1249
        %v3490 = vpop.f32.mrb[0].mxu0
        %v3491 = vadd.f32 %v3202, %v3490
        %v3492 = vpop.f32.mrb[0].mxu0
        %v3493 = vpop.f32.mrb[0].mxu0
        %v3494 = vadd.f32 %v3205, %v3493
        %v3495 = vpop.f32.mrb[0].mxu0
        %3496 = vmatprep.mubr.bf16.mxu0 0
        %3497 = vmatmul.mubr.bf16.gmra.mrb[0].mxu0 %v1252
        %v3498 = vpop.f32.mrb[0].mxu0
        %v3499 = vadd.f32 %v3210, %v3498
        %v3500 = vpop.f32.mrb[0].mxu0
        %v3501 = vpop.f32.mrb[0].mxu0
        %v3502 = vadd.f32 %v3213, %v3501
        %v3503 = vpop.f32.mrb[0].mxu0
        %3504 = vmatprep.mubr.bf16.mxu0 0
        %3505 = vmatmul.mubr.bf16.gmra.mrb[0].mxu0 %v1255
        %v3506 = vpop.f32.mrb[0].mxu0
        %v3507 = vadd.f32 %v3218, %v3506
        %v3508 = vpop.f32.mrb[0].mxu0
        %v3509 = vpop.f32.mrb[0].mxu0
        %v3510 = vadd.f32 %v3221, %v3509
        %v3511 = vpop.f32.mrb[0].mxu0
        %3512 = vmatprep.mubr.bf16.mxu0 0
        %3513 = vmatmul.mubr.bf16.gmra.mrb[0].mxu0 %v1258
        %v3514 = vpop.f32.mrb[0].mxu0
        %v3515 = vadd.f32 %v3226, %v3514
        %v3516 = vpop.f32.mrb[0].mxu0
        %v3517 = vpop.f32.mrb[0].mxu0
        %v3518 = vadd.f32 %v3229, %v3517
        %v3519 = vpop.f32.mrb[0].mxu0
        %3520 = vmatprep.mubr.bf16.mxu0 0
        %3521 = vmatmul.mubr.bf16.gmra.mrb[0].mxu0 %v1261
        %v3522 = vpop.f32.mrb[0].mxu0
        %v3523 = vadd.f32 %v3234, %v3522
        %v3524 = vpop.f32.mrb[0].mxu0
        %v3525 = vpop.f32.mrb[0].mxu0
        %v3526 = vadd.f32 %v3237, %v3525
        %v3527 = vpop.f32.mrb[0].mxu0
        %3528 = vmatprep.mubr.bf16.mxu0 0
        %3529 = vmatmul.mubr.bf16.gmra.mrb[0].mxu0 %v1264
        %v3530 = vpop.f32.mrb[0].mxu0
        %v3531 = vadd.f32 %v3242, %v3530
        %v3532 = vpop.f32.mrb[0].mxu0
        %v3533 = vpop.f32.mrb[0].mxu0
        %v3534 = vadd.f32 %v3245, %v3533
        %v3535 = vpop.f32.mrb[0].mxu0
        %3536 = vmatprep.mubr.bf16.mxu0 0
        %3537 = vmatmul.mubr.bf16.gmra.mrb[0].mxu0 %v1267
        %v3538 = vpop.f32.mrb[0].mxu0
        %v3539 = vadd.f32 %v3250, %v3538
        %v3540 = vpop.f32.mrb[0].mxu0
        %v3541 = vpop.f32.mrb[0].mxu0
        %v3542 = vadd.f32 %v3253, %v3541
        %v3543 = vpop.f32.mrb[0].mxu0
        %3544 = vmatprep.mubr.bf16.mxu0 0
        %3545 = vmatmul.mubr.bf16.gmra.mrb[0].mxu0 %v1270
        %v3546 = vpop.f32.mrb[0].mxu0
        %v3547 = vadd.f32 %v3258, %v3546
        %v3548 = vpop.f32.mrb[0].mxu0
        %v3549 = vpop.f32.mrb[0].mxu0
        %v3550 = vadd.f32 %v3261, %v3549
        %v3551 = vpop.f32.mrb[0].mxu0
        %3552 = vmatprep.mubr.bf16.mxu0 0
        %3553 = vmatmul.mubr.bf16.gmra.mrb[0].mxu0 %v1273
        %v3554 = vpop.f32.mrb[0].mxu0
        %v3555 = vadd.f32 %v3266, %v3554
        %v3556 = vpop.f32.mrb[0].mxu0
        %v3557 = vpop.f32.mrb[0].mxu0
        %v3558 = vadd.f32 %v3269, %v3557
        %v3559 = vpop.f32.mrb[0].mxu0
        %3560 = vmatprep.mubr.bf16.mxu0 0
        %3561 = vmatmul.mubr.bf16.gmra.mrb[0].mxu0 %v1276
        %v3562 = vpop.f32.mrb[0].mxu0
        %v3563 = vadd.f32 %v3274, %v3562
        %v3564 = vpop.f32.mrb[0].mxu0
        %v3565 = vpop.f32.mrb[0].mxu0
        %v3566 = vadd.f32 %v3277, %v3565
        %v3567 = vpop.f32.mrb[0].mxu0
        %3568 = vmatprep.mubr.bf16.mxu0 0
        %3569 = vmatmul.mubr.bf16.gmra.mrb[0].mxu0 %v1279
        %v3570 = vpop.f32.mrb[0].mxu0
        %v3571 = vadd.f32 %v3282, %v3570
        %v3572 = vpop.f32.mrb[0].mxu0
        %v3573 = vpop.f32.mrb[0].mxu0
        %v3574 = vadd.f32 %v3285, %v3573
        %v3575 = vpop.f32.mrb[0].mxu0
        %3576 = vmatprep.mubr.bf16.mxu0 0
        %3577 = vmatmul.mubr.bf16.gmra.mrb[0].mxu0 %v1282
        %v3578 = vpop.f32.mrb[0].mxu0
        %v3579 = vadd.f32 %v3290, %v3578
        %v3580 = vpop.f32.mrb[0].mxu0
        %v3581 = vpop.f32.mrb[0].mxu0
        %v3582 = vadd.f32 %v3293, %v3581
        %v3583 = vpop.f32.mrb[0].mxu0
        %3584 = vmatprep.mubr.bf16.mxu0 0
        %3585 = vmatmul.mubr.bf16.gmra.mrb[0].mxu0 %v1285
        %v3586 = vpop.f32.mrb[0].mxu0
        %v3587 = vadd.f32 %v3298, %v3586
        %v3588 = vpop.f32.mrb[0].mxu0
        %v3589 = vpop.f32.mrb[0].mxu0
        %v3590 = vadd.f32 %v3301, %v3589
        %v3591 = vpop.f32.mrb[0].mxu0
        %3592 = vmatprep.mubr.bf16.mxu0 0
        %3593 = vmatmul.mubr.bf16.gmra.mrb[0].mxu0 %v1288
        %v3594 = vpop.f32.mrb[0].mxu0
        %v3595 = vadd.f32 %v3306, %v3594
        %v3596 = vpop.f32.mrb[0].mxu0
        %v3597 = vpop.f32.mrb[0].mxu0
        %v3598 = vadd.f32 %v3309, %v3597
        %v3599 = vpop.f32.mrb[0].mxu0
        %3600 = vdwg.mxu0
        %v3601 = vrot.slane %v1805, 7
        %v3602 = vrot.slane %v1808, 7
        %v3603 = vrot.slane %v1813, 7
        %v3604 = vrot.slane %v1816, 7
        %v3605 = vrot.slane %v1821, 7
        %v3606 = vrot.slane %v1824, 7
        %v3607 = vrot.slane %v1829, 7
        %v3608 = vrot.slane %v1832, 7
        %v3609 = vrot.slane %v1837, 7
        %v3610 = vrot.slane %v1840, 7
        %v3611 = vrot.slane %v1845, 7
        %v3612 = vrot.slane %v1848, 7
        %v3613 = vrot.slane %v1853, 7
        %v3614 = vrot.slane %v1856, 7
        %v3615 = vrot.slane %v1861, 7
        %v3616 = vrot.slane %v1864, 7
        %v3617 = vrot.slane %v1869, 7
        %v3618 = vrot.slane %v1872, 7
        %v3619 = vrot.slane %v1877, 7
        %v3620 = vrot.slane %v1880, 7
        %v3621 = vrot.slane %v1885, 7
        %v3622 = vrot.slane %v1888, 7
        %v3623 = vrot.slane %v1893, 7
        %v3624 = vrot.slane %v1896, 7
        %v3625 = vrot.slane %v1901, 7
        %v3626 = vrot.slane %v1904, 7
        %v3627 = vrot.slane %v1909, 7
        %v3628 = vrot.slane %v1912, 7
        %v3629 = vrot.slane %v1917, 7
        %v3630 = vrot.slane %v1920, 7
        %v3631 = vrot.slane %v1925, 7
        %v3632 = vrot.slane %v1928, 7
        %v3633 = vrot.slane %v1933, 7
        %v3634 = vrot.slane %v1936, 7
        %v3635 = vrot.slane %v1941, 7
        %v3636 = vrot.slane %v1944, 7
        %v3637 = vrot.slane %v1949, 7
        %v3638 = vrot.slane %v1952, 7
        %v3639 = vrot.slane %v1957, 7
        %v3640 = vrot.slane %v1960, 7
        %v3641 = vrot.slane %v1965, 7
        %v3642 = vrot.slane %v1968, 7
        %v3643 = vrot.slane %v1973, 7
        %v3644 = vrot.slane %v1976, 7
        %v3645 = vrot.slane %v1981, 7
        %v3646 = vrot.slane %v1984, 7
        %v3647 = vrot.slane %v1989, 7
        %v3648 = vrot.slane %v1992, 7
        %v3649 = vrot.slane %v1997, 7
        %v3650 = vrot.slane %v2000, 7
        %v3651 = vrot.slane %v2005, 7
        %v3652 = vrot.slane %v2008, 7
        %v3653 = vrot.slane %v2013, 7
        %v3654 = vrot.slane %v2016, 7
        %v3655 = vrot.slane %v2021, 7
        %v3656 = vrot.slane %v2024, 7
        %v3657 = vrot.slane %v2029, 7
        %v3658 = vrot.slane %v2032, 7
        %v3659 = vrot.slane %v2037, 7
        %v3660 = vrot.slane %v2040, 7
        %v3661 = vrot.slane %v2045, 7
        %v3662 = vrot.slane %v2048, 7
        %v3663 = vrot.slane %v2053, 7
        %v3664 = vrot.slane %v2056, 7
        %v3665 = vlaneseq
        %v3666 = vshrl.u32 %v3665, 7
        %vm3667 = vcmp.lt.s32.totalorder %v3666, 1
        %v3668 = vsel %vm3667, %v3663, %v3664
        %v3669 = vsel %vm3667, %v3662, %v3663
        %v3670 = vsel %vm3667, %v3661, %v3662
        %v3671 = vsel %vm3667, %v3660, %v3661
        %v3672 = vsel %vm3667, %v3659, %v3660
        %v3673 = vsel %vm3667, %v3658, %v3659
        %v3674 = vsel %vm3667, %v3657, %v3658
        %v3675 = vsel %vm3667, %v3656, %v3657
        %v3676 = vsel %vm3667, %v3655, %v3656
        %v3677 = vsel %vm3667, %v3654, %v3655
        %v3678 = vsel %vm3667, %v3653, %v3654
        %v3679 = vsel %vm3667, %v3652, %v3653
        %v3680 = vsel %vm3667, %v3651, %v3652
        %v3681 = vsel %vm3667, %v3650, %v3651
        %v3682 = vsel %vm3667, %v3649, %v3650
        %v3683 = vsel %vm3667, %v3648, %v3649
        %v3684 = vsel %vm3667, %v3647, %v3648
        %v3685 = vsel %vm3667, %v3646, %v3647
        %v3686 = vsel %vm3667, %v3645, %v3646
        %v3687 = vsel %vm3667, %v3644, %v3645
        %v3688 = vsel %vm3667, %v3643, %v3644
        %v3689 = vsel %vm3667, %v3642, %v3643
        %v3690 = vsel %vm3667, %v3641, %v3642
        %v3691 = vsel %vm3667, %v3640, %v3641
        %v3692 = vsel %vm3667, %v3639, %v3640
        %v3693 = vsel %vm3667, %v3638, %v3639
        %v3694 = vsel %vm3667, %v3637, %v3638
        %v3695 = vsel %vm3667, %v3636, %v3637
        %v3696 = vsel %vm3667, %v3635, %v3636
        %v3697 = vsel %vm3667, %v3634, %v3635
        %v3698 = vsel %vm3667, %v3633, %v3634
        %v3699 = vsel %vm3667, %v3632, %v3633
        %v3700 = vsel %vm3667, %v3631, %v3632
        %v3701 = vsel %vm3667, %v3630, %v3631
        %v3702 = vsel %vm3667, %v3629, %v3630
        %v3703 = vsel %vm3667, %v3628, %v3629
        %v3704 = vsel %vm3667, %v3627, %v3628
        %v3705 = vsel %vm3667, %v3626, %v3627
        %v3706 = vsel %vm3667, %v3625, %v3626
        %v3707 = vsel %vm3667, %v3624, %v3625
        %v3708 = vsel %vm3667, %v3623, %v3624
        %v3709 = vsel %vm3667, %v3622, %v3623
        %v3710 = vsel %vm3667, %v3621, %v3622
        %v3711 = vsel %vm3667, %v3620, %v3621
        %v3712 = vsel %vm3667, %v3619, %v3620
        %v3713 = vsel %vm3667, %v3618, %v3619
        %v3714 = vsel %vm3667, %v3617, %v3618
        %v3715 = vsel %vm3667, %v3616, %v3617
        %v3716 = vsel %vm3667, %v3615, %v3616
        %v3717 = vsel %vm3667, %v3614, %v3615
        %v3718 = vsel %vm3667, %v3613, %v3614
        %v3719 = vsel %vm3667, %v3612, %v3613
        %v3720 = vsel %vm3667, %v3611, %v3612
        %v3721 = vsel %vm3667, %v3610, %v3611
        %v3722 = vsel %vm3667, %v3609, %v3610
        %v3723 = vsel %vm3667, %v3608, %v3609
        %v3724 = vsel %vm3667, %v3607, %v3608
        %v3725 = vsel %vm3667, %v3606, %v3607
        %v3726 = vsel %vm3667, %v3605, %v3606
        %v3727 = vsel %vm3667, %v3604, %v3605
        %v3728 = vsel %vm3667, %v3603, %v3604
        %v3729 = vsel %vm3667, %v3602, %v3603
        %v3730 = vsel %vm3667, %v3601, %v3602
        %v3731 = vsel %vm3667, %v3664, %v3601
        %v3732 = vadd.f32 %v3731, %v2576
        %v3733 = vadd.f32 %v3730, %v2579
        %v3734 = vadd.f32 %v3729, %v2584
        %v3735 = vadd.f32 %v3728, %v2587
        %v3736 = vadd.f32 %v3727, %v2592
        %v3737 = vadd.f32 %v3726, %v2595
        %v3738 = vadd.f32 %v3725, %v2600
        %v3739 = vadd.f32 %v3724, %v2603
        %v3740 = vadd.f32 %v3723, %v2608
        %v3741 = vadd.f32 %v3722, %v2611
        %v3742 = vadd.f32 %v3721, %v2616
        %v3743 = vadd.f32 %v3720, %v2619
        %v3744 = vadd.f32 %v3719, %v2624
        %v3745 = vadd.f32 %v3718, %v2627
        %v3746 = vadd.f32 %v3717, %v2632
        %v3747 = vadd.f32 %v3716, %v2635
        %v3748 = vadd.f32 %v3715, %v2640
        %v3749 = vadd.f32 %v3714, %v2643
        %v3750 = vadd.f32 %v3713, %v2648
        %v3751 = vadd.f32 %v3712, %v2651
        %v3752 = vadd.f32 %v3711, %v2656
        %v3753 = vadd.f32 %v3710, %v2659
        %v3754 = vadd.f32 %v3709, %v2664
        %v3755 = vadd.f32 %v3708, %v2667
        %v3756 = vadd.f32 %v3707, %v2672
        %v3757 = vadd.f32 %v3706, %v2675
        %v3758 = vadd.f32 %v3705, %v2680
        %v3759 = vadd.f32 %v3704, %v2683
        %v3760 = vadd.f32 %v3703, %v2688
        %v3761 = vadd.f32 %v3702, %v2691
        %v3762 = vadd.f32 %v3701, %v2696
        %v3763 = vadd.f32 %v3700, %v2699
        %v3764 = vadd.f32 %v3699, %v2704
        %v3765 = vadd.f32 %v3698, %v2707
        %v3766 = vadd.f32 %v3697, %v2712
        %v3767 = vadd.f32 %v3696, %v2715
        %v3768 = vadd.f32 %v3695, %v2720
        %v3769 = vadd.f32 %v3694, %v2723
        %v3770 = vadd.f32 %v3693, %v2728
        %v3771 = vadd.f32 %v3692, %v2731
        %v3772 = vadd.f32 %v3691, %v2736
        %v3773 = vadd.f32 %v3690, %v2739
        %v3774 = vadd.f32 %v3689, %v2744
        %v3775 = vadd.f32 %v3688, %v2747
        %v3776 = vadd.f32 %v3687, %v2752
        %v3777 = vadd.f32 %v3686, %v2755
        %v3778 = vadd.f32 %v3685, %v2760
        %v3779 = vadd.f32 %v3684, %v2763
        %v3780 = vadd.f32 %v3683, %v2768
        %v3781 = vadd.f32 %v3682, %v2771
        %v3782 = vadd.f32 %v3681, %v2776
        %v3783 = vadd.f32 %v3680, %v2779
        %v3784 = vadd.f32 %v3679, %v2784
        %v3785 = vadd.f32 %v3678, %v2787
        %v3786 = vadd.f32 %v3677, %v2792
        %v3787 = vadd.f32 %v3676, %v2795
        %v3788 = vadd.f32 %v3675, %v2800
        %v3789 = vadd.f32 %v3674, %v2803
        %v3790 = vadd.f32 %v3673, %v2808
        %v3791 = vadd.f32 %v3672, %v2811
        %v3792 = vadd.f32 %v3671, %v2816
        %v3793 = vadd.f32 %v3670, %v2819
        %v3794 = vadd.f32 %v3669, %v2824
        %v3795 = vadd.f32 %v3668, %v2827
        %v3796 = vrot.slane %v3347, 1
        %v3797 = vrot.slane %v3350, 1
        %v3798 = vrot.slane %v3355, 1
        %v3799 = vrot.slane %v3358, 1
        %v3800 = vrot.slane %v3363, 1
        %v3801 = vrot.slane %v3366, 1
        %v3802 = vrot.slane %v3371, 1
        %v3803 = vrot.slane %v3374, 1
        %v3804 = vrot.slane %v3379, 1
        %v3805 = vrot.slane %v3382, 1
        %v3806 = vrot.slane %v3387, 1
        %v3807 = vrot.slane %v3390, 1
        %v3808 = vrot.slane %v3395, 1
        %v3809 = vrot.slane %v3398, 1
        %v3810 = vrot.slane %v3403, 1
        %v3811 = vrot.slane %v3406, 1
        %v3812 = vrot.slane %v3411, 1
        %v3813 = vrot.slane %v3414, 1
        %v3814 = vrot.slane %v3419, 1
        %v3815 = vrot.slane %v3422, 1
        %v3816 = vrot.slane %v3427, 1
        %v3817 = vrot.slane %v3430, 1
        %v3818 = vrot.slane %v3435, 1
        %v3819 = vrot.slane %v3438, 1
        %v3820 = vrot.slane %v3443, 1
        %v3821 = vrot.slane %v3446, 1
        %v3822 = vrot.slane %v3451, 1
        %v3823 = vrot.slane %v3454, 1
        %v3824 = vrot.slane %v3459, 1
        %v3825 = vrot.slane %v3462, 1
        %v3826 = vrot.slane %v3467, 1
        %v3827 = vrot.slane %v3470, 1
        %v3828 = vrot.slane %v3475, 1
        %v3829 = vrot.slane %v3478, 1
        %v3830 = vrot.slane %v3483, 1
        %v3831 = vrot.slane %v3486, 1
        %v3832 = vrot.slane %v3491, 1
        %v3833 = vrot.slane %v3494, 1
        %v3834 = vrot.slane %v3499, 1
        %v3835 = vrot.slane %v3502, 1
        %v3836 = vrot.slane %v3507, 1
        %v3837 = vrot.slane %v3510, 1
        %v3838 = vrot.slane %v3515, 1
        %v3839 = vrot.slane %v3518, 1
        %v3840 = vrot.slane %v3523, 1
        %v3841 = vrot.slane %v3526, 1
        %v3842 = vrot.slane %v3531, 1
        %v3843 = vrot.slane %v3534, 1
        %v3844 = vrot.slane %v3539, 1
        %v3845 = vrot.slane %v3542, 1
        %v3846 = vrot.slane %v3547, 1
        %v3847 = vrot.slane %v3550, 1
        %v3848 = vrot.slane %v3555, 1
        %v3849 = vrot.slane %v3558, 1
        %v3850 = vrot.slane %v3563, 1
        %v3851 = vrot.slane %v3566, 1
        %v3852 = vrot.slane %v3571, 1
        %v3853 = vrot.slane %v3574, 1
        %v3854 = vrot.slane %v3579, 1
        %v3855 = vrot.slane %v3582, 1
        %v3856 = vrot.slane %v3587, 1
        %v3857 = vrot.slane %v3590, 1
        %v3858 = vrot.slane %v3595, 1
        %v3859 = vrot.slane %v3598, 1
        %vm3860 = vcmp.lt.s32.totalorder %v3666, 7
        %v3861 = vsel %vm3860, %v3858, %v3859
        %v3862 = vsel %vm3860, %v3857, %v3858
        %v3863 = vsel %vm3860, %v3856, %v3857
        %v3864 = vsel %vm3860, %v3855, %v3856
        %v3865 = vsel %vm3860, %v3854, %v3855
        %v3866 = vsel %vm3860, %v3853, %v3854
        %v3867 = vsel %vm3860, %v3852, %v3853
        %v3868 = vsel %vm3860, %v3851, %v3852
        %v3869 = vsel %vm3860, %v3850, %v3851
        %v3870 = vsel %vm3860, %v3849, %v3850
        %v3871 = vsel %vm3860, %v3848, %v3849
        %v3872 = vsel %vm3860, %v3847, %v3848
        %v3873 = vsel %vm3860, %v3846, %v3847
        %v3874 = vsel %vm3860, %v3845, %v3846
        %v3875 = vsel %vm3860, %v3844, %v3845
        %v3876 = vsel %vm3860, %v3843, %v3844
        %v3877 = vsel %vm3860, %v3842, %v3843
        %v3878 = vsel %vm3860, %v3841, %v3842
        %v3879 = vsel %vm3860, %v3840, %v3841
        %v3880 = vsel %vm3860, %v3839, %v3840
        %v3881 = vsel %vm3860, %v3838, %v3839
        %v3882 = vsel %vm3860, %v3837, %v3838
        %v3883 = vsel %vm3860, %v3836, %v3837
        %v3884 = vsel %vm3860, %v3835, %v3836
        %v3885 = vsel %vm3860, %v3834, %v3835
        %v3886 = vsel %vm3860, %v3833, %v3834
        %v3887 = vsel %vm3860, %v3832, %v3833
        %v3888 = vsel %vm3860, %v3831, %v3832
        %v3889 = vsel %vm3860, %v3830, %v3831
        %v3890 = vsel %vm3860, %v3829, %v3830
        %v3891 = vsel %vm3860, %v3828, %v3829
        %v3892 = vsel %vm3860, %v3827, %v3828
        %v3893 = vsel %vm3860, %v3826, %v3827
        %v3894 = vsel %vm3860, %v3825, %v3826
        %v3895 = vsel %vm3860, %v3824, %v3825
        %v3896 = vsel %vm3860, %v3823, %v3824
        %v3897 = vsel %vm3860, %v3822, %v3823
        %v3898 = vsel %vm3860, %v3821, %v3822
        %v3899 = vsel %vm3860, %v3820, %v3821
        %v3900 = vsel %vm3860, %v3819, %v3820
        %v3901 = vsel %vm3860, %v3818, %v3819
        %v3902 = vsel %vm3860, %v3817, %v3818
        %v3903 = vsel %vm3860, %v3816, %v3817
        %v3904 = vsel %vm3860, %v3815, %v3816
        %v3905 = vsel %vm3860, %v3814, %v3815
        %v3906 = vsel %vm3860, %v3813, %v3814
        %v3907 = vsel %vm3860, %v3812, %v3813
        %v3908 = vsel %vm3860, %v3811, %v3812
        %v3909 = vsel %vm3860, %v3810, %v3811
        %v3910 = vsel %vm3860, %v3809, %v3810
        %v3911 = vsel %vm3860, %v3808, %v3809
        %v3912 = vsel %vm3860, %v3807, %v3808
        %v3913 = vsel %vm3860, %v3806, %v3807
        %v3914 = vsel %vm3860, %v3805, %v3806
        %v3915 = vsel %vm3860, %v3804, %v3805
        %v3916 = vsel %vm3860, %v3803, %v3804
        %v3917 = vsel %vm3860, %v3802, %v3803
        %v3918 = vsel %vm3860, %v3801, %v3802
        %v3919 = vsel %vm3860, %v3800, %v3801
        %v3920 = vsel %vm3860, %v3799, %v3800
        %v3921 = vsel %vm3860, %v3798, %v3799
        %v3922 = vsel %vm3860, %v3797, %v3798
        %v3923 = vsel %vm3860, %v3796, %v3797
        %v3924 = vsel %vm3860, %v3859, %v3796
        %v3925 = vadd.f32 %v3732, %v3923
        %v3926 = vadd.f32 %v3733, %v3922
        %v3927 = vadd.f32 %v3734, %v3921
        %v3928 = vadd.f32 %v3735, %v3920
        %v3929 = vadd.f32 %v3736, %v3919
        %v3930 = vadd.f32 %v3737, %v3918
        %v3931 = vadd.f32 %v3738, %v3917
        %v3932 = vadd.f32 %v3739, %v3916
        %v3933 = vadd.f32 %v3740, %v3915
        %v3934 = vadd.f32 %v3741, %v3914
        %v3935 = vadd.f32 %v3742, %v3913
        %v3936 = vadd.f32 %v3743, %v3912
        %v3937 = vadd.f32 %v3744, %v3911
        %v3938 = vadd.f32 %v3745, %v3910
        %v3939 = vadd.f32 %v3746, %v3909
        %v3940 = vadd.f32 %v3747, %v3908
        %v3941 = vadd.f32 %v3748, %v3907
        %v3942 = vadd.f32 %v3749, %v3906
        %v3943 = vadd.f32 %v3750, %v3905
        %v3944 = vadd.f32 %v3751, %v3904
        %v3945 = vadd.f32 %v3752, %v3903
        %v3946 = vadd.f32 %v3753, %v3902
        %v3947 = vadd.f32 %v3754, %v3901
        %v3948 = vadd.f32 %v3755, %v3900
        %v3949 = vadd.f32 %v3756, %v3899
        %v3950 = vadd.f32 %v3757, %v3898
        %v3951 = vadd.f32 %v3758, %v3897
        %v3952 = vadd.f32 %v3759, %v3896
        %v3953 = vadd.f32 %v3760, %v3895
        %v3954 = vadd.f32 %v3761, %v3894
        %v3955 = vadd.f32 %v3762, %v3893
        %v3956 = vadd.f32 %v3763, %v3892
        %v3957 = vadd.f32 %v3764, %v3891
        %v3958 = vadd.f32 %v3765, %v3890
        %v3959 = vadd.f32 %v3766, %v3889
        %v3960 = vadd.f32 %v3767, %v3888
        %v3961 = vadd.f32 %v3768, %v3887
        %v3962 = vadd.f32 %v3769, %v3886
        %v3963 = vadd.f32 %v3770, %v3885
        %v3964 = vadd.f32 %v3771, %v3884
        %v3965 = vadd.f32 %v3772, %v3883
        %v3966 = vadd.f32 %v3773, %v3882
        %v3967 = vadd.f32 %v3774, %v3881
        %v3968 = vadd.f32 %v3775, %v3880
        %v3969 = vadd.f32 %v3776, %v3879
        %v3970 = vadd.f32 %v3777, %v3878
        %v3971 = vadd.f32 %v3778, %v3877
        %v3972 = vadd.f32 %v3779, %v3876
        %v3973 = vadd.f32 %v3780, %v3875
        %v3974 = vadd.f32 %v3781, %v3874
        %v3975 = vadd.f32 %v3782, %v3873
        %v3976 = vadd.f32 %v3783, %v3872
        %v3977 = vadd.f32 %v3784, %v3871
        %v3978 = vadd.f32 %v3785, %v3870
        %v3979 = vadd.f32 %v3786, %v3869
        %v3980 = vadd.f32 %v3787, %v3868
        %v3981 = vadd.f32 %v3788, %v3867
        %v3982 = vadd.f32 %v3789, %v3866
        %v3983 = vadd.f32 %v3790, %v3865
        %v3984 = vadd.f32 %v3791, %v3864
        %v3985 = vadd.f32 %v3792, %v3863
        %v3986 = vadd.f32 %v3793, %v3862
        %v3987 = vadd.f32 %v3794, %v3861
        %v3988 = vadd.f32 %v3795, %v3924
        %v3989 = vld [vmem:[%s2] sm:$0x1]
        %v3991 = vlaneseq
        %v3992 = vshrl.u32 %v3991, 7
        %v3993 = vsub.s32 0, %v3992
        %v3994 = vrot.slane %v3989, %v3993
        %v3996 = vmul.f32 %v3925, %v3994
        %v3997 = vmul.f32 %v3926, %v3994
        %v3998 = vmul.f32 %v3927, %v3994
        %v3999 = vmul.f32 %v3928, %v3994
        %v4000 = vmul.f32 %v3929, %v3994
        %v4001 = vmul.f32 %v3930, %v3994
        %v4002 = vmul.f32 %v3931, %v3994
        %v4003 = vmul.f32 %v3932, %v3994
        %v4004 = vmul.f32 %v3933, %v3994
        %v4005 = vmul.f32 %v3934, %v3994
        %v4006 = vmul.f32 %v3935, %v3994
        %v4007 = vmul.f32 %v3936, %v3994
        %v4008 = vmul.f32 %v3937, %v3994
        %v4009 = vmul.f32 %v3938, %v3994
        %v4010 = vmul.f32 %v3939, %v3994
        %v4011 = vmul.f32 %v3940, %v3994
        %v4012 = vmul.f32 %v3941, %v3994
        %v4013 = vmul.f32 %v3942, %v3994
        %v4014 = vmul.f32 %v3943, %v3994
        %v4015 = vmul.f32 %v3944, %v3994
        %v4016 = vmul.f32 %v3945, %v3994
        %v4017 = vmul.f32 %v3946, %v3994
        %v4018 = vmul.f32 %v3947, %v3994
        %v4019 = vmul.f32 %v3948, %v3994
        %v4020 = vmul.f32 %v3949, %v3994
        %v4021 = vmul.f32 %v3950, %v3994
        %v4022 = vmul.f32 %v3951, %v3994
        %v4023 = vmul.f32 %v3952, %v3994
        %v4024 = vmul.f32 %v3953, %v3994
        %v4025 = vmul.f32 %v3954, %v3994
        %v4026 = vmul.f32 %v3955, %v3994
        %v4027 = vmul.f32 %v3956, %v3994
        %v4028 = vmul.f32 %v3957, %v3994
        %v4029 = vmul.f32 %v3958, %v3994
        %v4030 = vmul.f32 %v3959, %v3994
        %v4031 = vmul.f32 %v3960, %v3994
        %v4032 = vmul.f32 %v3961, %v3994
        %v4033 = vmul.f32 %v3962, %v3994
        %v4034 = vmul.f32 %v3963, %v3994
        %v4035 = vmul.f32 %v3964, %v3994
        %v4036 = vmul.f32 %v3965, %v3994
        %v4037 = vmul.f32 %v3966, %v3994
        %v4038 = vmul.f32 %v3967, %v3994
        %v4039 = vmul.f32 %v3968, %v3994
        %v4040 = vmul.f32 %v3969, %v3994
        %v4041 = vmul.f32 %v3970, %v3994
        %v4042 = vmul.f32 %v3971, %v3994
        %v4043 = vmul.f32 %v3972, %v3994
        %v4044 = vmul.f32 %v3973, %v3994
        %v4045 = vmul.f32 %v3974, %v3994
        %v4046 = vmul.f32 %v3975, %v3994
        %v4047 = vmul.f32 %v3976, %v3994
        %v4048 = vmul.f32 %v3977, %v3994
        %v4049 = vmul.f32 %v3978, %v3994
        %v4050 = vmul.f32 %v3979, %v3994
        %v4051 = vmul.f32 %v3980, %v3994
        %v4052 = vmul.f32 %v3981, %v3994
        %v4053 = vmul.f32 %v3982, %v3994
        %v4054 = vmul.f32 %v3983, %v3994
        %v4055 = vmul.f32 %v3984, %v3994
        %v4056 = vmul.f32 %v3985, %v3994
        %v4057 = vmul.f32 %v3986, %v3994
        %v4058 = vmul.f32 %v3987, %v3994
        %v4059 = vmul.f32 %v3988, %v3994
        %v4060 = vld [vmem:[%s3] sm:$0x1]
        %v4062 = vlaneseq
        %v4063 = vshrl.u32 %v4062, 7
        %v4064 = vsub.s32 0, %v4063
        %v4065 = vrot.slane %v4060, %v4064
        %v4067 = vadd.f32 %v3996, %v4065
        %v4068 = vadd.f32 %v3997, %v4065
        %v4069 = vadd.f32 %v3998, %v4065
        %v4070 = vadd.f32 %v3999, %v4065
        %v4071 = vadd.f32 %v4000, %v4065
        %v4072 = vadd.f32 %v4001, %v4065
        %v4073 = vadd.f32 %v4002, %v4065
        %v4074 = vadd.f32 %v4003, %v4065
        %v4075 = vadd.f32 %v4004, %v4065
        %v4076 = vadd.f32 %v4005, %v4065
        %v4077 = vadd.f32 %v4006, %v4065
        %v4078 = vadd.f32 %v4007, %v4065
        %v4079 = vadd.f32 %v4008, %v4065
        %v4080 = vadd.f32 %v4009, %v4065
        %v4081 = vadd.f32 %v4010, %v4065
        %v4082 = vadd.f32 %v4011, %v4065
        %v4083 = vadd.f32 %v4012, %v4065
        %v4084 = vadd.f32 %v4013, %v4065
        %v4085 = vadd.f32 %v4014, %v4065
        %v4086 = vadd.f32 %v4015, %v4065
        %v4087 = vadd.f32 %v4016, %v4065
        %v4088 = vadd.f32 %v4017, %v4065
        %v4089 = vadd.f32 %v4018, %v4065
        %v4090 = vadd.f32 %v4019, %v4065
        %v4091 = vadd.f32 %v4020, %v4065
        %v4092 = vadd.f32 %v4021, %v4065
        %v4093 = vadd.f32 %v4022, %v4065
        %v4094 = vadd.f32 %v4023, %v4065
        %v4095 = vadd.f32 %v4024, %v4065
        %v4096 = vadd.f32 %v4025, %v4065
        %v4097 = vadd.f32 %v4026, %v4065
        %v4098 = vadd.f32 %v4027, %v4065
        %v4099 = vadd.f32 %v4028, %v4065
        %v4100 = vadd.f32 %v4029, %v4065
        %v4101 = vadd.f32 %v4030, %v4065
        %v4102 = vadd.f32 %v4031, %v4065
        %v4103 = vadd.f32 %v4032, %v4065
        %v4104 = vadd.f32 %v4033, %v4065
        %v4105 = vadd.f32 %v4034, %v4065
        %v4106 = vadd.f32 %v4035, %v4065
        %v4107 = vadd.f32 %v4036, %v4065
        %v4108 = vadd.f32 %v4037, %v4065
        %v4109 = vadd.f32 %v4038, %v4065
        %v4110 = vadd.f32 %v4039, %v4065
        %v4111 = vadd.f32 %v4040, %v4065
        %v4112 = vadd.f32 %v4041, %v4065
        %v4113 = vadd.f32 %v4042, %v4065
        %v4114 = vadd.f32 %v4043, %v4065
        %v4115 = vadd.f32 %v4044, %v4065
        %v4116 = vadd.f32 %v4045, %v4065
        %v4117 = vadd.f32 %v4046, %v4065
        %v4118 = vadd.f32 %v4047, %v4065
        %v4119 = vadd.f32 %v4048, %v4065
        %v4120 = vadd.f32 %v4049, %v4065
        %v4121 = vadd.f32 %v4050, %v4065
        %v4122 = vadd.f32 %v4051, %v4065
        %v4123 = vadd.f32 %v4052, %v4065
        %v4124 = vadd.f32 %v4053, %v4065
        %v4125 = vadd.f32 %v4054, %v4065
        %v4126 = vadd.f32 %v4055, %v4065
        %v4127 = vadd.f32 %v4056, %v4065
        %v4128 = vadd.f32 %v4057, %v4065
        %v4129 = vadd.f32 %v4058, %v4065
        %v4130 = vadd.f32 %v4059, %v4065
        %v4131 = vmax.f32 %v4067, 0.0
        %v4132 = vmax.f32 %v4068, 0.0
        %v4133 = vmax.f32 %v4069, 0.0
        %v4134 = vmax.f32 %v4070, 0.0
        %v4135 = vmax.f32 %v4071, 0.0
        %v4136 = vmax.f32 %v4072, 0.0
        %v4137 = vmax.f32 %v4073, 0.0
        %v4138 = vmax.f32 %v4074, 0.0
        %v4139 = vmax.f32 %v4075, 0.0
        %v4140 = vmax.f32 %v4076, 0.0
        %v4141 = vmax.f32 %v4077, 0.0
        %v4142 = vmax.f32 %v4078, 0.0
        %v4143 = vmax.f32 %v4079, 0.0
        %v4144 = vmax.f32 %v4080, 0.0
        %v4145 = vmax.f32 %v4081, 0.0
        %v4146 = vmax.f32 %v4082, 0.0
        %v4147 = vmax.f32 %v4083, 0.0
        %v4148 = vmax.f32 %v4084, 0.0
        %v4149 = vmax.f32 %v4085, 0.0
        %v4150 = vmax.f32 %v4086, 0.0
        %v4151 = vmax.f32 %v4087, 0.0
        %v4152 = vmax.f32 %v4088, 0.0
        %v4153 = vmax.f32 %v4089, 0.0
        %v4154 = vmax.f32 %v4090, 0.0
        %v4155 = vmax.f32 %v4091, 0.0
        %v4156 = vmax.f32 %v4092, 0.0
        %v4157 = vmax.f32 %v4093, 0.0
        %v4158 = vmax.f32 %v4094, 0.0
        %v4159 = vmax.f32 %v4095, 0.0
        %v4160 = vmax.f32 %v4096, 0.0
        %v4161 = vmax.f32 %v4097, 0.0
        %v4162 = vmax.f32 %v4098, 0.0
        %v4163 = vmax.f32 %v4099, 0.0
        %v4164 = vmax.f32 %v4100, 0.0
        %v4165 = vmax.f32 %v4101, 0.0
        %v4166 = vmax.f32 %v4102, 0.0
        %v4167 = vmax.f32 %v4103, 0.0
        %v4168 = vmax.f32 %v4104, 0.0
        %v4169 = vmax.f32 %v4105, 0.0
        %v4170 = vmax.f32 %v4106, 0.0
        %v4171 = vmax.f32 %v4107, 0.0
        %v4172 = vmax.f32 %v4108, 0.0
        %v4173 = vmax.f32 %v4109, 0.0
        %v4174 = vmax.f32 %v4110, 0.0
        %v4175 = vmax.f32 %v4111, 0.0
        %v4176 = vmax.f32 %v4112, 0.0
        %v4177 = vmax.f32 %v4113, 0.0
        %v4178 = vmax.f32 %v4114, 0.0
        %v4179 = vmax.f32 %v4115, 0.0
        %v4180 = vmax.f32 %v4116, 0.0
        %v4181 = vmax.f32 %v4117, 0.0
        %v4182 = vmax.f32 %v4118, 0.0
        %v4183 = vmax.f32 %v4119, 0.0
        %v4184 = vmax.f32 %v4120, 0.0
        %v4185 = vmax.f32 %v4121, 0.0
        %v4186 = vmax.f32 %v4122, 0.0
        %v4187 = vmax.f32 %v4123, 0.0
        %v4188 = vmax.f32 %v4124, 0.0
        %v4189 = vmax.f32 %v4125, 0.0
        %v4190 = vmax.f32 %v4126, 0.0
        %v4191 = vmax.f32 %v4127, 0.0
        %v4192 = vmax.f32 %v4128, 0.0
        %v4193 = vmax.f32 %v4129, 0.0
        %v4194 = vmax.f32 %v4130, 0.0
        %4195 = vst [vmem:[#allocation3] sm:$0xff] 0
        %4196 = vst [vmem:[#allocation3 + $0x8] sm:$0xff] 0
        %s4197 = scalar_lea.vmem [#allocation3], 272
        %4198 = vst [vmem:[%s4197] sm:$0xff] 0
        %4199 = vst [vmem:[%s4197 + $0x8] sm:$0xff] 0
        %v4200 = vpack.c.bf16 %v4132, %v4131
        %v4201 = vpack.c.bf16 %v4134, %v4133
        %v4202 = vpack.c.bf16 %v4136, %v4135
        %v4203 = vpack.c.bf16 %v4138, %v4137
        %v4204 = vpack.c.bf16 %v4140, %v4139
        %v4205 = vpack.c.bf16 %v4142, %v4141
        %v4206 = vpack.c.bf16 %v4144, %v4143
        %v4207 = vpack.c.bf16 %v4146, %v4145
        %v4208 = vpack.c.bf16 %v4148, %v4147
        %v4209 = vpack.c.bf16 %v4150, %v4149
        %v4210 = vpack.c.bf16 %v4152, %v4151
        %v4211 = vpack.c.bf16 %v4154, %v4153
        %v4212 = vpack.c.bf16 %v4156, %v4155
        %v4213 = vpack.c.bf16 %v4158, %v4157
        %v4214 = vpack.c.bf16 %v4160, %v4159
        %v4215 = vpack.c.bf16 %v4162, %v4161
        %v4216 = vpack.c.bf16 %v4164, %v4163
        %v4217 = vpack.c.bf16 %v4166, %v4165
        %v4218 = vpack.c.bf16 %v4168, %v4167
        %v4219 = vpack.c.bf16 %v4170, %v4169
        %v4220 = vpack.c.bf16 %v4172, %v4171
        %v4221 = vpack.c.bf16 %v4174, %v4173
        %v4222 = vpack.c.bf16 %v4176, %v4175
        %v4223 = vpack.c.bf16 %v4178, %v4177
        %v4224 = vpack.c.bf16 %v4180, %v4179
        %v4225 = vpack.c.bf16 %v4182, %v4181
        %v4226 = vpack.c.bf16 %v4184, %v4183
        %v4227 = vpack.c.bf16 %v4186, %v4185
        %v4228 = vpack.c.bf16 %v4188, %v4187
        %v4229 = vpack.c.bf16 %v4190, %v4189
        %v4230 = vpack.c.bf16 %v4192, %v4191
        %v4231 = vpack.c.bf16 %v4194, %v4193
        %s4232 = scalar_lea.vmem [#allocation3], 16
        %4233 = vst [vmem:[%s4232] sm:$0xff] %v4200
        %4234 = vst [vmem:[%s4232 + $0x8] sm:$0xff] %v4201
        %4235 = vst [vmem:[%s4232 + $0x10] sm:$0xff] %v4202
        %4236 = vst [vmem:[%s4232 + $0x18] sm:$0xff] %v4203
        %4237 = vst [vmem:[%s4232 + $0x20] sm:$0xff] %v4204
        %4238 = vst [vmem:[%s4232 + $0x28] sm:$0xff] %v4205
        %4239 = vst [vmem:[%s4232 + $0x30] sm:$0xff] %v4206
        %4240 = vst [vmem:[%s4232 + $0x38] sm:$0xff] %v4207
        %4241 = vst [vmem:[%s4232 + $0x40] sm:$0xff] %v4208
        %4242 = vst [vmem:[%s4232 + $0x48] sm:$0xff] %v4209
        %4243 = vst [vmem:[%s4232 + $0x50] sm:$0xff] %v4210
        %4244 = vst [vmem:[%s4232 + $0x58] sm:$0xff] %v4211
        %4245 = vst [vmem:[%s4232 + $0x60] sm:$0xff] %v4212
        %4246 = vst [vmem:[%s4232 + $0x68] sm:$0xff] %v4213
        %4247 = vst [vmem:[%s4232 + $0x70] sm:$0xff] %v4214
        %4248 = vst [vmem:[%s4232 + $0x78] sm:$0xff] %v4215
        %4249 = vst [vmem:[%s4232 + $0x80] sm:$0xff] %v4216
        %4250 = vst [vmem:[%s4232 + $0x88] sm:$0xff] %v4217
        %4251 = vst [vmem:[%s4232 + $0x90] sm:$0xff] %v4218
        %4252 = vst [vmem:[%s4232 + $0x98] sm:$0xff] %v4219
        %4253 = vst [vmem:[%s4232 + $0xa0] sm:$0xff] %v4220
        %4254 = vst [vmem:[%s4232 + $0xa8] sm:$0xff] %v4221
        %4255 = vst [vmem:[%s4232 + $0xb0] sm:$0xff] %v4222
        %4256 = vst [vmem:[%s4232 + $0xb8] sm:$0xff] %v4223
        %4257 = vst [vmem:[%s4232 + $0xc0] sm:$0xff] %v4224
        %4258 = vst [vmem:[%s4232 + $0xc8] sm:$0xff] %v4225
        %4259 = vst [vmem:[%s4232 + $0xd0] sm:$0xff] %v4226
        %4260 = vst [vmem:[%s4232 + $0xd8] sm:$0xff] %v4227
        %4261 = vst [vmem:[%s4232 + $0xe0] sm:$0xff] %v4228
        %4262 = vst [vmem:[%s4232 + $0xe8] sm:$0xff] %v4229
        %4263 = vst [vmem:[%s4232 + $0xf0] sm:$0xff] %v4230
        %4264 = vst [vmem:[%s4232 + $0xf8] sm:$0xff] %v4231
        %4265 = vst [vmem:[%s4232 + $0x8] sm:$0xff] 0
        %4266 = vst [vmem:[%s4232 + $0x18] sm:$0xff] 0
        %4267 = vst [vmem:[%s4232 + $0x28] sm:$0xff] 0
        %4268 = vst [vmem:[%s4232 + $0x38] sm:$0xff] 0
        %4269 = vst [vmem:[%s4232 + $0x48] sm:$0xff] 0
        %4270 = vst [vmem:[%s4232 + $0x58] sm:$0xff] 0
        %4271 = vst [vmem:[%s4232 + $0x68] sm:$0xff] 0
        %4272 = vst [vmem:[%s4232 + $0x78] sm:$0xff] 0
        %4273 = vst [vmem:[%s4232 + $0x88] sm:$0xff] 0
        %4274 = vst [vmem:[%s4232 + $0x98] sm:$0xff] 0
        %4275 = vst [vmem:[%s4232 + $0xa8] sm:$0xff] 0
        %4276 = vst [vmem:[%s4232 + $0xb8] sm:$0xff] 0
        %4277 = vst [vmem:[%s4232 + $0xc8] sm:$0xff] 0
        %4278 = vst [vmem:[%s4232 + $0xd8] sm:$0xff] 0
        %4279 = vst [vmem:[%s4232 + $0xe8] sm:$0xff] 0
        %4280 = vst [vmem:[%s4232 + $0xf8] sm:$0xff] 0
        %v4281 = vld [vmem:[#allocation3] sm:$0xff]
        %v4282 = vld [vmem:[#allocation3 + $0x8] sm:$0xff]
        %v4283 = vld [vmem:[#allocation3 + $0x10] sm:$0xff]
        %v4284 = vld [vmem:[#allocation3 + $0x18] sm:$0xff]
        %v4285 = vld [vmem:[#allocation3 + $0x20] sm:$0xff]
        %v4286 = vld [vmem:[#allocation3 + $0x28] sm:$0xff]
        %v4287 = vld [vmem:[#allocation3 + $0x30] sm:$0xff]
        %v4288 = vld [vmem:[#allocation3 + $0x38] sm:$0xff]
        %v4289 = vld [vmem:[#allocation3 + $0x40] sm:$0xff]
        %v4290 = vld [vmem:[#allocation3 + $0x48] sm:$0xff]
        %v4291 = vld [vmem:[#allocation3 + $0x50] sm:$0xff]
        %v4292 = vld [vmem:[#allocation3 + $0x58] sm:$0xff]
        %v4293 = vld [vmem:[#allocation3 + $0x60] sm:$0xff]
        %v4294 = vld [vmem:[#allocation3 + $0x68] sm:$0xff]
        %v4295 = vld [vmem:[#allocation3 + $0x70] sm:$0xff]
        %v4296 = vld [vmem:[#allocation3 + $0x78] sm:$0xff]
        %v4297 = vld [vmem:[#allocation3 + $0x80] sm:$0xff]
        %v4298 = vld [vmem:[#allocation3 + $0x88] sm:$0xff]
        %v4299 = vld [vmem:[#allocation3 + $0x90] sm:$0xff]
        %v4300 = vld [vmem:[#allocation3 + $0x98] sm:$0xff]
        %v4301 = vld [vmem:[#allocation3 + $0xa0] sm:$0xff]
        %v4302 = vld [vmem:[#allocation3 + $0xa8] sm:$0xff]
        %v4303 = vld [vmem:[#allocation3 + $0xb0] sm:$0xff]
        %v4304 = vld [vmem:[#allocation3 + $0xb8] sm:$0xff]
        %v4305 = vld [vmem:[#allocation3 + $0xc0] sm:$0xff]
        %v4306 = vld [vmem:[#allocation3 + $0xc8] sm:$0xff]
        %v4307 = vld [vmem:[#allocation3 + $0xd0] sm:$0xff]
        %v4308 = vld [vmem:[#allocation3 + $0xd8] sm:$0xff]
        %v4309 = vld [vmem:[#allocation3 + $0xe0] sm:$0xff]
        %v4310 = vld [vmem:[#allocation3 + $0xe8] sm:$0xff]
        %v4311 = vld [vmem:[#allocation3 + $0xf0] sm:$0xff]
        %v4312 = vld [vmem:[#allocation3 + $0xf8] sm:$0xff]
        %4313 = vst [vmem:[#allocation2] sm:$0xff] %v4281
        %4314 = vst [vmem:[#allocation2 + $0x18] sm:$0xff] %v4282
        %4315 = vst [vmem:[#allocation2 + $0x30] sm:$0xff] %v4283
        %4316 = vst [vmem:[#allocation2 + $0x48] sm:$0xff] %v4284
        %4317 = vst [vmem:[#allocation2 + $0x60] sm:$0xff] %v4285
        %4318 = vst [vmem:[#allocation2 + $0x78] sm:$0xff] %v4286
        %4319 = vst [vmem:[#allocation2 + $0x90] sm:$0xff] %v4287
        %4320 = vst [vmem:[#allocation2 + $0xa8] sm:$0xff] %v4288
        %4321 = vst [vmem:[#allocation2 + $0xc0] sm:$0xff] %v4289
        %4322 = vst [vmem:[#allocation2 + $0xd8] sm:$0xff] %v4290
        %4323 = vst [vmem:[#allocation2 + $0xf0] sm:$0xff] %v4291
        %4324 = vst [vmem:[#allocation2 + $0x108] sm:$0xff] %v4292
        %4325 = vst [vmem:[#allocation2 + $0x120] sm:$0xff] %v4293
        %4326 = vst [vmem:[#allocation2 + $0x138] sm:$0xff] %v4294
        %4327 = vst [vmem:[#allocation2 + $0x150] sm:$0xff] %v4295
        %4328 = vst [vmem:[#allocation2 + $0x168] sm:$0xff] %v4296
        %4329 = vst [vmem:[#allocation2 + $0x180] sm:$0xff] %v4297
        %4330 = vst [vmem:[#allocation2 + $0x198] sm:$0xff] %v4298
        %4331 = vst [vmem:[#allocation2 + $0x1b0] sm:$0xff] %v4299
        %4332 = vst [vmem:[#allocation2 + $0x1c8] sm:$0xff] %v4300
        %4333 = vst [vmem:[#allocation2 + $0x1e0] sm:$0xff] %v4301
        %4334 = vst [vmem:[#allocation2 + $0x1f8] sm:$0xff] %v4302
        %4335 = vst [vmem:[#allocation2 + $0x210] sm:$0xff] %v4303
        %4336 = vst [vmem:[#allocation2 + $0x228] sm:$0xff] %v4304
        %4337 = vst [vmem:[#allocation2 + $0x240] sm:$0xff] %v4305
        %4338 = vst [vmem:[#allocation2 + $0x258] sm:$0xff] %v4306
        %4339 = vst [vmem:[#allocation2 + $0x270] sm:$0xff] %v4307
        %4340 = vst [vmem:[#allocation2 + $0x288] sm:$0xff] %v4308
        %4341 = vst [vmem:[#allocation2 + $0x2a0] sm:$0xff] %v4309
        %4342 = vst [vmem:[#allocation2 + $0x2b8] sm:$0xff] %v4310
        %4343 = vst [vmem:[#allocation2 + $0x2d0] sm:$0xff] %v4311
        %4344 = vst [vmem:[#allocation2 + $0x2e8] sm:$0xff] %v4312
        %v4345 = vld [vmem:[%s4232] sm:$0xff]
        %v4346 = vld [vmem:[%s4232 + $0x8] sm:$0xff]
        %v4347 = vld [vmem:[%s4232 + $0x10] sm:$0xff]
        %v4348 = vld [vmem:[%s4232 + $0x18] sm:$0xff]
        %v4349 = vld [vmem:[%s4232 + $0x20] sm:$0xff]
        %v4350 = vld [vmem:[%s4232 + $0x28] sm:$0xff]
        %v4351 = vld [vmem:[%s4232 + $0x30] sm:$0xff]
        %v4352 = vld [vmem:[%s4232 + $0x38] sm:$0xff]
        %v4353 = vld [vmem:[%s4232 + $0x40] sm:$0xff]
        %v4354 = vld [vmem:[%s4232 + $0x48] sm:$0xff]
        %v4355 = vld [vmem:[%s4232 + $0x50] sm:$0xff]
        %v4356 = vld [vmem:[%s4232 + $0x58] sm:$0xff]
        %v4357 = vld [vmem:[%s4232 + $0x60] sm:$0xff]
        %v4358 = vld [vmem:[%s4232 + $0x68] sm:$0xff]
        %v4359 = vld [vmem:[%s4232 + $0x70] sm:$0xff]
        %v4360 = vld [vmem:[%s4232 + $0x78] sm:$0xff]
        %v4361 = vld [vmem:[%s4232 + $0x80] sm:$0xff]
        %v4362 = vld [vmem:[%s4232 + $0x88] sm:$0xff]
        %v4363 = vld [vmem:[%s4232 + $0x90] sm:$0xff]
        %v4364 = vld [vmem:[%s4232 + $0x98] sm:$0xff]
        %v4365 = vld [vmem:[%s4232 + $0xa0] sm:$0xff]
        %v4366 = vld [vmem:[%s4232 + $0xa8] sm:$0xff]
        %v4367 = vld [vmem:[%s4232 + $0xb0] sm:$0xff]
        %v4368 = vld [vmem:[%s4232 + $0xb8] sm:$0xff]
        %v4369 = vld [vmem:[%s4232 + $0xc0] sm:$0xff]
        %v4370 = vld [vmem:[%s4232 + $0xc8] sm:$0xff]
        %v4371 = vld [vmem:[%s4232 + $0xd0] sm:$0xff]
        %v4372 = vld [vmem:[%s4232 + $0xd8] sm:$0xff]
        %v4373 = vld [vmem:[%s4232 + $0xe0] sm:$0xff]
        %v4374 = vld [vmem:[%s4232 + $0xe8] sm:$0xff]
        %v4375 = vld [vmem:[%s4232 + $0xf0] sm:$0xff]
        %v4376 = vld [vmem:[%s4232 + $0xf8] sm:$0xff]
        %4377 = vst [vmem:[#allocation2 + $0x8] sm:$0xff] %v4345
        %4378 = vst [vmem:[#allocation2 + $0x20] sm:$0xff] %v4346
        %4379 = vst [vmem:[#allocation2 + $0x38] sm:$0xff] %v4347
        %4380 = vst [vmem:[#allocation2 + $0x50] sm:$0xff] %v4348
        %4381 = vst [vmem:[#allocation2 + $0x68] sm:$0xff] %v4349
        %4382 = vst [vmem:[#allocation2 + $0x80] sm:$0xff] %v4350
        %4383 = vst [vmem:[#allocation2 + $0x98] sm:$0xff] %v4351
        %4384 = vst [vmem:[#allocation2 + $0xb0] sm:$0xff] %v4352
        %4385 = vst [vmem:[#allocation2 + $0xc8] sm:$0xff] %v4353
        %4386 = vst [vmem:[#allocation2 + $0xe0] sm:$0xff] %v4354
        %4387 = vst [vmem:[#allocation2 + $0xf8] sm:$0xff] %v4355
        %4388 = vst [vmem:[#allocation2 + $0x110] sm:$0xff] %v4356
        %4389 = vst [vmem:[#allocation2 + $0x128] sm:$0xff] %v4357
        %4390 = vst [vmem:[#allocation2 + $0x140] sm:$0xff] %v4358
        %4391 = vst [vmem:[#allocation2 + $0x158] sm:$0xff] %v4359
        %4392 = vst [vmem:[#allocation2 + $0x170] sm:$0xff] %v4360
        %4393 = vst [vmem:[#allocation2 + $0x188] sm:$0xff] %v4361
        %4394 = vst [vmem:[#allocation2 + $0x1a0] sm:$0xff] %v4362
        %4395 = vst [vmem:[#allocation2 + $0x1b8] sm:$0xff] %v4363
        %4396 = vst [vmem:[#allocation2 + $0x1d0] sm:$0xff] %v4364
        %4397 = vst [vmem:[#allocation2 + $0x1e8] sm:$0xff] %v4365
        %4398 = vst [vmem:[#allocation2 + $0x200] sm:$0xff] %v4366
        %4399 = vst [vmem:[#allocation2 + $0x218] sm:$0xff] %v4367
        %4400 = vst [vmem:[#allocation2 + $0x230] sm:$0xff] %v4368
        %4401 = vst [vmem:[#allocation2 + $0x248] sm:$0xff] %v4369
        %4402 = vst [vmem:[#allocation2 + $0x260] sm:$0xff] %v4370
        %4403 = vst [vmem:[#allocation2 + $0x278] sm:$0xff] %v4371
        %4404 = vst [vmem:[#allocation2 + $0x290] sm:$0xff] %v4372
        %4405 = vst [vmem:[#allocation2 + $0x2a8] sm:$0xff] %v4373
        %4406 = vst [vmem:[#allocation2 + $0x2c0] sm:$0xff] %v4374
        %4407 = vst [vmem:[#allocation2 + $0x2d8] sm:$0xff] %v4375
        %4408 = vst [vmem:[#allocation2 + $0x2f0] sm:$0xff] %v4376
        %s4409 = scalar_lea.vmem [#allocation3], 32
        %v4410 = vld [vmem:[%s4409] sm:$0xff]
        %v4411 = vld [vmem:[%s4409 + $0x8] sm:$0xff]
        %v4412 = vld [vmem:[%s4409 + $0x10] sm:$0xff]
        %v4413 = vld [vmem:[%s4409 + $0x18] sm:$0xff]
        %v4414 = vld [vmem:[%s4409 + $0x20] sm:$0xff]
        %v4415 = vld [vmem:[%s4409 + $0x28] sm:$0xff]
        %v4416 = vld [vmem:[%s4409 + $0x30] sm:$0xff]
        %v4417 = vld [vmem:[%s4409 + $0x38] sm:$0xff]
        %v4418 = vld [vmem:[%s4409 + $0x40] sm:$0xff]
        %v4419 = vld [vmem:[%s4409 + $0x48] sm:$0xff]
        %v4420 = vld [vmem:[%s4409 + $0x50] sm:$0xff]
        %v4421 = vld [vmem:[%s4409 + $0x58] sm:$0xff]
        %v4422 = vld [vmem:[%s4409 + $0x60] sm:$0xff]
        %v4423 = vld [vmem:[%s4409 + $0x68] sm:$0xff]
        %v4424 = vld [vmem:[%s4409 + $0x70] sm:$0xff]
        %v4425 = vld [vmem:[%s4409 + $0x78] sm:$0xff]
        %v4426 = vld [vmem:[%s4409 + $0x80] sm:$0xff]
        %v4427 = vld [vmem:[%s4409 + $0x88] sm:$0xff]
        %v4428 = vld [vmem:[%s4409 + $0x90] sm:$0xff]
        %v4429 = vld [vmem:[%s4409 + $0x98] sm:$0xff]
        %v4430 = vld [vmem:[%s4409 + $0xa0] sm:$0xff]
        %v4431 = vld [vmem:[%s4409 + $0xa8] sm:$0xff]
        %v4432 = vld [vmem:[%s4409 + $0xb0] sm:$0xff]
        %v4433 = vld [vmem:[%s4409 + $0xb8] sm:$0xff]
        %v4434 = vld [vmem:[%s4409 + $0xc0] sm:$0xff]
        %v4435 = vld [vmem:[%s4409 + $0xc8] sm:$0xff]
        %v4436 = vld [vmem:[%s4409 + $0xd0] sm:$0xff]
        %v4437 = vld [vmem:[%s4409 + $0xd8] sm:$0xff]
        %v4438 = vld [vmem:[%s4409 + $0xe0] sm:$0xff]
        %v4439 = vld [vmem:[%s4409 + $0xe8] sm:$0xff]
        %v4440 = vld [vmem:[%s4409 + $0xf0] sm:$0xff]
        %v4441 = vld [vmem:[%s4409 + $0xf8] sm:$0xff]
        %4442 = vst [vmem:[#allocation2 + $0x10] sm:$0xff] %v4410
        %4443 = vst [vmem:[#allocation2 + $0x28] sm:$0xff] %v4411
        %4444 = vst [vmem:[#allocation2 + $0x40] sm:$0xff] %v4412
        %4445 = vst [vmem:[#allocation2 + $0x58] sm:$0xff] %v4413
        %4446 = vst [vmem:[#allocation2 + $0x70] sm:$0xff] %v4414
        %4447 = vst [vmem:[#allocation2 + $0x88] sm:$0xff] %v4415
        %4448 = vst [vmem:[#allocation2 + $0xa0] sm:$0xff] %v4416
        %4449 = vst [vmem:[#allocation2 + $0xb8] sm:$0xff] %v4417
        %4450 = vst [vmem:[#allocation2 + $0xd0] sm:$0xff] %v4418
        %4451 = vst [vmem:[#allocation2 + $0xe8] sm:$0xff] %v4419
        %4452 = vst [vmem:[#allocation2 + $0x100] sm:$0xff] %v4420
        %4453 = vst [vmem:[#allocation2 + $0x118] sm:$0xff] %v4421
        %4454 = vst [vmem:[#allocation2 + $0x130] sm:$0xff] %v4422
        %4455 = vst [vmem:[#allocation2 + $0x148] sm:$0xff] %v4423
        %4456 = vst [vmem:[#allocation2 + $0x160] sm:$0xff] %v4424
        %4457 = vst [vmem:[#allocation2 + $0x178] sm:$0xff] %v4425
        %4458 = vst [vmem:[#allocation2 + $0x190] sm:$0xff] %v4426
        %4459 = vst [vmem:[#allocation2 + $0x1a8] sm:$0xff] %v4427
        %4460 = vst [vmem:[#allocation2 + $0x1c0] sm:$0xff] %v4428
        %4461 = vst [vmem:[#allocation2 + $0x1d8] sm:$0xff] %v4429
        %4462 = vst [vmem:[#allocation2 + $0x1f0] sm:$0xff] %v4430
        %4463 = vst [vmem:[#allocation2 + $0x208] sm:$0xff] %v4431
        %4464 = vst [vmem:[#allocation2 + $0x220] sm:$0xff] %v4432
        %4465 = vst [vmem:[#allocation2 + $0x238] sm:$0xff] %v4433
        %4466 = vst [vmem:[#allocation2 + $0x250] sm:$0xff] %v4434
        %4467 = vst [vmem:[#allocation2 + $0x268] sm:$0xff] %v4435
        %4468 = vst [vmem:[#allocation2 + $0x280] sm:$0xff] %v4436
        %4469 = vst [vmem:[#allocation2 + $0x298] sm:$0xff] %v4437
        %4470 = vst [vmem:[#allocation2 + $0x2b0] sm:$0xff] %v4438
        %4471 = vst [vmem:[#allocation2 + $0x2c8] sm:$0xff] %v4439
        %4472 = vst [vmem:[#allocation2 + $0x2e0] sm:$0xff] %v4440
        %4473 = vst [vmem:[#allocation2 + $0x2f8] sm:$0xff] %v4441
        %v4474 = vld [vmem:[#allocation2] sm:$0xff]
        %v4475 = vld [vmem:[#allocation2 + $0x8] sm:$0xff]
        %v4476 = vld [vmem:[#allocation2 + $0x10] sm:$0xff]
        %v4477 = vld [vmem:[#allocation2 + $0x18] sm:$0xff]
        %v4478 = vld [vmem:[#allocation2 + $0x20] sm:$0xff]
        %v4479 = vld [vmem:[#allocation2 + $0x28] sm:$0xff]
        %v4480 = vld [vmem:[#allocation2 + $0x30] sm:$0xff]
        %v4481 = vld [vmem:[#allocation2 + $0x38] sm:$0xff]
        %v4482 = vld [vmem:[#allocation2 + $0x40] sm:$0xff]
        %v4483 = vld [vmem:[#allocation2 + $0x48] sm:$0xff]
        %v4484 = vld [vmem:[#allocation2 + $0x50] sm:$0xff]
        %v4485 = vld [vmem:[#allocation2 + $0x58] sm:$0xff]
        %v4486 = vld [vmem:[#allocation2 + $0x60] sm:$0xff]
        %v4487 = vld [vmem:[#allocation2 + $0x68] sm:$0xff]
        %v4488 = vld [vmem:[#allocation2 + $0x70] sm:$0xff]
        %v4489 = vld [vmem:[#allocation2 + $0x78] sm:$0xff]
        %v4490 = vld [vmem:[#allocation2 + $0x80] sm:$0xff]
        %v4491 = vld [vmem:[#allocation2 + $0x88] sm:$0xff]
        %v4492 = vld [vmem:[#allocation2 + $0x90] sm:$0xff]
        %v4493 = vld [vmem:[#allocation2 + $0x98] sm:$0xff]
        %v4494 = vld [vmem:[#allocation2 + $0xa0] sm:$0xff]
        %v4495 = vld [vmem:[#allocation2 + $0xa8] sm:$0xff]
        %v4496 = vld [vmem:[#allocation2 + $0xb0] sm:$0xff]
        %v4497 = vld [vmem:[#allocation2 + $0xb8] sm:$0xff]
        %v4498 = vld [vmem:[#allocation2 + $0xc0] sm:$0xff]
        %v4499 = vld [vmem:[#allocation2 + $0xc8] sm:$0xff]
        %v4500 = vld [vmem:[#allocation2 + $0xd0] sm:$0xff]
        %v4501 = vld [vmem:[#allocation2 + $0xd8] sm:$0xff]
        %v4502 = vld [vmem:[#allocation2 + $0xe0] sm:$0xff]
        %v4503 = vld [vmem:[#allocation2 + $0xe8] sm:$0xff]
        %v4504 = vld [vmem:[#allocation2 + $0xf0] sm:$0xff]
        %v4505 = vld [vmem:[#allocation2 + $0xf8] sm:$0xff]
        %v4506 = vld [vmem:[#allocation2 + $0x100] sm:$0xff]
        %v4507 = vld [vmem:[#allocation2 + $0x108] sm:$0xff]
        %v4508 = vld [vmem:[#allocation2 + $0x110] sm:$0xff]
        %v4509 = vld [vmem:[#allocation2 + $0x118] sm:$0xff]
        %v4510 = vld [vmem:[#allocation2 + $0x120] sm:$0xff]
        %v4511 = vld [vmem:[#allocation2 + $0x128] sm:$0xff]
        %v4512 = vld [vmem:[#allocation2 + $0x130] sm:$0xff]
        %v4513 = vld [vmem:[#allocation2 + $0x138] sm:$0xff]
        %v4514 = vld [vmem:[#allocation2 + $0x140] sm:$0xff]
        %v4515 = vld [vmem:[#allocation2 + $0x148] sm:$0xff]
        %v4516 = vld [vmem:[#allocation2 + $0x150] sm:$0xff]
        %v4517 = vld [vmem:[#allocation2 + $0x158] sm:$0xff]
        %v4518 = vld [vmem:[#allocation2 + $0x160] sm:$0xff]
        %v4519 = vld [vmem:[#allocation2 + $0x168] sm:$0xff]
        %v4520 = vld [vmem:[#allocation2 + $0x170] sm:$0xff]
        %v4521 = vld [vmem:[#allocation2 + $0x178] sm:$0xff]
        %v4522 = vld [vmem:[#allocation2 + $0x180] sm:$0xff]
        %v4523 = vld [vmem:[#allocation2 + $0x188] sm:$0xff]
        %v4524 = vld [vmem:[#allocation2 + $0x190] sm:$0xff]
        %v4525 = vld [vmem:[#allocation2 + $0x198] sm:$0xff]
        %v4526 = vld [vmem:[#allocation2 + $0x1a0] sm:$0xff]
        %v4527 = vld [vmem:[#allocation2 + $0x1a8] sm:$0xff]
        %v4528 = vld [vmem:[#allocation2 + $0x1b0] sm:$0xff]
        %v4529 = vld [vmem:[#allocation2 + $0x1b8] sm:$0xff]
        %v4530 = vld [vmem:[#allocation2 + $0x1c0] sm:$0xff]
        %v4531 = vld [vmem:[#allocation2 + $0x1c8] sm:$0xff]
        %v4532 = vld [vmem:[#allocation2 + $0x1d0] sm:$0xff]
        %v4533 = vld [vmem:[#allocation2 + $0x1d8] sm:$0xff]
        %v4534 = vld [vmem:[#allocation2 + $0x1e0] sm:$0xff]
        %v4535 = vld [vmem:[#allocation2 + $0x1e8] sm:$0xff]
        %v4536 = vld [vmem:[#allocation2 + $0x1f0] sm:$0xff]
        %v4537 = vld [vmem:[#allocation2 + $0x1f8] sm:$0xff]
        %v4538 = vld [vmem:[#allocation2 + $0x200] sm:$0xff]
        %v4539 = vld [vmem:[#allocation2 + $0x208] sm:$0xff]
        %v4540 = vld [vmem:[#allocation2 + $0x210] sm:$0xff]
        %v4541 = vld [vmem:[#allocation2 + $0x218] sm:$0xff]
        %v4542 = vld [vmem:[#allocation2 + $0x220] sm:$0xff]
        %v4543 = vld [vmem:[#allocation2 + $0x228] sm:$0xff]
        %v4544 = vld [vmem:[#allocation2 + $0x230] sm:$0xff]
        %v4545 = vld [vmem:[#allocation2 + $0x238] sm:$0xff]
        %v4546 = vld [vmem:[#allocation2 + $0x240] sm:$0xff]
        %v4547 = vld [vmem:[#allocation2 + $0x248] sm:$0xff]
        %v4548 = vld [vmem:[#allocation2 + $0x250] sm:$0xff]
        %v4549 = vld [vmem:[#allocation2 + $0x258] sm:$0xff]
        %v4550 = vld [vmem:[#allocation2 + $0x260] sm:$0xff]
        %v4551 = vld [vmem:[#allocation2 + $0x268] sm:$0xff]
        %v4552 = vld [vmem:[#allocation2 + $0x270] sm:$0xff]
        %v4553 = vld [vmem:[#allocation2 + $0x278] sm:$0xff]
        %v4554 = vld [vmem:[#allocation2 + $0x280] sm:$0xff]
        %v4555 = vld [vmem:[#allocation2 + $0x288] sm:$0xff]
        %v4556 = vld [vmem:[#allocation2 + $0x290] sm:$0xff]
        %v4557 = vld [vmem:[#allocation2 + $0x298] sm:$0xff]
        %v4558 = vld [vmem:[#allocation2 + $0x2a0] sm:$0xff]
        %v4559 = vld [vmem:[#allocation2 + $0x2a8] sm:$0xff]
        %v4560 = vld [vmem:[#allocation2 + $0x2b0] sm:$0xff]
        %v4561 = vld [vmem:[#allocation2 + $0x2b8] sm:$0xff]
        %v4562 = vld [vmem:[#allocation2 + $0x2c0] sm:$0xff]
        %v4563 = vld [vmem:[#allocation2 + $0x2c8] sm:$0xff]
        %v4564 = vld [vmem:[#allocation2 + $0x2d0] sm:$0xff]
        %v4565 = vld [vmem:[#allocation2 + $0x2d8] sm:$0xff]
        %v4566 = vld [vmem:[#allocation2 + $0x2e0] sm:$0xff]
        %v4567 = vld [vmem:[#allocation2 + $0x2e8] sm:$0xff]
        %v4568 = vld [vmem:[#allocation2 + $0x2f0] sm:$0xff]
        %v4569 = vld [vmem:[#allocation2 + $0x2f8] sm:$0xff]
        %v4570 = vld [vmem:[#allocation9] sm:$0xf]
        %v4571 = vld [vmem:[#allocation9 + $0x4] sm:$0xf]
        %v4572 = vld [vmem:[#allocation9 + $0x8] sm:$0xf]
        %v4573 = vld [vmem:[#allocation9 + $0xc] sm:$0xf]
        %v4574 = vld [vmem:[#allocation9 + $0x10] sm:$0xf]
        %v4575 = vld [vmem:[#allocation9 + $0x14] sm:$0xf]
        %v4576 = vld [vmem:[#allocation9 + $0x18] sm:$0xf]
        %v4577 = vld [vmem:[#allocation9 + $0x1c] sm:$0xf]
        %v4578 = vld [vmem:[#allocation9 + $0x20] sm:$0xf]
        %v4579 = vld [vmem:[#allocation9 + $0x24] sm:$0xf]
        %v4580 = vld [vmem:[#allocation9 + $0x28] sm:$0xf]
        %v4581 = vld [vmem:[#allocation9 + $0x2c] sm:$0xf]
        %v4582 = vld [vmem:[#allocation9 + $0x30] sm:$0xf]
        %v4583 = vld [vmem:[#allocation9 + $0x34] sm:$0xf]
        %v4584 = vld [vmem:[#allocation9 + $0x38] sm:$0xf]
        %v4585 = vld [vmem:[#allocation9 + $0x3c] sm:$0xf]
        %v4586 = vld [vmem:[#allocation9 + $0x40] sm:$0xf]
        %v4587 = vld [vmem:[#allocation9 + $0x44] sm:$0xf]
        %v4588 = vld [vmem:[#allocation9 + $0x48] sm:$0xf]
        %v4589 = vld [vmem:[#allocation9 + $0x4c] sm:$0xf]
        %v4590 = vld [vmem:[#allocation9 + $0x50] sm:$0xf]
        %v4591 = vld [vmem:[#allocation9 + $0x54] sm:$0xf]
        %v4592 = vld [vmem:[#allocation9 + $0x58] sm:$0xf]
        %v4593 = vld [vmem:[#allocation9 + $0x5c] sm:$0xf]
        %v4594 = vld [vmem:[#allocation9 + $0x60] sm:$0xf]
        %v4595 = vld [vmem:[#allocation9 + $0x64] sm:$0xf]
        %v4596 = vld [vmem:[#allocation9 + $0x68] sm:$0xf]
        %v4597 = vld [vmem:[#allocation9 + $0x6c] sm:$0xf]
        %v4598 = vld [vmem:[#allocation9 + $0x70] sm:$0xf]
        %v4599 = vld [vmem:[#allocation9 + $0x74] sm:$0xf]
        %v4600 = vld [vmem:[#allocation9 + $0x78] sm:$0xf]
        %v4601 = vld [vmem:[#allocation9 + $0x7c] sm:$0xf]
        %v4602 = vld [vmem:[#allocation9 + $0x80] sm:$0xf]
        %v4603 = vld [vmem:[#allocation9 + $0x84] sm:$0xf]
        %v4604 = vld [vmem:[#allocation9 + $0x88] sm:$0xf]
        %v4605 = vld [vmem:[#allocation9 + $0x8c] sm:$0xf]
        %v4606 = vld [vmem:[#allocation9 + $0x90] sm:$0xf]
        %v4607 = vld [vmem:[#allocation9 + $0x94] sm:$0xf]
        %v4608 = vld [vmem:[#allocation9 + $0x98] sm:$0xf]
        %v4609 = vld [vmem:[#allocation9 + $0x9c] sm:$0xf]
        %v4610 = vld [vmem:[#allocation9 + $0xa0] sm:$0xf]
        %v4611 = vld [vmem:[#allocation9 + $0xa4] sm:$0xf]
        %v4612 = vld [vmem:[#allocation9 + $0xa8] sm:$0xf]
        %v4613 = vld [vmem:[#allocation9 + $0xac] sm:$0xf]
        %v4614 = vld [vmem:[#allocation9 + $0xb0] sm:$0xf]
        %v4615 = vld [vmem:[#allocation9 + $0xb4] sm:$0xf]
        %v4616 = vld [vmem:[#allocation9 + $0xb8] sm:$0xf]
        %v4617 = vld [vmem:[#allocation9 + $0xbc] sm:$0xf]
        %v4666 = vunpack.c.l.b16 %v4570
        %v4667 = vunpack.c.l.b16 %v4571
        %v4668 = vunpack.c.l.b16 %v4572
        %v4669 = vunpack.c.l.b16 %v4573
        %v4670 = vunpack.c.l.b16 %v4574
        %v4671 = vunpack.c.l.b16 %v4575
        %v4672 = vunpack.c.l.b16 %v4576
        %v4673 = vunpack.c.l.b16 %v4577
        %v4674 = vunpack.c.l.b16 %v4578
        %v4675 = vunpack.c.l.b16 %v4579
        %v4676 = vunpack.c.l.b16 %v4580
        %v4677 = vunpack.c.l.b16 %v4581
        %v4678 = vunpack.c.l.b16 %v4582
        %v4679 = vunpack.c.l.b16 %v4583
        %v4680 = vunpack.c.l.b16 %v4584
        %v4681 = vunpack.c.l.b16 %v4585
        %v4682 = vunpack.c.l.b16 %v4586
        %v4683 = vunpack.c.l.b16 %v4587
        %v4684 = vunpack.c.l.b16 %v4588
        %v4685 = vunpack.c.l.b16 %v4589
        %v4686 = vunpack.c.l.b16 %v4590
        %v4687 = vunpack.c.l.b16 %v4591
        %v4688 = vunpack.c.l.b16 %v4592
        %v4689 = vunpack.c.l.b16 %v4593
        %v4690 = vunpack.c.l.b16 %v4594
        %v4691 = vunpack.c.l.b16 %v4595
        %v4692 = vunpack.c.l.b16 %v4596
        %v4693 = vunpack.c.l.b16 %v4597
        %v4694 = vunpack.c.l.b16 %v4598
        %v4695 = vunpack.c.l.b16 %v4599
        %v4696 = vunpack.c.l.b16 %v4600
        %v4697 = vunpack.c.l.b16 %v4601
        %v4698 = vunpack.c.l.b16 %v4602
        %v4699 = vunpack.c.l.b16 %v4603
        %v4700 = vunpack.c.l.b16 %v4604
        %v4701 = vunpack.c.l.b16 %v4605
        %v4702 = vunpack.c.l.b16 %v4606
        %v4703 = vunpack.c.l.b16 %v4607
        %v4704 = vunpack.c.l.b16 %v4608
        %v4705 = vunpack.c.l.b16 %v4609
        %v4706 = vunpack.c.l.b16 %v4610
        %v4707 = vunpack.c.l.b16 %v4611
        %v4708 = vunpack.c.l.b16 %v4612
        %v4709 = vunpack.c.l.b16 %v4613
        %v4710 = vunpack.c.l.b16 %v4614
        %v4711 = vunpack.c.l.b16 %v4615
        %v4712 = vunpack.c.l.b16 %v4616
        %v4713 = vunpack.c.l.b16 %v4617
        %v4714 = vpack.c.b16 %v4667, %v4666
        %v4715 = vpack.c.b16 %v4669, %v4668
        %v4716 = vpack.c.b16 %v4671, %v4670
        %v4717 = vpack.c.b16 %v4673, %v4672
        %v4718 = vpack.c.b16 %v4675, %v4674
        %v4719 = vpack.c.b16 %v4677, %v4676
        %v4720 = vpack.c.b16 %v4679, %v4678
        %v4721 = vpack.c.b16 %v4681, %v4680
        %v4722 = vpack.c.b16 %v4683, %v4682
        %v4723 = vpack.c.b16 %v4685, %v4684
        %v4724 = vpack.c.b16 %v4687, %v4686
        %v4725 = vpack.c.b16 %v4689, %v4688
        %v4726 = vpack.c.b16 %v4691, %v4690
        %v4727 = vpack.c.b16 %v4693, %v4692
        %v4728 = vpack.c.b16 %v4695, %v4694
        %v4729 = vpack.c.b16 %v4697, %v4696
        %v4730 = vpack.c.b16 %v4699, %v4698
        %v4731 = vpack.c.b16 %v4701, %v4700
        %v4732 = vpack.c.b16 %v4703, %v4702
        %v4733 = vpack.c.b16 %v4705, %v4704
        %v4734 = vpack.c.b16 %v4707, %v4706
        %v4735 = vpack.c.b16 %v4709, %v4708
        %v4736 = vpack.c.b16 %v4711, %v4710
        %v4737 = vpack.c.b16 %v4713, %v4712
        %4762 = vmatprep.subr.bf16.mxu0 0
        %4763 = vmatpush1.bf16.msra.mxu0 %v4714
        %4764 = vmatprep.subr.bf16.mxu0 0
        %4765 = vmatpush1.bf16.msra.mxu0 %v4715
        %4766 = vmatprep.subr.bf16.mxu0 0
        %4767 = vmatpush1.bf16.msra.mxu0 %v4716
        %4768 = vmatprep.subr.bf16.mxu0 0
        %4769 = vmatpush1.bf16.msra.mxu0 %v4717
        %4770 = vmatprep.subr.bf16.mxu0 0
        %4771 = vmatpush1.bf16.msra.mxu0 %v4718
        %4772 = vmatprep.subr.bf16.mxu0 0
        %4773 = vmatpush1.bf16.msra.mxu0 %v4719
        %4774 = vmatprep.subr.bf16.mxu0 0
        %4775 = vmatpush1.bf16.msra.mxu0 %v4720
        %4776 = vmatprep.subr.bf16.mxu0 0
        %4777 = vmatpush1.bf16.msra.mxu0 %v4721
        %4778 = vmatprep.subr.bf16.mxu0 0
        %4779 = vmatpush1.bf16.msra.mxu0 %v4722
        %4780 = vmatprep.subr.bf16.mxu0 0
        %4781 = vmatpush1.bf16.msra.mxu0 %v4723
        %4782 = vmatprep.subr.bf16.mxu0 0
        %4783 = vmatpush1.bf16.msra.mxu0 %v4724
        %4784 = vmatprep.subr.bf16.mxu0 0
        %4785 = vmatpush1.bf16.msra.mxu0 %v4725
        %4786 = vmatprep.subr.bf16.mxu0 0
        %4787 = vmatpush1.bf16.msra.mxu0 %v4726
        %4788 = vmatprep.subr.bf16.mxu0 0
        %4789 = vmatpush1.bf16.msra.mxu0 %v4727
        %4790 = vmatprep.subr.bf16.mxu0 0
        %4791 = vmatpush1.bf16.msra.mxu0 %v4728
        %4792 = vmatprep.subr.bf16.mxu0 0
        %4793 = vmatpush1.bf16.msra.mxu0 %v4729
        %4794 = vmatprep.mubr.bf16.mxu0 %v4475
        %4795 = vmatmul.mubr.bf16.gmra.mrb[0].mxu0 %v4474
        %v4796 = vpop.f32.mrb[0].mxu0
        %v4797 = vadd.f32 0.0, %v4796
        %v4798 = vpop.f32.mrb[0].mxu0
        %v4799 = vpop.f32.mrb[0].mxu0
        %v4800 = vadd.f32 0.0, %v4799
        %v4801 = vpop.f32.mrb[0].mxu0
        %4802 = vmatprep.mubr.bf16.mxu0 %v4478
        %4803 = vmatmul.mubr.bf16.gmra.mrb[0].mxu0 %v4477
        %v4804 = vpop.f32.mrb[0].mxu0
        %v4805 = vadd.f32 0.0, %v4804
        %v4806 = vpop.f32.mrb[0].mxu0
        %v4807 = vpop.f32.mrb[0].mxu0
        %v4808 = vadd.f32 0.0, %v4807
        %v4809 = vpop.f32.mrb[0].mxu0
        %4810 = vmatprep.mubr.bf16.mxu0 %v4481
        %4811 = vmatmul.mubr.bf16.gmra.mrb[0].mxu0 %v4480
        %v4812 = vpop.f32.mrb[0].mxu0
        %v4813 = vadd.f32 0.0, %v4812
        %v4814 = vpop.f32.mrb[0].mxu0
        %v4815 = vpop.f32.mrb[0].mxu0
        %v4816 = vadd.f32 0.0, %v4815
        %v4817 = vpop.f32.mrb[0].mxu0
        %4818 = vmatprep.mubr.bf16.mxu0 %v4484
        %4819 = vmatmul.mubr.bf16.gmra.mrb[0].mxu0 %v4483
        %v4820 = vpop.f32.mrb[0].mxu0
        %v4821 = vadd.f32 0.0, %v4820
        %v4822 = vpop.f32.mrb[0].mxu0
        %v4823 = vpop.f32.mrb[0].mxu0
        %v4824 = vadd.f32 0.0, %v4823
        %v4825 = vpop.f32.mrb[0].mxu0
        %4826 = vmatprep.mubr.bf16.mxu0 %v4487
        %4827 = vmatmul.mubr.bf16.gmra.mrb[0].mxu0 %v4486
        %v4828 = vpop.f32.mrb[0].mxu0
        %v4829 = vadd.f32 0.0, %v4828
        %v4830 = vpop.f32.mrb[0].mxu0
        %v4831 = vpop.f32.mrb[0].mxu0
        %v4832 = vadd.f32 0.0, %v4831
        %v4833 = vpop.f32.mrb[0].mxu0
        %4834 = vmatprep.mubr.bf16.mxu0 %v4490
        %4835 = vmatmul.mubr.bf16.gmra.mrb[0].mxu0 %v4489
        %v4836 = vpop.f32.mrb[0].mxu0
        %v4837 = vadd.f32 0.0, %v4836
        %v4838 = vpop.f32.mrb[0].mxu0
        %v4839 = vpop.f32.mrb[0].mxu0
        %v4840 = vadd.f32 0.0, %v4839
        %v4841 = vpop.f32.mrb[0].mxu0
        %4842 = vmatprep.mubr.bf16.mxu0 %v4493
        %4843 = vmatmul.mubr.bf16.gmra.mrb[0].mxu0 %v4492
        %v4844 = vpop.f32.mrb[0].mxu0
        %v4845 = vadd.f32 0.0, %v4844
        %v4846 = vpop.f32.mrb[0].mxu0
        %v4847 = vpop.f32.mrb[0].mxu0
        %v4848 = vadd.f32 0.0, %v4847
        %v4849 = vpop.f32.mrb[0].mxu0
        %4850 = vmatprep.mubr.bf16.mxu0 %v4496
        %4851 = vmatmul.mubr.bf16.gmra.mrb[0].mxu0 %v4495
        %v4852 = vpop.f32.mrb[0].mxu0
        %v4853 = vadd.f32 0.0, %v4852
        %v4854 = vpop.f32.mrb[0].mxu0
        %v4855 = vpop.f32.mrb[0].mxu0
        %v4856 = vadd.f32 0.0, %v4855
        %v4857 = vpop.f32.mrb[0].mxu0
        %4858 = vmatprep.mubr.bf16.mxu0 %v4499
        %4859 = vmatmul.mubr.bf16.gmra.mrb[0].mxu0 %v4498
        %v4860 = vpop.f32.mrb[0].mxu0
        %v4861 = vadd.f32 0.0, %v4860
        %v4862 = vpop.f32.mrb[0].mxu0
        %v4863 = vpop.f32.mrb[0].mxu0
        %v4864 = vadd.f32 0.0, %v4863
        %v4865 = vpop.f32.mrb[0].mxu0
        %4866 = vmatprep.mubr.bf16.mxu0 %v4502
        %4867 = vmatmul.mubr.bf16.gmra.mrb[0].mxu0 %v4501
        %v4868 = vpop.f32.mrb[0].mxu0
        %v4869 = vadd.f32 0.0, %v4868
        %v4870 = vpop.f32.mrb[0].mxu0
        %v4871 = vpop.f32.mrb[0].mxu0
        %v4872 = vadd.f32 0.0, %v4871
        %v4873 = vpop.f32.mrb[0].mxu0
        %4874 = vmatprep.mubr.bf16.mxu0 %v4505
        %4875 = vmatmul.mubr.bf16.gmra.mrb[0].mxu0 %v4504
        %v4876 = vpop.f32.mrb[0].mxu0
        %v4877 = vadd.f32 0.0, %v4876
        %v4878 = vpop.f32.mrb[0].mxu0
        %v4879 = vpop.f32.mrb[0].mxu0
        %v4880 = vadd.f32 0.0, %v4879
        %v4881 = vpop.f32.mrb[0].mxu0
        %4882 = vmatprep.mubr.bf16.mxu0 %v4508
        %4883 = vmatmul.mubr.bf16.gmra.mrb[0].mxu0 %v4507
        %v4884 = vpop.f32.mrb[0].mxu0
        %v4885 = vadd.f32 0.0, %v4884
        %v4886 = vpop.f32.mrb[0].mxu0
        %v4887 = vpop.f32.mrb[0].mxu0
        %v4888 = vadd.f32 0.0, %v4887
        %v4889 = vpop.f32.mrb[0].mxu0
        %4890 = vmatprep.mubr.bf16.mxu0 %v4511
        %4891 = vmatmul.mubr.bf16.gmra.mrb[0].mxu0 %v4510
        %v4892 = vpop.f32.mrb[0].mxu0
        %v4893 = vadd.f32 0.0, %v4892
        %v4894 = vpop.f32.mrb[0].mxu0
        %v4895 = vpop.f32.mrb[0].mxu0
        %v4896 = vadd.f32 0.0, %v4895
        %v4897 = vpop.f32.mrb[0].mxu0
        %4898 = vmatprep.mubr.bf16.mxu0 %v4514
        %4899 = vmatmul.mubr.bf16.gmra.mrb[0].mxu0 %v4513
        %v4900 = vpop.f32.mrb[0].mxu0
        %v4901 = vadd.f32 0.0, %v4900
        %v4902 = vpop.f32.mrb[0].mxu0
        %v4903 = vpop.f32.mrb[0].mxu0
        %v4904 = vadd.f32 0.0, %v4903
        %v4905 = vpop.f32.mrb[0].mxu0
        %4906 = vmatprep.mubr.bf16.mxu0 %v4517
        %4907 = vmatmul.mubr.bf16.gmra.mrb[0].mxu0 %v4516
        %v4908 = vpop.f32.mrb[0].mxu0
        %v4909 = vadd.f32 0.0, %v4908
        %v4910 = vpop.f32.mrb[0].mxu0
        %v4911 = vpop.f32.mrb[0].mxu0
        %v4912 = vadd.f32 0.0, %v4911
        %v4913 = vpop.f32.mrb[0].mxu0
        %4914 = vmatprep.mubr.bf16.mxu0 %v4520
        %4915 = vmatmul.mubr.bf16.gmra.mrb[0].mxu0 %v4519
        %v4916 = vpop.f32.mrb[0].mxu0
        %v4917 = vadd.f32 0.0, %v4916
        %v4918 = vpop.f32.mrb[0].mxu0
        %v4919 = vpop.f32.mrb[0].mxu0
        %v4920 = vadd.f32 0.0, %v4919
        %v4921 = vpop.f32.mrb[0].mxu0
        %4922 = vmatprep.mubr.bf16.mxu0 %v4523
        %4923 = vmatmul.mubr.bf16.gmra.mrb[0].mxu0 %v4522
        %v4924 = vpop.f32.mrb[0].mxu0
        %v4925 = vadd.f32 0.0, %v4924
        %v4926 = vpop.f32.mrb[0].mxu0
        %v4927 = vpop.f32.mrb[0].mxu0
        %v4928 = vadd.f32 0.0, %v4927
        %v4929 = vpop.f32.mrb[0].mxu0
        %4930 = vmatprep.mubr.bf16.mxu0 %v4526
        %4931 = vmatmul.mubr.bf16.gmra.mrb[0].mxu0 %v4525
        %v4932 = vpop.f32.mrb[0].mxu0
        %v4933 = vadd.f32 0.0, %v4932
        %v4934 = vpop.f32.mrb[0].mxu0
        %v4935 = vpop.f32.mrb[0].mxu0
        %v4936 = vadd.f32 0.0, %v4935
        %v4937 = vpop.f32.mrb[0].mxu0
        %4938 = vmatprep.mubr.bf16.mxu0 %v4529
        %4939 = vmatmul.mubr.bf16.gmra.mrb[0].mxu0 %v4528
        %v4940 = vpop.f32.mrb[0].mxu0
        %v4941 = vadd.f32 0.0, %v4940
        %v4942 = vpop.f32.mrb[0].mxu0
        %v4943 = vpop.f32.mrb[0].mxu0
        %v4944 = vadd.f32 0.0, %v4943
        %v4945 = vpop.f32.mrb[0].mxu0
        %4946 = vmatprep.mubr.bf16.mxu0 %v4532
        %4947 = vmatmul.mubr.bf16.gmra.mrb[0].mxu0 %v4531
        %v4948 = vpop.f32.mrb[0].mxu0
        %v4949 = vadd.f32 0.0, %v4948
        %v4950 = vpop.f32.mrb[0].mxu0
        %v4951 = vpop.f32.mrb[0].mxu0
        %v4952 = vadd.f32 0.0, %v4951
        %v4953 = vpop.f32.mrb[0].mxu0
        %4954 = vmatprep.mubr.bf16.mxu0 %v4535
        %4955 = vmatmul.mubr.bf16.gmra.mrb[0].mxu0 %v4534
        %v4956 = vpop.f32.mrb[0].mxu0
        %v4957 = vadd.f32 0.0, %v4956
        %v4958 = vpop.f32.mrb[0].mxu0
        %v4959 = vpop.f32.mrb[0].mxu0
        %v4960 = vadd.f32 0.0, %v4959
        %v4961 = vpop.f32.mrb[0].mxu0
        %4962 = vmatprep.mubr.bf16.mxu0 %v4538
        %4963 = vmatmul.mubr.bf16.gmra.mrb[0].mxu0 %v4537
        %v4964 = vpop.f32.mrb[0].mxu0
        %v4965 = vadd.f32 0.0, %v4964
        %v4966 = vpop.f32.mrb[0].mxu0
        %v4967 = vpop.f32.mrb[0].mxu0
        %v4968 = vadd.f32 0.0, %v4967
        %v4969 = vpop.f32.mrb[0].mxu0
        %4970 = vmatprep.mubr.bf16.mxu0 %v4541
        %4971 = vmatmul.mubr.bf16.gmra.mrb[0].mxu0 %v4540
        %v4972 = vpop.f32.mrb[0].mxu0
        %v4973 = vadd.f32 0.0, %v4972
        %v4974 = vpop.f32.mrb[0].mxu0
        %v4975 = vpop.f32.mrb[0].mxu0
        %v4976 = vadd.f32 0.0, %v4975
        %v4977 = vpop.f32.mrb[0].mxu0
        %4978 = vmatprep.mubr.bf16.mxu0 %v4544
        %4979 = vmatmul.mubr.bf16.gmra.mrb[0].mxu0 %v4543
        %v4980 = vpop.f32.mrb[0].mxu0
        %v4981 = vadd.f32 0.0, %v4980
        %v4982 = vpop.f32.mrb[0].mxu0
        %v4983 = vpop.f32.mrb[0].mxu0
        %v4984 = vadd.f32 0.0, %v4983
        %v4985 = vpop.f32.mrb[0].mxu0
        %4986 = vmatprep.mubr.bf16.mxu0 %v4547
        %4987 = vmatmul.mubr.bf16.gmra.mrb[0].mxu0 %v4546
        %v4988 = vpop.f32.mrb[0].mxu0
        %v4989 = vadd.f32 0.0, %v4988
        %v4990 = vpop.f32.mrb[0].mxu0
        %v4991 = vpop.f32.mrb[0].mxu0
        %v4992 = vadd.f32 0.0, %v4991
        %v4993 = vpop.f32.mrb[0].mxu0
        %4994 = vmatprep.mubr.bf16.mxu0 %v4550
        %4995 = vmatmul.mubr.bf16.gmra.mrb[0].mxu0 %v4549
        %v4996 = vpop.f32.mrb[0].mxu0
        %v4997 = vadd.f32 0.0, %v4996
        %v4998 = vpop.f32.mrb[0].mxu0
        %v4999 = vpop.f32.mrb[0].mxu0
        %v5000 = vadd.f32 0.0, %v4999
        %v5001 = vpop.f32.mrb[0].mxu0
        %5002 = vmatprep.mubr.bf16.mxu0 %v4553
        %5003 = vmatmul.mubr.bf16.gmra.mrb[0].mxu0 %v4552
        %v5004 = vpop.f32.mrb[0].mxu0
        %v5005 = vadd.f32 0.0, %v5004
        %v5006 = vpop.f32.mrb[0].mxu0
        %v5007 = vpop.f32.mrb[0].mxu0
        %v5008 = vadd.f32 0.0, %v5007
        %v5009 = vpop.f32.mrb[0].mxu0
        %5010 = vmatprep.mubr.bf16.mxu0 %v4556
        %5011 = vmatmul.mubr.bf16.gmra.mrb[0].mxu0 %v4555
        %v5012 = vpop.f32.mrb[0].mxu0
        %v5013 = vadd.f32 0.0, %v5012
        %v5014 = vpop.f32.mrb[0].mxu0
        %v5015 = vpop.f32.mrb[0].mxu0
        %v5016 = vadd.f32 0.0, %v5015
        %v5017 = vpop.f32.mrb[0].mxu0
        %5018 = vmatprep.mubr.bf16.mxu0 %v4559
        %5019 = vmatmul.mubr.bf16.gmra.mrb[0].mxu0 %v4558
        %v5020 = vpop.f32.mrb[0].mxu0
        %v5021 = vadd.f32 0.0, %v5020
        %v5022 = vpop.f32.mrb[0].mxu0
        %v5023 = vpop.f32.mrb[0].mxu0
        %v5024 = vadd.f32 0.0, %v5023
        %v5025 = vpop.f32.mrb[0].mxu0
        %5026 = vmatprep.mubr.bf16.mxu0 %v4562
        %5027 = vmatmul.mubr.bf16.gmra.mrb[0].mxu0 %v4561
        %v5028 = vpop.f32.mrb[0].mxu0
        %v5029 = vadd.f32 0.0, %v5028
        %v5030 = vpop.f32.mrb[0].mxu0
        %v5031 = vpop.f32.mrb[0].mxu0
        %v5032 = vadd.f32 0.0, %v5031
        %v5033 = vpop.f32.mrb[0].mxu0
        %5034 = vmatprep.mubr.bf16.mxu0 %v4565
        %5035 = vmatmul.mubr.bf16.gmra.mrb[0].mxu0 %v4564
        %v5036 = vpop.f32.mrb[0].mxu0
        %v5037 = vadd.f32 0.0, %v5036
        %v5038 = vpop.f32.mrb[0].mxu0
        %v5039 = vpop.f32.mrb[0].mxu0
        %v5040 = vadd.f32 0.0, %v5039
        %v5041 = vpop.f32.mrb[0].mxu0
        %5042 = vmatprep.mubr.bf16.mxu0 %v4568
        %5043 = vmatmul.mubr.bf16.gmra.mrb[0].mxu0 %v4567
        %v5044 = vpop.f32.mrb[0].mxu0
        %v5045 = vadd.f32 0.0, %v5044
        %v5046 = vpop.f32.mrb[0].mxu0
        %v5047 = vpop.f32.mrb[0].mxu0
        %v5048 = vadd.f32 0.0, %v5047
        %v5049 = vpop.f32.mrb[0].mxu0
        %5050 = vdwg.mxu0
        %5051 = vmatprep.subr.bf16.mxu0 0
        %5052 = vmatpush1.bf16.msra.mxu0 %v4730
        %5053 = vmatprep.subr.bf16.mxu0 0
        %5054 = vmatpush1.bf16.msra.mxu0 %v4731
        %5055 = vmatprep.subr.bf16.mxu0 0
        %5056 = vmatpush1.bf16.msra.mxu0 %v4732
        %5057 = vmatprep.subr.bf16.mxu0 0
        %5058 = vmatpush1.bf16.msra.mxu0 %v4733
        %5059 = vmatprep.subr.bf16.mxu0 0
        %5060 = vmatpush1.bf16.msra.mxu0 %v4734
        %5061 = vmatprep.subr.bf16.mxu0 0
        %5062 = vmatpush1.bf16.msra.mxu0 %v4735
        %5063 = vmatprep.subr.bf16.mxu0 0
        %5064 = vmatpush1.bf16.msra.mxu0 %v4736
        %5065 = vmatprep.subr.bf16.mxu0 0
        %5066 = vmatpush1.bf16.msra.mxu0 %v4737
        %5067 = vmatprep.subr.bf16.mxu0 0
        %5068 = vmatpush1.bf16.msra.mxu0 0
        %5069 = vmatprep.subr.bf16.mxu0 0
        %5070 = vmatpush1.bf16.msra.mxu0 0
        %5071 = vmatprep.subr.bf16.mxu0 0
        %5072 = vmatpush1.bf16.msra.mxu0 0
        %5073 = vmatprep.subr.bf16.mxu0 0
        %5074 = vmatpush1.bf16.msra.mxu0 0
        %5075 = vmatprep.subr.bf16.mxu0 0
        %5076 = vmatpush1.bf16.msra.mxu0 0
        %5077 = vmatprep.subr.bf16.mxu0 0
        %5078 = vmatpush1.bf16.msra.mxu0 0
        %5079 = vmatprep.subr.bf16.mxu0 0
        %5080 = vmatpush1.bf16.msra.mxu0 0
        %5081 = vmatprep.subr.bf16.mxu0 0
        %5082 = vmatpush1.bf16.msra.mxu0 0
        %5083 = vmatprep.mubr.bf16.mxu0 0
        %5084 = vmatmul.mubr.bf16.gmra.mrb[0].mxu0 %v4476
        %v5085 = vpop.f32.mrb[0].mxu0
        %v5086 = vadd.f32 %v4797, %v5085
        %v5087 = vpop.f32.mrb[0].mxu0
        %v5088 = vpop.f32.mrb[0].mxu0
        %v5089 = vadd.f32 %v4800, %v5088
        %v5090 = vpop.f32.mrb[0].mxu0
        %5091 = vmatprep.mubr.bf16.mxu0 0
        %5092 = vmatmul.mubr.bf16.gmra.mrb[0].mxu0 %v4479
        %v5093 = vpop.f32.mrb[0].mxu0
        %v5094 = vadd.f32 %v4805, %v5093
        %v5095 = vpop.f32.mrb[0].mxu0
        %v5096 = vpop.f32.mrb[0].mxu0
        %v5097 = vadd.f32 %v4808, %v5096
        %v5098 = vpop.f32.mrb[0].mxu0
        %5099 = vmatprep.mubr.bf16.mxu0 0
        %5100 = vmatmul.mubr.bf16.gmra.mrb[0].mxu0 %v4482
        %v5101 = vpop.f32.mrb[0].mxu0
        %v5102 = vadd.f32 %v4813, %v5101
        %v5103 = vpop.f32.mrb[0].mxu0
        %v5104 = vpop.f32.mrb[0].mxu0
        %v5105 = vadd.f32 %v4816, %v5104
        %v5106 = vpop.f32.mrb[0].mxu0
        %5107 = vmatprep.mubr.bf16.mxu0 0
        %5108 = vmatmul.mubr.bf16.gmra.mrb[0].mxu0 %v4485
        %v5109 = vpop.f32.mrb[0].mxu0
        %v5110 = vadd.f32 %v4821, %v5109
        %v5111 = vpop.f32.mrb[0].mxu0
        %v5112 = vpop.f32.mrb[0].mxu0
        %v5113 = vadd.f32 %v4824, %v5112
        %v5114 = vpop.f32.mrb[0].mxu0
        %5115 = vmatprep.mubr.bf16.mxu0 0
        %5116 = vmatmul.mubr.bf16.gmra.mrb[0].mxu0 %v4488
        %v5117 = vpop.f32.mrb[0].mxu0
        %v5118 = vadd.f32 %v4829, %v5117
        %v5119 = vpop.f32.mrb[0].mxu0
        %v5120 = vpop.f32.mrb[0].mxu0
        %v5121 = vadd.f32 %v4832, %v5120
        %v5122 = vpop.f32.mrb[0].mxu0
        %5123 = vmatprep.mubr.bf16.mxu0 0
        %5124 = vmatmul.mubr.bf16.gmra.mrb[0].mxu0 %v4491
        %v5125 = vpop.f32.mrb[0].mxu0
        %v5126 = vadd.f32 %v4837, %v5125
        %v5127 = vpop.f32.mrb[0].mxu0
        %v5128 = vpop.f32.mrb[0].mxu0
        %v5129 = vadd.f32 %v4840, %v5128
        %v5130 = vpop.f32.mrb[0].mxu0
        %5131 = vmatprep.mubr.bf16.mxu0 0
        %5132 = vmatmul.mubr.bf16.gmra.mrb[0].mxu0 %v4494
        %v5133 = vpop.f32.mrb[0].mxu0
        %v5134 = vadd.f32 %v4845, %v5133
        %v5135 = vpop.f32.mrb[0].mxu0
        %v5136 = vpop.f32.mrb[0].mxu0
        %v5137 = vadd.f32 %v4848, %v5136
        %v5138 = vpop.f32.mrb[0].mxu0
        %5139 = vmatprep.mubr.bf16.mxu0 0
        %5140 = vmatmul.mubr.bf16.gmra.mrb[0].mxu0 %v4497
        %v5141 = vpop.f32.mrb[0].mxu0
        %v5142 = vadd.f32 %v4853, %v5141
        %v5143 = vpop.f32.mrb[0].mxu0
        %v5144 = vpop.f32.mrb[0].mxu0
        %v5145 = vadd.f32 %v4856, %v5144
        %v5146 = vpop.f32.mrb[0].mxu0
        %5147 = vmatprep.mubr.bf16.mxu0 0
        %5148 = vmatmul.mubr.bf16.gmra.mrb[0].mxu0 %v4500
        %v5149 = vpop.f32.mrb[0].mxu0
        %v5150 = vadd.f32 %v4861, %v5149
        %v5151 = vpop.f32.mrb[0].mxu0
        %v5152 = vpop.f32.mrb[0].mxu0
        %v5153 = vadd.f32 %v4864, %v5152
        %v5154 = vpop.f32.mrb[0].mxu0
        %5155 = vmatprep.mubr.bf16.mxu0 0
        %5156 = vmatmul.mubr.bf16.gmra.mrb[0].mxu0 %v4503
        %v5157 = vpop.f32.mrb[0].mxu0
        %v5158 = vadd.f32 %v4869, %v5157
        %v5159 = vpop.f32.mrb[0].mxu0
        %v5160 = vpop.f32.mrb[0].mxu0
        %v5161 = vadd.f32 %v4872, %v5160
        %v5162 = vpop.f32.mrb[0].mxu0
        %5163 = vmatprep.mubr.bf16.mxu0 0
        %5164 = vmatmul.mubr.bf16.gmra.mrb[0].mxu0 %v4506
        %v5165 = vpop.f32.mrb[0].mxu0
        %v5166 = vadd.f32 %v4877, %v5165
        %v5167 = vpop.f32.mrb[0].mxu0
        %v5168 = vpop.f32.mrb[0].mxu0
        %v5169 = vadd.f32 %v4880, %v5168
        %v5170 = vpop.f32.mrb[0].mxu0
        %5171 = vmatprep.mubr.bf16.mxu0 0
        %5172 = vmatmul.mubr.bf16.gmra.mrb[0].mxu0 %v4509
        %v5173 = vpop.f32.mrb[0].mxu0
        %v5174 = vadd.f32 %v4885, %v5173
        %v5175 = vpop.f32.mrb[0].mxu0
        %v5176 = vpop.f32.mrb[0].mxu0
        %v5177 = vadd.f32 %v4888, %v5176
        %v5178 = vpop.f32.mrb[0].mxu0
        %5179 = vmatprep.mubr.bf16.mxu0 0
        %5180 = vmatmul.mubr.bf16.gmra.mrb[0].mxu0 %v4512
        %v5181 = vpop.f32.mrb[0].mxu0
        %v5182 = vadd.f32 %v4893, %v5181
        %v5183 = vpop.f32.mrb[0].mxu0
        %v5184 = vpop.f32.mrb[0].mxu0
        %v5185 = vadd.f32 %v4896, %v5184
        %v5186 = vpop.f32.mrb[0].mxu0
        %5187 = vmatprep.mubr.bf16.mxu0 0
        %5188 = vmatmul.mubr.bf16.gmra.mrb[0].mxu0 %v4515
        %v5189 = vpop.f32.mrb[0].mxu0
        %v5190 = vadd.f32 %v4901, %v5189
        %v5191 = vpop.f32.mrb[0].mxu0
        %v5192 = vpop.f32.mrb[0].mxu0
        %v5193 = vadd.f32 %v4904, %v5192
        %v5194 = vpop.f32.mrb[0].mxu0
        %5195 = vmatprep.mubr.bf16.mxu0 0
        %5196 = vmatmul.mubr.bf16.gmra.mrb[0].mxu0 %v4518
        %v5197 = vpop.f32.mrb[0].mxu0
        %v5198 = vadd.f32 %v4909, %v5197
        %v5199 = vpop.f32.mrb[0].mxu0
        %v5200 = vpop.f32.mrb[0].mxu0
        %v5201 = vadd.f32 %v4912, %v5200
        %v5202 = vpop.f32.mrb[0].mxu0
        %5203 = vmatprep.mubr.bf16.mxu0 0
        %5204 = vmatmul.mubr.bf16.gmra.mrb[0].mxu0 %v4521
        %v5205 = vpop.f32.mrb[0].mxu0
        %v5206 = vadd.f32 %v4917, %v5205
        %v5207 = vpop.f32.mrb[0].mxu0
        %v5208 = vpop.f32.mrb[0].mxu0
        %v5209 = vadd.f32 %v4920, %v5208
        %v5210 = vpop.f32.mrb[0].mxu0
        %5211 = vmatprep.mubr.bf16.mxu0 0
        %5212 = vmatmul.mubr.bf16.gmra.mrb[0].mxu0 %v4524
        %v5213 = vpop.f32.mrb[0].mxu0
        %v5214 = vadd.f32 %v4925, %v5213
        %v5215 = vpop.f32.mrb[0].mxu0
        %v5216 = vpop.f32.mrb[0].mxu0
        %v5217 = vadd.f32 %v4928, %v5216
        %v5218 = vpop.f32.mrb[0].mxu0
        %5219 = vmatprep.mubr.bf16.mxu0 0
        %5220 = vmatmul.mubr.bf16.gmra.mrb[0].mxu0 %v4527
        %v5221 = vpop.f32.mrb[0].mxu0
        %v5222 = vadd.f32 %v4933, %v5221
        %v5223 = vpop.f32.mrb[0].mxu0
        %v5224 = vpop.f32.mrb[0].mxu0
        %v5225 = vadd.f32 %v4936, %v5224
        %v5226 = vpop.f32.mrb[0].mxu0
        %5227 = vmatprep.mubr.bf16.mxu0 0
        %5228 = vmatmul.mubr.bf16.gmra.mrb[0].mxu0 %v4530
        %v5229 = vpop.f32.mrb[0].mxu0
        %v5230 = vadd.f32 %v4941, %v5229
        %v5231 = vpop.f32.mrb[0].mxu0
        %v5232 = vpop.f32.mrb[0].mxu0
        %v5233 = vadd.f32 %v4944, %v5232
        %v5234 = vpop.f32.mrb[0].mxu0
        %5235 = vmatprep.mubr.bf16.mxu0 0
        %5236 = vmatmul.mubr.bf16.gmra.mrb[0].mxu0 %v4533
        %v5237 = vpop.f32.mrb[0].mxu0
        %v5238 = vadd.f32 %v4949, %v5237
        %v5239 = vpop.f32.mrb[0].mxu0
        %v5240 = vpop.f32.mrb[0].mxu0
        %v5241 = vadd.f32 %v4952, %v5240
        %v5242 = vpop.f32.mrb[0].mxu0
        %5243 = vmatprep.mubr.bf16.mxu0 0
        %5244 = vmatmul.mubr.bf16.gmra.mrb[0].mxu0 %v4536
        %v5245 = vpop.f32.mrb[0].mxu0
        %v5246 = vadd.f32 %v4957, %v5245
        %v5247 = vpop.f32.mrb[0].mxu0
        %v5248 = vpop.f32.mrb[0].mxu0
        %v5249 = vadd.f32 %v4960, %v5248
        %v5250 = vpop.f32.mrb[0].mxu0
        %5251 = vmatprep.mubr.bf16.mxu0 0
        %5252 = vmatmul.mubr.bf16.gmra.mrb[0].mxu0 %v4539
        %v5253 = vpop.f32.mrb[0].mxu0
        %v5254 = vadd.f32 %v4965, %v5253
        %v5255 = vpop.f32.mrb[0].mxu0
        %v5256 = vpop.f32.mrb[0].mxu0
        %v5257 = vadd.f32 %v4968, %v5256
        %v5258 = vpop.f32.mrb[0].mxu0
        %5259 = vmatprep.mubr.bf16.mxu0 0
        %5260 = vmatmul.mubr.bf16.gmra.mrb[0].mxu0 %v4542
        %v5261 = vpop.f32.mrb[0].mxu0
        %v5262 = vadd.f32 %v4973, %v5261
        %v5263 = vpop.f32.mrb[0].mxu0
        %v5264 = vpop.f32.mrb[0].mxu0
        %v5265 = vadd.f32 %v4976, %v5264
        %v5266 = vpop.f32.mrb[0].mxu0
        %5267 = vmatprep.mubr.bf16.mxu0 0
        %5268 = vmatmul.mubr.bf16.gmra.mrb[0].mxu0 %v4545
        %v5269 = vpop.f32.mrb[0].mxu0
        %v5270 = vadd.f32 %v4981, %v5269
        %v5271 = vpop.f32.mrb[0].mxu0
        %v5272 = vpop.f32.mrb[0].mxu0
        %v5273 = vadd.f32 %v4984, %v5272
        %v5274 = vpop.f32.mrb[0].mxu0
        %5275 = vmatprep.mubr.bf16.mxu0 0
        %5276 = vmatmul.mubr.bf16.gmra.mrb[0].mxu0 %v4548
        %v5277 = vpop.f32.mrb[0].mxu0
        %v5278 = vadd.f32 %v4989, %v5277
        %v5279 = vpop.f32.mrb[0].mxu0
        %v5280 = vpop.f32.mrb[0].mxu0
        %v5281 = vadd.f32 %v4992, %v5280
        %v5282 = vpop.f32.mrb[0].mxu0
        %5283 = vmatprep.mubr.bf16.mxu0 0
        %5284 = vmatmul.mubr.bf16.gmra.mrb[0].mxu0 %v4551
        %v5285 = vpop.f32.mrb[0].mxu0
        %v5286 = vadd.f32 %v4997, %v5285
        %v5287 = vpop.f32.mrb[0].mxu0
        %v5288 = vpop.f32.mrb[0].mxu0
        %v5289 = vadd.f32 %v5000, %v5288
        %v5290 = vpop.f32.mrb[0].mxu0
        %5291 = vmatprep.mubr.bf16.mxu0 0
        %5292 = vmatmul.mubr.bf16.gmra.mrb[0].mxu0 %v4554
        %v5293 = vpop.f32.mrb[0].mxu0
        %v5294 = vadd.f32 %v5005, %v5293
        %v5295 = vpop.f32.mrb[0].mxu0
        %v5296 = vpop.f32.mrb[0].mxu0
        %v5297 = vadd.f32 %v5008, %v5296
        %v5298 = vpop.f32.mrb[0].mxu0
        %5299 = vmatprep.mubr.bf16.mxu0 0
        %5300 = vmatmul.mubr.bf16.gmra.mrb[0].mxu0 %v4557
        %v5301 = vpop.f32.mrb[0].mxu0
        %v5302 = vadd.f32 %v5013, %v5301
        %v5303 = vpop.f32.mrb[0].mxu0
        %v5304 = vpop.f32.mrb[0].mxu0
        %v5305 = vadd.f32 %v5016, %v5304
        %v5306 = vpop.f32.mrb[0].mxu0
        %5307 = vmatprep.mubr.bf16.mxu0 0
        %5308 = vmatmul.mubr.bf16.gmra.mrb[0].mxu0 %v4560
        %v5309 = vpop.f32.mrb[0].mxu0
        %v5310 = vadd.f32 %v5021, %v5309
        %v5311 = vpop.f32.mrb[0].mxu0
        %v5312 = vpop.f32.mrb[0].mxu0
        %v5313 = vadd.f32 %v5024, %v5312
        %v5314 = vpop.f32.mrb[0].mxu0
        %5315 = vmatprep.mubr.bf16.mxu0 0
        %5316 = vmatmul.mubr.bf16.gmra.mrb[0].mxu0 %v4563
        %v5317 = vpop.f32.mrb[0].mxu0
        %v5318 = vadd.f32 %v5029, %v5317
        %v5319 = vpop.f32.mrb[0].mxu0
        %v5320 = vpop.f32.mrb[0].mxu0
        %v5321 = vadd.f32 %v5032, %v5320
        %v5322 = vpop.f32.mrb[0].mxu0
        %5323 = vmatprep.mubr.bf16.mxu0 0
        %5324 = vmatmul.mubr.bf16.gmra.mrb[0].mxu0 %v4566
        %v5325 = vpop.f32.mrb[0].mxu0
        %v5326 = vadd.f32 %v5037, %v5325
        %v5327 = vpop.f32.mrb[0].mxu0
        %v5328 = vpop.f32.mrb[0].mxu0
        %v5329 = vadd.f32 %v5040, %v5328
        %v5330 = vpop.f32.mrb[0].mxu0
        %5331 = vmatprep.mubr.bf16.mxu0 0
        %5332 = vmatmul.mubr.bf16.gmra.mrb[0].mxu0 %v4569
        %v5333 = vpop.f32.mrb[0].mxu0
        %v5334 = vadd.f32 %v5045, %v5333
        %v5335 = vpop.f32.mrb[0].mxu0
        %v5336 = vpop.f32.mrb[0].mxu0
        %v5337 = vadd.f32 %v5048, %v5336
        %v5338 = vpop.f32.mrb[0].mxu0
        %5339 = vdwg.mxu0
        %s5340 = scalar_lea.vmem [#allocation9], 192
        %v5341 = vld [vmem:[%s5340] sm:$0xf]
        %v5342 = vld [vmem:[%s5340 + $0x4] sm:$0xf]
        %v5343 = vld [vmem:[%s5340 + $0x8] sm:$0xf]
        %v5344 = vld [vmem:[%s5340 + $0xc] sm:$0xf]
        %v5345 = vld [vmem:[%s5340 + $0x10] sm:$0xf]
        %v5346 = vld [vmem:[%s5340 + $0x14] sm:$0xf]
        %v5347 = vld [vmem:[%s5340 + $0x18] sm:$0xf]
        %v5348 = vld [vmem:[%s5340 + $0x1c] sm:$0xf]
        %v5349 = vld [vmem:[%s5340 + $0x20] sm:$0xf]
        %v5350 = vld [vmem:[%s5340 + $0x24] sm:$0xf]
        %v5351 = vld [vmem:[%s5340 + $0x28] sm:$0xf]
        %v5352 = vld [vmem:[%s5340 + $0x2c] sm:$0xf]
        %v5353 = vld [vmem:[%s5340 + $0x30] sm:$0xf]
        %v5354 = vld [vmem:[%s5340 + $0x34] sm:$0xf]
        %v5355 = vld [vmem:[%s5340 + $0x38] sm:$0xf]
        %v5356 = vld [vmem:[%s5340 + $0x3c] sm:$0xf]
        %v5357 = vld [vmem:[%s5340 + $0x40] sm:$0xf]
        %v5358 = vld [vmem:[%s5340 + $0x44] sm:$0xf]
        %v5359 = vld [vmem:[%s5340 + $0x48] sm:$0xf]
        %v5360 = vld [vmem:[%s5340 + $0x4c] sm:$0xf]
        %v5361 = vld [vmem:[%s5340 + $0x50] sm:$0xf]
        %v5362 = vld [vmem:[%s5340 + $0x54] sm:$0xf]
        %v5363 = vld [vmem:[%s5340 + $0x58] sm:$0xf]
        %v5364 = vld [vmem:[%s5340 + $0x5c] sm:$0xf]
        %v5365 = vld [vmem:[%s5340 + $0x60] sm:$0xf]
        %v5366 = vld [vmem:[%s5340 + $0x64] sm:$0xf]
        %v5367 = vld [vmem:[%s5340 + $0x68] sm:$0xf]
        %v5368 = vld [vmem:[%s5340 + $0x6c] sm:$0xf]
        %v5369 = vld [vmem:[%s5340 + $0x70] sm:$0xf]
        %v5370 = vld [vmem:[%s5340 + $0x74] sm:$0xf]
        %v5371 = vld [vmem:[%s5340 + $0x78] sm:$0xf]
        %v5372 = vld [vmem:[%s5340 + $0x7c] sm:$0xf]
        %v5373 = vld [vmem:[%s5340 + $0x80] sm:$0xf]
        %v5374 = vld [vmem:[%s5340 + $0x84] sm:$0xf]
        %v5375 = vld [vmem:[%s5340 + $0x88] sm:$0xf]
        %v5376 = vld [vmem:[%s5340 + $0x8c] sm:$0xf]
        %v5377 = vld [vmem:[%s5340 + $0x90] sm:$0xf]
        %v5378 = vld [vmem:[%s5340 + $0x94] sm:$0xf]
        %v5379 = vld [vmem:[%s5340 + $0x98] sm:$0xf]
        %v5380 = vld [vmem:[%s5340 + $0x9c] sm:$0xf]
        %v5381 = vld [vmem:[%s5340 + $0xa0] sm:$0xf]
        %v5382 = vld [vmem:[%s5340 + $0xa4] sm:$0xf]
        %v5383 = vld [vmem:[%s5340 + $0xa8] sm:$0xf]
        %v5384 = vld [vmem:[%s5340 + $0xac] sm:$0xf]
        %v5385 = vld [vmem:[%s5340 + $0xb0] sm:$0xf]
        %v5386 = vld [vmem:[%s5340 + $0xb4] sm:$0xf]
        %v5387 = vld [vmem:[%s5340 + $0xb8] sm:$0xf]
        %v5388 = vld [vmem:[%s5340 + $0xbc] sm:$0xf]
        %v5437 = vunpack.c.l.b16 %v5341
        %v5438 = vunpack.c.l.b16 %v5342
        %v5439 = vunpack.c.l.b16 %v5343
        %v5440 = vunpack.c.l.b16 %v5344
        %v5441 = vunpack.c.l.b16 %v5345
        %v5442 = vunpack.c.l.b16 %v5346
        %v5443 = vunpack.c.l.b16 %v5347
        %v5444 = vunpack.c.l.b16 %v5348
        %v5445 = vunpack.c.l.b16 %v5349
        %v5446 = vunpack.c.l.b16 %v5350
        %v5447 = vunpack.c.l.b16 %v5351
        %v5448 = vunpack.c.l.b16 %v5352
        %v5449 = vunpack.c.l.b16 %v5353
        %v5450 = vunpack.c.l.b16 %v5354
        %v5451 = vunpack.c.l.b16 %v5355
        %v5452 = vunpack.c.l.b16 %v5356
        %v5453 = vunpack.c.l.b16 %v5357
        %v5454 = vunpack.c.l.b16 %v5358
        %v5455 = vunpack.c.l.b16 %v5359
        %v5456 = vunpack.c.l.b16 %v5360
        %v5457 = vunpack.c.l.b16 %v5361
        %v5458 = vunpack.c.l.b16 %v5362
        %v5459 = vunpack.c.l.b16 %v5363
        %v5460 = vunpack.c.l.b16 %v5364
        %v5461 = vunpack.c.l.b16 %v5365
        %v5462 = vunpack.c.l.b16 %v5366
        %v5463 = vunpack.c.l.b16 %v5367
        %v5464 = vunpack.c.l.b16 %v5368
        %v5465 = vunpack.c.l.b16 %v5369
        %v5466 = vunpack.c.l.b16 %v5370
        %v5467 = vunpack.c.l.b16 %v5371
        %v5468 = vunpack.c.l.b16 %v5372
        %v5469 = vunpack.c.l.b16 %v5373
        %v5470 = vunpack.c.l.b16 %v5374
        %v5471 = vunpack.c.l.b16 %v5375
        %v5472 = vunpack.c.l.b16 %v5376
        %v5473 = vunpack.c.l.b16 %v5377
        %v5474 = vunpack.c.l.b16 %v5378
        %v5475 = vunpack.c.l.b16 %v5379
        %v5476 = vunpack.c.l.b16 %v5380
        %v5477 = vunpack.c.l.b16 %v5381
        %v5478 = vunpack.c.l.b16 %v5382
        %v5479 = vunpack.c.l.b16 %v5383
        %v5480 = vunpack.c.l.b16 %v5384
        %v5481 = vunpack.c.l.b16 %v5385
        %v5482 = vunpack.c.l.b16 %v5386
        %v5483 = vunpack.c.l.b16 %v5387
        %v5484 = vunpack.c.l.b16 %v5388
        %v5485 = vpack.c.b16 %v5438, %v5437
        %v5486 = vpack.c.b16 %v5440, %v5439
        %v5487 = vpack.c.b16 %v5442, %v5441
        %v5488 = vpack.c.b16 %v5444, %v5443
        %v5489 = vpack.c.b16 %v5446, %v5445
        %v5490 = vpack.c.b16 %v5448, %v5447
        %v5491 = vpack.c.b16 %v5450, %v5449
        %v5492 = vpack.c.b16 %v5452, %v5451
        %v5493 = vpack.c.b16 %v5454, %v5453
        %v5494 = vpack.c.b16 %v5456, %v5455
        %v5495 = vpack.c.b16 %v5458, %v5457
        %v5496 = vpack.c.b16 %v5460, %v5459
        %v5497 = vpack.c.b16 %v5462, %v5461
        %v5498 = vpack.c.b16 %v5464, %v5463
        %v5499 = vpack.c.b16 %v5466, %v5465
        %v5500 = vpack.c.b16 %v5468, %v5467
        %v5501 = vpack.c.b16 %v5470, %v5469
        %v5502 = vpack.c.b16 %v5472, %v5471
        %v5503 = vpack.c.b16 %v5474, %v5473
        %v5504 = vpack.c.b16 %v5476, %v5475
        %v5505 = vpack.c.b16 %v5478, %v5477
        %v5506 = vpack.c.b16 %v5480, %v5479
        %v5507 = vpack.c.b16 %v5482, %v5481
        %v5508 = vpack.c.b16 %v5484, %v5483
        %5533 = vmatprep.subr.bf16.mxu0 0
        %5534 = vmatpush1.bf16.msra.mxu0 %v5485
        %5535 = vmatprep.subr.bf16.mxu0 0
        %5536 = vmatpush1.bf16.msra.mxu0 %v5486
        %5537 = vmatprep.subr.bf16.mxu0 0
        %5538 = vmatpush1.bf16.msra.mxu0 %v5487
        %5539 = vmatprep.subr.bf16.mxu0 0
        %5540 = vmatpush1.bf16.msra.mxu0 %v5488
        %5541 = vmatprep.subr.bf16.mxu0 0
        %5542 = vmatpush1.bf16.msra.mxu0 %v5489
        %5543 = vmatprep.subr.bf16.mxu0 0
        %5544 = vmatpush1.bf16.msra.mxu0 %v5490
        %5545 = vmatprep.subr.bf16.mxu0 0
        %5546 = vmatpush1.bf16.msra.mxu0 %v5491
        %5547 = vmatprep.subr.bf16.mxu0 0
        %5548 = vmatpush1.bf16.msra.mxu0 %v5492
        %5549 = vmatprep.subr.bf16.mxu0 0
        %5550 = vmatpush1.bf16.msra.mxu0 %v5493
        %5551 = vmatprep.subr.bf16.mxu0 0
        %5552 = vmatpush1.bf16.msra.mxu0 %v5494
        %5553 = vmatprep.subr.bf16.mxu0 0
        %5554 = vmatpush1.bf16.msra.mxu0 %v5495
        %5555 = vmatprep.subr.bf16.mxu0 0
        %5556 = vmatpush1.bf16.msra.mxu0 %v5496
        %5557 = vmatprep.subr.bf16.mxu0 0
        %5558 = vmatpush1.bf16.msra.mxu0 %v5497
        %5559 = vmatprep.subr.bf16.mxu0 0
        %5560 = vmatpush1.bf16.msra.mxu0 %v5498
        %5561 = vmatprep.subr.bf16.mxu0 0
        %5562 = vmatpush1.bf16.msra.mxu0 %v5499
        %5563 = vmatprep.subr.bf16.mxu0 0
        %5564 = vmatpush1.bf16.msra.mxu0 %v5500
        %5565 = vmatprep.mubr.bf16.mxu0 %v4475
        %5566 = vmatmul.mubr.bf16.gmra.mrb[0].mxu0 %v4474
        %v5567 = vpop.f32.mrb[0].mxu0
        %v5568 = vadd.f32 0.0, %v5567
        %v5569 = vpop.f32.mrb[0].mxu0
        %v5570 = vpop.f32.mrb[0].mxu0
        %v5571 = vadd.f32 0.0, %v5570
        %v5572 = vpop.f32.mrb[0].mxu0
        %5573 = vmatprep.mubr.bf16.mxu0 %v4478
        %5574 = vmatmul.mubr.bf16.gmra.mrb[0].mxu0 %v4477
        %v5575 = vpop.f32.mrb[0].mxu0
        %v5576 = vadd.f32 0.0, %v5575
        %v5577 = vpop.f32.mrb[0].mxu0
        %v5578 = vpop.f32.mrb[0].mxu0
        %v5579 = vadd.f32 0.0, %v5578
        %v5580 = vpop.f32.mrb[0].mxu0
        %5581 = vmatprep.mubr.bf16.mxu0 %v4481
        %5582 = vmatmul.mubr.bf16.gmra.mrb[0].mxu0 %v4480
        %v5583 = vpop.f32.mrb[0].mxu0
        %v5584 = vadd.f32 0.0, %v5583
        %v5585 = vpop.f32.mrb[0].mxu0
        %v5586 = vpop.f32.mrb[0].mxu0
        %v5587 = vadd.f32 0.0, %v5586
        %v5588 = vpop.f32.mrb[0].mxu0
        %5589 = vmatprep.mubr.bf16.mxu0 %v4484
        %5590 = vmatmul.mubr.bf16.gmra.mrb[0].mxu0 %v4483
        %v5591 = vpop.f32.mrb[0].mxu0
        %v5592 = vadd.f32 0.0, %v5591
        %v5593 = vpop.f32.mrb[0].mxu0
        %v5594 = vpop.f32.mrb[0].mxu0
        %v5595 = vadd.f32 0.0, %v5594
        %v5596 = vpop.f32.mrb[0].mxu0
        %5597 = vmatprep.mubr.bf16.mxu0 %v4487
        %5598 = vmatmul.mubr.bf16.gmra.mrb[0].mxu0 %v4486
        %v5599 = vpop.f32.mrb[0].mxu0
        %v5600 = vadd.f32 0.0, %v5599
        %v5601 = vpop.f32.mrb[0].mxu0
        %v5602 = vpop.f32.mrb[0].mxu0
        %v5603 = vadd.f32 0.0, %v5602
        %v5604 = vpop.f32.mrb[0].mxu0
        %5605 = vmatprep.mubr.bf16.mxu0 %v4490
        %5606 = vmatmul.mubr.bf16.gmra.mrb[0].mxu0 %v4489
        %v5607 = vpop.f32.mrb[0].mxu0
        %v5608 = vadd.f32 0.0, %v5607
        %v5609 = vpop.f32.mrb[0].mxu0
        %v5610 = vpop.f32.mrb[0].mxu0
        %v5611 = vadd.f32 0.0, %v5610
        %v5612 = vpop.f32.mrb[0].mxu0
        %5613 = vmatprep.mubr.bf16.mxu0 %v4493
        %5614 = vmatmul.mubr.bf16.gmra.mrb[0].mxu0 %v4492
        %v5615 = vpop.f32.mrb[0].mxu0
        %v5616 = vadd.f32 0.0, %v5615
        %v5617 = vpop.f32.mrb[0].mxu0
        %v5618 = vpop.f32.mrb[0].mxu0
        %v5619 = vadd.f32 0.0, %v5618
        %v5620 = vpop.f32.mrb[0].mxu0
        %5621 = vmatprep.mubr.bf16.mxu0 %v4496
        %5622 = vmatmul.mubr.bf16.gmra.mrb[0].mxu0 %v4495
        %v5623 = vpop.f32.mrb[0].mxu0
        %v5624 = vadd.f32 0.0, %v5623
        %v5625 = vpop.f32.mrb[0].mxu0
        %v5626 = vpop.f32.mrb[0].mxu0
        %v5627 = vadd.f32 0.0, %v5626
        %v5628 = vpop.f32.mrb[0].mxu0
        %5629 = vmatprep.mubr.bf16.mxu0 %v4499
        %5630 = vmatmul.mubr.bf16.gmra.mrb[0].mxu0 %v4498
        %v5631 = vpop.f32.mrb[0].mxu0
        %v5632 = vadd.f32 0.0, %v5631
        %v5633 = vpop.f32.mrb[0].mxu0
        %v5634 = vpop.f32.mrb[0].mxu0
        %v5635 = vadd.f32 0.0, %v5634
        %v5636 = vpop.f32.mrb[0].mxu0
        %5637 = vmatprep.mubr.bf16.mxu0 %v4502
        %5638 = vmatmul.mubr.bf16.gmra.mrb[0].mxu0 %v4501
        %v5639 = vpop.f32.mrb[0].mxu0
        %v5640 = vadd.f32 0.0, %v5639
        %v5641 = vpop.f32.mrb[0].mxu0
        %v5642 = vpop.f32.mrb[0].mxu0
        %v5643 = vadd.f32 0.0, %v5642
        %v5644 = vpop.f32.mrb[0].mxu0
        %5645 = vmatprep.mubr.bf16.mxu0 %v4505
        %5646 = vmatmul.mubr.bf16.gmra.mrb[0].mxu0 %v4504
        %v5647 = vpop.f32.mrb[0].mxu0
        %v5648 = vadd.f32 0.0, %v5647
        %v5649 = vpop.f32.mrb[0].mxu0
        %v5650 = vpop.f32.mrb[0].mxu0
        %v5651 = vadd.f32 0.0, %v5650
        %v5652 = vpop.f32.mrb[0].mxu0
        %5653 = vmatprep.mubr.bf16.mxu0 %v4508
        %5654 = vmatmul.mubr.bf16.gmra.mrb[0].mxu0 %v4507
        %v5655 = vpop.f32.mrb[0].mxu0
        %v5656 = vadd.f32 0.0, %v5655
        %v5657 = vpop.f32.mrb[0].mxu0
        %v5658 = vpop.f32.mrb[0].mxu0
        %v5659 = vadd.f32 0.0, %v5658
        %v5660 = vpop.f32.mrb[0].mxu0
        %5661 = vmatprep.mubr.bf16.mxu0 %v4511
        %5662 = vmatmul.mubr.bf16.gmra.mrb[0].mxu0 %v4510
        %v5663 = vpop.f32.mrb[0].mxu0
        %v5664 = vadd.f32 0.0, %v5663
        %v5665 = vpop.f32.mrb[0].mxu0
        %v5666 = vpop.f32.mrb[0].mxu0
        %v5667 = vadd.f32 0.0, %v5666
        %v5668 = vpop.f32.mrb[0].mxu0
        %5669 = vmatprep.mubr.bf16.mxu0 %v4514
        %5670 = vmatmul.mubr.bf16.gmra.mrb[0].mxu0 %v4513
        %v5671 = vpop.f32.mrb[0].mxu0
        %v5672 = vadd.f32 0.0, %v5671
        %v5673 = vpop.f32.mrb[0].mxu0
        %v5674 = vpop.f32.mrb[0].mxu0
        %v5675 = vadd.f32 0.0, %v5674
        %v5676 = vpop.f32.mrb[0].mxu0
        %5677 = vmatprep.mubr.bf16.mxu0 %v4517
        %5678 = vmatmul.mubr.bf16.gmra.mrb[0].mxu0 %v4516
        %v5679 = vpop.f32.mrb[0].mxu0
        %v5680 = vadd.f32 0.0, %v5679
        %v5681 = vpop.f32.mrb[0].mxu0
        %v5682 = vpop.f32.mrb[0].mxu0
        %v5683 = vadd.f32 0.0, %v5682
        %v5684 = vpop.f32.mrb[0].mxu0
        %5685 = vmatprep.mubr.bf16.mxu0 %v4520
        %5686 = vmatmul.mubr.bf16.gmra.mrb[0].mxu0 %v4519
        %v5687 = vpop.f32.mrb[0].mxu0
        %v5688 = vadd.f32 0.0, %v5687
        %v5689 = vpop.f32.mrb[0].mxu0
        %v5690 = vpop.f32.mrb[0].mxu0
        %v5691 = vadd.f32 0.0, %v5690
        %v5692 = vpop.f32.mrb[0].mxu0
        %5693 = vmatprep.mubr.bf16.mxu0 %v4523
        %5694 = vmatmul.mubr.bf16.gmra.mrb[0].mxu0 %v4522
        %v5695 = vpop.f32.mrb[0].mxu0
        %v5696 = vadd.f32 0.0, %v5695
        %v5697 = vpop.f32.mrb[0].mxu0
        %v5698 = vpop.f32.mrb[0].mxu0
        %v5699 = vadd.f32 0.0, %v5698
        %v5700 = vpop.f32.mrb[0].mxu0
        %5701 = vmatprep.mubr.bf16.mxu0 %v4526
        %5702 = vmatmul.mubr.bf16.gmra.mrb[0].mxu0 %v4525
        %v5703 = vpop.f32.mrb[0].mxu0
        %v5704 = vadd.f32 0.0, %v5703
        %v5705 = vpop.f32.mrb[0].mxu0
        %v5706 = vpop.f32.mrb[0].mxu0
        %v5707 = vadd.f32 0.0, %v5706
        %v5708 = vpop.f32.mrb[0].mxu0
        %5709 = vmatprep.mubr.bf16.mxu0 %v4529
        %5710 = vmatmul.mubr.bf16.gmra.mrb[0].mxu0 %v4528
        %v5711 = vpop.f32.mrb[0].mxu0
        %v5712 = vadd.f32 0.0, %v5711
        %v5713 = vpop.f32.mrb[0].mxu0
        %v5714 = vpop.f32.mrb[0].mxu0
        %v5715 = vadd.f32 0.0, %v5714
        %v5716 = vpop.f32.mrb[0].mxu0
        %5717 = vmatprep.mubr.bf16.mxu0 %v4532
        %5718 = vmatmul.mubr.bf16.gmra.mrb[0].mxu0 %v4531
        %v5719 = vpop.f32.mrb[0].mxu0
        %v5720 = vadd.f32 0.0, %v5719
        %v5721 = vpop.f32.mrb[0].mxu0
        %v5722 = vpop.f32.mrb[0].mxu0
        %v5723 = vadd.f32 0.0, %v5722
        %v5724 = vpop.f32.mrb[0].mxu0
        %5725 = vmatprep.mubr.bf16.mxu0 %v4535
        %5726 = vmatmul.mubr.bf16.gmra.mrb[0].mxu0 %v4534
        %v5727 = vpop.f32.mrb[0].mxu0
        %v5728 = vadd.f32 0.0, %v5727
        %v5729 = vpop.f32.mrb[0].mxu0
        %v5730 = vpop.f32.mrb[0].mxu0
        %v5731 = vadd.f32 0.0, %v5730
        %v5732 = vpop.f32.mrb[0].mxu0
        %5733 = vmatprep.mubr.bf16.mxu0 %v4538
        %5734 = vmatmul.mubr.bf16.gmra.mrb[0].mxu0 %v4537
        %v5735 = vpop.f32.mrb[0].mxu0
        %v5736 = vadd.f32 0.0, %v5735
        %v5737 = vpop.f32.mrb[0].mxu0
        %v5738 = vpop.f32.mrb[0].mxu0
        %v5739 = vadd.f32 0.0, %v5738
        %v5740 = vpop.f32.mrb[0].mxu0
        %5741 = vmatprep.mubr.bf16.mxu0 %v4541
        %5742 = vmatmul.mubr.bf16.gmra.mrb[0].mxu0 %v4540
        %v5743 = vpop.f32.mrb[0].mxu0
        %v5744 = vadd.f32 0.0, %v5743
        %v5745 = vpop.f32.mrb[0].mxu0
        %v5746 = vpop.f32.mrb[0].mxu0
        %v5747 = vadd.f32 0.0, %v5746
        %v5748 = vpop.f32.mrb[0].mxu0
        %5749 = vmatprep.mubr.bf16.mxu0 %v4544
        %5750 = vmatmul.mubr.bf16.gmra.mrb[0].mxu0 %v4543
        %v5751 = vpop.f32.mrb[0].mxu0
        %v5752 = vadd.f32 0.0, %v5751
        %v5753 = vpop.f32.mrb[0].mxu0
        %v5754 = vpop.f32.mrb[0].mxu0
        %v5755 = vadd.f32 0.0, %v5754
        %v5756 = vpop.f32.mrb[0].mxu0
        %5757 = vmatprep.mubr.bf16.mxu0 %v4547
        %5758 = vmatmul.mubr.bf16.gmra.mrb[0].mxu0 %v4546
        %v5759 = vpop.f32.mrb[0].mxu0
        %v5760 = vadd.f32 0.0, %v5759
        %v5761 = vpop.f32.mrb[0].mxu0
        %v5762 = vpop.f32.mrb[0].mxu0
        %v5763 = vadd.f32 0.0, %v5762
        %v5764 = vpop.f32.mrb[0].mxu0
        %5765 = vmatprep.mubr.bf16.mxu0 %v4550
        %5766 = vmatmul.mubr.bf16.gmra.mrb[0].mxu0 %v4549
        %v5767 = vpop.f32.mrb[0].mxu0
        %v5768 = vadd.f32 0.0, %v5767
        %v5769 = vpop.f32.mrb[0].mxu0
        %v5770 = vpop.f32.mrb[0].mxu0
        %v5771 = vadd.f32 0.0, %v5770
        %v5772 = vpop.f32.mrb[0].mxu0
        %5773 = vmatprep.mubr.bf16.mxu0 %v4553
        %5774 = vmatmul.mubr.bf16.gmra.mrb[0].mxu0 %v4552
        %v5775 = vpop.f32.mrb[0].mxu0
        %v5776 = vadd.f32 0.0, %v5775
        %v5777 = vpop.f32.mrb[0].mxu0
        %v5778 = vpop.f32.mrb[0].mxu0
        %v5779 = vadd.f32 0.0, %v5778
        %v5780 = vpop.f32.mrb[0].mxu0
        %5781 = vmatprep.mubr.bf16.mxu0 %v4556
        %5782 = vmatmul.mubr.bf16.gmra.mrb[0].mxu0 %v4555
        %v5783 = vpop.f32.mrb[0].mxu0
        %v5784 = vadd.f32 0.0, %v5783
        %v5785 = vpop.f32.mrb[0].mxu0
        %v5786 = vpop.f32.mrb[0].mxu0
        %v5787 = vadd.f32 0.0, %v5786
        %v5788 = vpop.f32.mrb[0].mxu0
        %5789 = vmatprep.mubr.bf16.mxu0 %v4559
        %5790 = vmatmul.mubr.bf16.gmra.mrb[0].mxu0 %v4558
        %v5791 = vpop.f32.mrb[0].mxu0
        %v5792 = vadd.f32 0.0, %v5791
        %v5793 = vpop.f32.mrb[0].mxu0
        %v5794 = vpop.f32.mrb[0].mxu0
        %v5795 = vadd.f32 0.0, %v5794
        %v5796 = vpop.f32.mrb[0].mxu0
        %5797 = vmatprep.mubr.bf16.mxu0 %v4562
        %5798 = vmatmul.mubr.bf16.gmra.mrb[0].mxu0 %v4561
        %v5799 = vpop.f32.mrb[0].mxu0
        %v5800 = vadd.f32 0.0, %v5799
        %v5801 = vpop.f32.mrb[0].mxu0
        %v5802 = vpop.f32.mrb[0].mxu0
        %v5803 = vadd.f32 0.0, %v5802
        %v5804 = vpop.f32.mrb[0].mxu0
        %5805 = vmatprep.mubr.bf16.mxu0 %v4565
        %5806 = vmatmul.mubr.bf16.gmra.mrb[0].mxu0 %v4564
        %v5807 = vpop.f32.mrb[0].mxu0
        %v5808 = vadd.f32 0.0, %v5807
        %v5809 = vpop.f32.mrb[0].mxu0
        %v5810 = vpop.f32.mrb[0].mxu0
        %v5811 = vadd.f32 0.0, %v5810
        %v5812 = vpop.f32.mrb[0].mxu0
        %5813 = vmatprep.mubr.bf16.mxu0 %v4568
        %5814 = vmatmul.mubr.bf16.gmra.mrb[0].mxu0 %v4567
        %v5815 = vpop.f32.mrb[0].mxu0
        %v5816 = vadd.f32 0.0, %v5815
        %v5817 = vpop.f32.mrb[0].mxu0
        %v5818 = vpop.f32.mrb[0].mxu0
        %v5819 = vadd.f32 0.0, %v5818
        %v5820 = vpop.f32.mrb[0].mxu0
        %5821 = vdwg.mxu0
        %5822 = vmatprep.subr.bf16.mxu0 0
        %5823 = vmatpush1.bf16.msra.mxu0 %v5501
        %5824 = vmatprep.subr.bf16.mxu0 0
        %5825 = vmatpush1.bf16.msra.mxu0 %v5502
        %5826 = vmatprep.subr.bf16.mxu0 0
        %5827 = vmatpush1.bf16.msra.mxu0 %v5503
        %5828 = vmatprep.subr.bf16.mxu0 0
        %5829 = vmatpush1.bf16.msra.mxu0 %v5504
        %5830 = vmatprep.subr.bf16.mxu0 0
        %5831 = vmatpush1.bf16.msra.mxu0 %v5505
        %5832 = vmatprep.subr.bf16.mxu0 0
        %5833 = vmatpush1.bf16.msra.mxu0 %v5506
        %5834 = vmatprep.subr.bf16.mxu0 0
        %5835 = vmatpush1.bf16.msra.mxu0 %v5507
        %5836 = vmatprep.subr.bf16.mxu0 0
        %5837 = vmatpush1.bf16.msra.mxu0 %v5508
        %5838 = vmatprep.subr.bf16.mxu0 0
        %5839 = vmatpush1.bf16.msra.mxu0 0
        %5840 = vmatprep.subr.bf16.mxu0 0
        %5841 = vmatpush1.bf16.msra.mxu0 0
        %5842 = vmatprep.subr.bf16.mxu0 0
        %5843 = vmatpush1.bf16.msra.mxu0 0
        %5844 = vmatprep.subr.bf16.mxu0 0
        %5845 = vmatpush1.bf16.msra.mxu0 0
        %5846 = vmatprep.subr.bf16.mxu0 0
        %5847 = vmatpush1.bf16.msra.mxu0 0
        %5848 = vmatprep.subr.bf16.mxu0 0
        %5849 = vmatpush1.bf16.msra.mxu0 0
        %5850 = vmatprep.subr.bf16.mxu0 0
        %5851 = vmatpush1.bf16.msra.mxu0 0
        %5852 = vmatprep.subr.bf16.mxu0 0
        %5853 = vmatpush1.bf16.msra.mxu0 0
        %5854 = vmatprep.mubr.bf16.mxu0 0
        %5855 = vmatmul.mubr.bf16.gmra.mrb[0].mxu0 %v4476
        %v5856 = vpop.f32.mrb[0].mxu0
        %v5857 = vadd.f32 %v5568, %v5856
        %v5858 = vpop.f32.mrb[0].mxu0
        %v5859 = vpop.f32.mrb[0].mxu0
        %v5860 = vadd.f32 %v5571, %v5859
        %v5861 = vpop.f32.mrb[0].mxu0
        %5862 = vmatprep.mubr.bf16.mxu0 0
        %5863 = vmatmul.mubr.bf16.gmra.mrb[0].mxu0 %v4479
        %v5864 = vpop.f32.mrb[0].mxu0
        %v5865 = vadd.f32 %v5576, %v5864
        %v5866 = vpop.f32.mrb[0].mxu0
        %v5867 = vpop.f32.mrb[0].mxu0
        %v5868 = vadd.f32 %v5579, %v5867
        %v5869 = vpop.f32.mrb[0].mxu0
        %5870 = vmatprep.mubr.bf16.mxu0 0
        %5871 = vmatmul.mubr.bf16.gmra.mrb[0].mxu0 %v4482
        %v5872 = vpop.f32.mrb[0].mxu0
        %v5873 = vadd.f32 %v5584, %v5872
        %v5874 = vpop.f32.mrb[0].mxu0
        %v5875 = vpop.f32.mrb[0].mxu0
        %v5876 = vadd.f32 %v5587, %v5875
        %v5877 = vpop.f32.mrb[0].mxu0
        %5878 = vmatprep.mubr.bf16.mxu0 0
        %5879 = vmatmul.mubr.bf16.gmra.mrb[0].mxu0 %v4485
        %v5880 = vpop.f32.mrb[0].mxu0
        %v5881 = vadd.f32 %v5592, %v5880
        %v5882 = vpop.f32.mrb[0].mxu0
        %v5883 = vpop.f32.mrb[0].mxu0
        %v5884 = vadd.f32 %v5595, %v5883
        %v5885 = vpop.f32.mrb[0].mxu0
        %5886 = vmatprep.mubr.bf16.mxu0 0
        %5887 = vmatmul.mubr.bf16.gmra.mrb[0].mxu0 %v4488
        %v5888 = vpop.f32.mrb[0].mxu0
        %v5889 = vadd.f32 %v5600, %v5888
        %v5890 = vpop.f32.mrb[0].mxu0
        %v5891 = vpop.f32.mrb[0].mxu0
        %v5892 = vadd.f32 %v5603, %v5891
        %v5893 = vpop.f32.mrb[0].mxu0
        %5894 = vmatprep.mubr.bf16.mxu0 0
        %5895 = vmatmul.mubr.bf16.gmra.mrb[0].mxu0 %v4491
        %v5896 = vpop.f32.mrb[0].mxu0
        %v5897 = vadd.f32 %v5608, %v5896
        %v5898 = vpop.f32.mrb[0].mxu0
        %v5899 = vpop.f32.mrb[0].mxu0
        %v5900 = vadd.f32 %v5611, %v5899
        %v5901 = vpop.f32.mrb[0].mxu0
        %5902 = vmatprep.mubr.bf16.mxu0 0
        %5903 = vmatmul.mubr.bf16.gmra.mrb[0].mxu0 %v4494
        %v5904 = vpop.f32.mrb[0].mxu0
        %v5905 = vadd.f32 %v5616, %v5904
        %v5906 = vpop.f32.mrb[0].mxu0
        %v5907 = vpop.f32.mrb[0].mxu0
        %v5908 = vadd.f32 %v5619, %v5907
        %v5909 = vpop.f32.mrb[0].mxu0
        %5910 = vmatprep.mubr.bf16.mxu0 0
        %5911 = vmatmul.mubr.bf16.gmra.mrb[0].mxu0 %v4497
        %v5912 = vpop.f32.mrb[0].mxu0
        %v5913 = vadd.f32 %v5624, %v5912
        %v5914 = vpop.f32.mrb[0].mxu0
        %v5915 = vpop.f32.mrb[0].mxu0
        %v5916 = vadd.f32 %v5627, %v5915
        %v5917 = vpop.f32.mrb[0].mxu0
        %5918 = vmatprep.mubr.bf16.mxu0 0
        %5919 = vmatmul.mubr.bf16.gmra.mrb[0].mxu0 %v4500
        %v5920 = vpop.f32.mrb[0].mxu0
        %v5921 = vadd.f32 %v5632, %v5920
        %v5922 = vpop.f32.mrb[0].mxu0
        %v5923 = vpop.f32.mrb[0].mxu0
        %v5924 = vadd.f32 %v5635, %v5923
        %v5925 = vpop.f32.mrb[0].mxu0
        %5926 = vmatprep.mubr.bf16.mxu0 0
        %5927 = vmatmul.mubr.bf16.gmra.mrb[0].mxu0 %v4503
        %v5928 = vpop.f32.mrb[0].mxu0
        %v5929 = vadd.f32 %v5640, %v5928
        %v5930 = vpop.f32.mrb[0].mxu0
        %v5931 = vpop.f32.mrb[0].mxu0
        %v5932 = vadd.f32 %v5643, %v5931
        %v5933 = vpop.f32.mrb[0].mxu0
        %5934 = vmatprep.mubr.bf16.mxu0 0
        %5935 = vmatmul.mubr.bf16.gmra.mrb[0].mxu0 %v4506
        %v5936 = vpop.f32.mrb[0].mxu0
        %v5937 = vadd.f32 %v5648, %v5936
        %v5938 = vpop.f32.mrb[0].mxu0
        %v5939 = vpop.f32.mrb[0].mxu0
        %v5940 = vadd.f32 %v5651, %v5939
        %v5941 = vpop.f32.mrb[0].mxu0
        %5942 = vmatprep.mubr.bf16.mxu0 0
        %5943 = vmatmul.mubr.bf16.gmra.mrb[0].mxu0 %v4509
        %v5944 = vpop.f32.mrb[0].mxu0
        %v5945 = vadd.f32 %v5656, %v5944
        %v5946 = vpop.f32.mrb[0].mxu0
        %v5947 = vpop.f32.mrb[0].mxu0
        %v5948 = vadd.f32 %v5659, %v5947
        %v5949 = vpop.f32.mrb[0].mxu0
        %5950 = vmatprep.mubr.bf16.mxu0 0
        %5951 = vmatmul.mubr.bf16.gmra.mrb[0].mxu0 %v4512
        %v5952 = vpop.f32.mrb[0].mxu0
        %v5953 = vadd.f32 %v5664, %v5952
        %v5954 = vpop.f32.mrb[0].mxu0
        %v5955 = vpop.f32.mrb[0].mxu0
        %v5956 = vadd.f32 %v5667, %v5955
        %v5957 = vpop.f32.mrb[0].mxu0
        %5958 = vmatprep.mubr.bf16.mxu0 0
        %5959 = vmatmul.mubr.bf16.gmra.mrb[0].mxu0 %v4515
        %v5960 = vpop.f32.mrb[0].mxu0
        %v5961 = vadd.f32 %v5672, %v5960
        %v5962 = vpop.f32.mrb[0].mxu0
        %v5963 = vpop.f32.mrb[0].mxu0
        %v5964 = vadd.f32 %v5675, %v5963
        %v5965 = vpop.f32.mrb[0].mxu0
        %5966 = vmatprep.mubr.bf16.mxu0 0
        %5967 = vmatmul.mubr.bf16.gmra.mrb[0].mxu0 %v4518
        %v5968 = vpop.f32.mrb[0].mxu0
        %v5969 = vadd.f32 %v5680, %v5968
        %v5970 = vpop.f32.mrb[0].mxu0
        %v5971 = vpop.f32.mrb[0].mxu0
        %v5972 = vadd.f32 %v5683, %v5971
        %v5973 = vpop.f32.mrb[0].mxu0
        %5974 = vmatprep.mubr.bf16.mxu0 0
        %5975 = vmatmul.mubr.bf16.gmra.mrb[0].mxu0 %v4521
        %v5976 = vpop.f32.mrb[0].mxu0
        %v5977 = vadd.f32 %v5688, %v5976
        %v5978 = vpop.f32.mrb[0].mxu0
        %v5979 = vpop.f32.mrb[0].mxu0
        %v5980 = vadd.f32 %v5691, %v5979
        %v5981 = vpop.f32.mrb[0].mxu0
        %5982 = vmatprep.mubr.bf16.mxu0 0
        %5983 = vmatmul.mubr.bf16.gmra.mrb[0].mxu0 %v4524
        %v5984 = vpop.f32.mrb[0].mxu0
        %v5985 = vadd.f32 %v5696, %v5984
        %v5986 = vpop.f32.mrb[0].mxu0
        %v5987 = vpop.f32.mrb[0].mxu0
        %v5988 = vadd.f32 %v5699, %v5987
        %v5989 = vpop.f32.mrb[0].mxu0
        %5990 = vmatprep.mubr.bf16.mxu0 0
        %5991 = vmatmul.mubr.bf16.gmra.mrb[0].mxu0 %v4527
        %v5992 = vpop.f32.mrb[0].mxu0
        %v5993 = vadd.f32 %v5704, %v5992
        %v5994 = vpop.f32.mrb[0].mxu0
        %v5995 = vpop.f32.mrb[0].mxu0
        %v5996 = vadd.f32 %v5707, %v5995
        %v5997 = vpop.f32.mrb[0].mxu0
        %5998 = vmatprep.mubr.bf16.mxu0 0
        %5999 = vmatmul.mubr.bf16.gmra.mrb[0].mxu0 %v4530
        %v6000 = vpop.f32.mrb[0].mxu0
        %v6001 = vadd.f32 %v5712, %v6000
        %v6002 = vpop.f32.mrb[0].mxu0
        %v6003 = vpop.f32.mrb[0].mxu0
        %v6004 = vadd.f32 %v5715, %v6003
        %v6005 = vpop.f32.mrb[0].mxu0
        %6006 = vmatprep.mubr.bf16.mxu0 0
        %6007 = vmatmul.mubr.bf16.gmra.mrb[0].mxu0 %v4533
        %v6008 = vpop.f32.mrb[0].mxu0
        %v6009 = vadd.f32 %v5720, %v6008
        %v6010 = vpop.f32.mrb[0].mxu0
        %v6011 = vpop.f32.mrb[0].mxu0
        %v6012 = vadd.f32 %v5723, %v6011
        %v6013 = vpop.f32.mrb[0].mxu0
        %6014 = vmatprep.mubr.bf16.mxu0 0
        %6015 = vmatmul.mubr.bf16.gmra.mrb[0].mxu0 %v4536
        %v6016 = vpop.f32.mrb[0].mxu0
        %v6017 = vadd.f32 %v5728, %v6016
        %v6018 = vpop.f32.mrb[0].mxu0
        %v6019 = vpop.f32.mrb[0].mxu0
        %v6020 = vadd.f32 %v5731, %v6019
        %v6021 = vpop.f32.mrb[0].mxu0
        %6022 = vmatprep.mubr.bf16.mxu0 0
        %6023 = vmatmul.mubr.bf16.gmra.mrb[0].mxu0 %v4539
        %v6024 = vpop.f32.mrb[0].mxu0
        %v6025 = vadd.f32 %v5736, %v6024
        %v6026 = vpop.f32.mrb[0].mxu0
        %v6027 = vpop.f32.mrb[0].mxu0
        %v6028 = vadd.f32 %v5739, %v6027
        %v6029 = vpop.f32.mrb[0].mxu0
        %6030 = vmatprep.mubr.bf16.mxu0 0
        %6031 = vmatmul.mubr.bf16.gmra.mrb[0].mxu0 %v4542
        %v6032 = vpop.f32.mrb[0].mxu0
        %v6033 = vadd.f32 %v5744, %v6032
        %v6034 = vpop.f32.mrb[0].mxu0
        %v6035 = vpop.f32.mrb[0].mxu0
        %v6036 = vadd.f32 %v5747, %v6035
        %v6037 = vpop.f32.mrb[0].mxu0
        %6038 = vmatprep.mubr.bf16.mxu0 0
        %6039 = vmatmul.mubr.bf16.gmra.mrb[0].mxu0 %v4545
        %v6040 = vpop.f32.mrb[0].mxu0
        %v6041 = vadd.f32 %v5752, %v6040
        %v6042 = vpop.f32.mrb[0].mxu0
        %v6043 = vpop.f32.mrb[0].mxu0
        %v6044 = vadd.f32 %v5755, %v6043
        %v6045 = vpop.f32.mrb[0].mxu0
        %6046 = vmatprep.mubr.bf16.mxu0 0
        %6047 = vmatmul.mubr.bf16.gmra.mrb[0].mxu0 %v4548
        %v6048 = vpop.f32.mrb[0].mxu0
        %v6049 = vadd.f32 %v5760, %v6048
        %v6050 = vpop.f32.mrb[0].mxu0
        %v6051 = vpop.f32.mrb[0].mxu0
        %v6052 = vadd.f32 %v5763, %v6051
        %v6053 = vpop.f32.mrb[0].mxu0
        %6054 = vmatprep.mubr.bf16.mxu0 0
        %6055 = vmatmul.mubr.bf16.gmra.mrb[0].mxu0 %v4551
        %v6056 = vpop.f32.mrb[0].mxu0
        %v6057 = vadd.f32 %v5768, %v6056
        %v6058 = vpop.f32.mrb[0].mxu0
        %v6059 = vpop.f32.mrb[0].mxu0
        %v6060 = vadd.f32 %v5771, %v6059
        %v6061 = vpop.f32.mrb[0].mxu0
        %6062 = vmatprep.mubr.bf16.mxu0 0
        %6063 = vmatmul.mubr.bf16.gmra.mrb[0].mxu0 %v4554
        %v6064 = vpop.f32.mrb[0].mxu0
        %v6065 = vadd.f32 %v5776, %v6064
        %v6066 = vpop.f32.mrb[0].mxu0
        %v6067 = vpop.f32.mrb[0].mxu0
        %v6068 = vadd.f32 %v5779, %v6067
        %v6069 = vpop.f32.mrb[0].mxu0
        %6070 = vmatprep.mubr.bf16.mxu0 0
        %6071 = vmatmul.mubr.bf16.gmra.mrb[0].mxu0 %v4557
        %v6072 = vpop.f32.mrb[0].mxu0
        %v6073 = vadd.f32 %v5784, %v6072
        %v6074 = vpop.f32.mrb[0].mxu0
        %v6075 = vpop.f32.mrb[0].mxu0
        %v6076 = vadd.f32 %v5787, %v6075
        %v6077 = vpop.f32.mrb[0].mxu0
        %6078 = vmatprep.mubr.bf16.mxu0 0
        %6079 = vmatmul.mubr.bf16.gmra.mrb[0].mxu0 %v4560
        %v6080 = vpop.f32.mrb[0].mxu0
        %v6081 = vadd.f32 %v5792, %v6080
        %v6082 = vpop.f32.mrb[0].mxu0
        %v6083 = vpop.f32.mrb[0].mxu0
        %v6084 = vadd.f32 %v5795, %v6083
        %v6085 = vpop.f32.mrb[0].mxu0
        %6086 = vmatprep.mubr.bf16.mxu0 0
        %6087 = vmatmul.mubr.bf16.gmra.mrb[0].mxu0 %v4563
        %v6088 = vpop.f32.mrb[0].mxu0
        %v6089 = vadd.f32 %v5800, %v6088
        %v6090 = vpop.f32.mrb[0].mxu0
        %v6091 = vpop.f32.mrb[0].mxu0
        %v6092 = vadd.f32 %v5803, %v6091
        %v6093 = vpop.f32.mrb[0].mxu0
        %6094 = vmatprep.mubr.bf16.mxu0 0
        %6095 = vmatmul.mubr.bf16.gmra.mrb[0].mxu0 %v4566
        %v6096 = vpop.f32.mrb[0].mxu0
        %v6097 = vadd.f32 %v5808, %v6096
        %v6098 = vpop.f32.mrb[0].mxu0
        %v6099 = vpop.f32.mrb[0].mxu0
        %v6100 = vadd.f32 %v5811, %v6099
        %v6101 = vpop.f32.mrb[0].mxu0
        %6102 = vmatprep.mubr.bf16.mxu0 0
        %6103 = vmatmul.mubr.bf16.gmra.mrb[0].mxu0 %v4569
        %v6104 = vpop.f32.mrb[0].mxu0
        %v6105 = vadd.f32 %v5816, %v6104
        %v6106 = vpop.f32.mrb[0].mxu0
        %v6107 = vpop.f32.mrb[0].mxu0
        %v6108 = vadd.f32 %v5819, %v6107
        %v6109 = vpop.f32.mrb[0].mxu0
        %6110 = vdwg.mxu0
        %s6111 = scalar_lea.vmem [#allocation9], 384
        %v6112 = vld [vmem:[%s6111] sm:$0xf]
        %v6113 = vld [vmem:[%s6111 + $0x4] sm:$0xf]
        %v6114 = vld [vmem:[%s6111 + $0x8] sm:$0xf]
        %v6115 = vld [vmem:[%s6111 + $0xc] sm:$0xf]
        %v6116 = vld [vmem:[%s6111 + $0x10] sm:$0xf]
        %v6117 = vld [vmem:[%s6111 + $0x14] sm:$0xf]
        %v6118 = vld [vmem:[%s6111 + $0x18] sm:$0xf]
        %v6119 = vld [vmem:[%s6111 + $0x1c] sm:$0xf]
        %v6120 = vld [vmem:[%s6111 + $0x20] sm:$0xf]
        %v6121 = vld [vmem:[%s6111 + $0x24] sm:$0xf]
        %v6122 = vld [vmem:[%s6111 + $0x28] sm:$0xf]
        %v6123 = vld [vmem:[%s6111 + $0x2c] sm:$0xf]
        %v6124 = vld [vmem:[%s6111 + $0x30] sm:$0xf]
        %v6125 = vld [vmem:[%s6111 + $0x34] sm:$0xf]
        %v6126 = vld [vmem:[%s6111 + $0x38] sm:$0xf]
        %v6127 = vld [vmem:[%s6111 + $0x3c] sm:$0xf]
        %v6128 = vld [vmem:[%s6111 + $0x40] sm:$0xf]
        %v6129 = vld [vmem:[%s6111 + $0x44] sm:$0xf]
        %v6130 = vld [vmem:[%s6111 + $0x48] sm:$0xf]
        %v6131 = vld [vmem:[%s6111 + $0x4c] sm:$0xf]
        %v6132 = vld [vmem:[%s6111 + $0x50] sm:$0xf]
        %v6133 = vld [vmem:[%s6111 + $0x54] sm:$0xf]
        %v6134 = vld [vmem:[%s6111 + $0x58] sm:$0xf]
        %v6135 = vld [vmem:[%s6111 + $0x5c] sm:$0xf]
        %v6136 = vld [vmem:[%s6111 + $0x60] sm:$0xf]
        %v6137 = vld [vmem:[%s6111 + $0x64] sm:$0xf]
        %v6138 = vld [vmem:[%s6111 + $0x68] sm:$0xf]
        %v6139 = vld [vmem:[%s6111 + $0x6c] sm:$0xf]
        %v6140 = vld [vmem:[%s6111 + $0x70] sm:$0xf]
        %v6141 = vld [vmem:[%s6111 + $0x74] sm:$0xf]
        %v6142 = vld [vmem:[%s6111 + $0x78] sm:$0xf]
        %v6143 = vld [vmem:[%s6111 + $0x7c] sm:$0xf]
        %v6144 = vld [vmem:[%s6111 + $0x80] sm:$0xf]
        %v6145 = vld [vmem:[%s6111 + $0x84] sm:$0xf]
        %v6146 = vld [vmem:[%s6111 + $0x88] sm:$0xf]
        %v6147 = vld [vmem:[%s6111 + $0x8c] sm:$0xf]
        %v6148 = vld [vmem:[%s6111 + $0x90] sm:$0xf]
        %v6149 = vld [vmem:[%s6111 + $0x94] sm:$0xf]
        %v6150 = vld [vmem:[%s6111 + $0x98] sm:$0xf]
        %v6151 = vld [vmem:[%s6111 + $0x9c] sm:$0xf]
        %v6152 = vld [vmem:[%s6111 + $0xa0] sm:$0xf]
        %v6153 = vld [vmem:[%s6111 + $0xa4] sm:$0xf]
        %v6154 = vld [vmem:[%s6111 + $0xa8] sm:$0xf]
        %v6155 = vld [vmem:[%s6111 + $0xac] sm:$0xf]
        %v6156 = vld [vmem:[%s6111 + $0xb0] sm:$0xf]
        %v6157 = vld [vmem:[%s6111 + $0xb4] sm:$0xf]
        %v6158 = vld [vmem:[%s6111 + $0xb8] sm:$0xf]
        %v6159 = vld [vmem:[%s6111 + $0xbc] sm:$0xf]
        %v6208 = vunpack.c.l.b16 %v6112
        %v6209 = vunpack.c.l.b16 %v6113
        %v6210 = vunpack.c.l.b16 %v6114
        %v6211 = vunpack.c.l.b16 %v6115
        %v6212 = vunpack.c.l.b16 %v6116
        %v6213 = vunpack.c.l.b16 %v6117
        %v6214 = vunpack.c.l.b16 %v6118
        %v6215 = vunpack.c.l.b16 %v6119
        %v6216 = vunpack.c.l.b16 %v6120
        %v6217 = vunpack.c.l.b16 %v6121
        %v6218 = vunpack.c.l.b16 %v6122
        %v6219 = vunpack.c.l.b16 %v6123
        %v6220 = vunpack.c.l.b16 %v6124
        %v6221 = vunpack.c.l.b16 %v6125
        %v6222 = vunpack.c.l.b16 %v6126
        %v6223 = vunpack.c.l.b16 %v6127
        %v6224 = vunpack.c.l.b16 %v6128
        %v6225 = vunpack.c.l.b16 %v6129
        %v6226 = vunpack.c.l.b16 %v6130
        %v6227 = vunpack.c.l.b16 %v6131
        %v6228 = vunpack.c.l.b16 %v6132
        %v6229 = vunpack.c.l.b16 %v6133
        %v6230 = vunpack.c.l.b16 %v6134
        %v6231 = vunpack.c.l.b16 %v6135
        %v6232 = vunpack.c.l.b16 %v6136
        %v6233 = vunpack.c.l.b16 %v6137
        %v6234 = vunpack.c.l.b16 %v6138
        %v6235 = vunpack.c.l.b16 %v6139
        %v6236 = vunpack.c.l.b16 %v6140
        %v6237 = vunpack.c.l.b16 %v6141
        %v6238 = vunpack.c.l.b16 %v6142
        %v6239 = vunpack.c.l.b16 %v6143
        %v6240 = vunpack.c.l.b16 %v6144
        %v6241 = vunpack.c.l.b16 %v6145
        %v6242 = vunpack.c.l.b16 %v6146
        %v6243 = vunpack.c.l.b16 %v6147
        %v6244 = vunpack.c.l.b16 %v6148
        %v6245 = vunpack.c.l.b16 %v6149
        %v6246 = vunpack.c.l.b16 %v6150
        %v6247 = vunpack.c.l.b16 %v6151
        %v6248 = vunpack.c.l.b16 %v6152
        %v6249 = vunpack.c.l.b16 %v6153
        %v6250 = vunpack.c.l.b16 %v6154
        %v6251 = vunpack.c.l.b16 %v6155
        %v6252 = vunpack.c.l.b16 %v6156
        %v6253 = vunpack.c.l.b16 %v6157
        %v6254 = vunpack.c.l.b16 %v6158
        %v6255 = vunpack.c.l.b16 %v6159
        %v6256 = vpack.c.b16 %v6209, %v6208
        %v6257 = vpack.c.b16 %v6211, %v6210
        %v6258 = vpack.c.b16 %v6213, %v6212
        %v6259 = vpack.c.b16 %v6215, %v6214
        %v6260 = vpack.c.b16 %v6217, %v6216
        %v6261 = vpack.c.b16 %v6219, %v6218
        %v6262 = vpack.c.b16 %v6221, %v6220
        %v6263 = vpack.c.b16 %v6223, %v6222
        %v6264 = vpack.c.b16 %v6225, %v6224
        %v6265 = vpack.c.b16 %v6227, %v6226
        %v6266 = vpack.c.b16 %v6229, %v6228
        %v6267 = vpack.c.b16 %v6231, %v6230
        %v6268 = vpack.c.b16 %v6233, %v6232
        %v6269 = vpack.c.b16 %v6235, %v6234
        %v6270 = vpack.c.b16 %v6237, %v6236
        %v6271 = vpack.c.b16 %v6239, %v6238
        %v6272 = vpack.c.b16 %v6241, %v6240
        %v6273 = vpack.c.b16 %v6243, %v6242
        %v6274 = vpack.c.b16 %v6245, %v6244
        %v6275 = vpack.c.b16 %v6247, %v6246
        %v6276 = vpack.c.b16 %v6249, %v6248
        %v6277 = vpack.c.b16 %v6251, %v6250
        %v6278 = vpack.c.b16 %v6253, %v6252
        %v6279 = vpack.c.b16 %v6255, %v6254
        %6304 = vmatprep.subr.bf16.mxu0 0
        %6305 = vmatpush1.bf16.msra.mxu0 %v6256
        %6306 = vmatprep.subr.bf16.mxu0 0
        %6307 = vmatpush1.bf16.msra.mxu0 %v6257
        %6308 = vmatprep.subr.bf16.mxu0 0
        %6309 = vmatpush1.bf16.msra.mxu0 %v6258
        %6310 = vmatprep.subr.bf16.mxu0 0
        %6311 = vmatpush1.bf16.msra.mxu0 %v6259
        %6312 = vmatprep.subr.bf16.mxu0 0
        %6313 = vmatpush1.bf16.msra.mxu0 %v6260
        %6314 = vmatprep.subr.bf16.mxu0 0
        %6315 = vmatpush1.bf16.msra.mxu0 %v6261
        %6316 = vmatprep.subr.bf16.mxu0 0
        %6317 = vmatpush1.bf16.msra.mxu0 %v6262
        %6318 = vmatprep.subr.bf16.mxu0 0
        %6319 = vmatpush1.bf16.msra.mxu0 %v6263
        %6320 = vmatprep.subr.bf16.mxu0 0
        %6321 = vmatpush1.bf16.msra.mxu0 %v6264
        %6322 = vmatprep.subr.bf16.mxu0 0
        %6323 = vmatpush1.bf16.msra.mxu0 %v6265
        %6324 = vmatprep.subr.bf16.mxu0 0
        %6325 = vmatpush1.bf16.msra.mxu0 %v6266
        %6326 = vmatprep.subr.bf16.mxu0 0
        %6327 = vmatpush1.bf16.msra.mxu0 %v6267
        %6328 = vmatprep.subr.bf16.mxu0 0
        %6329 = vmatpush1.bf16.msra.mxu0 %v6268
        %6330 = vmatprep.subr.bf16.mxu0 0
        %6331 = vmatpush1.bf16.msra.mxu0 %v6269
        %6332 = vmatprep.subr.bf16.mxu0 0
        %6333 = vmatpush1.bf16.msra.mxu0 %v6270
        %6334 = vmatprep.subr.bf16.mxu0 0
        %6335 = vmatpush1.bf16.msra.mxu0 %v6271
        %6336 = vmatprep.mubr.bf16.mxu0 %v4475
        %6337 = vmatmul.mubr.bf16.gmra.mrb[0].mxu0 %v4474
        %v6338 = vpop.f32.mrb[0].mxu0
        %v6339 = vadd.f32 0.0, %v6338
        %v6340 = vpop.f32.mrb[0].mxu0
        %v6341 = vpop.f32.mrb[0].mxu0
        %v6342 = vadd.f32 0.0, %v6341
        %v6343 = vpop.f32.mrb[0].mxu0
        %6344 = vmatprep.mubr.bf16.mxu0 %v4478
        %6345 = vmatmul.mubr.bf16.gmra.mrb[0].mxu0 %v4477
        %v6346 = vpop.f32.mrb[0].mxu0
        %v6347 = vadd.f32 0.0, %v6346
        %v6348 = vpop.f32.mrb[0].mxu0
        %v6349 = vpop.f32.mrb[0].mxu0
        %v6350 = vadd.f32 0.0, %v6349
        %v6351 = vpop.f32.mrb[0].mxu0
        %6352 = vmatprep.mubr.bf16.mxu0 %v4481
        %6353 = vmatmul.mubr.bf16.gmra.mrb[0].mxu0 %v4480
        %v6354 = vpop.f32.mrb[0].mxu0
        %v6355 = vadd.f32 0.0, %v6354
        %v6356 = vpop.f32.mrb[0].mxu0
        %v6357 = vpop.f32.mrb[0].mxu0
        %v6358 = vadd.f32 0.0, %v6357
        %v6359 = vpop.f32.mrb[0].mxu0
        %6360 = vmatprep.mubr.bf16.mxu0 %v4484
        %6361 = vmatmul.mubr.bf16.gmra.mrb[0].mxu0 %v4483
        %v6362 = vpop.f32.mrb[0].mxu0
        %v6363 = vadd.f32 0.0, %v6362
        %v6364 = vpop.f32.mrb[0].mxu0
        %v6365 = vpop.f32.mrb[0].mxu0
        %v6366 = vadd.f32 0.0, %v6365
        %v6367 = vpop.f32.mrb[0].mxu0
        %6368 = vmatprep.mubr.bf16.mxu0 %v4487
        %6369 = vmatmul.mubr.bf16.gmra.mrb[0].mxu0 %v4486
        %v6370 = vpop.f32.mrb[0].mxu0
        %v6371 = vadd.f32 0.0, %v6370
        %v6372 = vpop.f32.mrb[0].mxu0
        %v6373 = vpop.f32.mrb[0].mxu0
        %v6374 = vadd.f32 0.0, %v6373
        %v6375 = vpop.f32.mrb[0].mxu0
        %6376 = vmatprep.mubr.bf16.mxu0 %v4490
        %6377 = vmatmul.mubr.bf16.gmra.mrb[0].mxu0 %v4489
        %v6378 = vpop.f32.mrb[0].mxu0
        %v6379 = vadd.f32 0.0, %v6378
        %v6380 = vpop.f32.mrb[0].mxu0
        %v6381 = vpop.f32.mrb[0].mxu0
        %v6382 = vadd.f32 0.0, %v6381
        %v6383 = vpop.f32.mrb[0].mxu0
        %6384 = vmatprep.mubr.bf16.mxu0 %v4493
        %6385 = vmatmul.mubr.bf16.gmra.mrb[0].mxu0 %v4492
        %v6386 = vpop.f32.mrb[0].mxu0
        %v6387 = vadd.f32 0.0, %v6386
        %v6388 = vpop.f32.mrb[0].mxu0
        %v6389 = vpop.f32.mrb[0].mxu0
        %v6390 = vadd.f32 0.0, %v6389
        %v6391 = vpop.f32.mrb[0].mxu0
        %6392 = vmatprep.mubr.bf16.mxu0 %v4496
        %6393 = vmatmul.mubr.bf16.gmra.mrb[0].mxu0 %v4495
        %v6394 = vpop.f32.mrb[0].mxu0
        %v6395 = vadd.f32 0.0, %v6394
        %v6396 = vpop.f32.mrb[0].mxu0
        %v6397 = vpop.f32.mrb[0].mxu0
        %v6398 = vadd.f32 0.0, %v6397
        %v6399 = vpop.f32.mrb[0].mxu0
        %6400 = vmatprep.mubr.bf16.mxu0 %v4499
        %6401 = vmatmul.mubr.bf16.gmra.mrb[0].mxu0 %v4498
        %v6402 = vpop.f32.mrb[0].mxu0
        %v6403 = vadd.f32 0.0, %v6402
        %v6404 = vpop.f32.mrb[0].mxu0
        %v6405 = vpop.f32.mrb[0].mxu0
        %v6406 = vadd.f32 0.0, %v6405
        %v6407 = vpop.f32.mrb[0].mxu0
        %6408 = vmatprep.mubr.bf16.mxu0 %v4502
        %6409 = vmatmul.mubr.bf16.gmra.mrb[0].mxu0 %v4501
        %v6410 = vpop.f32.mrb[0].mxu0
        %v6411 = vadd.f32 0.0, %v6410
        %v6412 = vpop.f32.mrb[0].mxu0
        %v6413 = vpop.f32.mrb[0].mxu0
        %v6414 = vadd.f32 0.0, %v6413
        %v6415 = vpop.f32.mrb[0].mxu0
        %6416 = vmatprep.mubr.bf16.mxu0 %v4505
        %6417 = vmatmul.mubr.bf16.gmra.mrb[0].mxu0 %v4504
        %v6418 = vpop.f32.mrb[0].mxu0
        %v6419 = vadd.f32 0.0, %v6418
        %v6420 = vpop.f32.mrb[0].mxu0
        %v6421 = vpop.f32.mrb[0].mxu0
        %v6422 = vadd.f32 0.0, %v6421
        %v6423 = vpop.f32.mrb[0].mxu0
        %6424 = vmatprep.mubr.bf16.mxu0 %v4508
        %6425 = vmatmul.mubr.bf16.gmra.mrb[0].mxu0 %v4507
        %v6426 = vpop.f32.mrb[0].mxu0
        %v6427 = vadd.f32 0.0, %v6426
        %v6428 = vpop.f32.mrb[0].mxu0
        %v6429 = vpop.f32.mrb[0].mxu0
        %v6430 = vadd.f32 0.0, %v6429
        %v6431 = vpop.f32.mrb[0].mxu0
        %6432 = vmatprep.mubr.bf16.mxu0 %v4511
        %6433 = vmatmul.mubr.bf16.gmra.mrb[0].mxu0 %v4510
        %v6434 = vpop.f32.mrb[0].mxu0
        %v6435 = vadd.f32 0.0, %v6434
        %v6436 = vpop.f32.mrb[0].mxu0
        %v6437 = vpop.f32.mrb[0].mxu0
        %v6438 = vadd.f32 0.0, %v6437
        %v6439 = vpop.f32.mrb[0].mxu0
        %6440 = vmatprep.mubr.bf16.mxu0 %v4514
        %6441 = vmatmul.mubr.bf16.gmra.mrb[0].mxu0 %v4513
        %v6442 = vpop.f32.mrb[0].mxu0
        %v6443 = vadd.f32 0.0, %v6442
        %v6444 = vpop.f32.mrb[0].mxu0
        %v6445 = vpop.f32.mrb[0].mxu0
        %v6446 = vadd.f32 0.0, %v6445
        %v6447 = vpop.f32.mrb[0].mxu0
        %6448 = vmatprep.mubr.bf16.mxu0 %v4517
        %6449 = vmatmul.mubr.bf16.gmra.mrb[0].mxu0 %v4516
        %v6450 = vpop.f32.mrb[0].mxu0
        %v6451 = vadd.f32 0.0, %v6450
        %v6452 = vpop.f32.mrb[0].mxu0
        %v6453 = vpop.f32.mrb[0].mxu0
        %v6454 = vadd.f32 0.0, %v6453
        %v6455 = vpop.f32.mrb[0].mxu0
        %6456 = vmatprep.mubr.bf16.mxu0 %v4520
        %6457 = vmatmul.mubr.bf16.gmra.mrb[0].mxu0 %v4519
        %v6458 = vpop.f32.mrb[0].mxu0
        %v6459 = vadd.f32 0.0, %v6458
        %v6460 = vpop.f32.mrb[0].mxu0
        %v6461 = vpop.f32.mrb[0].mxu0
        %v6462 = vadd.f32 0.0, %v6461
        %v6463 = vpop.f32.mrb[0].mxu0
        %6464 = vmatprep.mubr.bf16.mxu0 %v4523
        %6465 = vmatmul.mubr.bf16.gmra.mrb[0].mxu0 %v4522
        %v6466 = vpop.f32.mrb[0].mxu0
        %v6467 = vadd.f32 0.0, %v6466
        %v6468 = vpop.f32.mrb[0].mxu0
        %v6469 = vpop.f32.mrb[0].mxu0
        %v6470 = vadd.f32 0.0, %v6469
        %v6471 = vpop.f32.mrb[0].mxu0
        %6472 = vmatprep.mubr.bf16.mxu0 %v4526
        %6473 = vmatmul.mubr.bf16.gmra.mrb[0].mxu0 %v4525
        %v6474 = vpop.f32.mrb[0].mxu0
        %v6475 = vadd.f32 0.0, %v6474
        %v6476 = vpop.f32.mrb[0].mxu0
        %v6477 = vpop.f32.mrb[0].mxu0
        %v6478 = vadd.f32 0.0, %v6477
        %v6479 = vpop.f32.mrb[0].mxu0
        %6480 = vmatprep.mubr.bf16.mxu0 %v4529
        %6481 = vmatmul.mubr.bf16.gmra.mrb[0].mxu0 %v4528
        %v6482 = vpop.f32.mrb[0].mxu0
        %v6483 = vadd.f32 0.0, %v6482
        %v6484 = vpop.f32.mrb[0].mxu0
        %v6485 = vpop.f32.mrb[0].mxu0
        %v6486 = vadd.f32 0.0, %v6485
        %v6487 = vpop.f32.mrb[0].mxu0
        %6488 = vmatprep.mubr.bf16.mxu0 %v4532
        %6489 = vmatmul.mubr.bf16.gmra.mrb[0].mxu0 %v4531
        %v6490 = vpop.f32.mrb[0].mxu0
        %v6491 = vadd.f32 0.0, %v6490
        %v6492 = vpop.f32.mrb[0].mxu0
        %v6493 = vpop.f32.mrb[0].mxu0
        %v6494 = vadd.f32 0.0, %v6493
        %v6495 = vpop.f32.mrb[0].mxu0
        %6496 = vmatprep.mubr.bf16.mxu0 %v4535
        %6497 = vmatmul.mubr.bf16.gmra.mrb[0].mxu0 %v4534
        %v6498 = vpop.f32.mrb[0].mxu0
        %v6499 = vadd.f32 0.0, %v6498
        %v6500 = vpop.f32.mrb[0].mxu0
        %v6501 = vpop.f32.mrb[0].mxu0
        %v6502 = vadd.f32 0.0, %v6501
        %v6503 = vpop.f32.mrb[0].mxu0
        %6504 = vmatprep.mubr.bf16.mxu0 %v4538
        %6505 = vmatmul.mubr.bf16.gmra.mrb[0].mxu0 %v4537
        %v6506 = vpop.f32.mrb[0].mxu0
        %v6507 = vadd.f32 0.0, %v6506
        %v6508 = vpop.f32.mrb[0].mxu0
        %v6509 = vpop.f32.mrb[0].mxu0
        %v6510 = vadd.f32 0.0, %v6509
        %v6511 = vpop.f32.mrb[0].mxu0
        %6512 = vmatprep.mubr.bf16.mxu0 %v4541
        %6513 = vmatmul.mubr.bf16.gmra.mrb[0].mxu0 %v4540
        %v6514 = vpop.f32.mrb[0].mxu0
        %v6515 = vadd.f32 0.0, %v6514
        %v6516 = vpop.f32.mrb[0].mxu0
        %v6517 = vpop.f32.mrb[0].mxu0
        %v6518 = vadd.f32 0.0, %v6517
        %v6519 = vpop.f32.mrb[0].mxu0
        %6520 = vmatprep.mubr.bf16.mxu0 %v4544
        %6521 = vmatmul.mubr.bf16.gmra.mrb[0].mxu0 %v4543
        %v6522 = vpop.f32.mrb[0].mxu0
        %v6523 = vadd.f32 0.0, %v6522
        %v6524 = vpop.f32.mrb[0].mxu0
        %v6525 = vpop.f32.mrb[0].mxu0
        %v6526 = vadd.f32 0.0, %v6525
        %v6527 = vpop.f32.mrb[0].mxu0
        %6528 = vmatprep.mubr.bf16.mxu0 %v4547
        %6529 = vmatmul.mubr.bf16.gmra.mrb[0].mxu0 %v4546
        %v6530 = vpop.f32.mrb[0].mxu0
        %v6531 = vadd.f32 0.0, %v6530
        %v6532 = vpop.f32.mrb[0].mxu0
        %v6533 = vpop.f32.mrb[0].mxu0
        %v6534 = vadd.f32 0.0, %v6533
        %v6535 = vpop.f32.mrb[0].mxu0
        %6536 = vmatprep.mubr.bf16.mxu0 %v4550
        %6537 = vmatmul.mubr.bf16.gmra.mrb[0].mxu0 %v4549
        %v6538 = vpop.f32.mrb[0].mxu0
        %v6539 = vadd.f32 0.0, %v6538
        %v6540 = vpop.f32.mrb[0].mxu0
        %v6541 = vpop.f32.mrb[0].mxu0
        %v6542 = vadd.f32 0.0, %v6541
        %v6543 = vpop.f32.mrb[0].mxu0
        %6544 = vmatprep.mubr.bf16.mxu0 %v4553
        %6545 = vmatmul.mubr.bf16.gmra.mrb[0].mxu0 %v4552
        %v6546 = vpop.f32.mrb[0].mxu0
        %v6547 = vadd.f32 0.0, %v6546
        %v6548 = vpop.f32.mrb[0].mxu0
        %v6549 = vpop.f32.mrb[0].mxu0
        %v6550 = vadd.f32 0.0, %v6549
        %v6551 = vpop.f32.mrb[0].mxu0
        %6552 = vmatprep.mubr.bf16.mxu0 %v4556
        %6553 = vmatmul.mubr.bf16.gmra.mrb[0].mxu0 %v4555
        %v6554 = vpop.f32.mrb[0].mxu0
        %v6555 = vadd.f32 0.0, %v6554
        %v6556 = vpop.f32.mrb[0].mxu0
        %v6557 = vpop.f32.mrb[0].mxu0
        %v6558 = vadd.f32 0.0, %v6557
        %v6559 = vpop.f32.mrb[0].mxu0
        %6560 = vmatprep.mubr.bf16.mxu0 %v4559
        %6561 = vmatmul.mubr.bf16.gmra.mrb[0].mxu0 %v4558
        %v6562 = vpop.f32.mrb[0].mxu0
        %v6563 = vadd.f32 0.0, %v6562
        %v6564 = vpop.f32.mrb[0].mxu0
        %v6565 = vpop.f32.mrb[0].mxu0
        %v6566 = vadd.f32 0.0, %v6565
        %v6567 = vpop.f32.mrb[0].mxu0
        %6568 = vmatprep.mubr.bf16.mxu0 %v4562
        %6569 = vmatmul.mubr.bf16.gmra.mrb[0].mxu0 %v4561
        %v6570 = vpop.f32.mrb[0].mxu0
        %v6571 = vadd.f32 0.0, %v6570
        %v6572 = vpop.f32.mrb[0].mxu0
        %v6573 = vpop.f32.mrb[0].mxu0
        %v6574 = vadd.f32 0.0, %v6573
        %v6575 = vpop.f32.mrb[0].mxu0
        %6576 = vmatprep.mubr.bf16.mxu0 %v4565
        %6577 = vmatmul.mubr.bf16.gmra.mrb[0].mxu0 %v4564
        %v6578 = vpop.f32.mrb[0].mxu0
        %v6579 = vadd.f32 0.0, %v6578
        %v6580 = vpop.f32.mrb[0].mxu0
        %v6581 = vpop.f32.mrb[0].mxu0
        %v6582 = vadd.f32 0.0, %v6581
        %v6583 = vpop.f32.mrb[0].mxu0
        %6584 = vmatprep.mubr.bf16.mxu0 %v4568
        %6585 = vmatmul.mubr.bf16.gmra.mrb[0].mxu0 %v4567
        %v6586 = vpop.f32.mrb[0].mxu0
        %v6587 = vadd.f32 0.0, %v6586
        %v6588 = vpop.f32.mrb[0].mxu0
        %v6589 = vpop.f32.mrb[0].mxu0
        %v6590 = vadd.f32 0.0, %v6589
        %v6591 = vpop.f32.mrb[0].mxu0
        %6592 = vdwg.mxu0
        %6593 = vmatprep.subr.bf16.mxu0 0
        %6594 = vmatpush1.bf16.msra.mxu0 %v6272
        %6595 = vmatprep.subr.bf16.mxu0 0
        %6596 = vmatpush1.bf16.msra.mxu0 %v6273
        %6597 = vmatprep.subr.bf16.mxu0 0
        %6598 = vmatpush1.bf16.msra.mxu0 %v6274
        %6599 = vmatprep.subr.bf16.mxu0 0
        %6600 = vmatpush1.bf16.msra.mxu0 %v6275
        %6601 = vmatprep.subr.bf16.mxu0 0
        %6602 = vmatpush1.bf16.msra.mxu0 %v6276
        %6603 = vmatprep.subr.bf16.mxu0 0
        %6604 = vmatpush1.bf16.msra.mxu0 %v6277
        %6605 = vmatprep.subr.bf16.mxu0 0
        %6606 = vmatpush1.bf16.msra.mxu0 %v6278
        %6607 = vmatprep.subr.bf16.mxu0 0
        %6608 = vmatpush1.bf16.msra.mxu0 %v6279
        %6609 = vmatprep.subr.bf16.mxu0 0
        %6610 = vmatpush1.bf16.msra.mxu0 0
        %6611 = vmatprep.subr.bf16.mxu0 0
        %6612 = vmatpush1.bf16.msra.mxu0 0
        %6613 = vmatprep.subr.bf16.mxu0 0
        %6614 = vmatpush1.bf16.msra.mxu0 0
        %6615 = vmatprep.subr.bf16.mxu0 0
        %6616 = vmatpush1.bf16.msra.mxu0 0
        %6617 = vmatprep.subr.bf16.mxu0 0
        %6618 = vmatpush1.bf16.msra.mxu0 0
        %6619 = vmatprep.subr.bf16.mxu0 0
        %6620 = vmatpush1.bf16.msra.mxu0 0
        %6621 = vmatprep.subr.bf16.mxu0 0
        %6622 = vmatpush1.bf16.msra.mxu0 0
        %6623 = vmatprep.subr.bf16.mxu0 0
        %6624 = vmatpush1.bf16.msra.mxu0 0
        %6625 = vmatprep.mubr.bf16.mxu0 0
        %6626 = vmatmul.mubr.bf16.gmra.mrb[0].mxu0 %v4476
        %v6627 = vpop.f32.mrb[0].mxu0
        %v6628 = vadd.f32 %v6339, %v6627
        %v6629 = vpop.f32.mrb[0].mxu0
        %v6630 = vpop.f32.mrb[0].mxu0
        %v6631 = vadd.f32 %v6342, %v6630
        %v6632 = vpop.f32.mrb[0].mxu0
        %6633 = vmatprep.mubr.bf16.mxu0 0
        %6634 = vmatmul.mubr.bf16.gmra.mrb[0].mxu0 %v4479
        %v6635 = vpop.f32.mrb[0].mxu0
        %v6636 = vadd.f32 %v6347, %v6635
        %v6637 = vpop.f32.mrb[0].mxu0
        %v6638 = vpop.f32.mrb[0].mxu0
        %v6639 = vadd.f32 %v6350, %v6638
        %v6640 = vpop.f32.mrb[0].mxu0
        %6641 = vmatprep.mubr.bf16.mxu0 0
        %6642 = vmatmul.mubr.bf16.gmra.mrb[0].mxu0 %v4482
        %v6643 = vpop.f32.mrb[0].mxu0
        %v6644 = vadd.f32 %v6355, %v6643
        %v6645 = vpop.f32.mrb[0].mxu0
        %v6646 = vpop.f32.mrb[0].mxu0
        %v6647 = vadd.f32 %v6358, %v6646
        %v6648 = vpop.f32.mrb[0].mxu0
        %6649 = vmatprep.mubr.bf16.mxu0 0
        %6650 = vmatmul.mubr.bf16.gmra.mrb[0].mxu0 %v4485
        %v6651 = vpop.f32.mrb[0].mxu0
        %v6652 = vadd.f32 %v6363, %v6651
        %v6653 = vpop.f32.mrb[0].mxu0
        %v6654 = vpop.f32.mrb[0].mxu0
        %v6655 = vadd.f32 %v6366, %v6654
        %v6656 = vpop.f32.mrb[0].mxu0
        %6657 = vmatprep.mubr.bf16.mxu0 0
        %6658 = vmatmul.mubr.bf16.gmra.mrb[0].mxu0 %v4488
        %v6659 = vpop.f32.mrb[0].mxu0
        %v6660 = vadd.f32 %v6371, %v6659
        %v6661 = vpop.f32.mrb[0].mxu0
        %v6662 = vpop.f32.mrb[0].mxu0
        %v6663 = vadd.f32 %v6374, %v6662
        %v6664 = vpop.f32.mrb[0].mxu0
        %6665 = vmatprep.mubr.bf16.mxu0 0
        %6666 = vmatmul.mubr.bf16.gmra.mrb[0].mxu0 %v4491
        %v6667 = vpop.f32.mrb[0].mxu0
        %v6668 = vadd.f32 %v6379, %v6667
        %v6669 = vpop.f32.mrb[0].mxu0
        %v6670 = vpop.f32.mrb[0].mxu0
        %v6671 = vadd.f32 %v6382, %v6670
        %v6672 = vpop.f32.mrb[0].mxu0
        %6673 = vmatprep.mubr.bf16.mxu0 0
        %6674 = vmatmul.mubr.bf16.gmra.mrb[0].mxu0 %v4494
        %v6675 = vpop.f32.mrb[0].mxu0
        %v6676 = vadd.f32 %v6387, %v6675
        %v6677 = vpop.f32.mrb[0].mxu0
        %v6678 = vpop.f32.mrb[0].mxu0
        %v6679 = vadd.f32 %v6390, %v6678
        %v6680 = vpop.f32.mrb[0].mxu0
        %6681 = vmatprep.mubr.bf16.mxu0 0
        %6682 = vmatmul.mubr.bf16.gmra.mrb[0].mxu0 %v4497
        %v6683 = vpop.f32.mrb[0].mxu0
        %v6684 = vadd.f32 %v6395, %v6683
        %v6685 = vpop.f32.mrb[0].mxu0
        %v6686 = vpop.f32.mrb[0].mxu0
        %v6687 = vadd.f32 %v6398, %v6686
        %v6688 = vpop.f32.mrb[0].mxu0
        %6689 = vmatprep.mubr.bf16.mxu0 0
        %6690 = vmatmul.mubr.bf16.gmra.mrb[0].mxu0 %v4500
        %v6691 = vpop.f32.mrb[0].mxu0
        %v6692 = vadd.f32 %v6403, %v6691
        %v6693 = vpop.f32.mrb[0].mxu0
        %v6694 = vpop.f32.mrb[0].mxu0
        %v6695 = vadd.f32 %v6406, %v6694
        %v6696 = vpop.f32.mrb[0].mxu0
        %6697 = vmatprep.mubr.bf16.mxu0 0
        %6698 = vmatmul.mubr.bf16.gmra.mrb[0].mxu0 %v4503
        %v6699 = vpop.f32.mrb[0].mxu0
        %v6700 = vadd.f32 %v6411, %v6699
        %v6701 = vpop.f32.mrb[0].mxu0
        %v6702 = vpop.f32.mrb[0].mxu0
        %v6703 = vadd.f32 %v6414, %v6702
        %v6704 = vpop.f32.mrb[0].mxu0
        %6705 = vmatprep.mubr.bf16.mxu0 0
        %6706 = vmatmul.mubr.bf16.gmra.mrb[0].mxu0 %v4506
        %v6707 = vpop.f32.mrb[0].mxu0
        %v6708 = vadd.f32 %v6419, %v6707
        %v6709 = vpop.f32.mrb[0].mxu0
        %v6710 = vpop.f32.mrb[0].mxu0
        %v6711 = vadd.f32 %v6422, %v6710
        %v6712 = vpop.f32.mrb[0].mxu0
        %6713 = vmatprep.mubr.bf16.mxu0 0
        %6714 = vmatmul.mubr.bf16.gmra.mrb[0].mxu0 %v4509
        %v6715 = vpop.f32.mrb[0].mxu0
        %v6716 = vadd.f32 %v6427, %v6715
        %v6717 = vpop.f32.mrb[0].mxu0
        %v6718 = vpop.f32.mrb[0].mxu0
        %v6719 = vadd.f32 %v6430, %v6718
        %v6720 = vpop.f32.mrb[0].mxu0
        %6721 = vmatprep.mubr.bf16.mxu0 0
        %6722 = vmatmul.mubr.bf16.gmra.mrb[0].mxu0 %v4512
        %v6723 = vpop.f32.mrb[0].mxu0
        %v6724 = vadd.f32 %v6435, %v6723
        %v6725 = vpop.f32.mrb[0].mxu0
        %v6726 = vpop.f32.mrb[0].mxu0
        %v6727 = vadd.f32 %v6438, %v6726
        %v6728 = vpop.f32.mrb[0].mxu0
        %6729 = vmatprep.mubr.bf16.mxu0 0
        %6730 = vmatmul.mubr.bf16.gmra.mrb[0].mxu0 %v4515
        %v6731 = vpop.f32.mrb[0].mxu0
        %v6732 = vadd.f32 %v6443, %v6731
        %v6733 = vpop.f32.mrb[0].mxu0
        %v6734 = vpop.f32.mrb[0].mxu0
        %v6735 = vadd.f32 %v6446, %v6734
        %v6736 = vpop.f32.mrb[0].mxu0
        %6737 = vmatprep.mubr.bf16.mxu0 0
        %6738 = vmatmul.mubr.bf16.gmra.mrb[0].mxu0 %v4518
        %v6739 = vpop.f32.mrb[0].mxu0
        %v6740 = vadd.f32 %v6451, %v6739
        %v6741 = vpop.f32.mrb[0].mxu0
        %v6742 = vpop.f32.mrb[0].mxu0
        %v6743 = vadd.f32 %v6454, %v6742
        %v6744 = vpop.f32.mrb[0].mxu0
        %6745 = vmatprep.mubr.bf16.mxu0 0
        %6746 = vmatmul.mubr.bf16.gmra.mrb[0].mxu0 %v4521
        %v6747 = vpop.f32.mrb[0].mxu0
        %v6748 = vadd.f32 %v6459, %v6747
        %v6749 = vpop.f32.mrb[0].mxu0
        %v6750 = vpop.f32.mrb[0].mxu0
        %v6751 = vadd.f32 %v6462, %v6750
        %v6752 = vpop.f32.mrb[0].mxu0
        %6753 = vmatprep.mubr.bf16.mxu0 0
        %6754 = vmatmul.mubr.bf16.gmra.mrb[0].mxu0 %v4524
        %v6755 = vpop.f32.mrb[0].mxu0
        %v6756 = vadd.f32 %v6467, %v6755
        %v6757 = vpop.f32.mrb[0].mxu0
        %v6758 = vpop.f32.mrb[0].mxu0
        %v6759 = vadd.f32 %v6470, %v6758
        %v6760 = vpop.f32.mrb[0].mxu0
        %6761 = vmatprep.mubr.bf16.mxu0 0
        %6762 = vmatmul.mubr.bf16.gmra.mrb[0].mxu0 %v4527
        %v6763 = vpop.f32.mrb[0].mxu0
        %v6764 = vadd.f32 %v6475, %v6763
        %v6765 = vpop.f32.mrb[0].mxu0
        %v6766 = vpop.f32.mrb[0].mxu0
        %v6767 = vadd.f32 %v6478, %v6766
        %v6768 = vpop.f32.mrb[0].mxu0
        %6769 = vmatprep.mubr.bf16.mxu0 0
        %6770 = vmatmul.mubr.bf16.gmra.mrb[0].mxu0 %v4530
        %v6771 = vpop.f32.mrb[0].mxu0
        %v6772 = vadd.f32 %v6483, %v6771
        %v6773 = vpop.f32.mrb[0].mxu0
        %v6774 = vpop.f32.mrb[0].mxu0
        %v6775 = vadd.f32 %v6486, %v6774
        %v6776 = vpop.f32.mrb[0].mxu0
        %6777 = vmatprep.mubr.bf16.mxu0 0
        %6778 = vmatmul.mubr.bf16.gmra.mrb[0].mxu0 %v4533
        %v6779 = vpop.f32.mrb[0].mxu0
        %v6780 = vadd.f32 %v6491, %v6779
        %v6781 = vpop.f32.mrb[0].mxu0
        %v6782 = vpop.f32.mrb[0].mxu0
        %v6783 = vadd.f32 %v6494, %v6782
        %v6784 = vpop.f32.mrb[0].mxu0
        %6785 = vmatprep.mubr.bf16.mxu0 0
        %6786 = vmatmul.mubr.bf16.gmra.mrb[0].mxu0 %v4536
        %v6787 = vpop.f32.mrb[0].mxu0
        %v6788 = vadd.f32 %v6499, %v6787
        %v6789 = vpop.f32.mrb[0].mxu0
        %v6790 = vpop.f32.mrb[0].mxu0
        %v6791 = vadd.f32 %v6502, %v6790
        %v6792 = vpop.f32.mrb[0].mxu0
        %6793 = vmatprep.mubr.bf16.mxu0 0
        %6794 = vmatmul.mubr.bf16.gmra.mrb[0].mxu0 %v4539
        %v6795 = vpop.f32.mrb[0].mxu0
        %v6796 = vadd.f32 %v6507, %v6795
        %v6797 = vpop.f32.mrb[0].mxu0
        %v6798 = vpop.f32.mrb[0].mxu0
        %v6799 = vadd.f32 %v6510, %v6798
        %v6800 = vpop.f32.mrb[0].mxu0
        %6801 = vmatprep.mubr.bf16.mxu0 0
        %6802 = vmatmul.mubr.bf16.gmra.mrb[0].mxu0 %v4542
        %v6803 = vpop.f32.mrb[0].mxu0
        %v6804 = vadd.f32 %v6515, %v6803
        %v6805 = vpop.f32.mrb[0].mxu0
        %v6806 = vpop.f32.mrb[0].mxu0
        %v6807 = vadd.f32 %v6518, %v6806
        %v6808 = vpop.f32.mrb[0].mxu0
        %6809 = vmatprep.mubr.bf16.mxu0 0
        %6810 = vmatmul.mubr.bf16.gmra.mrb[0].mxu0 %v4545
        %v6811 = vpop.f32.mrb[0].mxu0
        %v6812 = vadd.f32 %v6523, %v6811
        %v6813 = vpop.f32.mrb[0].mxu0
        %v6814 = vpop.f32.mrb[0].mxu0
        %v6815 = vadd.f32 %v6526, %v6814
        %v6816 = vpop.f32.mrb[0].mxu0
        %6817 = vmatprep.mubr.bf16.mxu0 0
        %6818 = vmatmul.mubr.bf16.gmra.mrb[0].mxu0 %v4548
        %v6819 = vpop.f32.mrb[0].mxu0
        %v6820 = vadd.f32 %v6531, %v6819
        %v6821 = vpop.f32.mrb[0].mxu0
        %v6822 = vpop.f32.mrb[0].mxu0
        %v6823 = vadd.f32 %v6534, %v6822
        %v6824 = vpop.f32.mrb[0].mxu0
        %6825 = vmatprep.mubr.bf16.mxu0 0
        %6826 = vmatmul.mubr.bf16.gmra.mrb[0].mxu0 %v4551
        %v6827 = vpop.f32.mrb[0].mxu0
        %v6828 = vadd.f32 %v6539, %v6827
        %v6829 = vpop.f32.mrb[0].mxu0
        %v6830 = vpop.f32.mrb[0].mxu0
        %v6831 = vadd.f32 %v6542, %v6830
        %v6832 = vpop.f32.mrb[0].mxu0
        %6833 = vmatprep.mubr.bf16.mxu0 0
        %6834 = vmatmul.mubr.bf16.gmra.mrb[0].mxu0 %v4554
        %v6835 = vpop.f32.mrb[0].mxu0
        %v6836 = vadd.f32 %v6547, %v6835
        %v6837 = vpop.f32.mrb[0].mxu0
        %v6838 = vpop.f32.mrb[0].mxu0
        %v6839 = vadd.f32 %v6550, %v6838
        %v6840 = vpop.f32.mrb[0].mxu0
        %6841 = vmatprep.mubr.bf16.mxu0 0
        %6842 = vmatmul.mubr.bf16.gmra.mrb[0].mxu0 %v4557
        %v6843 = vpop.f32.mrb[0].mxu0
        %v6844 = vadd.f32 %v6555, %v6843
        %v6845 = vpop.f32.mrb[0].mxu0
        %v6846 = vpop.f32.mrb[0].mxu0
        %v6847 = vadd.f32 %v6558, %v6846
        %v6848 = vpop.f32.mrb[0].mxu0
        %6849 = vmatprep.mubr.bf16.mxu0 0
        %6850 = vmatmul.mubr.bf16.gmra.mrb[0].mxu0 %v4560
        %v6851 = vpop.f32.mrb[0].mxu0
        %v6852 = vadd.f32 %v6563, %v6851
        %v6853 = vpop.f32.mrb[0].mxu0
        %v6854 = vpop.f32.mrb[0].mxu0
        %v6855 = vadd.f32 %v6566, %v6854
        %v6856 = vpop.f32.mrb[0].mxu0
        %6857 = vmatprep.mubr.bf16.mxu0 0
        %6858 = vmatmul.mubr.bf16.gmra.mrb[0].mxu0 %v4563
        %v6859 = vpop.f32.mrb[0].mxu0
        %v6860 = vadd.f32 %v6571, %v6859
        %v6861 = vpop.f32.mrb[0].mxu0
        %v6862 = vpop.f32.mrb[0].mxu0
        %v6863 = vadd.f32 %v6574, %v6862
        %v6864 = vpop.f32.mrb[0].mxu0
        %6865 = vmatprep.mubr.bf16.mxu0 0
        %6866 = vmatmul.mubr.bf16.gmra.mrb[0].mxu0 %v4566
        %v6867 = vpop.f32.mrb[0].mxu0
        %v6868 = vadd.f32 %v6579, %v6867
        %v6869 = vpop.f32.mrb[0].mxu0
        %v6870 = vpop.f32.mrb[0].mxu0
        %v6871 = vadd.f32 %v6582, %v6870
        %v6872 = vpop.f32.mrb[0].mxu0
        %6873 = vmatprep.mubr.bf16.mxu0 0
        %6874 = vmatmul.mubr.bf16.gmra.mrb[0].mxu0 %v4569
        %v6875 = vpop.f32.mrb[0].mxu0
        %v6876 = vadd.f32 %v6587, %v6875
        %v6877 = vpop.f32.mrb[0].mxu0
        %v6878 = vpop.f32.mrb[0].mxu0
        %v6879 = vadd.f32 %v6590, %v6878
        %v6880 = vpop.f32.mrb[0].mxu0
        %6881 = vdwg.mxu0
        %v6882 = vrot.slane %v5086, 7
        %v6883 = vrot.slane %v5089, 7
        %v6884 = vrot.slane %v5094, 7
        %v6885 = vrot.slane %v5097, 7
        %v6886 = vrot.slane %v5102, 7
        %v6887 = vrot.slane %v5105, 7
        %v6888 = vrot.slane %v5110, 7
        %v6889 = vrot.slane %v5113, 7
        %v6890 = vrot.slane %v5118, 7
        %v6891 = vrot.slane %v5121, 7
        %v6892 = vrot.slane %v5126, 7
        %v6893 = vrot.slane %v5129, 7
        %v6894 = vrot.slane %v5134, 7
        %v6895 = vrot.slane %v5137, 7
        %v6896 = vrot.slane %v5142, 7
        %v6897 = vrot.slane %v5145, 7
        %v6898 = vrot.slane %v5150, 7
        %v6899 = vrot.slane %v5153, 7
        %v6900 = vrot.slane %v5158, 7
        %v6901 = vrot.slane %v5161, 7
        %v6902 = vrot.slane %v5166, 7
        %v6903 = vrot.slane %v5169, 7
        %v6904 = vrot.slane %v5174, 7
        %v6905 = vrot.slane %v5177, 7
        %v6906 = vrot.slane %v5182, 7
        %v6907 = vrot.slane %v5185, 7
        %v6908 = vrot.slane %v5190, 7
        %v6909 = vrot.slane %v5193, 7
        %v6910 = vrot.slane %v5198, 7
        %v6911 = vrot.slane %v5201, 7
        %v6912 = vrot.slane %v5206, 7
        %v6913 = vrot.slane %v5209, 7
        %v6914 = vrot.slane %v5214, 7
        %v6915 = vrot.slane %v5217, 7
        %v6916 = vrot.slane %v5222, 7
        %v6917 = vrot.slane %v5225, 7
        %v6918 = vrot.slane %v5230, 7
        %v6919 = vrot.slane %v5233, 7
        %v6920 = vrot.slane %v5238, 7
        %v6921 = vrot.slane %v5241, 7
        %v6922 = vrot.slane %v5246, 7
        %v6923 = vrot.slane %v5249, 7
        %v6924 = vrot.slane %v5254, 7
        %v6925 = vrot.slane %v5257, 7
        %v6926 = vrot.slane %v5262, 7
        %v6927 = vrot.slane %v5265, 7
        %v6928 = vrot.slane %v5270, 7
        %v6929 = vrot.slane %v5273, 7
        %v6930 = vrot.slane %v5278, 7
        %v6931 = vrot.slane %v5281, 7
        %v6932 = vrot.slane %v5286, 7
        %v6933 = vrot.slane %v5289, 7
        %v6934 = vrot.slane %v5294, 7
        %v6935 = vrot.slane %v5297, 7
        %v6936 = vrot.slane %v5302, 7
        %v6937 = vrot.slane %v5305, 7
        %v6938 = vrot.slane %v5310, 7
        %v6939 = vrot.slane %v5313, 7
        %v6940 = vrot.slane %v5318, 7
        %v6941 = vrot.slane %v5321, 7
        %v6942 = vrot.slane %v5326, 7
        %v6943 = vrot.slane %v5329, 7
        %v6944 = vrot.slane %v5334, 7
        %v6945 = vrot.slane %v5337, 7
        %v6946 = vsel %vm3667, %v6944, %v6945
        %v6947 = vsel %vm3667, %v6943, %v6944
        %v6948 = vsel %vm3667, %v6942, %v6943
        %v6949 = vsel %vm3667, %v6941, %v6942
        %v6950 = vsel %vm3667, %v6940, %v6941
        %v6951 = vsel %vm3667, %v6939, %v6940
        %v6952 = vsel %vm3667, %v6938, %v6939
        %v6953 = vsel %vm3667, %v6937, %v6938
        %v6954 = vsel %vm3667, %v6936, %v6937
        %v6955 = vsel %vm3667, %v6935, %v6936
        %v6956 = vsel %vm3667, %v6934, %v6935
        %v6957 = vsel %vm3667, %v6933, %v6934
        %v6958 = vsel %vm3667, %v6932, %v6933
        %v6959 = vsel %vm3667, %v6931, %v6932
        %v6960 = vsel %vm3667, %v6930, %v6931
        %v6961 = vsel %vm3667, %v6929, %v6930
        %v6962 = vsel %vm3667, %v6928, %v6929
        %v6963 = vsel %vm3667, %v6927, %v6928
        %v6964 = vsel %vm3667, %v6926, %v6927
        %v6965 = vsel %vm3667, %v6925, %v6926
        %v6966 = vsel %vm3667, %v6924, %v6925
        %v6967 = vsel %vm3667, %v6923, %v6924
        %v6968 = vsel %vm3667, %v6922, %v6923
        %v6969 = vsel %vm3667, %v6921, %v6922
        %v6970 = vsel %vm3667, %v6920, %v6921
        %v6971 = vsel %vm3667, %v6919, %v6920
        %v6972 = vsel %vm3667, %v6918, %v6919
        %v6973 = vsel %vm3667, %v6917, %v6918
        %v6974 = vsel %vm3667, %v6916, %v6917
        %v6975 = vsel %vm3667, %v6915, %v6916
        %v6976 = vsel %vm3667, %v6914, %v6915
        %v6977 = vsel %vm3667, %v6913, %v6914
        %v6978 = vsel %vm3667, %v6912, %v6913
        %v6979 = vsel %vm3667, %v6911, %v6912
        %v6980 = vsel %vm3667, %v6910, %v6911
        %v6981 = vsel %vm3667, %v6909, %v6910
        %v6982 = vsel %vm3667, %v6908, %v6909
        %v6983 = vsel %vm3667, %v6907, %v6908
        %v6984 = vsel %vm3667, %v6906, %v6907
        %v6985 = vsel %vm3667, %v6905, %v6906
        %v6986 = vsel %vm3667, %v6904, %v6905
        %v6987 = vsel %vm3667, %v6903, %v6904
        %v6988 = vsel %vm3667, %v6902, %v6903
        %v6989 = vsel %vm3667, %v6901, %v6902
        %v6990 = vsel %vm3667, %v6900, %v6901
        %v6991 = vsel %vm3667, %v6899, %v6900
        %v6992 = vsel %vm3667, %v6898, %v6899
        %v6993 = vsel %vm3667, %v6897, %v6898
        %v6994 = vsel %vm3667, %v6896, %v6897
        %v6995 = vsel %vm3667, %v6895, %v6896
        %v6996 = vsel %vm3667, %v6894, %v6895
        %v6997 = vsel %vm3667, %v6893, %v6894
        %v6998 = vsel %vm3667, %v6892, %v6893
        %v6999 = vsel %vm3667, %v6891, %v6892
        %v7000 = vsel %vm3667, %v6890, %v6891
        %v7001 = vsel %vm3667, %v6889, %v6890
        %v7002 = vsel %vm3667, %v6888, %v6889
        %v7003 = vsel %vm3667, %v6887, %v6888
        %v7004 = vsel %vm3667, %v6886, %v6887
        %v7005 = vsel %vm3667, %v6885, %v6886
        %v7006 = vsel %vm3667, %v6884, %v6885
        %v7007 = vsel %vm3667, %v6883, %v6884
        %v7008 = vsel %vm3667, %v6882, %v6883
        %v7009 = vsel %vm3667, %v6945, %v6882
        %v7010 = vadd.f32 %v7009, %v5857
        %v7011 = vadd.f32 %v7008, %v5860
        %v7012 = vadd.f32 %v7007, %v5865
        %v7013 = vadd.f32 %v7006, %v5868
        %v7014 = vadd.f32 %v7005, %v5873
        %v7015 = vadd.f32 %v7004, %v5876
        %v7016 = vadd.f32 %v7003, %v5881
        %v7017 = vadd.f32 %v7002, %v5884
        %v7018 = vadd.f32 %v7001, %v5889
        %v7019 = vadd.f32 %v7000, %v5892
        %v7020 = vadd.f32 %v6999, %v5897
        %v7021 = vadd.f32 %v6998, %v5900
        %v7022 = vadd.f32 %v6997, %v5905
        %v7023 = vadd.f32 %v6996, %v5908
        %v7024 = vadd.f32 %v6995, %v5913
        %v7025 = vadd.f32 %v6994, %v5916
        %v7026 = vadd.f32 %v6993, %v5921
        %v7027 = vadd.f32 %v6992, %v5924
        %v7028 = vadd.f32 %v6991, %v5929
        %v7029 = vadd.f32 %v6990, %v5932
        %v7030 = vadd.f32 %v6989, %v5937
        %v7031 = vadd.f32 %v6988, %v5940
        %v7032 = vadd.f32 %v6987, %v5945
        %v7033 = vadd.f32 %v6986, %v5948
        %v7034 = vadd.f32 %v6985, %v5953
        %v7035 = vadd.f32 %v6984, %v5956
        %v7036 = vadd.f32 %v6983, %v5961
        %v7037 = vadd.f32 %v6982, %v5964
        %v7038 = vadd.f32 %v6981, %v5969
        %v7039 = vadd.f32 %v6980, %v5972
        %v7040 = vadd.f32 %v6979, %v5977
        %v7041 = vadd.f32 %v6978, %v5980
        %v7042 = vadd.f32 %v6977, %v5985
        %v7043 = vadd.f32 %v6976, %v5988
        %v7044 = vadd.f32 %v6975, %v5993
        %v7045 = vadd.f32 %v6974, %v5996
        %v7046 = vadd.f32 %v6973, %v6001
        %v7047 = vadd.f32 %v6972, %v6004
        %v7048 = vadd.f32 %v6971, %v6009
        %v7049 = vadd.f32 %v6970, %v6012
        %v7050 = vadd.f32 %v6969, %v6017
        %v7051 = vadd.f32 %v6968, %v6020
        %v7052 = vadd.f32 %v6967, %v6025
        %v7053 = vadd.f32 %v6966, %v6028
        %v7054 = vadd.f32 %v6965, %v6033
        %v7055 = vadd.f32 %v6964, %v6036
        %v7056 = vadd.f32 %v6963, %v6041
        %v7057 = vadd.f32 %v6962, %v6044
        %v7058 = vadd.f32 %v6961, %v6049
        %v7059 = vadd.f32 %v6960, %v6052
        %v7060 = vadd.f32 %v6959, %v6057
        %v7061 = vadd.f32 %v6958, %v6060
        %v7062 = vadd.f32 %v6957, %v6065
        %v7063 = vadd.f32 %v6956, %v6068
        %v7064 = vadd.f32 %v6955, %v6073
        %v7065 = vadd.f32 %v6954, %v6076
        %v7066 = vadd.f32 %v6953, %v6081
        %v7067 = vadd.f32 %v6952, %v6084
        %v7068 = vadd.f32 %v6951, %v6089
        %v7069 = vadd.f32 %v6950, %v6092
        %v7070 = vadd.f32 %v6949, %v6097
        %v7071 = vadd.f32 %v6948, %v6100
        %v7072 = vadd.f32 %v6947, %v6105
        %v7073 = vadd.f32 %v6946, %v6108
        %v7074 = vrot.slane %v6628, 1
        %v7075 = vrot.slane %v6631, 1
        %v7076 = vrot.slane %v6636, 1
        %v7077 = vrot.slane %v6639, 1
        %v7078 = vrot.slane %v6644, 1
        %v7079 = vrot.slane %v6647, 1
        %v7080 = vrot.slane %v6652, 1
        %v7081 = vrot.slane %v6655, 1
        %v7082 = vrot.slane %v6660, 1
        %v7083 = vrot.slane %v6663, 1
        %v7084 = vrot.slane %v6668, 1
        %v7085 = vrot.slane %v6671, 1
        %v7086 = vrot.slane %v6676, 1
        %v7087 = vrot.slane %v6679, 1
        %v7088 = vrot.slane %v6684, 1
        %v7089 = vrot.slane %v6687, 1
        %v7090 = vrot.slane %v6692, 1
        %v7091 = vrot.slane %v6695, 1
        %v7092 = vrot.slane %v6700, 1
        %v7093 = vrot.slane %v6703, 1
        %v7094 = vrot.slane %v6708, 1
        %v7095 = vrot.slane %v6711, 1
        %v7096 = vrot.slane %v6716, 1
        %v7097 = vrot.slane %v6719, 1
        %v7098 = vrot.slane %v6724, 1
        %v7099 = vrot.slane %v6727, 1
        %v7100 = vrot.slane %v6732, 1
        %v7101 = vrot.slane %v6735, 1
        %v7102 = vrot.slane %v6740, 1
        %v7103 = vrot.slane %v6743, 1
        %v7104 = vrot.slane %v6748, 1
        %v7105 = vrot.slane %v6751, 1
        %v7106 = vrot.slane %v6756, 1
        %v7107 = vrot.slane %v6759, 1
        %v7108 = vrot.slane %v6764, 1
        %v7109 = vrot.slane %v6767, 1
        %v7110 = vrot.slane %v6772, 1
        %v7111 = vrot.slane %v6775, 1
        %v7112 = vrot.slane %v6780, 1
        %v7113 = vrot.slane %v6783, 1
        %v7114 = vrot.slane %v6788, 1
        %v7115 = vrot.slane %v6791, 1
        %v7116 = vrot.slane %v6796, 1
        %v7117 = vrot.slane %v6799, 1
        %v7118 = vrot.slane %v6804, 1
        %v7119 = vrot.slane %v6807, 1
        %v7120 = vrot.slane %v6812, 1
        %v7121 = vrot.slane %v6815, 1
        %v7122 = vrot.slane %v6820, 1
        %v7123 = vrot.slane %v6823, 1
        %v7124 = vrot.slane %v6828, 1
        %v7125 = vrot.slane %v6831, 1
        %v7126 = vrot.slane %v6836, 1
        %v7127 = vrot.slane %v6839, 1
        %v7128 = vrot.slane %v6844, 1
        %v7129 = vrot.slane %v6847, 1
        %v7130 = vrot.slane %v6852, 1
        %v7131 = vrot.slane %v6855, 1
        %v7132 = vrot.slane %v6860, 1
        %v7133 = vrot.slane %v6863, 1
        %v7134 = vrot.slane %v6868, 1
        %v7135 = vrot.slane %v6871, 1
        %v7136 = vrot.slane %v6876, 1
        %v7137 = vrot.slane %v6879, 1
        %v7138 = vsel %vm3860, %v7136, %v7137
        %v7139 = vsel %vm3860, %v7135, %v7136
        %v7140 = vsel %vm3860, %v7134, %v7135
        %v7141 = vsel %vm3860, %v7133, %v7134
        %v7142 = vsel %vm3860, %v7132, %v7133
        %v7143 = vsel %vm3860, %v7131, %v7132
        %v7144 = vsel %vm3860, %v7130, %v7131
        %v7145 = vsel %vm3860, %v7129, %v7130
        %v7146 = vsel %vm3860, %v7128, %v7129
        %v7147 = vsel %vm3860, %v7127, %v7128
        %v7148 = vsel %vm3860, %v7126, %v7127
        %v7149 = vsel %vm3860, %v7125, %v7126
        %v7150 = vsel %vm3860, %v7124, %v7125
        %v7151 = vsel %vm3860, %v7123, %v7124
        %v7152 = vsel %vm3860, %v7122, %v7123
        %v7153 = vsel %vm3860, %v7121, %v7122
        %v7154 = vsel %vm3860, %v7120, %v7121
        %v7155 = vsel %vm3860, %v7119, %v7120
        %v7156 = vsel %vm3860, %v7118, %v7119
        %v7157 = vsel %vm3860, %v7117, %v7118
        %v7158 = vsel %vm3860, %v7116, %v7117
        %v7159 = vsel %vm3860, %v7115, %v7116
        %v7160 = vsel %vm3860, %v7114, %v7115
        %v7161 = vsel %vm3860, %v7113, %v7114
        %v7162 = vsel %vm3860, %v7112, %v7113
        %v7163 = vsel %vm3860, %v7111, %v7112
        %v7164 = vsel %vm3860, %v7110, %v7111
        %v7165 = vsel %vm3860, %v7109, %v7110
        %v7166 = vsel %vm3860, %v7108, %v7109
        %v7167 = vsel %vm3860, %v7107, %v7108
        %v7168 = vsel %vm3860, %v7106, %v7107
        %v7169 = vsel %vm3860, %v7105, %v7106
        %v7170 = vsel %vm3860, %v7104, %v7105
        %v7171 = vsel %vm3860, %v7103, %v7104
        %v7172 = vsel %vm3860, %v7102, %v7103
        %v7173 = vsel %vm3860, %v7101, %v7102
        %v7174 = vsel %vm3860, %v7100, %v7101
        %v7175 = vsel %vm3860, %v7099, %v7100
        %v7176 = vsel %vm3860, %v7098, %v7099
        %v7177 = vsel %vm3860, %v7097, %v7098
        %v7178 = vsel %vm3860, %v7096, %v7097
        %v7179 = vsel %vm3860, %v7095, %v7096
        %v7180 = vsel %vm3860, %v7094, %v7095
        %v7181 = vsel %vm3860, %v7093, %v7094
        %v7182 = vsel %vm3860, %v7092, %v7093
        %v7183 = vsel %vm3860, %v7091, %v7092
        %v7184 = vsel %vm3860, %v7090, %v7091
        %v7185 = vsel %vm3860, %v7089, %v7090
        %v7186 = vsel %vm3860, %v7088, %v7089
        %v7187 = vsel %vm3860, %v7087, %v7088
        %v7188 = vsel %vm3860, %v7086, %v7087
        %v7189 = vsel %vm3860, %v7085, %v7086
        %v7190 = vsel %vm3860, %v7084, %v7085
        %v7191 = vsel %vm3860, %v7083, %v7084
        %v7192 = vsel %vm3860, %v7082, %v7083
        %v7193 = vsel %vm3860, %v7081, %v7082
        %v7194 = vsel %vm3860, %v7080, %v7081
        %v7195 = vsel %vm3860, %v7079, %v7080
        %v7196 = vsel %vm3860, %v7078, %v7079
        %v7197 = vsel %vm3860, %v7077, %v7078
        %v7198 = vsel %vm3860, %v7076, %v7077
        %v7199 = vsel %vm3860, %v7075, %v7076
        %v7200 = vsel %vm3860, %v7074, %v7075
        %v7201 = vsel %vm3860, %v7137, %v7074
        %v7202 = vadd.f32 %v7010, %v7200
        %v7203 = vadd.f32 %v7011, %v7199
        %v7204 = vadd.f32 %v7012, %v7198
        %v7205 = vadd.f32 %v7013, %v7197
        %v7206 = vadd.f32 %v7014, %v7196
        %v7207 = vadd.f32 %v7015, %v7195
        %v7208 = vadd.f32 %v7016, %v7194
        %v7209 = vadd.f32 %v7017, %v7193
        %v7210 = vadd.f32 %v7018, %v7192
        %v7211 = vadd.f32 %v7019, %v7191
        %v7212 = vadd.f32 %v7020, %v7190
        %v7213 = vadd.f32 %v7021, %v7189
        %v7214 = vadd.f32 %v7022, %v7188
        %v7215 = vadd.f32 %v7023, %v7187
        %v7216 = vadd.f32 %v7024, %v7186
        %v7217 = vadd.f32 %v7025, %v7185
        %v7218 = vadd.f32 %v7026, %v7184
        %v7219 = vadd.f32 %v7027, %v7183
        %v7220 = vadd.f32 %v7028, %v7182
        %v7221 = vadd.f32 %v7029, %v7181
        %v7222 = vadd.f32 %v7030, %v7180
        %v7223 = vadd.f32 %v7031, %v7179
        %v7224 = vadd.f32 %v7032, %v7178
        %v7225 = vadd.f32 %v7033, %v7177
        %v7226 = vadd.f32 %v7034, %v7176
        %v7227 = vadd.f32 %v7035, %v7175
        %v7228 = vadd.f32 %v7036, %v7174
        %v7229 = vadd.f32 %v7037, %v7173
        %v7230 = vadd.f32 %v7038, %v7172
        %v7231 = vadd.f32 %v7039, %v7171
        %v7232 = vadd.f32 %v7040, %v7170
        %v7233 = vadd.f32 %v7041, %v7169
        %v7234 = vadd.f32 %v7042, %v7168
        %v7235 = vadd.f32 %v7043, %v7167
        %v7236 = vadd.f32 %v7044, %v7166
        %v7237 = vadd.f32 %v7045, %v7165
        %v7238 = vadd.f32 %v7046, %v7164
        %v7239 = vadd.f32 %v7047, %v7163
        %v7240 = vadd.f32 %v7048, %v7162
        %v7241 = vadd.f32 %v7049, %v7161
        %v7242 = vadd.f32 %v7050, %v7160
        %v7243 = vadd.f32 %v7051, %v7159
        %v7244 = vadd.f32 %v7052, %v7158
        %v7245 = vadd.f32 %v7053, %v7157
        %v7246 = vadd.f32 %v7054, %v7156
        %v7247 = vadd.f32 %v7055, %v7155
        %v7248 = vadd.f32 %v7056, %v7154
        %v7249 = vadd.f32 %v7057, %v7153
        %v7250 = vadd.f32 %v7058, %v7152
        %v7251 = vadd.f32 %v7059, %v7151
        %v7252 = vadd.f32 %v7060, %v7150
        %v7253 = vadd.f32 %v7061, %v7149
        %v7254 = vadd.f32 %v7062, %v7148
        %v7255 = vadd.f32 %v7063, %v7147
        %v7256 = vadd.f32 %v7064, %v7146
        %v7257 = vadd.f32 %v7065, %v7145
        %v7258 = vadd.f32 %v7066, %v7144
        %v7259 = vadd.f32 %v7067, %v7143
        %v7260 = vadd.f32 %v7068, %v7142
        %v7261 = vadd.f32 %v7069, %v7141
        %v7262 = vadd.f32 %v7070, %v7140
        %v7263 = vadd.f32 %v7071, %v7139
        %v7264 = vadd.f32 %v7072, %v7138
        %v7265 = vadd.f32 %v7073, %v7201
        %v7266 = vld [vmem:[%s5] sm:$0x1]
        %v7268 = vlaneseq
        %v7269 = vshrl.u32 %v7268, 7
        %v7270 = vsub.s32 0, %v7269
        %v7271 = vrot.slane %v7266, %v7270
        %v7273 = vmul.f32 %v7202, %v7271
        %v7274 = vmul.f32 %v7203, %v7271
        %v7275 = vmul.f32 %v7204, %v7271
        %v7276 = vmul.f32 %v7205, %v7271
        %v7277 = vmul.f32 %v7206, %v7271
        %v7278 = vmul.f32 %v7207, %v7271
        %v7279 = vmul.f32 %v7208, %v7271
        %v7280 = vmul.f32 %v7209, %v7271
        %v7281 = vmul.f32 %v7210, %v7271
        %v7282 = vmul.f32 %v7211, %v7271
        %v7283 = vmul.f32 %v7212, %v7271
        %v7284 = vmul.f32 %v7213, %v7271
        %v7285 = vmul.f32 %v7214, %v7271
        %v7286 = vmul.f32 %v7215, %v7271
        %v7287 = vmul.f32 %v7216, %v7271
        %v7288 = vmul.f32 %v7217, %v7271
        %v7289 = vmul.f32 %v7218, %v7271
        %v7290 = vmul.f32 %v7219, %v7271
        %v7291 = vmul.f32 %v7220, %v7271
        %v7292 = vmul.f32 %v7221, %v7271
        %v7293 = vmul.f32 %v7222, %v7271
        %v7294 = vmul.f32 %v7223, %v7271
        %v7295 = vmul.f32 %v7224, %v7271
        %v7296 = vmul.f32 %v7225, %v7271
        %v7297 = vmul.f32 %v7226, %v7271
        %v7298 = vmul.f32 %v7227, %v7271
        %v7299 = vmul.f32 %v7228, %v7271
        %v7300 = vmul.f32 %v7229, %v7271
        %v7301 = vmul.f32 %v7230, %v7271
        %v7302 = vmul.f32 %v7231, %v7271
        %v7303 = vmul.f32 %v7232, %v7271
        %v7304 = vmul.f32 %v7233, %v7271
        %v7305 = vmul.f32 %v7234, %v7271
        %v7306 = vmul.f32 %v7235, %v7271
        %v7307 = vmul.f32 %v7236, %v7271
        %v7308 = vmul.f32 %v7237, %v7271
        %v7309 = vmul.f32 %v7238, %v7271
        %v7310 = vmul.f32 %v7239, %v7271
        %v7311 = vmul.f32 %v7240, %v7271
        %v7312 = vmul.f32 %v7241, %v7271
        %v7313 = vmul.f32 %v7242, %v7271
        %v7314 = vmul.f32 %v7243, %v7271
        %v7315 = vmul.f32 %v7244, %v7271
        %v7316 = vmul.f32 %v7245, %v7271
        %v7317 = vmul.f32 %v7246, %v7271
        %v7318 = vmul.f32 %v7247, %v7271
        %v7319 = vmul.f32 %v7248, %v7271
        %v7320 = vmul.f32 %v7249, %v7271
        %v7321 = vmul.f32 %v7250, %v7271
        %v7322 = vmul.f32 %v7251, %v7271
        %v7323 = vmul.f32 %v7252, %v7271
        %v7324 = vmul.f32 %v7253, %v7271
        %v7325 = vmul.f32 %v7254, %v7271
        %v7326 = vmul.f32 %v7255, %v7271
        %v7327 = vmul.f32 %v7256, %v7271
        %v7328 = vmul.f32 %v7257, %v7271
        %v7329 = vmul.f32 %v7258, %v7271
        %v7330 = vmul.f32 %v7259, %v7271
        %v7331 = vmul.f32 %v7260, %v7271
        %v7332 = vmul.f32 %v7261, %v7271
        %v7333 = vmul.f32 %v7262, %v7271
        %v7334 = vmul.f32 %v7263, %v7271
        %v7335 = vmul.f32 %v7264, %v7271
        %v7336 = vmul.f32 %v7265, %v7271
        %v7337 = vld [vmem:[%s6] sm:$0x1]
        %v7339 = vlaneseq
        %v7340 = vshrl.u32 %v7339, 7
        %v7341 = vsub.s32 0, %v7340
        %v7342 = vrot.slane %v7337, %v7341
        %v7344 = vadd.f32 %v7273, %v7342
        %v7345 = vadd.f32 %v7274, %v7342
        %v7346 = vadd.f32 %v7275, %v7342
        %v7347 = vadd.f32 %v7276, %v7342
        %v7348 = vadd.f32 %v7277, %v7342
        %v7349 = vadd.f32 %v7278, %v7342
        %v7350 = vadd.f32 %v7279, %v7342
        %v7351 = vadd.f32 %v7280, %v7342
        %v7352 = vadd.f32 %v7281, %v7342
        %v7353 = vadd.f32 %v7282, %v7342
        %v7354 = vadd.f32 %v7283, %v7342
        %v7355 = vadd.f32 %v7284, %v7342
        %v7356 = vadd.f32 %v7285, %v7342
        %v7357 = vadd.f32 %v7286, %v7342
        %v7358 = vadd.f32 %v7287, %v7342
        %v7359 = vadd.f32 %v7288, %v7342
        %v7360 = vadd.f32 %v7289, %v7342
        %v7361 = vadd.f32 %v7290, %v7342
        %v7362 = vadd.f32 %v7291, %v7342
        %v7363 = vadd.f32 %v7292, %v7342
        %v7364 = vadd.f32 %v7293, %v7342
        %v7365 = vadd.f32 %v7294, %v7342
        %v7366 = vadd.f32 %v7295, %v7342
        %v7367 = vadd.f32 %v7296, %v7342
        %v7368 = vadd.f32 %v7297, %v7342
        %v7369 = vadd.f32 %v7298, %v7342
        %v7370 = vadd.f32 %v7299, %v7342
        %v7371 = vadd.f32 %v7300, %v7342
        %v7372 = vadd.f32 %v7301, %v7342
        %v7373 = vadd.f32 %v7302, %v7342
        %v7374 = vadd.f32 %v7303, %v7342
        %v7375 = vadd.f32 %v7304, %v7342
        %v7376 = vadd.f32 %v7305, %v7342
        %v7377 = vadd.f32 %v7306, %v7342
        %v7378 = vadd.f32 %v7307, %v7342
        %v7379 = vadd.f32 %v7308, %v7342
        %v7380 = vadd.f32 %v7309, %v7342
        %v7381 = vadd.f32 %v7310, %v7342
        %v7382 = vadd.f32 %v7311, %v7342
        %v7383 = vadd.f32 %v7312, %v7342
        %v7384 = vadd.f32 %v7313, %v7342
        %v7385 = vadd.f32 %v7314, %v7342
        %v7386 = vadd.f32 %v7315, %v7342
        %v7387 = vadd.f32 %v7316, %v7342
        %v7388 = vadd.f32 %v7317, %v7342
        %v7389 = vadd.f32 %v7318, %v7342
        %v7390 = vadd.f32 %v7319, %v7342
        %v7391 = vadd.f32 %v7320, %v7342
        %v7392 = vadd.f32 %v7321, %v7342
        %v7393 = vadd.f32 %v7322, %v7342
        %v7394 = vadd.f32 %v7323, %v7342
        %v7395 = vadd.f32 %v7324, %v7342
        %v7396 = vadd.f32 %v7325, %v7342
        %v7397 = vadd.f32 %v7326, %v7342
        %v7398 = vadd.f32 %v7327, %v7342
        %v7399 = vadd.f32 %v7328, %v7342
        %v7400 = vadd.f32 %v7329, %v7342
        %v7401 = vadd.f32 %v7330, %v7342
        %v7402 = vadd.f32 %v7331, %v7342
        %v7403 = vadd.f32 %v7332, %v7342
        %v7404 = vadd.f32 %v7333, %v7342
        %v7405 = vadd.f32 %v7334, %v7342
        %v7406 = vadd.f32 %v7335, %v7342
        %v7407 = vadd.f32 %v7336, %v7342
        %v7408 = vld [vmem:[%s615] sm:$0xf]
        %v7409 = vld [vmem:[%s615 + $0x4] sm:$0xf]
        %v7410 = vld [vmem:[%s615 + $0x8] sm:$0xf]
        %v7411 = vld [vmem:[%s615 + $0xc] sm:$0xf]
        %v7412 = vld [vmem:[%s615 + $0x10] sm:$0xf]
        %v7413 = vld [vmem:[%s615 + $0x14] sm:$0xf]
        %v7414 = vld [vmem:[%s615 + $0x18] sm:$0xf]
        %v7415 = vld [vmem:[%s615 + $0x1c] sm:$0xf]
        %v7416 = vld [vmem:[%s615 + $0x20] sm:$0xf]
        %v7417 = vld [vmem:[%s615 + $0x24] sm:$0xf]
        %v7418 = vld [vmem:[%s615 + $0x28] sm:$0xf]
        %v7419 = vld [vmem:[%s615 + $0x2c] sm:$0xf]
        %v7420 = vld [vmem:[%s615 + $0x30] sm:$0xf]
        %v7421 = vld [vmem:[%s615 + $0x34] sm:$0xf]
        %v7422 = vld [vmem:[%s615 + $0x38] sm:$0xf]
        %v7423 = vld [vmem:[%s615 + $0x3c] sm:$0xf]
        %v7424 = vld [vmem:[%s615 + $0x40] sm:$0xf]
        %v7425 = vld [vmem:[%s615 + $0x44] sm:$0xf]
        %v7426 = vld [vmem:[%s615 + $0x48] sm:$0xf]
        %v7427 = vld [vmem:[%s615 + $0x4c] sm:$0xf]
        %v7428 = vld [vmem:[%s615 + $0x50] sm:$0xf]
        %v7429 = vld [vmem:[%s615 + $0x54] sm:$0xf]
        %v7430 = vld [vmem:[%s615 + $0x58] sm:$0xf]
        %v7431 = vld [vmem:[%s615 + $0x5c] sm:$0xf]
        %v7432 = vld [vmem:[%s615 + $0x60] sm:$0xf]
        %v7433 = vld [vmem:[%s615 + $0x64] sm:$0xf]
        %v7434 = vld [vmem:[%s615 + $0x68] sm:$0xf]
        %v7435 = vld [vmem:[%s615 + $0x6c] sm:$0xf]
        %v7436 = vld [vmem:[%s615 + $0x70] sm:$0xf]
        %v7437 = vld [vmem:[%s615 + $0x74] sm:$0xf]
        %v7438 = vld [vmem:[%s615 + $0x78] sm:$0xf]
        %v7439 = vld [vmem:[%s615 + $0x7c] sm:$0xf]
        %v7440 = vld [vmem:[%s615 + $0x80] sm:$0xf]
        %v7441 = vld [vmem:[%s615 + $0x84] sm:$0xf]
        %v7442 = vld [vmem:[%s615 + $0x88] sm:$0xf]
        %v7443 = vld [vmem:[%s615 + $0x8c] sm:$0xf]
        %v7444 = vld [vmem:[%s615 + $0x90] sm:$0xf]
        %v7445 = vld [vmem:[%s615 + $0x94] sm:$0xf]
        %v7446 = vld [vmem:[%s615 + $0x98] sm:$0xf]
        %v7447 = vld [vmem:[%s615 + $0x9c] sm:$0xf]
        %v7448 = vld [vmem:[%s615 + $0xa0] sm:$0xf]
        %v7449 = vld [vmem:[%s615 + $0xa4] sm:$0xf]
        %v7450 = vld [vmem:[%s615 + $0xa8] sm:$0xf]
        %v7451 = vld [vmem:[%s615 + $0xac] sm:$0xf]
        %v7452 = vld [vmem:[%s615 + $0xb0] sm:$0xf]
        %v7453 = vld [vmem:[%s615 + $0xb4] sm:$0xf]
        %v7454 = vld [vmem:[%s615 + $0xb8] sm:$0xf]
        %v7455 = vld [vmem:[%s615 + $0xbc] sm:$0xf]
        %v7456 = vld [vmem:[%s615 + $0xc0] sm:$0xf]
        %v7457 = vld [vmem:[%s615 + $0xc4] sm:$0xf]
        %v7458 = vld [vmem:[%s615 + $0xc8] sm:$0xf]
        %v7459 = vld [vmem:[%s615 + $0xcc] sm:$0xf]
        %v7460 = vld [vmem:[%s615 + $0xd0] sm:$0xf]
        %v7461 = vld [vmem:[%s615 + $0xd4] sm:$0xf]
        %v7462 = vld [vmem:[%s615 + $0xd8] sm:$0xf]
        %v7463 = vld [vmem:[%s615 + $0xdc] sm:$0xf]
        %v7464 = vld [vmem:[%s615 + $0xe0] sm:$0xf]
        %v7465 = vld [vmem:[%s615 + $0xe4] sm:$0xf]
        %v7466 = vld [vmem:[%s615 + $0xe8] sm:$0xf]
        %v7467 = vld [vmem:[%s615 + $0xec] sm:$0xf]
        %v7468 = vld [vmem:[%s615 + $0xf0] sm:$0xf]
        %v7469 = vld [vmem:[%s615 + $0xf4] sm:$0xf]
        %v7470 = vld [vmem:[%s615 + $0xf8] sm:$0xf]
        %v7471 = vld [vmem:[%s615 + $0xfc] sm:$0xf]
        %v7472 = vunpack.c.l.bf16 %v7408
        %v7473 = vunpack.c.l.bf16 %v7409
        %v7474 = vunpack.c.l.bf16 %v7410
        %v7475 = vunpack.c.l.bf16 %v7411
        %v7476 = vunpack.c.l.bf16 %v7412
        %v7477 = vunpack.c.l.bf16 %v7413
        %v7478 = vunpack.c.l.bf16 %v7414
        %v7479 = vunpack.c.l.bf16 %v7415
        %v7480 = vunpack.c.l.bf16 %v7416
        %v7481 = vunpack.c.l.bf16 %v7417
        %v7482 = vunpack.c.l.bf16 %v7418
        %v7483 = vunpack.c.l.bf16 %v7419
        %v7484 = vunpack.c.l.bf16 %v7420
        %v7485 = vunpack.c.l.bf16 %v7421
        %v7486 = vunpack.c.l.bf16 %v7422
        %v7487 = vunpack.c.l.bf16 %v7423
        %v7488 = vunpack.c.l.bf16 %v7424
        %v7489 = vunpack.c.l.bf16 %v7425
        %v7490 = vunpack.c.l.bf16 %v7426
        %v7491 = vunpack.c.l.bf16 %v7427
        %v7492 = vunpack.c.l.bf16 %v7428
        %v7493 = vunpack.c.l.bf16 %v7429
        %v7494 = vunpack.c.l.bf16 %v7430
        %v7495 = vunpack.c.l.bf16 %v7431
        %v7496 = vunpack.c.l.bf16 %v7432
        %v7497 = vunpack.c.l.bf16 %v7433
        %v7498 = vunpack.c.l.bf16 %v7434
        %v7499 = vunpack.c.l.bf16 %v7435
        %v7500 = vunpack.c.l.bf16 %v7436
        %v7501 = vunpack.c.l.bf16 %v7437
        %v7502 = vunpack.c.l.bf16 %v7438
        %v7503 = vunpack.c.l.bf16 %v7439
        %v7504 = vunpack.c.l.bf16 %v7440
        %v7505 = vunpack.c.l.bf16 %v7441
        %v7506 = vunpack.c.l.bf16 %v7442
        %v7507 = vunpack.c.l.bf16 %v7443
        %v7508 = vunpack.c.l.bf16 %v7444
        %v7509 = vunpack.c.l.bf16 %v7445
        %v7510 = vunpack.c.l.bf16 %v7446
        %v7511 = vunpack.c.l.bf16 %v7447
        %v7512 = vunpack.c.l.bf16 %v7448
        %v7513 = vunpack.c.l.bf16 %v7449
        %v7514 = vunpack.c.l.bf16 %v7450
        %v7515 = vunpack.c.l.bf16 %v7451
        %v7516 = vunpack.c.l.bf16 %v7452
        %v7517 = vunpack.c.l.bf16 %v7453
        %v7518 = vunpack.c.l.bf16 %v7454
        %v7519 = vunpack.c.l.bf16 %v7455
        %v7520 = vunpack.c.l.bf16 %v7456
        %v7521 = vunpack.c.l.bf16 %v7457
        %v7522 = vunpack.c.l.bf16 %v7458
        %v7523 = vunpack.c.l.bf16 %v7459
        %v7524 = vunpack.c.l.bf16 %v7460
        %v7525 = vunpack.c.l.bf16 %v7461
        %v7526 = vunpack.c.l.bf16 %v7462
        %v7527 = vunpack.c.l.bf16 %v7463
        %v7528 = vunpack.c.l.bf16 %v7464
        %v7529 = vunpack.c.l.bf16 %v7465
        %v7530 = vunpack.c.l.bf16 %v7466
        %v7531 = vunpack.c.l.bf16 %v7467
        %v7532 = vunpack.c.l.bf16 %v7468
        %v7533 = vunpack.c.l.bf16 %v7469
        %v7534 = vunpack.c.l.bf16 %v7470
        %v7535 = vunpack.c.l.bf16 %v7471
        %v7536 = vadd.f32 %v7344, %v7472
        %v7537 = vadd.f32 %v7345, %v7473
        %v7538 = vadd.f32 %v7346, %v7474
        %v7539 = vadd.f32 %v7347, %v7475
        %v7540 = vadd.f32 %v7348, %v7476
        %v7541 = vadd.f32 %v7349, %v7477
        %v7542 = vadd.f32 %v7350, %v7478
        %v7543 = vadd.f32 %v7351, %v7479
        %v7544 = vadd.f32 %v7352, %v7480
        %v7545 = vadd.f32 %v7353, %v7481
        %v7546 = vadd.f32 %v7354, %v7482
        %v7547 = vadd.f32 %v7355, %v7483
        %v7548 = vadd.f32 %v7356, %v7484
        %v7549 = vadd.f32 %v7357, %v7485
        %v7550 = vadd.f32 %v7358, %v7486
        %v7551 = vadd.f32 %v7359, %v7487
        %v7552 = vadd.f32 %v7360, %v7488
        %v7553 = vadd.f32 %v7361, %v7489
        %v7554 = vadd.f32 %v7362, %v7490
        %v7555 = vadd.f32 %v7363, %v7491
        %v7556 = vadd.f32 %v7364, %v7492
        %v7557 = vadd.f32 %v7365, %v7493
        %v7558 = vadd.f32 %v7366, %v7494
        %v7559 = vadd.f32 %v7367, %v7495
        %v7560 = vadd.f32 %v7368, %v7496
        %v7561 = vadd.f32 %v7369, %v7497
        %v7562 = vadd.f32 %v7370, %v7498
        %v7563 = vadd.f32 %v7371, %v7499
        %v7564 = vadd.f32 %v7372, %v7500
        %v7565 = vadd.f32 %v7373, %v7501
        %v7566 = vadd.f32 %v7374, %v7502
        %v7567 = vadd.f32 %v7375, %v7503
        %v7568 = vadd.f32 %v7376, %v7504
        %v7569 = vadd.f32 %v7377, %v7505
        %v7570 = vadd.f32 %v7378, %v7506
        %v7571 = vadd.f32 %v7379, %v7507
        %v7572 = vadd.f32 %v7380, %v7508
        %v7573 = vadd.f32 %v7381, %v7509
        %v7574 = vadd.f32 %v7382, %v7510
        %v7575 = vadd.f32 %v7383, %v7511
        %v7576 = vadd.f32 %v7384, %v7512
        %v7577 = vadd.f32 %v7385, %v7513
        %v7578 = vadd.f32 %v7386, %v7514
        %v7579 = vadd.f32 %v7387, %v7515
        %v7580 = vadd.f32 %v7388, %v7516
        %v7581 = vadd.f32 %v7389, %v7517
        %v7582 = vadd.f32 %v7390, %v7518
        %v7583 = vadd.f32 %v7391, %v7519
        %v7584 = vadd.f32 %v7392, %v7520
        %v7585 = vadd.f32 %v7393, %v7521
        %v7586 = vadd.f32 %v7394, %v7522
        %v7587 = vadd.f32 %v7395, %v7523
        %v7588 = vadd.f32 %v7396, %v7524
        %v7589 = vadd.f32 %v7397, %v7525
        %v7590 = vadd.f32 %v7398, %v7526
        %v7591 = vadd.f32 %v7399, %v7527
        %v7592 = vadd.f32 %v7400, %v7528
        %v7593 = vadd.f32 %v7401, %v7529
        %v7594 = vadd.f32 %v7402, %v7530
        %v7595 = vadd.f32 %v7403, %v7531
        %v7596 = vadd.f32 %v7404, %v7532
        %v7597 = vadd.f32 %v7405, %v7533
        %v7598 = vadd.f32 %v7406, %v7534
        %v7599 = vadd.f32 %v7407, %v7535
        %v7600 = vmax.f32 %v7536, 0.0
        %v7601 = vmax.f32 %v7537, 0.0
        %v7602 = vmax.f32 %v7538, 0.0
        %v7603 = vmax.f32 %v7539, 0.0
        %v7604 = vmax.f32 %v7540, 0.0
        %v7605 = vmax.f32 %v7541, 0.0
        %v7606 = vmax.f32 %v7542, 0.0
        %v7607 = vmax.f32 %v7543, 0.0
        %v7608 = vmax.f32 %v7544, 0.0
        %v7609 = vmax.f32 %v7545, 0.0
        %v7610 = vmax.f32 %v7546, 0.0
        %v7611 = vmax.f32 %v7547, 0.0
        %v7612 = vmax.f32 %v7548, 0.0
        %v7613 = vmax.f32 %v7549, 0.0
        %v7614 = vmax.f32 %v7550, 0.0
        %v7615 = vmax.f32 %v7551, 0.0
        %v7616 = vmax.f32 %v7552, 0.0
        %v7617 = vmax.f32 %v7553, 0.0
        %v7618 = vmax.f32 %v7554, 0.0
        %v7619 = vmax.f32 %v7555, 0.0
        %v7620 = vmax.f32 %v7556, 0.0
        %v7621 = vmax.f32 %v7557, 0.0
        %v7622 = vmax.f32 %v7558, 0.0
        %v7623 = vmax.f32 %v7559, 0.0
        %v7624 = vmax.f32 %v7560, 0.0
        %v7625 = vmax.f32 %v7561, 0.0
        %v7626 = vmax.f32 %v7562, 0.0
        %v7627 = vmax.f32 %v7563, 0.0
        %v7628 = vmax.f32 %v7564, 0.0
        %v7629 = vmax.f32 %v7565, 0.0
        %v7630 = vmax.f32 %v7566, 0.0
        %v7631 = vmax.f32 %v7567, 0.0
        %v7632 = vmax.f32 %v7568, 0.0
        %v7633 = vmax.f32 %v7569, 0.0
        %v7634 = vmax.f32 %v7570, 0.0
        %v7635 = vmax.f32 %v7571, 0.0
        %v7636 = vmax.f32 %v7572, 0.0
        %v7637 = vmax.f32 %v7573, 0.0
        %v7638 = vmax.f32 %v7574, 0.0
        %v7639 = vmax.f32 %v7575, 0.0
        %v7640 = vmax.f32 %v7576, 0.0
        %v7641 = vmax.f32 %v7577, 0.0
        %v7642 = vmax.f32 %v7578, 0.0
        %v7643 = vmax.f32 %v7579, 0.0
        %v7644 = vmax.f32 %v7580, 0.0
        %v7645 = vmax.f32 %v7581, 0.0
        %v7646 = vmax.f32 %v7582, 0.0
        %v7647 = vmax.f32 %v7583, 0.0
        %v7648 = vmax.f32 %v7584, 0.0
        %v7649 = vmax.f32 %v7585, 0.0
        %v7650 = vmax.f32 %v7586, 0.0
        %v7651 = vmax.f32 %v7587, 0.0
        %v7652 = vmax.f32 %v7588, 0.0
        %v7653 = vmax.f32 %v7589, 0.0
        %v7654 = vmax.f32 %v7590, 0.0
        %v7655 = vmax.f32 %v7591, 0.0
        %v7656 = vmax.f32 %v7592, 0.0
        %v7657 = vmax.f32 %v7593, 0.0
        %v7658 = vmax.f32 %v7594, 0.0
        %v7659 = vmax.f32 %v7595, 0.0
        %v7660 = vmax.f32 %v7596, 0.0
        %v7661 = vmax.f32 %v7597, 0.0
        %v7662 = vmax.f32 %v7598, 0.0
        %v7663 = vmax.f32 %v7599, 0.0
        %v7664 = vpack.c.bf16 %v7601, %v7600
        %v7665 = vpack.c.bf16 %v7603, %v7602
        %v7666 = vpack.c.bf16 %v7605, %v7604
        %v7667 = vpack.c.bf16 %v7607, %v7606
        %v7668 = vpack.c.bf16 %v7609, %v7608
        %v7669 = vpack.c.bf16 %v7611, %v7610
        %v7670 = vpack.c.bf16 %v7613, %v7612
        %v7671 = vpack.c.bf16 %v7615, %v7614
        %v7672 = vpack.c.bf16 %v7617, %v7616
        %v7673 = vpack.c.bf16 %v7619, %v7618
        %v7674 = vpack.c.bf16 %v7621, %v7620
        %v7675 = vpack.c.bf16 %v7623, %v7622
        %v7676 = vpack.c.bf16 %v7625, %v7624
        %v7677 = vpack.c.bf16 %v7627, %v7626
        %v7678 = vpack.c.bf16 %v7629, %v7628
        %v7679 = vpack.c.bf16 %v7631, %v7630
        %v7680 = vpack.c.bf16 %v7633, %v7632
        %v7681 = vpack.c.bf16 %v7635, %v7634
        %v7682 = vpack.c.bf16 %v7637, %v7636
        %v7683 = vpack.c.bf16 %v7639, %v7638
        %v7684 = vpack.c.bf16 %v7641, %v7640
        %v7685 = vpack.c.bf16 %v7643, %v7642
        %v7686 = vpack.c.bf16 %v7645, %v7644
        %v7687 = vpack.c.bf16 %v7647, %v7646
        %v7688 = vpack.c.bf16 %v7649, %v7648
        %v7689 = vpack.c.bf16 %v7651, %v7650
        %v7690 = vpack.c.bf16 %v7653, %v7652
        %v7691 = vpack.c.bf16 %v7655, %v7654
        %v7692 = vpack.c.bf16 %v7657, %v7656
        %v7693 = vpack.c.bf16 %v7659, %v7658
        %v7694 = vpack.c.bf16 %v7661, %v7660
        %v7695 = vpack.c.bf16 %v7663, %v7662
        %v7728 = vunpack.c.l.b16 %v7664
        %v7729 = vunpack.c.h.b16 %v7664
        %v7730 = vunpack.c.l.b16 %v7665
        %v7731 = vunpack.c.h.b16 %v7665
        %v7732 = vunpack.c.l.b16 %v7666
        %v7733 = vunpack.c.h.b16 %v7666
        %v7734 = vunpack.c.l.b16 %v7667
        %v7735 = vunpack.c.h.b16 %v7667
        %v7736 = vunpack.c.l.b16 %v7668
        %v7737 = vunpack.c.h.b16 %v7668
        %v7738 = vunpack.c.l.b16 %v7669
        %v7739 = vunpack.c.h.b16 %v7669
        %v7740 = vunpack.c.l.b16 %v7670
        %v7741 = vunpack.c.h.b16 %v7670
        %v7742 = vunpack.c.l.b16 %v7671
        %v7743 = vunpack.c.h.b16 %v7671
        %v7744 = vunpack.c.l.b16 %v7672
        %v7745 = vunpack.c.h.b16 %v7672
        %v7746 = vunpack.c.l.b16 %v7673
        %v7747 = vunpack.c.h.b16 %v7673
        %v7748 = vunpack.c.l.b16 %v7674
        %v7749 = vunpack.c.h.b16 %v7674
        %v7750 = vunpack.c.l.b16 %v7675
        %v7751 = vunpack.c.h.b16 %v7675
        %v7752 = vunpack.c.l.b16 %v7676
        %v7753 = vunpack.c.h.b16 %v7676
        %v7754 = vunpack.c.l.b16 %v7677
        %v7755 = vunpack.c.h.b16 %v7677
        %v7756 = vunpack.c.l.b16 %v7678
        %v7757 = vunpack.c.h.b16 %v7678
        %v7758 = vunpack.c.l.b16 %v7679
        %v7759 = vunpack.c.h.b16 %v7679
        %v7760 = vunpack.c.l.b16 %v7680
        %v7761 = vunpack.c.h.b16 %v7680
        %v7762 = vunpack.c.l.b16 %v7681
        %v7763 = vunpack.c.h.b16 %v7681
        %v7764 = vunpack.c.l.b16 %v7682
        %v7765 = vunpack.c.h.b16 %v7682
        %v7766 = vunpack.c.l.b16 %v7683
        %v7767 = vunpack.c.h.b16 %v7683
        %v7768 = vunpack.c.l.b16 %v7684
        %v7769 = vunpack.c.h.b16 %v7684
        %v7770 = vunpack.c.l.b16 %v7685
        %v7771 = vunpack.c.h.b16 %v7685
        %v7772 = vunpack.c.l.b16 %v7686
        %v7773 = vunpack.c.h.b16 %v7686
        %v7774 = vunpack.c.l.b16 %v7687
        %v7775 = vunpack.c.h.b16 %v7687
        %v7776 = vunpack.c.l.b16 %v7688
        %v7777 = vunpack.c.h.b16 %v7688
        %v7778 = vunpack.c.l.b16 %v7689
        %v7779 = vunpack.c.h.b16 %v7689
        %v7780 = vunpack.c.l.b16 %v7690
        %v7781 = vunpack.c.h.b16 %v7690
        %v7782 = vunpack.c.l.b16 %v7691
        %v7783 = vunpack.c.h.b16 %v7691
        %v7784 = vunpack.c.l.b16 %v7692
        %v7785 = vunpack.c.h.b16 %v7692
        %v7786 = vunpack.c.l.b16 %v7693
        %v7787 = vunpack.c.h.b16 %v7693
        %v7788 = vunpack.c.l.b16 %v7694
        %v7789 = vunpack.c.h.b16 %v7694
        %v7790 = vunpack.c.l.b16 %v7695
        %v7791 = vunpack.c.h.b16 %v7695
        %v7792 = vpack.c.b16 %v7728, %v7728
        %v7793 = vpack.c.b16 %v7729, %v7729
        %v7794 = vpack.c.b16 %v7730, %v7730
        %v7795 = vpack.c.b16 %v7731, %v7731
        %v7796 = vpack.c.b16 %v7732, %v7732
        %v7797 = vpack.c.b16 %v7733, %v7733
        %v7798 = vpack.c.b16 %v7734, %v7734
        %v7799 = vpack.c.b16 %v7735, %v7735
        %v7800 = vpack.c.b16 %v7736, %v7736
        %v7801 = vpack.c.b16 %v7737, %v7737
        %v7802 = vpack.c.b16 %v7738, %v7738
        %v7803 = vpack.c.b16 %v7739, %v7739
        %v7804 = vpack.c.b16 %v7740, %v7740
        %v7805 = vpack.c.b16 %v7741, %v7741
        %v7806 = vpack.c.b16 %v7742, %v7742
        %v7807 = vpack.c.b16 %v7743, %v7743
        %v7808 = vpack.c.b16 %v7744, %v7744
        %v7809 = vpack.c.b16 %v7745, %v7745
        %v7810 = vpack.c.b16 %v7746, %v7746
        %v7811 = vpack.c.b16 %v7747, %v7747
        %v7812 = vpack.c.b16 %v7748, %v7748
        %v7813 = vpack.c.b16 %v7749, %v7749
        %v7814 = vpack.c.b16 %v7750, %v7750
        %v7815 = vpack.c.b16 %v7751, %v7751
        %v7816 = vpack.c.b16 %v7752, %v7752
        %v7817 = vpack.c.b16 %v7753, %v7753
        %v7818 = vpack.c.b16 %v7754, %v7754
        %v7819 = vpack.c.b16 %v7755, %v7755
        %v7820 = vpack.c.b16 %v7756, %v7756
        %v7821 = vpack.c.b16 %v7757, %v7757
        %v7822 = vpack.c.b16 %v7758, %v7758
        %v7823 = vpack.c.b16 %v7759, %v7759
        %v7824 = vpack.c.b16 %v7760, %v7760
        %v7825 = vpack.c.b16 %v7761, %v7761
        %v7826 = vpack.c.b16 %v7762, %v7762
        %v7827 = vpack.c.b16 %v7763, %v7763
        %v7828 = vpack.c.b16 %v7764, %v7764
        %v7829 = vpack.c.b16 %v7765, %v7765
        %v7830 = vpack.c.b16 %v7766, %v7766
        %v7831 = vpack.c.b16 %v7767, %v7767
        %v7832 = vpack.c.b16 %v7768, %v7768
        %v7833 = vpack.c.b16 %v7769, %v7769
        %v7834 = vpack.c.b16 %v7770, %v7770
        %v7835 = vpack.c.b16 %v7771, %v7771
        %v7836 = vpack.c.b16 %v7772, %v7772
        %v7837 = vpack.c.b16 %v7773, %v7773
        %v7838 = vpack.c.b16 %v7774, %v7774
        %v7839 = vpack.c.b16 %v7775, %v7775
        %v7840 = vpack.c.b16 %v7776, %v7776
        %v7841 = vpack.c.b16 %v7777, %v7777
        %v7842 = vpack.c.b16 %v7778, %v7778
        %v7843 = vpack.c.b16 %v7779, %v7779
        %v7844 = vpack.c.b16 %v7780, %v7780
        %v7845 = vpack.c.b16 %v7781, %v7781
        %v7846 = vpack.c.b16 %v7782, %v7782
        %v7847 = vpack.c.b16 %v7783, %v7783
        %v7848 = vpack.c.b16 %v7784, %v7784
        %v7849 = vpack.c.b16 %v7785, %v7785
        %v7850 = vpack.c.b16 %v7786, %v7786
        %v7851 = vpack.c.b16 %v7787, %v7787
        %v7852 = vpack.c.b16 %v7788, %v7788
        %v7853 = vpack.c.b16 %v7789, %v7789
        %v7854 = vpack.c.b16 %v7790, %v7790
        %v7855 = vpack.c.b16 %v7791, %v7791
        %7920 = vst [vmem:[%s325] sm:$0xf] %v7792
        %7921 = vst [vmem:[%s325 + $0x4] sm:$0xf] %v7793
        %7922 = vst [vmem:[%s325 + $0x8] sm:$0xf] %v7794
        %7923 = vst [vmem:[%s325 + $0xc] sm:$0xf] %v7795
        %7924 = vst [vmem:[%s325 + $0x10] sm:$0xf] %v7796
        %7925 = vst [vmem:[%s325 + $0x14] sm:$0xf] %v7797
        %7926 = vst [vmem:[%s325 + $0x18] sm:$0xf] %v7798
        %7927 = vst [vmem:[%s325 + $0x1c] sm:$0xf] %v7799
        %7928 = vst [vmem:[%s325 + $0x20] sm:$0xf] %v7800
        %7929 = vst [vmem:[%s325 + $0x24] sm:$0xf] %v7801
        %7930 = vst [vmem:[%s325 + $0x28] sm:$0xf] %v7802
        %7931 = vst [vmem:[%s325 + $0x2c] sm:$0xf] %v7803
        %7932 = vst [vmem:[%s325 + $0x30] sm:$0xf] %v7804
        %7933 = vst [vmem:[%s325 + $0x34] sm:$0xf] %v7805
        %7934 = vst [vmem:[%s325 + $0x38] sm:$0xf] %v7806
        %7935 = vst [vmem:[%s325 + $0x3c] sm:$0xf] %v7807
        %7936 = vst [vmem:[%s325 + $0x40] sm:$0xf] %v7808
        %7937 = vst [vmem:[%s325 + $0x44] sm:$0xf] %v7809
        %7938 = vst [vmem:[%s325 + $0x48] sm:$0xf] %v7810
        %7939 = vst [vmem:[%s325 + $0x4c] sm:$0xf] %v7811
        %7940 = vst [vmem:[%s325 + $0x50] sm:$0xf] %v7812
        %7941 = vst [vmem:[%s325 + $0x54] sm:$0xf] %v7813
        %7942 = vst [vmem:[%s325 + $0x58] sm:$0xf] %v7814
        %7943 = vst [vmem:[%s325 + $0x5c] sm:$0xf] %v7815
        %7944 = vst [vmem:[%s325 + $0x60] sm:$0xf] %v7816
        %7945 = vst [vmem:[%s325 + $0x64] sm:$0xf] %v7817
        %7946 = vst [vmem:[%s325 + $0x68] sm:$0xf] %v7818
        %7947 = vst [vmem:[%s325 + $0x6c] sm:$0xf] %v7819
        %7948 = vst [vmem:[%s325 + $0x70] sm:$0xf] %v7820
        %7949 = vst [vmem:[%s325 + $0x74] sm:$0xf] %v7821
        %7950 = vst [vmem:[%s325 + $0x78] sm:$0xf] %v7822
        %7951 = vst [vmem:[%s325 + $0x7c] sm:$0xf] %v7823
        %7952 = vst [vmem:[%s325 + $0x80] sm:$0xf] %v7824
        %7953 = vst [vmem:[%s325 + $0x84] sm:$0xf] %v7825
        %7954 = vst [vmem:[%s325 + $0x88] sm:$0xf] %v7826
        %7955 = vst [vmem:[%s325 + $0x8c] sm:$0xf] %v7827
        %7956 = vst [vmem:[%s325 + $0x90] sm:$0xf] %v7828
        %7957 = vst [vmem:[%s325 + $0x94] sm:$0xf] %v7829
        %7958 = vst [vmem:[%s325 + $0x98] sm:$0xf] %v7830
        %7959 = vst [vmem:[%s325 + $0x9c] sm:$0xf] %v7831
        %7960 = vst [vmem:[%s325 + $0xa0] sm:$0xf] %v7832
        %7961 = vst [vmem:[%s325 + $0xa4] sm:$0xf] %v7833
        %7962 = vst [vmem:[%s325 + $0xa8] sm:$0xf] %v7834
        %7963 = vst [vmem:[%s325 + $0xac] sm:$0xf] %v7835
        %7964 = vst [vmem:[%s325 + $0xb0] sm:$0xf] %v7836
        %7965 = vst [vmem:[%s325 + $0xb4] sm:$0xf] %v7837
        %7966 = vst [vmem:[%s325 + $0xb8] sm:$0xf] %v7838
        %7967 = vst [vmem:[%s325 + $0xbc] sm:$0xf] %v7839
        %7968 = vst [vmem:[%s325 + $0xc0] sm:$0xf] %v7840
        %7969 = vst [vmem:[%s325 + $0xc4] sm:$0xf] %v7841
        %7970 = vst [vmem:[%s325 + $0xc8] sm:$0xf] %v7842
        %7971 = vst [vmem:[%s325 + $0xcc] sm:$0xf] %v7843
        %7972 = vst [vmem:[%s325 + $0xd0] sm:$0xf] %v7844
        %7973 = vst [vmem:[%s325 + $0xd4] sm:$0xf] %v7845
        %7974 = vst [vmem:[%s325 + $0xd8] sm:$0xf] %v7846
        %7975 = vst [vmem:[%s325 + $0xdc] sm:$0xf] %v7847
        %7976 = vst [vmem:[%s325 + $0xe0] sm:$0xf] %v7848
        %7977 = vst [vmem:[%s325 + $0xe4] sm:$0xf] %v7849
        %7978 = vst [vmem:[%s325 + $0xe8] sm:$0xf] %v7850
        %7979 = vst [vmem:[%s325 + $0xec] sm:$0xf] %v7851
        %7980 = vst [vmem:[%s325 + $0xf0] sm:$0xf] %v7852
        %7981 = vst [vmem:[%s325 + $0xf4] sm:$0xf] %v7853
        %7982 = vst [vmem:[%s325 + $0xf8] sm:$0xf] %v7854
        %7983 = vst [vmem:[%s325 + $0xfc] sm:$0xf] %v7855
        %s7984 = sand.u32 %s185, 1
        %s7985 = scalar_lea.sflag [#allocation6], %s7984
        %s7986 = sand.u32 %s185, 1
        %s7987 = smul.addr %s7986, 256
        %s7988 = scalar_lea.vmem [#allocation10], %s7987
        // Predicated region
        $region61: #{tpu_custom_call.1} parent=47 // pred_check
          %p7989 = pneg %p195
        $region62: #{tpu_custom_call.1} parent=47 // pred_check_branch
          %7991 = sbr.rel (%p7989) target = $region64
        $region63: #{tpu_custom_call.1} parent=47 // pred_region
          %s7993 = ssub.s32 4096, 4096
          %7994 = vsyncadd %s7985, %s7993
          %s7995 = smul.addr %s25, 64
          %s7996 = smul.addr %s7995, 64
          %s7997 = scalar_lea.hbm %s7, %s7996
          %s7998 = sshll.u32 %s7988, 4
          %s7999 = int_to_ptr.vmem [resolvable:$true] %s7998
          %8004 = dma.vmem_to_hbm [thread:$0]  %s7999, 4096, %s7997, %s7985, 64, 64, 4
        $region64: #{tpu_custom_call.1} parent=47 // pred_fallthru
          _
      $region48: #{tpu_custom_call.1} parent=5 // pred_fallthru
        _
      %p8005 = scmp.le.s32.totalorder 2, %s20
      // Predicated region
      $region65: #{tpu_custom_call.1} parent=5 // pred_check
        %p8006 = pneg %p8005
      $region66: #{tpu_custom_call.1} parent=5 // pred_check_branch
        %8008 = sbr.rel (%p8006) target = $region68
      $region67: #{tpu_custom_call.1} parent=5 // pred_region
        %s8009 = ssub.s32 %s20, 2
        // Predicated region
        $region69: #{tpu_custom_call.1} parent=67 // pred_check
          %p8010 = pneg %p201
        $region70: #{tpu_custom_call.1} parent=67 // pred_check_branch
          %8012 = sbr.rel (%p8010) target = $region72
        $region71: #{tpu_custom_call.1} parent=67 // pred_region
          %s8013 = sand.u32 %s186, 1
          %s8014 = scalar_lea.sflag [#allocation6], %s8013
          %s8015 = sand.u32 %s186, 1
          %s8016 = smul.addr %s8015, 256
          %s8017 = scalar_lea.vmem [#allocation10], %s8016
          %8018 = dma.done %s8014, 4096
        $region72: #{tpu_custom_call.1} parent=67 // pred_fallthru
          _
      $region68: #{tpu_custom_call.1} parent=5 // pred_fallthru
        _
    $region6: #{tpu_custom_call.1} parent=1 // loop_footer
      %s24 = sadd.s32 1, %s20
    $region7: #{tpu_custom_call.1} parent=1 // loop_footer_branch
      %19 = sbr.rel target = $region3
    $region8: #{tpu_custom_call.1} parent=1 // loop_exit
      _
    %8019 = vsyncpa [#allocation5], 1
    %s8020 = scalar_lea.sflag [#allocation5], 1
    %8021 = vsyncpa %s8020, 1
    %8022 = vsyncpa [#allocation8], 1
    %8023 = vsyncpa [#allocation6], 1
    %s8024 = scalar_lea.sflag [#allocation6], 1
    %8025 = vsyncpa %s8024, 1

</llo_original>
